<compile_context>
chip_gen: v5e
topology: v5e:2x2
jax: 0.10.0
libtpu: 0.0.40
codegen_flags: <defaults>
</compile_context>

<pallas_src>
import functools

import jax
import jax.numpy as jnp
from jax.experimental import pallas as pl
from jax.experimental.pallas import tpu as pltpu


# fixed ordering of the per-layer stacked parameters passed to the kernel
LAYER_PARAM_NAMES = (
    "bn1_g", "bn1_b", "w_qkv", "b_qkv", "w_post", "b_post",
    "g1_wy_rz", "g1_wx_rz", "g1_brz", "g1_wy_g", "g1_wx_g", "g1_bh",
    "bn2_g", "bn2_b", "w_mlp1", "b_mlp1", "w_mlp2", "b_mlp2",
    "g2_wy_rz", "g2_wx_rz", "g2_brz", "g2_wy_g", "g2_wx_g", "g2_bh",
)


# --------------------------- in-kernel helpers ------------------------------ #

def _batchnorm(x, gamma, beta, eps):
    """Training-mode BatchNorm1d (biased variance), two-pass for stability."""
    mean = jnp.mean(x, axis=0, keepdims=True)
    xc = x - mean
    var = jnp.mean(xc * xc, axis=0, keepdims=True)
    return xc * jax.lax.rsqrt(var + eps) * gamma + beta


def _gate(x, y, wy_rz, wx_rz, b_rz, wy_g, wx_g, b_h, bg, emb):
    """GatingMechanism: six E->E linears as sums of two dots (no concat)."""
    yb = y.astype(jnp.bfloat16)
    pre = (jnp.dot(yb, wy_rz, preferred_element_type=jnp.float32)
           + jnp.dot(x.astype(jnp.bfloat16), wx_rz,
                     preferred_element_type=jnp.float32)
           + b_rz)
    r = jax.nn.sigmoid(pre[:, :emb])                         # Wr(y)+Ur(x)
    z = jax.nn.sigmoid(pre[:, emb:] - bg)                    # Wz(y)+Uz(x)-bg
    h = jnp.tanh(jnp.dot(yb, wy_g, preferred_element_type=jnp.float32)
                 + jnp.dot((r * x).astype(jnp.bfloat16), wx_g,
                           preferred_element_type=jnp.float32)
                 + b_h)
    return (1.0 - z) * x + z * h


def _masked_max_pool(h, mask, neg):
    """mask[G, N] membership -> [G, E] max over member rows (0 if empty)."""
    # TODO(synk): tile over N with a running [G,E] max for production sizes.
    pooled = jnp.max(jnp.where(mask[:, :, None] > 0.0, h[None, :, :], neg), axis=1)
    nonempty = jnp.sum(mask, axis=1, keepdims=True) > 0.0
    return jnp.where(nonempty, pooled, 0.0)


# ------------------------------ fused kernel -------------------------------- #

def _encoder_kernel(
    # constant (grid-invariant) inputs
    x_ref, adj_ref, dagpe_ref, dag_mask_ref, obs_mask_ref,
    w_prep_ref, b_prep_ref, w_dag_ref, b_dag_ref, w_glob_ref, b_glob_ref,
    # per-layer (streamed) inputs -- squeezed views of [L, ...] stacks
    bn1_g_ref, bn1_b_ref, w_qkv_ref, b_qkv_ref, w_post_ref, b_post_ref,
    g1_wy_rz_ref, g1_wx_rz_ref, g1_brz_ref, g1_wy_g_ref, g1_wx_g_ref, g1_bh_ref,
    bn2_g_ref, bn2_b_ref, w_mlp1_ref, b_mlp1_ref, w_mlp2_ref, b_mlp2_ref,
    g2_wy_rz_ref, g2_wx_rz_ref, g2_brz_ref, g2_wy_g_ref, g2_wx_g_ref, g2_bh_ref,
    # outputs
    h_node_ref, h_dag_ref, h_glob_ref,
    # scratch (persists across grid steps)
    h_scr, negb_scr, hasin_scr,
    *, num_heads, head_dim, bg, eps,
):
    emb = num_heads * head_dim
    neg = jnp.float32(-1e30)
    layer = pl.program_id(0)

    @pl.when(layer == 0)
    def _prologue():
        # connectivity-derived tensors, computed ONCE for all layers/heads
        adjf = adj_ref[...].astype(jnp.float32)              # adj[dst, src]
        edge = adjf > 0.0
        negb_scr[...] = jnp.where(edge, 0.0, neg)
        hasin_scr[...] = jnp.max(jnp.where(edge, jnp.float32(1.0),
                                           jnp.float32(0.0)),
                                 axis=-1, keepdims=True)
        # prep linear: x -> h0
        h_scr[...] = (jnp.dot(x_ref[...], w_prep_ref[...],
                              preferred_element_type=jnp.float32)
                      + b_prep_ref[...])

    # ----------------- one transformer layer per grid step ----------------- #
    h0 = h_scr[...] + dagpe_ref[...]
    h0n = _batchnorm(h0, bn1_g_ref[...], bn1_b_ref[...], eps)

    # fused Q/K/V projection (Q columns already carry 1/sqrt(head_dim))
    qkv = (jnp.dot(h0n.astype(jnp.bfloat16), w_qkv_ref[...],
                   preferred_element_type=jnp.float32) + b_qkv_ref[...])

    neg_bias = negb_scr[...]
    heads = []
    for hd in range(num_heads):
        lo = hd * head_dim                                   # 128-lane aligned
        q = qkv[:, lo:lo + head_dim].astype(jnp.bfloat16)
        k = qkv[:, emb + lo:emb + lo + head_dim].astype(jnp.bfloat16)
        v = qkv[:, 2 * emb + lo:2 * emb + lo + head_dim].astype(jnp.bfloat16)
        # q @ k^T (no materialized transpose) with additive edge bias
        s = jax.lax.dot_general(q, k, (((1,), (1,)), ((), ())),
                                preferred_element_type=jnp.float32) + neg_bias
        m = jnp.max(s, axis=-1, keepdims=True)
        p = jnp.exp(s - m)                                   # masked -> underflow 0
        denom = jnp.sum(p, axis=-1, keepdims=True)
        o = jnp.dot(p.astype(jnp.bfloat16), v, preferred_element_type=jnp.float32)
        # deferred normalization: one [N, head_dim] multiply instead of [N, N]
        heads.append(o * pl.reciprocal(jnp.maximum(denom, jnp.float32(1e-30)),
                                       approx=True))
    att = jnp.concatenate(heads, axis=-1) * hasin_scr[...]   # zero no-in-edge rows

    # post linear + ReLU
    h1 = jnp.maximum(
        jnp.dot(att.astype(jnp.bfloat16), w_post_ref[...],
                preferred_element_type=jnp.float32) + b_post_ref[...], 0.0)
    # gate1: (h0, h1) -> h1
    h1 = _gate(h0, h1, g1_wy_rz_ref[...], g1_wx_rz_ref[...], g1_brz_ref[...],
               g1_wy_g_ref[...], g1_wx_g_ref[...], g1_bh_ref[...], bg, emb)

    h1n = _batchnorm(h1, bn2_g_ref[...], bn2_b_ref[...], eps)
    # MLP([E, 2E, E], norm=None) with the trailing ReLU fused
    t = jnp.maximum(
        jnp.dot(h1n.astype(jnp.bfloat16), w_mlp1_ref[...],
                preferred_element_type=jnp.float32) + b_mlp1_ref[...], 0.0)
    h2 = jnp.maximum(
        jnp.dot(t.astype(jnp.bfloat16), w_mlp2_ref[...],
                preferred_element_type=jnp.float32) + b_mlp2_ref[...], 0.0)
    # gate2: (h1, h2) -> h0 (carried to next layer via scratch)
    h_scr[...] = _gate(h1, h2, g2_wy_rz_ref[...], g2_wx_rz_ref[...],
                       g2_brz_ref[...], g2_wy_g_ref[...], g2_wx_g_ref[...],
                       g2_bh_ref[...], bg, emb)

    @pl.when(layer == pl.num_programs(0) - 1)
    def _epilogue():
        h_final = h_scr[...]
        h_node_ref[...] = h_final
        # DAG encoder: masked global max pool over terminal nodes + Linear
        pooled_dag = _masked_max_pool(h_final, dag_mask_ref[...], neg)
        h_dag = (jnp.dot(pooled_dag.astype(jnp.bfloat16), w_dag_ref[...],
                         preferred_element_type=jnp.float32) + b_dag_ref[...])
        h_dag_ref[...] = h_dag
        # global encoder: segment_max_csr over obs segments + Linear
        pooled_glob = _masked_max_pool(h_dag, obs_mask_ref[...], neg)
        h_glob_ref[...] = (jnp.dot(pooled_glob.astype(jnp.bfloat16),
                                   w_glob_ref[...],
                                   preferred_element_type=jnp.float32)
                           + b_glob_ref[...])


# ------------------------------- host wrapper -------------------------------- #

def positional_encoding(depth, dim, base_freq=1e-4):
    # torch_geometric.nn.PositionalEncoding(out_channels)
    freq = jnp.power(jnp.float32(base_freq),
                     jnp.linspace(0.0, 1.0, dim // 2, dtype=jnp.float32))
    out = depth[:, None].astype(jnp.float32) * freq[None, :]
    return jnp.concatenate([jnp.sin(out), jnp.cos(out)], axis=-1)      # [N, E]


def encoder_forward(params, x, adj, depth, dag_mask, obs_mask, *,
                    embed_dim, num_heads, num_layers):
    head_dim = embed_dim // num_heads
    dagpe = positional_encoding(depth, embed_dim)

    const_inputs = (
        x.astype(jnp.bfloat16),                 # matmul input -> bf16
        adj.astype(jnp.int8),                   # 4x less DMA than f32
        dagpe,
        dag_mask.astype(jnp.float32),
        obs_mask.astype(jnp.float32),
        params["prep_w"], params["prep_b"],
        params["dag_w"], params["dag_b"],
        params["glob_w"], params["glob_b"],
    )
    layer_inputs = tuple(params["layers"][name] for name in LAYER_PARAM_NAMES)

    # constant inputs: full-array block, same block every grid step (no re-DMA)
    const_specs = [pl.BlockSpec(a.shape, lambda l: (0, 0)) for a in const_inputs]
    # per-layer inputs: stream layer l's slice, double-buffered by the pipeline
    layer_specs = [pl.BlockSpec((None,) + a.shape[1:], lambda l: (l, 0, 0))
                   for a in layer_inputs]

    n = x.shape[0]
    g = dag_mask.shape[0]
    s = obs_mask.shape[0]
    out_shape = (
        jax.ShapeDtypeStruct((n, embed_dim), jnp.float32),
        jax.ShapeDtypeStruct((g, embed_dim), jnp.float32),
        jax.ShapeDtypeStruct((s, embed_dim), jnp.float32),
    )
    out_specs = (
        pl.BlockSpec((n, embed_dim), lambda l: (0, 0)),
        pl.BlockSpec((g, embed_dim), lambda l: (0, 0)),
        pl.BlockSpec((s, embed_dim), lambda l: (0, 0)),
    )

    kernel = functools.partial(
        _encoder_kernel, num_heads=num_heads, head_dim=head_dim,
        bg=0.1, eps=1e-5)

    grid_spec = pltpu.PrefetchScalarGridSpec(
        num_scalar_prefetch=0,
        grid=(num_layers,),
        in_specs=list(const_specs) + list(layer_specs),
        out_specs=out_specs,
        scratch_shapes=[
            pltpu.VMEM((n, embed_dim), jnp.float32),   # carried node state h
            pltpu.VMEM((n, n), jnp.float32),           # softmax edge bias (0/-1e30)
            pltpu.VMEM((n, 1), jnp.float32),           # has-incoming-edge mask
        ],
    )

    h_node, h_dag, h_glob = pl.pallas_call(
        kernel,
        out_shape=out_shape,
        grid_spec=grid_spec,
        compiler_params=pltpu.CompilerParams(
            dimension_semantics=("arbitrary",),        # layer axis carries state
            vmem_limit_bytes=64 * 1024 * 1024,
        ),
    )(*const_inputs, *layer_inputs)
    return {"node": h_node, "dag": h_dag, "glob": h_glob}


# --------------------------------- params ------------------------------------ #

def init_params(key, num_feats, embed_dim, num_heads, num_layers):
    E = embed_dim
    scale = 1.0 / float(E // num_heads) ** 0.5
    keys = iter(jax.random.split(key, 4096))

    def lin(din, dout):
        w = 0.1 * jax.random.normal(next(keys), (din, dout), jnp.float32)
        b = 0.01 * jax.random.normal(next(keys), (1, dout), jnp.float32)
        return w, b

    def gate():
        # six E->E linears packed into (y-side, x-side) matrices
        (wr, br), (ur, bur) = lin(E, E), lin(E, E)
        (wz, bz), (uz, buz) = lin(E, E), lin(E, E)
        (wg, bgw), (ug, bgu) = lin(E, E), lin(E, E)
        return dict(
            wy_rz=jnp.concatenate([wr, wz], -1).astype(jnp.bfloat16),   # [E, 2E]
            wx_rz=jnp.concatenate([ur, uz], -1).astype(jnp.bfloat16),   # [E, 2E]
            brz=jnp.concatenate([br + bur, bz + buz], -1),              # [1, 2E]
            wy_g=wg.astype(jnp.bfloat16), wx_g=ug.astype(jnp.bfloat16), # [E, E]
            bh=bgw + bgu,                                               # [1, E]
        )

    prep_w, prep_b = lin(num_feats, E)

    per_layer = {name: [] for name in LAYER_PARAM_NAMES}
    for _ in range(num_layers):
        (wq, bq), (wk, bk), (wv, bv) = lin(E, E), lin(E, E), lin(E, E)
        w_post, b_post = lin(E, E)
        g1 = gate()
        w_m1, b_m1 = lin(E, 2 * E)
        w_m2, b_m2 = lin(2 * E, E)
        g2 = gate()
        vals = dict(
            bn1_g=jnp.ones((1, E), jnp.float32),
            bn1_b=jnp.zeros((1, E), jnp.float32),
            # 1/sqrt(head_dim) folded into the Q block (weight AND bias)
            w_qkv=jnp.concatenate([wq * scale, wk, wv], -1).astype(jnp.bfloat16),
            b_qkv=jnp.concatenate([bq * scale, bk, bv], -1),
            w_post=w_post.astype(jnp.bfloat16), b_post=b_post,
            g1_wy_rz=g1["wy_rz"], g1_wx_rz=g1["wx_rz"], g1_brz=g1["brz"],
            g1_wy_g=g1["wy_g"], g1_wx_g=g1["wx_g"], g1_bh=g1["bh"],
            bn2_g=jnp.ones((1, E), jnp.float32),
            bn2_b=jnp.zeros((1, E), jnp.float32),
            w_mlp1=w_m1.astype(jnp.bfloat16), b_mlp1=b_m1,
            w_mlp2=w_m2.astype(jnp.bfloat16), b_mlp2=b_m2,
            g2_wy_rz=g2["wy_rz"], g2_wx_rz=g2["wx_rz"], g2_brz=g2["brz"],
            g2_wy_g=g2["wy_g"], g2_wx_g=g2["wx_g"], g2_bh=g2["bh"],
        )
        for name in LAYER_PARAM_NAMES:
            per_layer[name].append(vals[name])

    dag_w, dag_b = lin(E, E)
    glob_w, glob_b = lin(E, E)

    return {
        "prep_w": prep_w.astype(jnp.bfloat16), "prep_b": prep_b,
        "layers": {name: jnp.stack(per_layer[name]) for name in LAYER_PARAM_NAMES},
        "dag_w": dag_w.astype(jnp.bfloat16), "dag_b": dag_b,
        "glob_w": glob_w.astype(jnp.bfloat16), "glob_b": glob_b,
    }


# ----------------------------------- main ------------------------------------ #

if __name__ == "__main__":
    # nodes, node feats, embed dim (lane-dense), heads (head_dim=128), layers
    N, F, E, H, L = 8, 8, 256, 2, 2
    G = 2                               # num graphs in the batch

    key = jax.random.PRNGKey(0)
    kx, kp = jax.random.split(key)

    x = jax.random.normal(kx, (N, F), jnp.float32)

    # Two small DAGs: nodes 0-3 (graph 0) and 4-7 (graph 1). Edges src -> dst;
    # adjacency stored as adj[dst, src] (PyG flow='source_to_target').
    edges = [(0, 1), (0, 2), (1, 3), (2, 3), (4, 5), (4, 6), (5, 7), (6, 7)]
    adj = jnp.zeros((N, N), jnp.float32)
    for src, dst in edges:
        adj = adj.at[dst, src].set(1.0)

    depth = jnp.array([0, 1, 1, 2, 0, 1, 1, 2], jnp.float32)
    batch = jnp.array([0, 0, 0, 0, 1, 1, 1, 1], jnp.int32)
    stage_mask = jnp.array([1, 1, 1, 1, 0, 1, 1, 1], jnp.float32)

    # global_max_pool(h_node[stage_mask], batch[stage_mask], size=G) as dense masks
    dag_mask = jnp.stack(
        [(batch == gi).astype(jnp.float32) * stage_mask for gi in range(G)], axis=0
    )                                                                  # [G, N]
    # default obs_ptr = [0, num_graphs]  ->  a single segment covering all dags
    obs_mask = jnp.ones((1, G), jnp.float32)                           # [1, G]

    params = init_params(kp, F, E, H, L)

    out = encoder_forward(
        params, x, adj, depth, dag_mask, obs_mask,
        embed_dim=E, num_heads=H, num_layers=L,
    )
    jax.block_until_ready(out)

    assert out["node"].shape == (N, E)
    assert out["dag"].shape == (G, E)
    assert out["glob"].shape == (1, E)
    assert all(bool(jnp.all(jnp.isfinite(v))) for v in out.values())
    print("KERNEL_OK")
</pallas_src>

<mosaic_0001>
module attributes {stable_mosaic.version = 11 : i64} {
  func.func @_encoder_kernel(%arg0: i32, %arg1: memref<8x8xbf16, #tpu.memory_space<vmem>>, %arg2: memref<8x8xi8, #tpu.memory_space<vmem>>, %arg3: memref<8x256xf32, #tpu.memory_space<vmem>>, %arg4: memref<2x8xf32, #tpu.memory_space<vmem>>, %arg5: memref<1x2xf32, #tpu.memory_space<vmem>>, %arg6: memref<8x256xbf16, #tpu.memory_space<vmem>>, %arg7: memref<1x256xf32, #tpu.memory_space<vmem>>, %arg8: memref<256x256xbf16, #tpu.memory_space<vmem>>, %arg9: memref<1x256xf32, #tpu.memory_space<vmem>>, %arg10: memref<256x256xbf16, #tpu.memory_space<vmem>>, %arg11: memref<1x256xf32, #tpu.memory_space<vmem>>, %arg12: memref<1x1x256xf32, #tpu.memory_space<vmem>>, %arg13: memref<1x1x256xf32, #tpu.memory_space<vmem>>, %arg14: memref<1x256x768xbf16, #tpu.memory_space<vmem>>, %arg15: memref<1x1x768xf32, #tpu.memory_space<vmem>>, %arg16: memref<1x256x256xbf16, #tpu.memory_space<vmem>>, %arg17: memref<1x1x256xf32, #tpu.memory_space<vmem>>, %arg18: memref<1x256x512xbf16, #tpu.memory_space<vmem>>, %arg19: memref<1x256x512xbf16, #tpu.memory_space<vmem>>, %arg20: memref<1x1x512xf32, #tpu.memory_space<vmem>>, %arg21: memref<1x256x256xbf16, #tpu.memory_space<vmem>>, %arg22: memref<1x256x256xbf16, #tpu.memory_space<vmem>>, %arg23: memref<1x1x256xf32, #tpu.memory_space<vmem>>, %arg24: memref<1x1x256xf32, #tpu.memory_space<vmem>>, %arg25: memref<1x1x256xf32, #tpu.memory_space<vmem>>, %arg26: memref<1x256x512xbf16, #tpu.memory_space<vmem>>, %arg27: memref<1x1x512xf32, #tpu.memory_space<vmem>>, %arg28: memref<1x512x256xbf16, #tpu.memory_space<vmem>>, %arg29: memref<1x1x256xf32, #tpu.memory_space<vmem>>, %arg30: memref<1x256x512xbf16, #tpu.memory_space<vmem>>, %arg31: memref<1x256x512xbf16, #tpu.memory_space<vmem>>, %arg32: memref<1x1x512xf32, #tpu.memory_space<vmem>>, %arg33: memref<1x256x256xbf16, #tpu.memory_space<vmem>>, %arg34: memref<1x256x256xbf16, #tpu.memory_space<vmem>>, %arg35: memref<1x1x256xf32, #tpu.memory_space<vmem>>, %arg36: memref<8x256xf32, #tpu.memory_space<vmem>>, %arg37: memref<2x256xf32, #tpu.memory_space<vmem>>, %arg38: memref<1x256xf32, #tpu.memory_space<vmem>>, %arg39: memref<8x256xf32, #tpu.memory_space<vmem>>, %arg40: memref<8x8xf32, #tpu.memory_space<vmem>>, %arg41: memref<8x1xf32, #tpu.memory_space<vmem>>) attributes {dimension_semantics = [#tpu.dimension_semantics<arbitrary>], iteration_bounds = array<i64: 2>, scalar_prefetch = 0 : i64, scratch_operands = 3 : i64, tpu.core_type = #tpu.core_type<tc>, window_params = [{pipeline_mode = #tpu.pipeline_mode<synchronous>, transform_indices = @transform_0, window_bounds = array<i64: 8, 8>}, {pipeline_mode = #tpu.pipeline_mode<synchronous>, transform_indices = @transform_1, window_bounds = array<i64: 8, 8>}, {pipeline_mode = #tpu.pipeline_mode<synchronous>, transform_indices = @transform_2, window_bounds = array<i64: 8, 256>}, {pipeline_mode = #tpu.pipeline_mode<synchronous>, transform_indices = @transform_3, window_bounds = array<i64: 2, 8>}, {pipeline_mode = #tpu.pipeline_mode<synchronous>, transform_indices = @transform_4, window_bounds = array<i64: 1, 2>}, {pipeline_mode = #tpu.pipeline_mode<synchronous>, transform_indices = @transform_5, window_bounds = array<i64: 8, 256>}, {pipeline_mode = #tpu.pipeline_mode<synchronous>, transform_indices = @transform_6, window_bounds = array<i64: 1, 256>}, {pipeline_mode = #tpu.pipeline_mode<synchronous>, transform_indices = @transform_7, window_bounds = array<i64: 256, 256>}, {pipeline_mode = #tpu.pipeline_mode<synchronous>, transform_indices = @transform_8, window_bounds = array<i64: 1, 256>}, {pipeline_mode = #tpu.pipeline_mode<synchronous>, transform_indices = @transform_9, window_bounds = array<i64: 256, 256>}, {pipeline_mode = #tpu.pipeline_mode<synchronous>, transform_indices = @transform_10, window_bounds = array<i64: 1, 256>}, {transform_indices = @transform_11, window_bounds = array<i64: 1, 1, 256>}, {transform_indices = @transform_12, window_bounds = array<i64: 1, 1, 256>}, {transform_indices = @transform_13, window_bounds = array<i64: 1, 256, 768>}, {transform_indices = @transform_14, window_bounds = array<i64: 1, 1, 768>}, {transform_indices = @transform_15, window_bounds = array<i64: 1, 256, 256>}, {transform_indices = @transform_16, window_bounds = array<i64: 1, 1, 256>}, {transform_indices = @transform_17, window_bounds = array<i64: 1, 256, 512>}, {transform_indices = @transform_18, window_bounds = array<i64: 1, 256, 512>}, {transform_indices = @transform_19, window_bounds = array<i64: 1, 1, 512>}, {transform_indices = @transform_20, window_bounds = array<i64: 1, 256, 256>}, {transform_indices = @transform_21, window_bounds = array<i64: 1, 256, 256>}, {transform_indices = @transform_22, window_bounds = array<i64: 1, 1, 256>}, {transform_indices = @transform_23, window_bounds = array<i64: 1, 1, 256>}, {transform_indices = @transform_24, window_bounds = array<i64: 1, 1, 256>}, {transform_indices = @transform_25, window_bounds = array<i64: 1, 256, 512>}, {transform_indices = @transform_26, window_bounds = array<i64: 1, 1, 512>}, {transform_indices = @transform_27, window_bounds = array<i64: 1, 512, 256>}, {transform_indices = @transform_28, window_bounds = array<i64: 1, 1, 256>}, {transform_indices = @transform_29, window_bounds = array<i64: 1, 256, 512>}, {transform_indices = @transform_30, window_bounds = array<i64: 1, 256, 512>}, {transform_indices = @transform_31, window_bounds = array<i64: 1, 1, 512>}, {transform_indices = @transform_32, window_bounds = array<i64: 1, 256, 256>}, {transform_indices = @transform_33, window_bounds = array<i64: 1, 256, 256>}, {transform_indices = @transform_34, window_bounds = array<i64: 1, 1, 256>}, {pipeline_mode = #tpu.pipeline_mode<synchronous>, transform_indices = @transform_35, window_bounds = array<i64: 8, 256>}, {pipeline_mode = #tpu.pipeline_mode<synchronous>, transform_indices = @transform_36, window_bounds = array<i64: 2, 256>}, {pipeline_mode = #tpu.pipeline_mode<synchronous>, transform_indices = @transform_37, window_bounds = array<i64: 1, 256>}]} {
    %c0_i32 = arith.constant 0 : i32
    %0 = arith.cmpi eq, %arg0, %c0_i32 : i32
    %1 = arith.extui %0 : i1 to i32
    %cst = arith.constant -1.000000e+30 : f32
    %c0_i32_0 = arith.constant 0 : i32
    %2 = arith.cmpi ne, %1, %c0_i32_0 : i32
    scf.if %2 {
      %c0_127 = arith.constant 0 : index
      %c0_128 = arith.constant 0 : index
      %237 = vector.load %arg2[%c0_127, %c0_128] : memref<8x8xi8, #tpu.memory_space<vmem>>, vector<8x8xi8>
      %238 = arith.sitofp %237 : vector<8x8xi8> to vector<8x8xf32>
      %cst_129 = arith.constant 0.000000e+00 : f32
      %239 = vector.broadcast %cst_129 : f32 to vector<8x8xf32>
      %240 = arith.cmpf ogt, %238, %239 : vector<8x8xf32>
      %cst_130 = arith.constant 0.000000e+00 : f32
      %241 = vector.broadcast %cst_130 : f32 to vector<8x8xf32>
      %242 = vector.broadcast %cst : f32 to vector<8x8xf32>
      %243 = arith.select %240, %241, %242 : vector<8x8xi1>, vector<8x8xf32>
      %c0_131 = arith.constant 0 : index
      %c0_132 = arith.constant 0 : index
      %244 = vector.load %arg40[%c0_131, %c0_132] : memref<8x8xf32, #tpu.memory_space<vmem>>, vector<8x8xf32>
      tpu.vector_store %arg40[%c0_131, %c0_132], %243 {strides = array<i32>} : memref<8x8xf32, #tpu.memory_space<vmem>>, vector<8x8xf32>,
      %cst_133 = arith.constant 1.000000e+00 : f32
      %cst_134 = arith.constant 0.000000e+00 : f32
      %245 = vector.broadcast %cst_133 : f32 to vector<8x8xf32>
      %246 = vector.broadcast %cst_134 : f32 to vector<8x8xf32>
      %247 = arith.select %240, %245, %246 : vector<8x8xi1>, vector<8x8xf32>
      %cst_135 = arith.constant dense<0xFF800000> : vector<8xf32>
      %248 = vector.multi_reduction <maximumf>, %247, %cst_135 [1] : vector<8x8xf32> to vector<8xf32>
      %249 = vector.shape_cast %248 : vector<8xf32> to vector<8x1xf32>
      %c0_136 = arith.constant 0 : index
      %c0_137 = arith.constant 0 : index
      %250 = vector.load %arg41[%c0_136, %c0_137] : memref<8x1xf32, #tpu.memory_space<vmem>>, vector<8x1xf32>
      tpu.vector_store %arg41[%c0_136, %c0_137], %249 {strides = array<i32>} : memref<8x1xf32, #tpu.memory_space<vmem>>, vector<8x1xf32>,
      %c0_138 = arith.constant 0 : index
      %c0_139 = arith.constant 0 : index
      %251 = vector.load %arg1[%c0_138, %c0_139] : memref<8x8xbf16, #tpu.memory_space<vmem>>, vector<8x8xbf16>
      %c0_140 = arith.constant 0 : index
      %c0_141 = arith.constant 0 : index
      %252 = vector.load %arg6[%c0_140, %c0_141] : memref<8x256xbf16, #tpu.memory_space<vmem>>, vector<8x256xbf16>
      %cst_142 = arith.constant dense<0.000000e+00> : vector<8x256xf32>
      %253 = tpu.matmul %251, %252, %cst_142 {dimension_numbers = #tpu.dot_dimension_numbers<[1], [0], [0], [1], [0, 0, 1, 1], [], []>} : vector<8x8xbf16>, vector<8x256xbf16>, vector<8x256xf32> -> vector<8x256xf32>
      %c0_143 = arith.constant 0 : index
      %c0_144 = arith.constant 0 : index
      %254 = vector.load %arg7[%c0_143, %c0_144] : memref<1x256xf32, #tpu.memory_space<vmem>>, vector<1x256xf32>
      %255 = vector.broadcast %254 : vector<1x256xf32> to vector<8x256xf32>
      %256 = arith.addf %253, %255 : vector<8x256xf32>
      %c0_145 = arith.constant 0 : index
      %c0_146 = arith.constant 0 : index
      %257 = vector.load %arg39[%c0_145, %c0_146] : memref<8x256xf32, #tpu.memory_space<vmem>>, vector<8x256xf32>
      tpu.vector_store %arg39[%c0_145, %c0_146], %256 {strides = array<i32>} : memref<8x256xf32, #tpu.memory_space<vmem>>, vector<8x256xf32>,
    } else {
    }
    %c0 = arith.constant 0 : index
    %c0_1 = arith.constant 0 : index
    %3 = vector.load %arg39[%c0, %c0_1] : memref<8x256xf32, #tpu.memory_space<vmem>>, vector<8x256xf32>
    %c0_2 = arith.constant 0 : index
    %c0_3 = arith.constant 0 : index
    %4 = vector.load %arg3[%c0_2, %c0_3] : memref<8x256xf32, #tpu.memory_space<vmem>>, vector<8x256xf32>
    %5 = arith.addf %3, %4 : vector<8x256xf32>
    %c0_4 = arith.constant 0 : index
    %c0_5 = arith.constant 0 : index
    %c0_6 = arith.constant 0 : index
    %6 = vector.load %arg12[%c0_4, %c0_5, %c0_6] : memref<1x1x256xf32, #tpu.memory_space<vmem>>, vector<1x1x256xf32>
    %7 = vector.shape_cast %6 : vector<1x1x256xf32> to vector<1x256xf32>
    %c0_7 = arith.constant 0 : index
    %c0_8 = arith.constant 0 : index
    %c0_9 = arith.constant 0 : index
    %8 = vector.load %arg13[%c0_7, %c0_8, %c0_9] : memref<1x1x256xf32, #tpu.memory_space<vmem>>, vector<1x1x256xf32>
    %9 = vector.shape_cast %8 : vector<1x1x256xf32> to vector<1x256xf32>
    %cst_10 = arith.constant dense<0.000000e+00> : vector<256xf32>
    %10 = vector.multi_reduction <add>, %5, %cst_10 [0] : vector<8x256xf32> to vector<256xf32>
    %11 = vector.shape_cast %10 : vector<256xf32> to vector<1x256xf32>
    %cst_11 = arith.constant 8.000000e+00 : f32
    %12 = vector.broadcast %cst_11 : f32 to vector<1x256xf32>
    %13 = arith.divf %11, %12 : vector<1x256xf32>
    %14 = vector.broadcast %13 : vector<1x256xf32> to vector<8x256xf32>
    %15 = arith.subf %5, %14 : vector<8x256xf32>
    %16 = arith.mulf %15, %15 : vector<8x256xf32>
    %cst_12 = arith.constant dense<0.000000e+00> : vector<256xf32>
    %17 = vector.multi_reduction <add>, %16, %cst_12 [0] : vector<8x256xf32> to vector<256xf32>
    %18 = vector.shape_cast %17 : vector<256xf32> to vector<1x256xf32>
    %cst_13 = arith.constant 8.000000e+00 : f32
    %19 = vector.broadcast %cst_13 : f32 to vector<1x256xf32>
    %20 = arith.divf %18, %19 : vector<1x256xf32>
    %cst_14 = arith.constant 9.99999974E-6 : f32
    %21 = vector.broadcast %cst_14 : f32 to vector<1x256xf32>
    %22 = arith.addf %20, %21 : vector<1x256xf32>
    %23 = math.rsqrt %22 : vector<1x256xf32>
    %24 = vector.broadcast %23 : vector<1x256xf32> to vector<8x256xf32>
    %25 = arith.mulf %15, %24 : vector<8x256xf32>
    %26 = vector.broadcast %7 : vector<1x256xf32> to vector<8x256xf32>
    %27 = arith.mulf %25, %26 : vector<8x256xf32>
    %28 = vector.broadcast %9 : vector<1x256xf32> to vector<8x256xf32>
    %29 = arith.addf %27, %28 : vector<8x256xf32>
    %30 = arith.truncf %29 : vector<8x256xf32> to vector<8x256xbf16>
    %c0_15 = arith.constant 0 : index
    %c0_16 = arith.constant 0 : index
    %c0_17 = arith.constant 0 : index
    %31 = vector.load %arg14[%c0_15, %c0_16, %c0_17] : memref<1x256x768xbf16, #tpu.memory_space<vmem>>, vector<1x256x768xbf16>
    %32 = vector.shape_cast %31 : vector<1x256x768xbf16> to vector<256x768xbf16>
    %cst_18 = arith.constant dense<0.000000e+00> : vector<8x768xf32>
    %33 = tpu.matmul %30, %32, %cst_18 {dimension_numbers = #tpu.dot_dimension_numbers<[1], [0], [0], [1], [0, 0, 1, 1], [], []>} : vector<8x256xbf16>, vector<256x768xbf16>, vector<8x768xf32> -> vector<8x768xf32>
    %c0_19 = arith.constant 0 : index
    %c0_20 = arith.constant 0 : index
    %c0_21 = arith.constant 0 : index
    %34 = vector.load %arg15[%c0_19, %c0_20, %c0_21] : memref<1x1x768xf32, #tpu.memory_space<vmem>>, vector<1x1x768xf32>
    %35 = vector.shape_cast %34 : vector<1x1x768xf32> to vector<1x768xf32>
    %36 = vector.broadcast %35 : vector<1x768xf32> to vector<8x768xf32>
    %37 = arith.addf %33, %36 : vector<8x768xf32>
    %c0_22 = arith.constant 0 : index
    %c0_23 = arith.constant 0 : index
    %38 = vector.load %arg40[%c0_22, %c0_23] : memref<8x8xf32, #tpu.memory_space<vmem>>, vector<8x8xf32>
    %39 = vector.extract_strided_slice %37 {offsets = [0, 0], sizes = [8, 128], strides = [1, 1]} : vector<8x768xf32> to vector<8x128xf32>
    %40 = arith.truncf %39 : vector<8x128xf32> to vector<8x128xbf16>
    %41 = vector.extract_strided_slice %37 {offsets = [0, 256], sizes = [8, 128], strides = [1, 1]} : vector<8x768xf32> to vector<8x128xf32>
    %42 = arith.truncf %41 : vector<8x128xf32> to vector<8x128xbf16>
    %43 = vector.extract_strided_slice %37 {offsets = [0, 512], sizes = [8, 128], strides = [1, 1]} : vector<8x768xf32> to vector<8x128xf32>
    %44 = arith.truncf %43 : vector<8x128xf32> to vector<8x128xbf16>
    %cst_24 = arith.constant dense<0.000000e+00> : vector<8x8xf32>
    %45 = tpu.matmul %40, %42, %cst_24 {dimension_numbers = #tpu.dot_dimension_numbers<[1], [1], [0], [0], [0, 0, 1, 0], [], []>} : vector<8x128xbf16>, vector<8x128xbf16>, vector<8x8xf32> -> vector<8x8xf32>
    %46 = arith.addf %45, %38 : vector<8x8xf32>
    %cst_25 = arith.constant dense<0xFF800000> : vector<8xf32>
    %47 = vector.multi_reduction <maximumf>, %46, %cst_25 [1] : vector<8x8xf32> to vector<8xf32>
    %48 = vector.shape_cast %47 : vector<8xf32> to vector<8x1xf32>
    %49 = vector.broadcast %48 : vector<8x1xf32> to vector<8x8xf32>
    %50 = arith.subf %46, %49 : vector<8x8xf32>
    %51 = math.exp %50 : vector<8x8xf32>
    %cst_26 = arith.constant dense<0.000000e+00> : vector<8xf32>
    %52 = vector.multi_reduction <add>, %51, %cst_26 [1] : vector<8x8xf32> to vector<8xf32>
    %53 = vector.shape_cast %52 : vector<8xf32> to vector<8x1xf32>
    %54 = arith.truncf %51 : vector<8x8xf32> to vector<8x8xbf16>
    %cst_27 = arith.constant dense<0.000000e+00> : vector<8x128xf32>
    %55 = tpu.matmul %54, %44, %cst_27 {dimension_numbers = #tpu.dot_dimension_numbers<[1], [0], [0], [1], [0, 0, 1, 1], [], []>} : vector<8x8xbf16>, vector<8x128xbf16>, vector<8x128xf32> -> vector<8x128xf32>
    %cst_28 = arith.constant 1.000000e-30 : f32
    %56 = vector.broadcast %cst_28 : f32 to vector<8x1xf32>
    %57 = arith.maximumf %53, %56 : vector<8x1xf32>
    %58 = tpu.reciprocal %57 {approx = true} : vector<8x1xf32> -> vector<8x1xf32>
    %59 = vector.broadcast %58 : vector<8x1xf32> to vector<8x128xf32>
    %60 = arith.mulf %55, %59 : vector<8x128xf32>
    %61 = vector.extract_strided_slice %37 {offsets = [0, 128], sizes = [8, 128], strides = [1, 1]} : vector<8x768xf32> to vector<8x128xf32>
    %62 = arith.truncf %61 : vector<8x128xf32> to vector<8x128xbf16>
    %63 = vector.extract_strided_slice %37 {offsets = [0, 384], sizes = [8, 128], strides = [1, 1]} : vector<8x768xf32> to vector<8x128xf32>
    %64 = arith.truncf %63 : vector<8x128xf32> to vector<8x128xbf16>
    %65 = vector.extract_strided_slice %37 {offsets = [0, 640], sizes = [8, 128], strides = [1, 1]} : vector<8x768xf32> to vector<8x128xf32>
    %66 = arith.truncf %65 : vector<8x128xf32> to vector<8x128xbf16>
    %cst_29 = arith.constant dense<0.000000e+00> : vector<8x8xf32>
    %67 = tpu.matmul %62, %64, %cst_29 {dimension_numbers = #tpu.dot_dimension_numbers<[1], [1], [0], [0], [0, 0, 1, 0], [], []>} : vector<8x128xbf16>, vector<8x128xbf16>, vector<8x8xf32> -> vector<8x8xf32>
    %68 = arith.addf %67, %38 : vector<8x8xf32>
    %cst_30 = arith.constant dense<0xFF800000> : vector<8xf32>
    %69 = vector.multi_reduction <maximumf>, %68, %cst_30 [1] : vector<8x8xf32> to vector<8xf32>
    %70 = vector.shape_cast %69 : vector<8xf32> to vector<8x1xf32>
    %71 = vector.broadcast %70 : vector<8x1xf32> to vector<8x8xf32>
    %72 = arith.subf %68, %71 : vector<8x8xf32>
    %73 = math.exp %72 : vector<8x8xf32>
    %cst_31 = arith.constant dense<0.000000e+00> : vector<8xf32>
    %74 = vector.multi_reduction <add>, %73, %cst_31 [1] : vector<8x8xf32> to vector<8xf32>
    %75 = vector.shape_cast %74 : vector<8xf32> to vector<8x1xf32>
    %76 = arith.truncf %73 : vector<8x8xf32> to vector<8x8xbf16>
    %cst_32 = arith.constant dense<0.000000e+00> : vector<8x128xf32>
    %77 = tpu.matmul %76, %66, %cst_32 {dimension_numbers = #tpu.dot_dimension_numbers<[1], [0], [0], [1], [0, 0, 1, 1], [], []>} : vector<8x8xbf16>, vector<8x128xbf16>, vector<8x128xf32> -> vector<8x128xf32>
    %cst_33 = arith.constant 1.000000e-30 : f32
    %78 = vector.broadcast %cst_33 : f32 to vector<8x1xf32>
    %79 = arith.maximumf %75, %78 : vector<8x1xf32>
    %80 = tpu.reciprocal %79 {approx = true} : vector<8x1xf32> -> vector<8x1xf32>
    %81 = vector.broadcast %80 : vector<8x1xf32> to vector<8x128xf32>
    %82 = arith.mulf %77, %81 : vector<8x128xf32>
    %83 = tpu.concatenate %60, %82 in 1 : vector<8x128xf32>, vector<8x128xf32> -> vector<8x256xf32>
    %c0_34 = arith.constant 0 : index
    %c0_35 = arith.constant 0 : index
    %84 = vector.load %arg41[%c0_34, %c0_35] : memref<8x1xf32, #tpu.memory_space<vmem>>, vector<8x1xf32>
    %85 = vector.broadcast %84 : vector<8x1xf32> to vector<8x256xf32>
    %86 = arith.mulf %83, %85 : vector<8x256xf32>
    %87 = arith.truncf %86 : vector<8x256xf32> to vector<8x256xbf16>
    %c0_36 = arith.constant 0 : index
    %c0_37 = arith.constant 0 : index
    %c0_38 = arith.constant 0 : index
    %88 = vector.load %arg16[%c0_36, %c0_37, %c0_38] : memref<1x256x256xbf16, #tpu.memory_space<vmem>>, vector<1x256x256xbf16>
    %89 = vector.shape_cast %88 : vector<1x256x256xbf16> to vector<256x256xbf16>
    %cst_39 = arith.constant dense<0.000000e+00> : vector<8x256xf32>
    %90 = tpu.matmul %87, %89, %cst_39 {dimension_numbers = #tpu.dot_dimension_numbers<[1], [0], [0], [1], [0, 0, 1, 1], [], []>} : vector<8x256xbf16>, vector<256x256xbf16>, vector<8x256xf32> -> vector<8x256xf32>
    %c0_40 = arith.constant 0 : index
    %c0_41 = arith.constant 0 : index
    %c0_42 = arith.constant 0 : index
    %91 = vector.load %arg17[%c0_40, %c0_41, %c0_42] : memref<1x1x256xf32, #tpu.memory_space<vmem>>, vector<1x1x256xf32>
    %92 = vector.shape_cast %91 : vector<1x1x256xf32> to vector<1x256xf32>
    %93 = vector.broadcast %92 : vector<1x256xf32> to vector<8x256xf32>
    %94 = arith.addf %90, %93 : vector<8x256xf32>
    %cst_43 = arith.constant 0.000000e+00 : f32
    %95 = vector.broadcast %cst_43 : f32 to vector<8x256xf32>
    %96 = arith.maximumf %94, %95 : vector<8x256xf32>
    %c0_44 = arith.constant 0 : index
    %c0_45 = arith.constant 0 : index
    %c0_46 = arith.constant 0 : index
    %97 = vector.load %arg18[%c0_44, %c0_45, %c0_46] : memref<1x256x512xbf16, #tpu.memory_space<vmem>>, vector<1x256x512xbf16>
    %98 = vector.shape_cast %97 : vector<1x256x512xbf16> to vector<256x512xbf16>
    %c0_47 = arith.constant 0 : index
    %c0_48 = arith.constant 0 : index
    %c0_49 = arith.constant 0 : index
    %99 = vector.load %arg19[%c0_47, %c0_48, %c0_49] : memref<1x256x512xbf16, #tpu.memory_space<vmem>>, vector<1x256x512xbf16>
    %100 = vector.shape_cast %99 : vector<1x256x512xbf16> to vector<256x512xbf16>
    %c0_50 = arith.constant 0 : index
    %c0_51 = arith.constant 0 : index
    %c0_52 = arith.constant 0 : index
    %101 = vector.load %arg20[%c0_50, %c0_51, %c0_52] : memref<1x1x512xf32, #tpu.memory_space<vmem>>, vector<1x1x512xf32>
    %102 = vector.shape_cast %101 : vector<1x1x512xf32> to vector<1x512xf32>
    %c0_53 = arith.constant 0 : index
    %c0_54 = arith.constant 0 : index
    %c0_55 = arith.constant 0 : index
    %103 = vector.load %arg21[%c0_53, %c0_54, %c0_55] : memref<1x256x256xbf16, #tpu.memory_space<vmem>>, vector<1x256x256xbf16>
    %104 = vector.shape_cast %103 : vector<1x256x256xbf16> to vector<256x256xbf16>
    %c0_56 = arith.constant 0 : index
    %c0_57 = arith.constant 0 : index
    %c0_58 = arith.constant 0 : index
    %105 = vector.load %arg22[%c0_56, %c0_57, %c0_58] : memref<1x256x256xbf16, #tpu.memory_space<vmem>>, vector<1x256x256xbf16>
    %106 = vector.shape_cast %105 : vector<1x256x256xbf16> to vector<256x256xbf16>
    %c0_59 = arith.constant 0 : index
    %c0_60 = arith.constant 0 : index
    %c0_61 = arith.constant 0 : index
    %107 = vector.load %arg23[%c0_59, %c0_60, %c0_61] : memref<1x1x256xf32, #tpu.memory_space<vmem>>, vector<1x1x256xf32>
    %108 = vector.shape_cast %107 : vector<1x1x256xf32> to vector<1x256xf32>
    %109 = arith.truncf %96 : vector<8x256xf32> to vector<8x256xbf16>
    %cst_62 = arith.constant dense<0.000000e+00> : vector<8x512xf32>
    %110 = tpu.matmul %109, %98, %cst_62 {dimension_numbers = #tpu.dot_dimension_numbers<[1], [0], [0], [1], [0, 0, 1, 1], [], []>} : vector<8x256xbf16>, vector<256x512xbf16>, vector<8x512xf32> -> vector<8x512xf32>
    %111 = arith.truncf %5 : vector<8x256xf32> to vector<8x256xbf16>
    %cst_63 = arith.constant dense<0.000000e+00> : vector<8x512xf32>
    %112 = tpu.matmul %111, %100, %cst_63 {dimension_numbers = #tpu.dot_dimension_numbers<[1], [0], [0], [1], [0, 0, 1, 1], [], []>} : vector<8x256xbf16>, vector<256x512xbf16>, vector<8x512xf32> -> vector<8x512xf32>
    %113 = arith.addf %110, %112 : vector<8x512xf32>
    %114 = vector.broadcast %102 : vector<1x512xf32> to vector<8x512xf32>
    %115 = arith.addf %113, %114 : vector<8x512xf32>
    %116 = vector.extract_strided_slice %115 {offsets = [0, 0], sizes = [8, 256], strides = [1, 1]} : vector<8x512xf32> to vector<8x256xf32>
    %117 = arith.negf %116 : vector<8x256xf32>
    %118 = math.exp %117 : vector<8x256xf32>
    %cst_64 = arith.constant 1.000000e+00 : f32
    %119 = vector.broadcast %cst_64 : f32 to vector<8x256xf32>
    %120 = arith.addf %119, %118 : vector<8x256xf32>
    %121 = arith.divf %119, %120 : vector<8x256xf32>
    %122 = vector.extract_strided_slice %115 {offsets = [0, 256], sizes = [8, 256], strides = [1, 1]} : vector<8x512xf32> to vector<8x256xf32>
    %cst_65 = arith.constant 1.000000e-01 : f32
    %123 = vector.broadcast %cst_65 : f32 to vector<8x256xf32>
    %124 = arith.subf %122, %123 : vector<8x256xf32>
    %125 = arith.negf %124 : vector<8x256xf32>
    %126 = math.exp %125 : vector<8x256xf32>
    %cst_66 = arith.constant 1.000000e+00 : f32
    %127 = vector.broadcast %cst_66 : f32 to vector<8x256xf32>
    %128 = arith.addf %127, %126 : vector<8x256xf32>
    %129 = arith.divf %127, %128 : vector<8x256xf32>
    %cst_67 = arith.constant dense<0.000000e+00> : vector<8x256xf32>
    %130 = tpu.matmul %109, %104, %cst_67 {dimension_numbers = #tpu.dot_dimension_numbers<[1], [0], [0], [1], [0, 0, 1, 1], [], []>} : vector<8x256xbf16>, vector<256x256xbf16>, vector<8x256xf32> -> vector<8x256xf32>
    %131 = arith.mulf %121, %5 : vector<8x256xf32>
    %132 = arith.truncf %131 : vector<8x256xf32> to vector<8x256xbf16>
    %cst_68 = arith.constant dense<0.000000e+00> : vector<8x256xf32>
    %133 = tpu.matmul %132, %106, %cst_68 {dimension_numbers = #tpu.dot_dimension_numbers<[1], [0], [0], [1], [0, 0, 1, 1], [], []>} : vector<8x256xbf16>, vector<256x256xbf16>, vector<8x256xf32> -> vector<8x256xf32>
    %134 = arith.addf %130, %133 : vector<8x256xf32>
    %135 = vector.broadcast %108 : vector<1x256xf32> to vector<8x256xf32>
    %136 = arith.addf %134, %135 : vector<8x256xf32>
    %137 = math.tanh %136 : vector<8x256xf32>
    %cst_69 = arith.constant 1.000000e+00 : f32
    %138 = vector.broadcast %cst_69 : f32 to vector<8x256xf32>
    %139 = arith.subf %138, %129 : vector<8x256xf32>
    %140 = arith.mulf %139, %5 : vector<8x256xf32>
    %141 = arith.mulf %129, %137 : vector<8x256xf32>
    %142 = arith.addf %140, %141 : vector<8x256xf32>
    %c0_70 = arith.constant 0 : index
    %c0_71 = arith.constant 0 : index
    %c0_72 = arith.constant 0 : index
    %143 = vector.load %arg24[%c0_70, %c0_71, %c0_72] : memref<1x1x256xf32, #tpu.memory_space<vmem>>, vector<1x1x256xf32>
    %144 = vector.shape_cast %143 : vector<1x1x256xf32> to vector<1x256xf32>
    %c0_73 = arith.constant 0 : index
    %c0_74 = arith.constant 0 : index
    %c0_75 = arith.constant 0 : index
    %145 = vector.load %arg25[%c0_73, %c0_74, %c0_75] : memref<1x1x256xf32, #tpu.memory_space<vmem>>, vector<1x1x256xf32>
    %146 = vector.shape_cast %145 : vector<1x1x256xf32> to vector<1x256xf32>
    %cst_76 = arith.constant dense<0.000000e+00> : vector<256xf32>
    %147 = vector.multi_reduction <add>, %142, %cst_76 [0] : vector<8x256xf32> to vector<256xf32>
    %148 = vector.shape_cast %147 : vector<256xf32> to vector<1x256xf32>
    %cst_77 = arith.constant 8.000000e+00 : f32
    %149 = vector.broadcast %cst_77 : f32 to vector<1x256xf32>
    %150 = arith.divf %148, %149 : vector<1x256xf32>
    %151 = vector.broadcast %150 : vector<1x256xf32> to vector<8x256xf32>
    %152 = arith.subf %142, %151 : vector<8x256xf32>
    %153 = arith.mulf %152, %152 : vector<8x256xf32>
    %cst_78 = arith.constant dense<0.000000e+00> : vector<256xf32>
    %154 = vector.multi_reduction <add>, %153, %cst_78 [0] : vector<8x256xf32> to vector<256xf32>
    %155 = vector.shape_cast %154 : vector<256xf32> to vector<1x256xf32>
    %cst_79 = arith.constant 8.000000e+00 : f32
    %156 = vector.broadcast %cst_79 : f32 to vector<1x256xf32>
    %157 = arith.divf %155, %156 : vector<1x256xf32>
    %cst_80 = arith.constant 9.99999974E-6 : f32
    %158 = vector.broadcast %cst_80 : f32 to vector<1x256xf32>
    %159 = arith.addf %157, %158 : vector<1x256xf32>
    %160 = math.rsqrt %159 : vector<1x256xf32>
    %161 = vector.broadcast %160 : vector<1x256xf32> to vector<8x256xf32>
    %162 = arith.mulf %152, %161 : vector<8x256xf32>
    %163 = vector.broadcast %144 : vector<1x256xf32> to vector<8x256xf32>
    %164 = arith.mulf %162, %163 : vector<8x256xf32>
    %165 = vector.broadcast %146 : vector<1x256xf32> to vector<8x256xf32>
    %166 = arith.addf %164, %165 : vector<8x256xf32>
    %167 = arith.truncf %166 : vector<8x256xf32> to vector<8x256xbf16>
    %c0_81 = arith.constant 0 : index
    %c0_82 = arith.constant 0 : index
    %c0_83 = arith.constant 0 : index
    %168 = vector.load %arg26[%c0_81, %c0_82, %c0_83] : memref<1x256x512xbf16, #tpu.memory_space<vmem>>, vector<1x256x512xbf16>
    %169 = vector.shape_cast %168 : vector<1x256x512xbf16> to vector<256x512xbf16>
    %cst_84 = arith.constant dense<0.000000e+00> : vector<8x512xf32>
    %170 = tpu.matmul %167, %169, %cst_84 {dimension_numbers = #tpu.dot_dimension_numbers<[1], [0], [0], [1], [0, 0, 1, 1], [], []>} : vector<8x256xbf16>, vector<256x512xbf16>, vector<8x512xf32> -> vector<8x512xf32>
    %c0_85 = arith.constant 0 : index
    %c0_86 = arith.constant 0 : index
    %c0_87 = arith.constant 0 : index
    %171 = vector.load %arg27[%c0_85, %c0_86, %c0_87] : memref<1x1x512xf32, #tpu.memory_space<vmem>>, vector<1x1x512xf32>
    %172 = vector.shape_cast %171 : vector<1x1x512xf32> to vector<1x512xf32>
    %173 = vector.broadcast %172 : vector<1x512xf32> to vector<8x512xf32>
    %174 = arith.addf %170, %173 : vector<8x512xf32>
    %cst_88 = arith.constant 0.000000e+00 : f32
    %175 = vector.broadcast %cst_88 : f32 to vector<8x512xf32>
    %176 = arith.maximumf %174, %175 : vector<8x512xf32>
    %177 = arith.truncf %176 : vector<8x512xf32> to vector<8x512xbf16>
    %c0_89 = arith.constant 0 : index
    %c0_90 = arith.constant 0 : index
    %c0_91 = arith.constant 0 : index
    %178 = vector.load %arg28[%c0_89, %c0_90, %c0_91] : memref<1x512x256xbf16, #tpu.memory_space<vmem>>, vector<1x512x256xbf16>
    %179 = vector.shape_cast %178 : vector<1x512x256xbf16> to vector<512x256xbf16>
    %cst_92 = arith.constant dense<0.000000e+00> : vector<8x256xf32>
    %180 = tpu.matmul %177, %179, %cst_92 {dimension_numbers = #tpu.dot_dimension_numbers<[1], [0], [0], [1], [0, 0, 1, 1], [], []>} : vector<8x512xbf16>, vector<512x256xbf16>, vector<8x256xf32> -> vector<8x256xf32>
    %c0_93 = arith.constant 0 : index
    %c0_94 = arith.constant 0 : index
    %c0_95 = arith.constant 0 : index
    %181 = vector.load %arg29[%c0_93, %c0_94, %c0_95] : memref<1x1x256xf32, #tpu.memory_space<vmem>>, vector<1x1x256xf32>
    %182 = vector.shape_cast %181 : vector<1x1x256xf32> to vector<1x256xf32>
    %183 = vector.broadcast %182 : vector<1x256xf32> to vector<8x256xf32>
    %184 = arith.addf %180, %183 : vector<8x256xf32>
    %cst_96 = arith.constant 0.000000e+00 : f32
    %185 = vector.broadcast %cst_96 : f32 to vector<8x256xf32>
    %186 = arith.maximumf %184, %185 : vector<8x256xf32>
    %c0_97 = arith.constant 0 : index
    %c0_98 = arith.constant 0 : index
    %c0_99 = arith.constant 0 : index
    %187 = vector.load %arg30[%c0_97, %c0_98, %c0_99] : memref<1x256x512xbf16, #tpu.memory_space<vmem>>, vector<1x256x512xbf16>
    %188 = vector.shape_cast %187 : vector<1x256x512xbf16> to vector<256x512xbf16>
    %c0_100 = arith.constant 0 : index
    %c0_101 = arith.constant 0 : index
    %c0_102 = arith.constant 0 : index
    %189 = vector.load %arg31[%c0_100, %c0_101, %c0_102] : memref<1x256x512xbf16, #tpu.memory_space<vmem>>, vector<1x256x512xbf16>
    %190 = vector.shape_cast %189 : vector<1x256x512xbf16> to vector<256x512xbf16>
    %c0_103 = arith.constant 0 : index
    %c0_104 = arith.constant 0 : index
    %c0_105 = arith.constant 0 : index
    %191 = vector.load %arg32[%c0_103, %c0_104, %c0_105] : memref<1x1x512xf32, #tpu.memory_space<vmem>>, vector<1x1x512xf32>
    %192 = vector.shape_cast %191 : vector<1x1x512xf32> to vector<1x512xf32>
    %c0_106 = arith.constant 0 : index
    %c0_107 = arith.constant 0 : index
    %c0_108 = arith.constant 0 : index
    %193 = vector.load %arg33[%c0_106, %c0_107, %c0_108] : memref<1x256x256xbf16, #tpu.memory_space<vmem>>, vector<1x256x256xbf16>
    %194 = vector.shape_cast %193 : vector<1x256x256xbf16> to vector<256x256xbf16>
    %c0_109 = arith.constant 0 : index
    %c0_110 = arith.constant 0 : index
    %c0_111 = arith.constant 0 : index
    %195 = vector.load %arg34[%c0_109, %c0_110, %c0_111] : memref<1x256x256xbf16, #tpu.memory_space<vmem>>, vector<1x256x256xbf16>
    %196 = vector.shape_cast %195 : vector<1x256x256xbf16> to vector<256x256xbf16>
    %c0_112 = arith.constant 0 : index
    %c0_113 = arith.constant 0 : index
    %c0_114 = arith.constant 0 : index
    %197 = vector.load %arg35[%c0_112, %c0_113, %c0_114] : memref<1x1x256xf32, #tpu.memory_space<vmem>>, vector<1x1x256xf32>
    %198 = vector.shape_cast %197 : vector<1x1x256xf32> to vector<1x256xf32>
    %199 = arith.truncf %186 : vector<8x256xf32> to vector<8x256xbf16>
    %cst_115 = arith.constant dense<0.000000e+00> : vector<8x512xf32>
    %200 = tpu.matmul %199, %188, %cst_115 {dimension_numbers = #tpu.dot_dimension_numbers<[1], [0], [0], [1], [0, 0, 1, 1], [], []>} : vector<8x256xbf16>, vector<256x512xbf16>, vector<8x512xf32> -> vector<8x512xf32>
    %201 = arith.truncf %142 : vector<8x256xf32> to vector<8x256xbf16>
    %cst_116 = arith.constant dense<0.000000e+00> : vector<8x512xf32>
    %202 = tpu.matmul %201, %190, %cst_116 {dimension_numbers = #tpu.dot_dimension_numbers<[1], [0], [0], [1], [0, 0, 1, 1], [], []>} : vector<8x256xbf16>, vector<256x512xbf16>, vector<8x512xf32> -> vector<8x512xf32>
    %203 = arith.addf %200, %202 : vector<8x512xf32>
    %204 = vector.broadcast %192 : vector<1x512xf32> to vector<8x512xf32>
    %205 = arith.addf %203, %204 : vector<8x512xf32>
    %206 = vector.extract_strided_slice %205 {offsets = [0, 0], sizes = [8, 256], strides = [1, 1]} : vector<8x512xf32> to vector<8x256xf32>
    %207 = arith.negf %206 : vector<8x256xf32>
    %208 = math.exp %207 : vector<8x256xf32>
    %cst_117 = arith.constant 1.000000e+00 : f32
    %209 = vector.broadcast %cst_117 : f32 to vector<8x256xf32>
    %210 = arith.addf %209, %208 : vector<8x256xf32>
    %211 = arith.divf %209, %210 : vector<8x256xf32>
    %212 = vector.extract_strided_slice %205 {offsets = [0, 256], sizes = [8, 256], strides = [1, 1]} : vector<8x512xf32> to vector<8x256xf32>
    %cst_118 = arith.constant 1.000000e-01 : f32
    %213 = vector.broadcast %cst_118 : f32 to vector<8x256xf32>
    %214 = arith.subf %212, %213 : vector<8x256xf32>
    %215 = arith.negf %214 : vector<8x256xf32>
    %216 = math.exp %215 : vector<8x256xf32>
    %cst_119 = arith.constant 1.000000e+00 : f32
    %217 = vector.broadcast %cst_119 : f32 to vector<8x256xf32>
    %218 = arith.addf %217, %216 : vector<8x256xf32>
    %219 = arith.divf %217, %218 : vector<8x256xf32>
    %cst_120 = arith.constant dense<0.000000e+00> : vector<8x256xf32>
    %220 = tpu.matmul %199, %194, %cst_120 {dimension_numbers = #tpu.dot_dimension_numbers<[1], [0], [0], [1], [0, 0, 1, 1], [], []>} : vector<8x256xbf16>, vector<256x256xbf16>, vector<8x256xf32> -> vector<8x256xf32>
    %221 = arith.mulf %211, %142 : vector<8x256xf32>
    %222 = arith.truncf %221 : vector<8x256xf32> to vector<8x256xbf16>
    %cst_121 = arith.constant dense<0.000000e+00> : vector<8x256xf32>
    %223 = tpu.matmul %222, %196, %cst_121 {dimension_numbers = #tpu.dot_dimension_numbers<[1], [0], [0], [1], [0, 0, 1, 1], [], []>} : vector<8x256xbf16>, vector<256x256xbf16>, vector<8x256xf32> -> vector<8x256xf32>
    %224 = arith.addf %220, %223 : vector<8x256xf32>
    %225 = vector.broadcast %198 : vector<1x256xf32> to vector<8x256xf32>
    %226 = arith.addf %224, %225 : vector<8x256xf32>
    %227 = math.tanh %226 : vector<8x256xf32>
    %cst_122 = arith.constant 1.000000e+00 : f32
    %228 = vector.broadcast %cst_122 : f32 to vector<8x256xf32>
    %229 = arith.subf %228, %219 : vector<8x256xf32>
    %230 = arith.mulf %229, %142 : vector<8x256xf32>
    %231 = arith.mulf %219, %227 : vector<8x256xf32>
    %232 = arith.addf %230, %231 : vector<8x256xf32>
    %c0_123 = arith.constant 0 : index
    %c0_124 = arith.constant 0 : index
    %233 = vector.load %arg39[%c0_123, %c0_124] : memref<8x256xf32, #tpu.memory_space<vmem>>, vector<8x256xf32>
    tpu.vector_store %arg39[%c0_123, %c0_124], %232 {strides = array<i32>} : memref<8x256xf32, #tpu.memory_space<vmem>>, vector<8x256xf32>,
    %c1_i32 = arith.constant 1 : i32
    %234 = arith.cmpi eq, %arg0, %c1_i32 : i32
    %235 = arith.extui %234 : i1 to i32
    %cst_125 = arith.constant -1.000000e+30 : f32
    %c0_i32_126 = arith.constant 0 : i32
    %236 = arith.cmpi ne, %235, %c0_i32_126 : i32
    scf.if %236 {
      %c0_127 = arith.constant 0 : index
      %c0_128 = arith.constant 0 : index
      %237 = vector.load %arg39[%c0_127, %c0_128] : memref<8x256xf32, #tpu.memory_space<vmem>>, vector<8x256xf32>
      %c0_129 = arith.constant 0 : index
      %c0_130 = arith.constant 0 : index
      %238 = vector.load %arg36[%c0_129, %c0_130] : memref<8x256xf32, #tpu.memory_space<vmem>>, vector<8x256xf32>
      tpu.vector_store %arg36[%c0_129, %c0_130], %237 {strides = array<i32>} : memref<8x256xf32, #tpu.memory_space<vmem>>, vector<8x256xf32>,
      %c0_131 = arith.constant 0 : index
      %c0_132 = arith.constant 0 : index
      %239 = vector.load %arg4[%c0_131, %c0_132] : memref<2x8xf32, #tpu.memory_space<vmem>>, vector<2x8xf32>
      %240 = vector.shape_cast %239 : vector<2x8xf32> to vector<2x8x1xf32>
      %cst_133 = arith.constant 0.000000e+00 : f32
      %241 = vector.broadcast %cst_133 : f32 to vector<2x8x1xf32>
      %242 = arith.cmpf ogt, %240, %241 : vector<2x8x1xf32>
      %243 = vector.shape_cast %237 : vector<8x256xf32> to vector<1x8x256xf32>
      %244 = vector.shape_cast %242 : vector<2x8x1xi1> to vector<2x8x1xi1>
      %245 = vector.broadcast %244 : vector<2x8x1xi1> to vector<2x8x256xi1>
      %246 = vector.shape_cast %243 : vector<1x8x256xf32> to vector<1x8x256xf32>
      %247 = vector.broadcast %246 : vector<1x8x256xf32> to vector<2x8x256xf32>
      %248 = vector.broadcast %cst_125 : f32 to vector<2x8x256xf32>
      %249 = arith.select %245, %247, %248 : vector<2x8x256xi1>, vector<2x8x256xf32>
      %cst_134 = arith.constant dense<0xFF800000> : vector<2x256xf32>
      %250 = vector.multi_reduction <maximumf>, %249, %cst_134 [1] : vector<2x8x256xf32> to vector<2x256xf32>
      %cst_135 = arith.constant dense<0.000000e+00> : vector<2xf32>
      %251 = vector.multi_reduction <add>, %239, %cst_135 [1] : vector<2x8xf32> to vector<2xf32>
      %252 = vector.shape_cast %251 : vector<2xf32> to vector<2x1xf32>
      %cst_136 = arith.constant 0.000000e+00 : f32
      %253 = vector.broadcast %cst_136 : f32 to vector<2x1xf32>
      %254 = arith.cmpf ogt, %252, %253 : vector<2x1xf32>
      %cst_137 = arith.constant 0.000000e+00 : f32
      %255 = vector.shape_cast %254 : vector<2x1xi1> to vector<2x1xi1>
      %256 = vector.broadcast %255 : vector<2x1xi1> to vector<2x256xi1>
      %257 = vector.broadcast %cst_137 : f32 to vector<2x256xf32>
      %258 = arith.select %256, %250, %257 : vector<2x256xi1>, vector<2x256xf32>
      %259 = arith.truncf %258 : vector<2x256xf32> to vector<2x256xbf16>
      %c0_138 = arith.constant 0 : index
      %c0_139 = arith.constant 0 : index
      %260 = vector.load %arg8[%c0_138, %c0_139] : memref<256x256xbf16, #tpu.memory_space<vmem>>, vector<256x256xbf16>
      %cst_140 = arith.constant dense<0.000000e+00> : vector<2x256xf32>
      %261 = tpu.matmul %259, %260, %cst_140 {dimension_numbers = #tpu.dot_dimension_numbers<[1], [0], [0], [1], [0, 0, 1, 1], [], []>} : vector<2x256xbf16>, vector<256x256xbf16>, vector<2x256xf32> -> vector<2x256xf32>
      %c0_141 = arith.constant 0 : index
      %c0_142 = arith.constant 0 : index
      %262 = vector.load %arg9[%c0_141, %c0_142] : memref<1x256xf32, #tpu.memory_space<vmem>>, vector<1x256xf32>
      %263 = vector.broadcast %262 : vector<1x256xf32> to vector<2x256xf32>
      %264 = arith.addf %261, %263 : vector<2x256xf32>
      %c0_143 = arith.constant 0 : index
      %c0_144 = arith.constant 0 : index
      %265 = vector.load %arg37[%c0_143, %c0_144] : memref<2x256xf32, #tpu.memory_space<vmem>>, vector<2x256xf32>
      tpu.vector_store %arg37[%c0_143, %c0_144], %264 {strides = array<i32>} : memref<2x256xf32, #tpu.memory_space<vmem>>, vector<2x256xf32>,
      %c0_145 = arith.constant 0 : index
      %c0_146 = arith.constant 0 : index
      %266 = vector.load %arg5[%c0_145, %c0_146] : memref<1x2xf32, #tpu.memory_space<vmem>>, vector<1x2xf32>
      %267 = vector.shape_cast %266 : vector<1x2xf32> to vector<1x2x1xf32>
      %cst_147 = arith.constant 0.000000e+00 : f32
      %268 = vector.broadcast %cst_147 : f32 to vector<1x2x1xf32>
      %269 = arith.cmpf ogt, %267, %268 : vector<1x2x1xf32>
      %270 = vector.shape_cast %264 : vector<2x256xf32> to vector<1x2x256xf32>
      %271 = vector.shape_cast %269 : vector<1x2x1xi1> to vector<1x2x1xi1>
      %272 = vector.broadcast %271 : vector<1x2x1xi1> to vector<1x2x256xi1>
      %273 = vector.broadcast %cst_125 : f32 to vector<1x2x256xf32>
      %274 = arith.select %272, %270, %273 : vector<1x2x256xi1>, vector<1x2x256xf32>
      %cst_148 = arith.constant dense<0xFF800000> : vector<1x256xf32>
      %275 = vector.multi_reduction <maximumf>, %274, %cst_148 [1] : vector<1x2x256xf32> to vector<1x256xf32>
      %cst_149 = arith.constant dense<0.000000e+00> : vector<1xf32>
      %276 = vector.multi_reduction <add>, %266, %cst_149 [1] : vector<1x2xf32> to vector<1xf32>
      %277 = vector.shape_cast %276 : vector<1xf32> to vector<1x1xf32>
      %cst_150 = arith.constant 0.000000e+00 : f32
      %278 = vector.broadcast %cst_150 : f32 to vector<1x1xf32>
      %279 = arith.cmpf ogt, %277, %278 : vector<1x1xf32>
      %cst_151 = arith.constant 0.000000e+00 : f32
      %280 = vector.shape_cast %279 : vector<1x1xi1> to vector<1x1xi1>
      %281 = vector.broadcast %280 : vector<1x1xi1> to vector<1x256xi1>
      %282 = vector.broadcast %cst_151 : f32 to vector<1x256xf32>
      %283 = arith.select %281, %275, %282 : vector<1x256xi1>, vector<1x256xf32>
      %284 = arith.truncf %283 : vector<1x256xf32> to vector<1x256xbf16>
      %c0_152 = arith.constant 0 : index
      %c0_153 = arith.constant 0 : index
      %285 = vector.load %arg10[%c0_152, %c0_153] : memref<256x256xbf16, #tpu.memory_space<vmem>>, vector<256x256xbf16>
      %cst_154 = arith.constant dense<0.000000e+00> : vector<1x256xf32>
      %286 = tpu.matmul %284, %285, %cst_154 {dimension_numbers = #tpu.dot_dimension_numbers<[1], [0], [0], [1], [0, 0, 1, 1], [], []>} : vector<1x256xbf16>, vector<256x256xbf16>, vector<1x256xf32> -> vector<1x256xf32>
      %c0_155 = arith.constant 0 : index
      %c0_156 = arith.constant 0 : index
      %287 = vector.load %arg11[%c0_155, %c0_156] : memref<1x256xf32, #tpu.memory_space<vmem>>, vector<1x256xf32>
      %288 = arith.addf %286, %287 : vector<1x256xf32>
      %c0_157 = arith.constant 0 : index
      %c0_158 = arith.constant 0 : index
      %289 = vector.load %arg38[%c0_157, %c0_158] : memref<1x256xf32, #tpu.memory_space<vmem>>, vector<1x256xf32>
      tpu.vector_store %arg38[%c0_157, %c0_158], %288 {strides = array<i32>} : memref<1x256xf32, #tpu.memory_space<vmem>>, vector<1x256xf32>,
    } else {
    }
    return
  }
  func.func @transform_0(%arg0: i32) -> (i32, i32) {
    %c0_i32 = arith.constant 0 : i32
    %c0_i32_0 = arith.constant 0 : i32
    %c0_i32_1 = arith.constant 0 : i32
    return %c0_i32, %c0_i32_0 : i32, i32
  }
  func.func @transform_1(%arg0: i32) -> (i32, i32) {
    %c0_i32 = arith.constant 0 : i32
    %c0_i32_0 = arith.constant 0 : i32
    %c0_i32_1 = arith.constant 0 : i32
    return %c0_i32, %c0_i32_0 : i32, i32
  }
  func.func @transform_2(%arg0: i32) -> (i32, i32) {
    %c0_i32 = arith.constant 0 : i32
    %c0_i32_0 = arith.constant 0 : i32
    %c0_i32_1 = arith.constant 0 : i32
    return %c0_i32, %c0_i32_0 : i32, i32
  }
  func.func @transform_3(%arg0: i32) -> (i32, i32) {
    %c0_i32 = arith.constant 0 : i32
    %c0_i32_0 = arith.constant 0 : i32
    %c0_i32_1 = arith.constant 0 : i32
    return %c0_i32, %c0_i32_0 : i32, i32
  }
  func.func @transform_4(%arg0: i32) -> (i32, i32) {
    %c0_i32 = arith.constant 0 : i32
    %c0_i32_0 = arith.constant 0 : i32
    %c0_i32_1 = arith.constant 0 : i32
    return %c0_i32, %c0_i32_0 : i32, i32
  }
  func.func @transform_5(%arg0: i32) -> (i32, i32) {
    %c0_i32 = arith.constant 0 : i32
    %c0_i32_0 = arith.constant 0 : i32
    %c0_i32_1 = arith.constant 0 : i32
    return %c0_i32, %c0_i32_0 : i32, i32
  }
  func.func @transform_6(%arg0: i32) -> (i32, i32) {
    %c0_i32 = arith.constant 0 : i32
    %c0_i32_0 = arith.constant 0 : i32
    %c0_i32_1 = arith.constant 0 : i32
    return %c0_i32, %c0_i32_0 : i32, i32
  }
  func.func @transform_7(%arg0: i32) -> (i32, i32) {
    %c0_i32 = arith.constant 0 : i32
    %c0_i32_0 = arith.constant 0 : i32
    %c0_i32_1 = arith.constant 0 : i32
    return %c0_i32, %c0_i32_0 : i32, i32
  }
  func.func @transform_8(%arg0: i32) -> (i32, i32) {
    %c0_i32 = arith.constant 0 : i32
    %c0_i32_0 = arith.constant 0 : i32
    %c0_i32_1 = arith.constant 0 : i32
    return %c0_i32, %c0_i32_0 : i32, i32
  }
  func.func @transform_9(%arg0: i32) -> (i32, i32) {
    %c0_i32 = arith.constant 0 : i32
    %c0_i32_0 = arith.constant 0 : i32
    %c0_i32_1 = arith.constant 0 : i32
    return %c0_i32, %c0_i32_0 : i32, i32
  }
  func.func @transform_10(%arg0: i32) -> (i32, i32) {
    %c0_i32 = arith.constant 0 : i32
    %c0_i32_0 = arith.constant 0 : i32
    %c0_i32_1 = arith.constant 0 : i32
    return %c0_i32, %c0_i32_0 : i32, i32
  }
  func.func @transform_11(%arg0: i32) -> (i32, i32, i32) {
    %c0_i32 = arith.constant 0 : i32
    %c0_i32_0 = arith.constant 0 : i32
    %c0_i32_1 = arith.constant 0 : i32
    return %arg0, %c0_i32, %c0_i32_0 : i32, i32, i32
  }
  func.func @transform_12(%arg0: i32) -> (i32, i32, i32) {
    %c0_i32 = arith.constant 0 : i32
    %c0_i32_0 = arith.constant 0 : i32
    %c0_i32_1 = arith.constant 0 : i32
    return %arg0, %c0_i32, %c0_i32_0 : i32, i32, i32
  }
  func.func @transform_13(%arg0: i32) -> (i32, i32, i32) {
    %c0_i32 = arith.constant 0 : i32
    %c0_i32_0 = arith.constant 0 : i32
    %c0_i32_1 = arith.constant 0 : i32
    return %arg0, %c0_i32, %c0_i32_0 : i32, i32, i32
  }
  func.func @transform_14(%arg0: i32) -> (i32, i32, i32) {
    %c0_i32 = arith.constant 0 : i32
    %c0_i32_0 = arith.constant 0 : i32
    %c0_i32_1 = arith.constant 0 : i32
    return %arg0, %c0_i32, %c0_i32_0 : i32, i32, i32
  }
  func.func @transform_15(%arg0: i32) -> (i32, i32, i32) {
    %c0_i32 = arith.constant 0 : i32
    %c0_i32_0 = arith.constant 0 : i32
    %c0_i32_1 = arith.constant 0 : i32
    return %arg0, %c0_i32, %c0_i32_0 : i32, i32, i32
  }
  func.func @transform_16(%arg0: i32) -> (i32, i32, i32) {
    %c0_i32 = arith.constant 0 : i32
    %c0_i32_0 = arith.constant 0 : i32
    %c0_i32_1 = arith.constant 0 : i32
    return %arg0, %c0_i32, %c0_i32_0 : i32, i32, i32
  }
  func.func @transform_17(%arg0: i32) -> (i32, i32, i32) {
    %c0_i32 = arith.constant 0 : i32
    %c0_i32_0 = arith.constant 0 : i32
    %c0_i32_1 = arith.constant 0 : i32
    return %arg0, %c0_i32, %c0_i32_0 : i32, i32, i32
  }
  func.func @transform_18(%arg0: i32) -> (i32, i32, i32) {
    %c0_i32 = arith.constant 0 : i32
    %c0_i32_0 = arith.constant 0 : i32
    %c0_i32_1 = arith.constant 0 : i32
    return %arg0, %c0_i32, %c0_i32_0 : i32, i32, i32
  }
  func.func @transform_19(%arg0: i32) -> (i32, i32, i32) {
    %c0_i32 = arith.constant 0 : i32
    %c0_i32_0 = arith.constant 0 : i32
    %c0_i32_1 = arith.constant 0 : i32
    return %arg0, %c0_i32, %c0_i32_0 : i32, i32, i32
  }
  func.func @transform_20(%arg0: i32) -> (i32, i32, i32) {
    %c0_i32 = arith.constant 0 : i32
    %c0_i32_0 = arith.constant 0 : i32
    %c0_i32_1 = arith.constant 0 : i32
    return %arg0, %c0_i32, %c0_i32_0 : i32, i32, i32
  }
  func.func @transform_21(%arg0: i32) -> (i32, i32, i32) {
    %c0_i32 = arith.constant 0 : i32
    %c0_i32_0 = arith.constant 0 : i32
    %c0_i32_1 = arith.constant 0 : i32
    return %arg0, %c0_i32, %c0_i32_0 : i32, i32, i32
  }
  func.func @transform_22(%arg0: i32) -> (i32, i32, i32) {
    %c0_i32 = arith.constant 0 : i32
    %c0_i32_0 = arith.constant 0 : i32
    %c0_i32_1 = arith.constant 0 : i32
    return %arg0, %c0_i32, %c0_i32_0 : i32, i32, i32
  }
  func.func @transform_23(%arg0: i32) -> (i32, i32, i32) {
    %c0_i32 = arith.constant 0 : i32
    %c0_i32_0 = arith.constant 0 : i32
    %c0_i32_1 = arith.constant 0 : i32
    return %arg0, %c0_i32, %c0_i32_0 : i32, i32, i32
  }
  func.func @transform_24(%arg0: i32) -> (i32, i32, i32) {
    %c0_i32 = arith.constant 0 : i32
    %c0_i32_0 = arith.constant 0 : i32
    %c0_i32_1 = arith.constant 0 : i32
    return %arg0, %c0_i32, %c0_i32_0 : i32, i32, i32
  }
  func.func @transform_25(%arg0: i32) -> (i32, i32, i32) {
    %c0_i32 = arith.constant 0 : i32
    %c0_i32_0 = arith.constant 0 : i32
    %c0_i32_1 = arith.constant 0 : i32
    return %arg0, %c0_i32, %c0_i32_0 : i32, i32, i32
  }
  func.func @transform_26(%arg0: i32) -> (i32, i32, i32) {
    %c0_i32 = arith.constant 0 : i32
    %c0_i32_0 = arith.constant 0 : i32
    %c0_i32_1 = arith.constant 0 : i32
    return %arg0, %c0_i32, %c0_i32_0 : i32, i32, i32
  }
  func.func @transform_27(%arg0: i32) -> (i32, i32, i32) {
    %c0_i32 = arith.constant 0 : i32
    %c0_i32_0 = arith.constant 0 : i32
    %c0_i32_1 = arith.constant 0 : i32
    return %arg0, %c0_i32, %c0_i32_0 : i32, i32, i32
  }
  func.func @transform_28(%arg0: i32) -> (i32, i32, i32) {
    %c0_i32 = arith.constant 0 : i32
    %c0_i32_0 = arith.constant 0 : i32
    %c0_i32_1 = arith.constant 0 : i32
    return %arg0, %c0_i32, %c0_i32_0 : i32, i32, i32
  }
  func.func @transform_29(%arg0: i32) -> (i32, i32, i32) {
    %c0_i32 = arith.constant 0 : i32
    %c0_i32_0 = arith.constant 0 : i32
    %c0_i32_1 = arith.constant 0 : i32
    return %arg0, %c0_i32, %c0_i32_0 : i32, i32, i32
  }
  func.func @transform_30(%arg0: i32) -> (i32, i32, i32) {
    %c0_i32 = arith.constant 0 : i32
    %c0_i32_0 = arith.constant 0 : i32
    %c0_i32_1 = arith.constant 0 : i32
    return %arg0, %c0_i32, %c0_i32_0 : i32, i32, i32
  }
  func.func @transform_31(%arg0: i32) -> (i32, i32, i32) {
    %c0_i32 = arith.constant 0 : i32
    %c0_i32_0 = arith.constant 0 : i32
    %c0_i32_1 = arith.constant 0 : i32
    return %arg0, %c0_i32, %c0_i32_0 : i32, i32, i32
  }
  func.func @transform_32(%arg0: i32) -> (i32, i32, i32) {
    %c0_i32 = arith.constant 0 : i32
    %c0_i32_0 = arith.constant 0 : i32
    %c0_i32_1 = arith.constant 0 : i32
    return %arg0, %c0_i32, %c0_i32_0 : i32, i32, i32
  }
  func.func @transform_33(%arg0: i32) -> (i32, i32, i32) {
    %c0_i32 = arith.constant 0 : i32
    %c0_i32_0 = arith.constant 0 : i32
    %c0_i32_1 = arith.constant 0 : i32
    return %arg0, %c0_i32, %c0_i32_0 : i32, i32, i32
  }
  func.func @transform_34(%arg0: i32) -> (i32, i32, i32) {
    %c0_i32 = arith.constant 0 : i32
    %c0_i32_0 = arith.constant 0 : i32
    %c0_i32_1 = arith.constant 0 : i32
    return %arg0, %c0_i32, %c0_i32_0 : i32, i32, i32
  }
  func.func @transform_35(%arg0: i32) -> (i32, i32) {
    %c0_i32 = arith.constant 0 : i32
    %c0_i32_0 = arith.constant 0 : i32
    %c0_i32_1 = arith.constant 0 : i32
    return %c0_i32, %c0_i32_0 : i32, i32
  }
  func.func @transform_36(%arg0: i32) -> (i32, i32) {
    %c0_i32 = arith.constant 0 : i32
    %c0_i32_0 = arith.constant 0 : i32
    %c0_i32_1 = arith.constant 0 : i32
    return %c0_i32, %c0_i32_0 : i32, i32
  }
  func.func @transform_37(%arg0: i32) -> (i32, i32) {
    %c0_i32 = arith.constant 0 : i32
    %c0_i32_0 = arith.constant 0 : i32
    %c0_i32_1 = arith.constant 0 : i32
    return %c0_i32, %c0_i32_0 : i32, i32
  }
}

</mosaic_0001>

<llo_original>
// kernel: tpu_custom_call.1
$region0: #{tpu_custom_call.1}
  #allocation0 [shape = 'u32[]', space=smem, size = 0x4, offset = 0x4, fixed_abs, tag = 'smem constant byte address 0x4 - core index']
  #allocation1 [shape = 'u32[72,128]{1,0:T(1,128)}', space=vmem, size = 0x9000, scoped, tag = 'internal scratch']
  #allocation2 [shape = 'f32[8,256]{1,0:T(8,128)}', space=vmem, size = 0x2000, scoped, tag = 'scratch operand']
  #allocation3 [shape = 'f32[8,8]{1,0:T(8,128)}', space=vmem, size = 0x1000, scoped, tag = 'scratch operand']
  #allocation4 [shape = 'f32[8,1]{1,0:T(8,128)}', space=vmem, size = 0x1000, scoped, tag = 'scratch operand']
  %s0 = inlined_call_operand.smem [shape: u32[38], index: -1, kind: input, shape index: {}]
  %s1 = sld [smem:[%s0]]
  %s2 = scalar_lea.smem %s0, 1
  %s3 = sld [smem:[%s2]]
  %s4 = scalar_lea.smem %s0, 2
  %s5 = sld [smem:[%s4]]
  %s6 = scalar_lea.smem %s0, 3
  %s7 = sld [smem:[%s6]]
  %s8 = scalar_lea.smem %s0, 4
  %s9 = sld [smem:[%s8]]
  %s10 = scalar_lea.smem %s0, 5
  %s11 = sld [smem:[%s10]]
  %s12 = scalar_lea.smem %s0, 6
  %s13 = sld [smem:[%s12]]
  %s14 = scalar_lea.smem %s0, 7
  %s15 = sld [smem:[%s14]]
  %s16 = scalar_lea.smem %s0, 8
  %s17 = sld [smem:[%s16]]
  %s18 = scalar_lea.smem %s0, 9
  %s19 = sld [smem:[%s18]]
  %s20 = scalar_lea.smem %s0, 10
  %s21 = sld [smem:[%s20]]
  %s22 = scalar_lea.smem %s0, 11
  %s23 = sld [smem:[%s22]]
  %s24 = scalar_lea.smem %s0, 12
  %s25 = sld [smem:[%s24]]
  %s26 = scalar_lea.smem %s0, 13
  %s27 = sld [smem:[%s26]]
  %s28 = scalar_lea.smem %s0, 14
  %s29 = sld [smem:[%s28]]
  %s30 = scalar_lea.smem %s0, 15
  %s31 = sld [smem:[%s30]]
  %s32 = scalar_lea.smem %s0, 16
  %s33 = sld [smem:[%s32]]
  %s34 = scalar_lea.smem %s0, 17
  %s35 = sld [smem:[%s34]]
  %s36 = scalar_lea.smem %s0, 18
  %s37 = sld [smem:[%s36]]
  %s38 = scalar_lea.smem %s0, 19
  %s39 = sld [smem:[%s38]]
  %s40 = scalar_lea.smem %s0, 20
  %s41 = sld [smem:[%s40]]
  %s42 = scalar_lea.smem %s0, 21
  %s43 = sld [smem:[%s42]]
  %s44 = scalar_lea.smem %s0, 22
  %s45 = sld [smem:[%s44]]
  %s46 = scalar_lea.smem %s0, 23
  %s47 = sld [smem:[%s46]]
  %s48 = scalar_lea.smem %s0, 24
  %s49 = sld [smem:[%s48]]
  %s50 = scalar_lea.smem %s0, 25
  %s51 = sld [smem:[%s50]]
  %s52 = scalar_lea.smem %s0, 26
  %s53 = sld [smem:[%s52]]
  %s54 = scalar_lea.smem %s0, 27
  %s55 = sld [smem:[%s54]]
  %s56 = scalar_lea.smem %s0, 28
  %s57 = sld [smem:[%s56]]
  %s58 = scalar_lea.smem %s0, 29
  %s59 = sld [smem:[%s58]]
  %s60 = scalar_lea.smem %s0, 30
  %s61 = sld [smem:[%s60]]
  %s62 = scalar_lea.smem %s0, 31
  %s63 = sld [smem:[%s62]]
  %s64 = scalar_lea.smem %s0, 32
  %s65 = sld [smem:[%s64]]
  %s66 = scalar_lea.smem %s0, 33
  %s67 = sld [smem:[%s66]]
  %s68 = scalar_lea.smem %s0, 34
  %s69 = sld [smem:[%s68]]
  %s70 = scalar_lea.smem %s0, 35
  %s71 = sld [smem:[%s70]]
  %s72 = scalar_lea.smem %s0, 36
  %s73 = sld [smem:[%s72]]
  %s74 = scalar_lea.smem %s0, 37
  %s75 = sld [smem:[%s74]]
  %76 = xla_tuple %s71, %s73, %s75
  %s77 = sld [smem:[#allocation0]]
  $region321: #{tpu_custom_call.1} parent=0
    _
  %s79 = ssub.s32 1, %s77
  %s80 = scalar_select 0, %s79, %s77
  $region1: #{tpu_custom_call.1} parent=0
    #allocation5 [shape = 'u8[2048]{0}', space=vmem, size = 0x800, scoped, tag = 'input window, operand 0, single buffered']
    #allocation6 [shape = 's32[2]{0}', space=sflag, size = 0x8, scoped, tag = 'scoped memory for tpu_custom_call.1']
    #allocation7 [shape = 's32[2]{0}', space=sflag, size = 0x8, scoped, tag = 'scoped memory for tpu_custom_call.1']
    #allocation8 [shape = 'u8[1024]{0}', space=vmem, size = 0x400, scoped, tag = 'input window, operand 1, single buffered']
    #allocation9 [shape = 's32[1]{0}', space=sflag, size = 0x4, scoped, tag = 'scoped memory for tpu_custom_call.1']
    #allocation10 [shape = 'u8[8192]{0}', space=vmem, size = 0x2000, scoped, tag = 'input window, operand 2, single buffered']
    #allocation11 [shape = 'u8[1024]{0}', space=vmem, size = 0x400, scoped, tag = 'input window, operand 3, single buffered']
    #allocation12 [shape = 's32[1]{0}', space=sflag, size = 0x4, scoped, tag = 'scoped memory for tpu_custom_call.1']
    #allocation13 [shape = 'u8[512]{0}', space=vmem, size = 0x400, scoped, tag = 'input window, operand 4, single buffered']
    #allocation14 [shape = 'u8[4096]{0}', space=vmem, size = 0x1000, scoped, tag = 'input window, operand 5, single buffered']
    #allocation15 [shape = 's32[1]{0}', space=sflag, size = 0x4, scoped, tag = 'scoped memory for tpu_custom_call.1']
    #allocation16 [shape = 'u8[1024]{0}', space=vmem, size = 0x400, scoped, tag = 'input window, operand 6, single buffered']
    #allocation17 [shape = 'u8[131072]{0}', space=vmem, size = 0x20000, scoped, tag = 'input window, operand 7, single buffered']
    #allocation18 [shape = 's32[1]{0}', space=sflag, size = 0x4, scoped, tag = 'scoped memory for tpu_custom_call.1']
    #allocation19 [shape = 'u8[1024]{0}', space=vmem, size = 0x400, scoped, tag = 'input window, operand 8, single buffered']
    #allocation20 [shape = 'u8[131072]{0}', space=vmem, size = 0x20000, scoped, tag = 'input window, operand 9, single buffered']
    #allocation21 [shape = 's32[1]{0}', space=sflag, size = 0x4, scoped, tag = 'scoped memory for tpu_custom_call.1']
    #allocation22 [shape = 'u8[1024]{0}', space=vmem, size = 0x400, scoped, tag = 'input window, operand 10, single buffered']
    #allocation23 [shape = 'u8[2048]{0}', space=vmem, size = 0x800, scoped, tag = 'input window, operand 11']
    #allocation24 [shape = 's32[2]{0}', space=sflag, size = 0x8, scoped, tag = 'scoped memory for tpu_custom_call.1']
    #allocation25 [shape = 'u8[2048]{0}', space=vmem, size = 0x800, scoped, tag = 'input window, operand 12']
    #allocation26 [shape = 'u8[786432]{0}', space=vmem, size = 0xc0000, scoped, tag = 'input window, operand 13']
    #allocation27 [shape = 's32[2]{0}', space=sflag, size = 0x8, scoped, tag = 'scoped memory for tpu_custom_call.1']
    #allocation28 [shape = 'u8[262144]{0}', space=vmem, size = 0x40000, scoped, tag = 'input window, operand 15']
    #allocation29 [shape = 'u8[2048]{0}', space=vmem, size = 0x800, scoped, tag = 'input window, operand 16']
    #allocation30 [shape = 's32[2]{0}', space=sflag, size = 0x8, scoped, tag = 'scoped memory for tpu_custom_call.1']
    #allocation31 [shape = 'u8[524288]{0}', space=vmem, size = 0x80000, scoped, tag = 'input window, operand 17']
    #allocation32 [shape = 'u8[524288]{0}', space=vmem, size = 0x80000, scoped, tag = 'input window, operand 18']
    #allocation33 [shape = 's32[2]{0}', space=sflag, size = 0x8, scoped, tag = 'scoped memory for tpu_custom_call.1']
    #allocation34 [shape = 'u8[4096]{0}', space=vmem, size = 0x1000, scoped, tag = 'input window, operand 19']
    #allocation35 [shape = 'u8[262144]{0}', space=vmem, size = 0x40000, scoped, tag = 'input window, operand 20']
    #allocation36 [shape = 's32[2]{0}', space=sflag, size = 0x8, scoped, tag = 'scoped memory for tpu_custom_call.1']
    #allocation37 [shape = 'u8[262144]{0}', space=vmem, size = 0x40000, scoped, tag = 'input window, operand 21']
    #allocation38 [shape = 'u8[2048]{0}', space=vmem, size = 0x800, scoped, tag = 'input window, operand 22']
    #allocation39 [shape = 's32[2]{0}', space=sflag, size = 0x8, scoped, tag = 'scoped memory for tpu_custom_call.1']
    #allocation40 [shape = 'u8[2048]{0}', space=vmem, size = 0x800, scoped, tag = 'input window, operand 23']
    #allocation41 [shape = 'u8[2048]{0}', space=vmem, size = 0x800, scoped, tag = 'input window, operand 24']
    #allocation42 [shape = 's32[2]{0}', space=sflag, size = 0x8, scoped, tag = 'scoped memory for tpu_custom_call.1']
    #allocation43 [shape = 'u8[524288]{0}', space=vmem, size = 0x80000, scoped, tag = 'input window, operand 25']
    #allocation44 [shape = 'u8[524288]{0}', space=vmem, size = 0x80000, scoped, tag = 'input window, operand 27']
    #allocation45 [shape = 's32[2]{0}', space=sflag, size = 0x8, scoped, tag = 'scoped memory for tpu_custom_call.1']
    #allocation46 [shape = 'u8[2048]{0}', space=vmem, size = 0x800, scoped, tag = 'input window, operand 28']
    #allocation47 [shape = 'u8[524288]{0}', space=vmem, size = 0x80000, scoped, tag = 'input window, operand 29']
    #allocation48 [shape = 's32[2]{0}', space=sflag, size = 0x8, scoped, tag = 'scoped memory for tpu_custom_call.1']
    #allocation49 [shape = 'u8[524288]{0}', space=vmem, size = 0x80000, scoped, tag = 'input window, operand 30']
    #allocation50 [shape = 'u8[262144]{0}', space=vmem, size = 0x40000, scoped, tag = 'input window, operand 32']
    #allocation51 [shape = 's32[2]{0}', space=sflag, size = 0x8, scoped, tag = 'scoped memory for tpu_custom_call.1']
    #allocation52 [shape = 'u8[262144]{0}', space=vmem, size = 0x40000, scoped, tag = 'input window, operand 33']
    #allocation53 [shape = 'u8[8192]{0}', space=vmem, size = 0x2000, scoped, tag = 'output window, operand 0, single buffered']
    #allocation54 [shape = 'u8[2048]{0}', space=vmem, size = 0x800, scoped, tag = 'output window, operand 1, single buffered']
    #allocation55 [shape = 's32[1]{0}', space=sflag, size = 0x4, scoped, tag = 'scoped memory for tpu_custom_call.1']
    #allocation56 [shape = 'u8[1024]{0}', space=vmem, size = 0x400, scoped, tag = 'output window, operand 2, single buffered']
    %81 = vsyncpa [#allocation6], 0
    %82 = vsyncpa [#allocation9], 0
    %83 = vsyncpa [#allocation12], 0
    %84 = vsyncpa [#allocation15], 0
    %85 = vsyncpa [#allocation18], 0
    %86 = vsyncpa [#allocation21], 0
    %87 = vsyncpa [#allocation24], 0
    %s88 = scalar_lea.sflag [#allocation24], 1
    %89 = vsyncpa %s88, 0
    %90 = vsyncpa [#allocation27], 0
    %s91 = scalar_lea.sflag [#allocation27], 1
    %92 = vsyncpa %s91, 0
    %93 = vsyncpa [#allocation30], 0
    %s94 = scalar_lea.sflag [#allocation30], 1
    %95 = vsyncpa %s94, 0
    %96 = vsyncpa [#allocation33], 0
    %s97 = scalar_lea.sflag [#allocation33], 1
    %98 = vsyncpa %s97, 0
    %99 = vsyncpa [#allocation36], 0
    %s100 = scalar_lea.sflag [#allocation36], 1
    %101 = vsyncpa %s100, 0
    %102 = vsyncpa [#allocation39], 0
    %s103 = scalar_lea.sflag [#allocation39], 1
    %104 = vsyncpa %s103, 0
    %105 = vsyncpa [#allocation42], 0
    %s106 = scalar_lea.sflag [#allocation42], 1
    %107 = vsyncpa %s106, 0
    %108 = vsyncpa [#allocation45], 0
    %s109 = scalar_lea.sflag [#allocation45], 1
    %110 = vsyncpa %s109, 0
    %111 = vsyncpa [#allocation48], 0
    %s112 = scalar_lea.sflag [#allocation48], 1
    %113 = vsyncpa %s112, 0
    %114 = vsyncpa [#allocation51], 0
    %s115 = scalar_lea.sflag [#allocation51], 1
    %116 = vsyncpa %s115, 0
    %117 = vsyncpa [#allocation7], 0
    %118 = vsyncpa [#allocation55], 0
    loop: start=0, step=1, limit=4
    $region2: #{tpu_custom_call.1} parent=1 // loop_pre_header
      _
    $region3: #{tpu_custom_call.1} parent=1 // loop_header
      %s120 = sphi 0, %s124
      %p121 = scmp.ge.s32.totalorder %s120, 4
      %s128 = sphi 0, %s128
      %s130 = sphi 0, %s128
      %s131 = sphi 0, %s130
      %s145 = sphi 0, %s131
      %s149 = sphi 0, %s149
      %s151 = sphi 0, %s149
      %s152 = sphi 0, %s151
      %s166 = sphi 0, %s152
      %s170 = sphi 0, %s170
      %s172 = sphi 0, %s170
      %s173 = sphi 0, %s172
      %s187 = sphi 0, %s173
      %s191 = sphi 0, %s191
      %s193 = sphi 0, %s191
      %s194 = sphi 0, %s193
      %s208 = sphi 0, %s194
      %s212 = sphi 0, %s212
      %s214 = sphi 0, %s212
      %s215 = sphi 0, %s214
      %s229 = sphi 0, %s215
      %s233 = sphi 0, %s233
      %s235 = sphi 0, %s233
      %s236 = sphi 0, %s235
      %s250 = sphi 0, %s236
      %s254 = sphi 0, %s254
      %s256 = sphi 0, %s254
      %s257 = sphi 0, %s256
      %s271 = sphi 0, %s257
      %s275 = sphi 0, %s275
      %s277 = sphi 0, %s275
      %s278 = sphi 0, %s277
      %s292 = sphi 0, %s278
      %s296 = sphi 0, %s296
      %s298 = sphi 0, %s296
      %s299 = sphi 0, %s298
      %s313 = sphi 0, %s299
      %s317 = sphi 0, %s317
      %s319 = sphi 0, %s317
      %s320 = sphi 0, %s319
      %s334 = sphi 0, %s320
      %s338 = sphi 0, %s338
      %s340 = sphi 0, %s338
      %s341 = sphi 0, %s340
      %s355 = sphi 0, %s341
      %s361 = sphi 0, %s363
      %s364 = sphi 0, %s361
      %s365 = sphi 0, %s364
      %s381 = sphi 0, %s365
      %s387 = sphi 0, %s389
      %s390 = sphi 0, %s387
      %s391 = sphi 0, %s390
      %s407 = sphi 0, %s391
      %s413 = sphi 0, %s415
      %s416 = sphi 0, %s413
      %s417 = sphi 0, %s416
      %s433 = sphi 0, %s417
      %s439 = sphi 0, %s441
      %s442 = sphi 0, %s439
      %s443 = sphi 0, %s442
      %s459 = sphi 0, %s443
      %s465 = sphi 0, %s467
      %s468 = sphi 0, %s465
      %s469 = sphi 0, %s468
      %s485 = sphi 0, %s469
      %s491 = sphi 0, %s493
      %s494 = sphi 0, %s491
      %s495 = sphi 0, %s494
      %s511 = sphi 0, %s495
      %s517 = sphi 0, %s519
      %s520 = sphi 0, %s517
      %s521 = sphi 0, %s520
      %s537 = sphi 0, %s521
      %s543 = sphi 0, %s545
      %s546 = sphi 0, %s543
      %s547 = sphi 0, %s546
      %s563 = sphi 0, %s547
      %s569 = sphi 0, %s571
      %s572 = sphi 0, %s569
      %s573 = sphi 0, %s572
      %s589 = sphi 0, %s573
      %s595 = sphi 0, %s597
      %s598 = sphi 0, %s595
      %s599 = sphi 0, %s598
      %s615 = sphi 0, %s599
      %s621 = sphi 0, %s623
      %s624 = sphi 0, %s621
      %s625 = sphi 0, %s624
      %s641 = sphi 0, %s625
      %s647 = sphi 0, %s649
      %s650 = sphi 0, %s647
      %s651 = sphi 0, %s650
      %s667 = sphi 0, %s651
      %s673 = sphi 0, %s675
      %s676 = sphi 0, %s673
      %s677 = sphi 0, %s676
      %s693 = sphi 0, %s677
      %s699 = sphi 0, %s701
      %s702 = sphi 0, %s699
      %s703 = sphi 0, %s702
      %s719 = sphi 0, %s703
      %s725 = sphi 0, %s727
      %s728 = sphi 0, %s725
      %s729 = sphi 0, %s728
      %s745 = sphi 0, %s729
      %s751 = sphi 0, %s753
      %s754 = sphi 0, %s751
      %s755 = sphi 0, %s754
      %s771 = sphi 0, %s755
      %s777 = sphi 0, %s779
      %s780 = sphi 0, %s777
      %s781 = sphi 0, %s780
      %s797 = sphi 0, %s781
      %s803 = sphi 0, %s805
      %s806 = sphi 0, %s803
      %s807 = sphi 0, %s806
      %s823 = sphi 0, %s807
      %s829 = sphi 0, %s831
      %s832 = sphi 0, %s829
      %s833 = sphi 0, %s832
      %s849 = sphi 0, %s833
      %s855 = sphi 0, %s857
      %s858 = sphi 0, %s855
      %s859 = sphi 0, %s858
      %s875 = sphi 0, %s859
      %s881 = sphi 0, %s883
      %s884 = sphi 0, %s881
      %s885 = sphi 0, %s884
      %s901 = sphi 0, %s885
      %s907 = sphi 0, %s909
      %s910 = sphi 0, %s907
      %s911 = sphi 0, %s910
      %s927 = sphi 0, %s911
      %s933 = sphi 0, %s935
      %s936 = sphi 0, %s933
      %s937 = sphi 0, %s936
      %s953 = sphi 0, %s937
      %s959 = sphi 0, %s961
      %s962 = sphi 0, %s959
      %s963 = sphi 0, %s962
      %s979 = sphi 0, %s963
      %s983 = sphi 0, %s983
      %s985 = sphi 0, %s983
      %s986 = sphi 0, %s985
      %s1000 = sphi 0, %s986
      %s1004 = sphi 0, %s1004
      %s1006 = sphi 0, %s1004
      %s1007 = sphi 0, %s1006
      %s1021 = sphi 0, %s1007
      %s1025 = sphi 0, %s1025
      %s1027 = sphi 0, %s1025
      %s1028 = sphi 0, %s1027
      %s1042 = sphi 0, %s1028
    $region4: #{tpu_custom_call.1} parent=1 // loop_header_branch
      %123 = sbr.rel (%p121) target = $region8
    $region5: #{tpu_custom_call.1} parent=1 // loop_body
      %s125 = ssub.s32 %s120, 1
      %s126 = ssub.s32 %s120, 2
      %s127 = sadd.s32 %s120, 1
      %s129 = sadd.s32 %s128, 1
      %p132 = scmp.eq.s32.totalorder %s120, 1
      %p133 = scmp.ne.s32.totalorder %s128, %s130
      %p134 = scmp.eq.s32.totalorder %s120, 0
      %p135 = por %p133, %p134
      %p136 = scmp.ne.s32.totalorder %s128, %s130
      %p137 = scmp.eq.s32.totalorder %s125, 1
      %p138 = por %p136, %p137
      %p139 = scmp.ne.s32.totalorder %s130, %s131
      %p140 = scmp.eq.s32.totalorder %s125, 0
      %p141 = por %p139, %p140
      %p142 = scmp.ne.s32.totalorder %s130, %s131
      %p143 = scmp.eq.s32.totalorder %s126, 1
      %p144 = por %p142, %p143
      %p146 = scmp.ne.s32.totalorder %s131, %s145
      %p147 = scmp.eq.s32.totalorder %s126, 0
      %p148 = por %p146, %p147
      %s150 = sadd.s32 %s149, 1
      %p153 = scmp.eq.s32.totalorder %s120, 1
      %p154 = scmp.ne.s32.totalorder %s149, %s151
      %p155 = scmp.eq.s32.totalorder %s120, 0
      %p156 = por %p154, %p155
      %p157 = scmp.ne.s32.totalorder %s149, %s151
      %p158 = scmp.eq.s32.totalorder %s125, 1
      %p159 = por %p157, %p158
      %p160 = scmp.ne.s32.totalorder %s151, %s152
      %p161 = scmp.eq.s32.totalorder %s125, 0
      %p162 = por %p160, %p161
      %p163 = scmp.ne.s32.totalorder %s151, %s152
      %p164 = scmp.eq.s32.totalorder %s126, 1
      %p165 = por %p163, %p164
      %p167 = scmp.ne.s32.totalorder %s152, %s166
      %p168 = scmp.eq.s32.totalorder %s126, 0
      %p169 = por %p167, %p168
      %s171 = sadd.s32 %s170, 1
      %p174 = scmp.eq.s32.totalorder %s120, 1
      %p175 = scmp.ne.s32.totalorder %s170, %s172
      %p176 = scmp.eq.s32.totalorder %s120, 0
      %p177 = por %p175, %p176
      %p178 = scmp.ne.s32.totalorder %s170, %s172
      %p179 = scmp.eq.s32.totalorder %s125, 1
      %p180 = por %p178, %p179
      %p181 = scmp.ne.s32.totalorder %s172, %s173
      %p182 = scmp.eq.s32.totalorder %s125, 0
      %p183 = por %p181, %p182
      %p184 = scmp.ne.s32.totalorder %s172, %s173
      %p185 = scmp.eq.s32.totalorder %s126, 1
      %p186 = por %p184, %p185
      %p188 = scmp.ne.s32.totalorder %s173, %s187
      %p189 = scmp.eq.s32.totalorder %s126, 0
      %p190 = por %p188, %p189
      %s192 = sadd.s32 %s191, 1
      %p195 = scmp.eq.s32.totalorder %s120, 1
      %p196 = scmp.ne.s32.totalorder %s191, %s193
      %p197 = scmp.eq.s32.totalorder %s120, 0
      %p198 = por %p196, %p197
      %p199 = scmp.ne.s32.totalorder %s191, %s193
      %p200 = scmp.eq.s32.totalorder %s125, 1
      %p201 = por %p199, %p200
      %p202 = scmp.ne.s32.totalorder %s193, %s194
      %p203 = scmp.eq.s32.totalorder %s125, 0
      %p204 = por %p202, %p203
      %p205 = scmp.ne.s32.totalorder %s193, %s194
      %p206 = scmp.eq.s32.totalorder %s126, 1
      %p207 = por %p205, %p206
      %p209 = scmp.ne.s32.totalorder %s194, %s208
      %p210 = scmp.eq.s32.totalorder %s126, 0
      %p211 = por %p209, %p210
      %s213 = sadd.s32 %s212, 1
      %p216 = scmp.eq.s32.totalorder %s120, 1
      %p217 = scmp.ne.s32.totalorder %s212, %s214
      %p218 = scmp.eq.s32.totalorder %s120, 0
      %p219 = por %p217, %p218
      %p220 = scmp.ne.s32.totalorder %s212, %s214
      %p221 = scmp.eq.s32.totalorder %s125, 1
      %p222 = por %p220, %p221
      %p223 = scmp.ne.s32.totalorder %s214, %s215
      %p224 = scmp.eq.s32.totalorder %s125, 0
      %p225 = por %p223, %p224
      %p226 = scmp.ne.s32.totalorder %s214, %s215
      %p227 = scmp.eq.s32.totalorder %s126, 1
      %p228 = por %p226, %p227
      %p230 = scmp.ne.s32.totalorder %s215, %s229
      %p231 = scmp.eq.s32.totalorder %s126, 0
      %p232 = por %p230, %p231
      %s234 = sadd.s32 %s233, 1
      %p237 = scmp.eq.s32.totalorder %s120, 1
      %p238 = scmp.ne.s32.totalorder %s233, %s235
      %p239 = scmp.eq.s32.totalorder %s120, 0
      %p240 = por %p238, %p239
      %p241 = scmp.ne.s32.totalorder %s233, %s235
      %p242 = scmp.eq.s32.totalorder %s125, 1
      %p243 = por %p241, %p242
      %p244 = scmp.ne.s32.totalorder %s235, %s236
      %p245 = scmp.eq.s32.totalorder %s125, 0
      %p246 = por %p244, %p245
      %p247 = scmp.ne.s32.totalorder %s235, %s236
      %p248 = scmp.eq.s32.totalorder %s126, 1
      %p249 = por %p247, %p248
      %p251 = scmp.ne.s32.totalorder %s236, %s250
      %p252 = scmp.eq.s32.totalorder %s126, 0
      %p253 = por %p251, %p252
      %s255 = sadd.s32 %s254, 1
      %p258 = scmp.eq.s32.totalorder %s120, 1
      %p259 = scmp.ne.s32.totalorder %s254, %s256
      %p260 = scmp.eq.s32.totalorder %s120, 0
      %p261 = por %p259, %p260
      %p262 = scmp.ne.s32.totalorder %s254, %s256
      %p263 = scmp.eq.s32.totalorder %s125, 1
      %p264 = por %p262, %p263
      %p265 = scmp.ne.s32.totalorder %s256, %s257
      %p266 = scmp.eq.s32.totalorder %s125, 0
      %p267 = por %p265, %p266
      %p268 = scmp.ne.s32.totalorder %s256, %s257
      %p269 = scmp.eq.s32.totalorder %s126, 1
      %p270 = por %p268, %p269
      %p272 = scmp.ne.s32.totalorder %s257, %s271
      %p273 = scmp.eq.s32.totalorder %s126, 0
      %p274 = por %p272, %p273
      %s276 = sadd.s32 %s275, 1
      %p279 = scmp.eq.s32.totalorder %s120, 1
      %p280 = scmp.ne.s32.totalorder %s275, %s277
      %p281 = scmp.eq.s32.totalorder %s120, 0
      %p282 = por %p280, %p281
      %p283 = scmp.ne.s32.totalorder %s275, %s277
      %p284 = scmp.eq.s32.totalorder %s125, 1
      %p285 = por %p283, %p284
      %p286 = scmp.ne.s32.totalorder %s277, %s278
      %p287 = scmp.eq.s32.totalorder %s125, 0
      %p288 = por %p286, %p287
      %p289 = scmp.ne.s32.totalorder %s277, %s278
      %p290 = scmp.eq.s32.totalorder %s126, 1
      %p291 = por %p289, %p290
      %p293 = scmp.ne.s32.totalorder %s278, %s292
      %p294 = scmp.eq.s32.totalorder %s126, 0
      %p295 = por %p293, %p294
      %s297 = sadd.s32 %s296, 1
      %p300 = scmp.eq.s32.totalorder %s120, 1
      %p301 = scmp.ne.s32.totalorder %s296, %s298
      %p302 = scmp.eq.s32.totalorder %s120, 0
      %p303 = por %p301, %p302
      %p304 = scmp.ne.s32.totalorder %s296, %s298
      %p305 = scmp.eq.s32.totalorder %s125, 1
      %p306 = por %p304, %p305
      %p307 = scmp.ne.s32.totalorder %s298, %s299
      %p308 = scmp.eq.s32.totalorder %s125, 0
      %p309 = por %p307, %p308
      %p310 = scmp.ne.s32.totalorder %s298, %s299
      %p311 = scmp.eq.s32.totalorder %s126, 1
      %p312 = por %p310, %p311
      %p314 = scmp.ne.s32.totalorder %s299, %s313
      %p315 = scmp.eq.s32.totalorder %s126, 0
      %p316 = por %p314, %p315
      %s318 = sadd.s32 %s317, 1
      %p321 = scmp.eq.s32.totalorder %s120, 1
      %p322 = scmp.ne.s32.totalorder %s317, %s319
      %p323 = scmp.eq.s32.totalorder %s120, 0
      %p324 = por %p322, %p323
      %p325 = scmp.ne.s32.totalorder %s317, %s319
      %p326 = scmp.eq.s32.totalorder %s125, 1
      %p327 = por %p325, %p326
      %p328 = scmp.ne.s32.totalorder %s319, %s320
      %p329 = scmp.eq.s32.totalorder %s125, 0
      %p330 = por %p328, %p329
      %p331 = scmp.ne.s32.totalorder %s319, %s320
      %p332 = scmp.eq.s32.totalorder %s126, 1
      %p333 = por %p331, %p332
      %p335 = scmp.ne.s32.totalorder %s320, %s334
      %p336 = scmp.eq.s32.totalorder %s126, 0
      %p337 = por %p335, %p336
      %s339 = sadd.s32 %s338, 1
      %p342 = scmp.eq.s32.totalorder %s120, 1
      %p343 = scmp.ne.s32.totalorder %s338, %s340
      %p344 = scmp.eq.s32.totalorder %s120, 0
      %p345 = por %p343, %p344
      %p346 = scmp.ne.s32.totalorder %s338, %s340
      %p347 = scmp.eq.s32.totalorder %s125, 1
      %p348 = por %p346, %p347
      %p349 = scmp.ne.s32.totalorder %s340, %s341
      %p350 = scmp.eq.s32.totalorder %s125, 0
      %p351 = por %p349, %p350
      %p352 = scmp.ne.s32.totalorder %s340, %s341
      %p353 = scmp.eq.s32.totalorder %s126, 1
      %p354 = por %p352, %p353
      %p356 = scmp.ne.s32.totalorder %s341, %s355
      %p357 = scmp.eq.s32.totalorder %s126, 0
      %p358 = por %p356, %p357
      %s359 = ssub.s32 %s120, %s127
      %p360 = scmp.eq.s32.totalorder %s359, 0
      %s362 = sadd.s32 %s361, 1
      %s363 = scalar_select %p360, %s361, %s362
      %p366 = pneg %p360
      %p367 = scmp.eq.s32.totalorder %s120, 1
      %p368 = por %p366, %p367
      %p369 = scmp.ne.s32.totalorder %s361, %s364
      %p370 = scmp.eq.s32.totalorder %s120, 0
      %p371 = por %p369, %p370
      %p372 = scmp.ne.s32.totalorder %s361, %s364
      %p373 = scmp.eq.s32.totalorder %s125, 1
      %p374 = por %p372, %p373
      %p375 = scmp.ne.s32.totalorder %s364, %s365
      %p376 = scmp.eq.s32.totalorder %s125, 0
      %p377 = por %p375, %p376
      %p378 = scmp.ne.s32.totalorder %s364, %s365
      %p379 = scmp.eq.s32.totalorder %s126, 1
      %p380 = por %p378, %p379
      %p382 = scmp.ne.s32.totalorder %s365, %s381
      %p383 = scmp.eq.s32.totalorder %s126, 0
      %p384 = por %p382, %p383
      %s385 = ssub.s32 %s120, %s127
      %p386 = scmp.eq.s32.totalorder %s385, 0
      %s388 = sadd.s32 %s387, 1
      %s389 = scalar_select %p386, %s387, %s388
      %p392 = pneg %p386
      %p393 = scmp.eq.s32.totalorder %s120, 1
      %p394 = por %p392, %p393
      %p395 = scmp.ne.s32.totalorder %s387, %s390
      %p396 = scmp.eq.s32.totalorder %s120, 0
      %p397 = por %p395, %p396
      %p398 = scmp.ne.s32.totalorder %s387, %s390
      %p399 = scmp.eq.s32.totalorder %s125, 1
      %p400 = por %p398, %p399
      %p401 = scmp.ne.s32.totalorder %s390, %s391
      %p402 = scmp.eq.s32.totalorder %s125, 0
      %p403 = por %p401, %p402
      %p404 = scmp.ne.s32.totalorder %s390, %s391
      %p405 = scmp.eq.s32.totalorder %s126, 1
      %p406 = por %p404, %p405
      %p408 = scmp.ne.s32.totalorder %s391, %s407
      %p409 = scmp.eq.s32.totalorder %s126, 0
      %p410 = por %p408, %p409
      %s411 = ssub.s32 %s120, %s127
      %p412 = scmp.eq.s32.totalorder %s411, 0
      %s414 = sadd.s32 %s413, 1
      %s415 = scalar_select %p412, %s413, %s414
      %p418 = pneg %p412
      %p419 = scmp.eq.s32.totalorder %s120, 1
      %p420 = por %p418, %p419
      %p421 = scmp.ne.s32.totalorder %s413, %s416
      %p422 = scmp.eq.s32.totalorder %s120, 0
      %p423 = por %p421, %p422
      %p424 = scmp.ne.s32.totalorder %s413, %s416
      %p425 = scmp.eq.s32.totalorder %s125, 1
      %p426 = por %p424, %p425
      %p427 = scmp.ne.s32.totalorder %s416, %s417
      %p428 = scmp.eq.s32.totalorder %s125, 0
      %p429 = por %p427, %p428
      %p430 = scmp.ne.s32.totalorder %s416, %s417
      %p431 = scmp.eq.s32.totalorder %s126, 1
      %p432 = por %p430, %p431
      %p434 = scmp.ne.s32.totalorder %s417, %s433
      %p435 = scmp.eq.s32.totalorder %s126, 0
      %p436 = por %p434, %p435
      %s437 = ssub.s32 %s120, %s127
      %p438 = scmp.eq.s32.totalorder %s437, 0
      %s440 = sadd.s32 %s439, 1
      %s441 = scalar_select %p438, %s439, %s440
      %p444 = pneg %p438
      %p445 = scmp.eq.s32.totalorder %s120, 1
      %p446 = por %p444, %p445
      %p447 = scmp.ne.s32.totalorder %s439, %s442
      %p448 = scmp.eq.s32.totalorder %s120, 0
      %p449 = por %p447, %p448
      %p450 = scmp.ne.s32.totalorder %s439, %s442
      %p451 = scmp.eq.s32.totalorder %s125, 1
      %p452 = por %p450, %p451
      %p453 = scmp.ne.s32.totalorder %s442, %s443
      %p454 = scmp.eq.s32.totalorder %s125, 0
      %p455 = por %p453, %p454
      %p456 = scmp.ne.s32.totalorder %s442, %s443
      %p457 = scmp.eq.s32.totalorder %s126, 1
      %p458 = por %p456, %p457
      %p460 = scmp.ne.s32.totalorder %s443, %s459
      %p461 = scmp.eq.s32.totalorder %s126, 0
      %p462 = por %p460, %p461
      %s463 = ssub.s32 %s120, %s127
      %p464 = scmp.eq.s32.totalorder %s463, 0
      %s466 = sadd.s32 %s465, 1
      %s467 = scalar_select %p464, %s465, %s466
      %p470 = pneg %p464
      %p471 = scmp.eq.s32.totalorder %s120, 1
      %p472 = por %p470, %p471
      %p473 = scmp.ne.s32.totalorder %s465, %s468
      %p474 = scmp.eq.s32.totalorder %s120, 0
      %p475 = por %p473, %p474
      %p476 = scmp.ne.s32.totalorder %s465, %s468
      %p477 = scmp.eq.s32.totalorder %s125, 1
      %p478 = por %p476, %p477
      %p479 = scmp.ne.s32.totalorder %s468, %s469
      %p480 = scmp.eq.s32.totalorder %s125, 0
      %p481 = por %p479, %p480
      %p482 = scmp.ne.s32.totalorder %s468, %s469
      %p483 = scmp.eq.s32.totalorder %s126, 1
      %p484 = por %p482, %p483
      %p486 = scmp.ne.s32.totalorder %s469, %s485
      %p487 = scmp.eq.s32.totalorder %s126, 0
      %p488 = por %p486, %p487
      %s489 = ssub.s32 %s120, %s127
      %p490 = scmp.eq.s32.totalorder %s489, 0
      %s492 = sadd.s32 %s491, 1
      %s493 = scalar_select %p490, %s491, %s492
      %p496 = pneg %p490
      %p497 = scmp.eq.s32.totalorder %s120, 1
      %p498 = por %p496, %p497
      %p499 = scmp.ne.s32.totalorder %s491, %s494
      %p500 = scmp.eq.s32.totalorder %s120, 0
      %p501 = por %p499, %p500
      %p502 = scmp.ne.s32.totalorder %s491, %s494
      %p503 = scmp.eq.s32.totalorder %s125, 1
      %p504 = por %p502, %p503
      %p505 = scmp.ne.s32.totalorder %s494, %s495
      %p506 = scmp.eq.s32.totalorder %s125, 0
      %p507 = por %p505, %p506
      %p508 = scmp.ne.s32.totalorder %s494, %s495
      %p509 = scmp.eq.s32.totalorder %s126, 1
      %p510 = por %p508, %p509
      %p512 = scmp.ne.s32.totalorder %s495, %s511
      %p513 = scmp.eq.s32.totalorder %s126, 0
      %p514 = por %p512, %p513
      %s515 = ssub.s32 %s120, %s127
      %p516 = scmp.eq.s32.totalorder %s515, 0
      %s518 = sadd.s32 %s517, 1
      %s519 = scalar_select %p516, %s517, %s518
      %p522 = pneg %p516
      %p523 = scmp.eq.s32.totalorder %s120, 1
      %p524 = por %p522, %p523
      %p525 = scmp.ne.s32.totalorder %s517, %s520
      %p526 = scmp.eq.s32.totalorder %s120, 0
      %p527 = por %p525, %p526
      %p528 = scmp.ne.s32.totalorder %s517, %s520
      %p529 = scmp.eq.s32.totalorder %s125, 1
      %p530 = por %p528, %p529
      %p531 = scmp.ne.s32.totalorder %s520, %s521
      %p532 = scmp.eq.s32.totalorder %s125, 0
      %p533 = por %p531, %p532
      %p534 = scmp.ne.s32.totalorder %s520, %s521
      %p535 = scmp.eq.s32.totalorder %s126, 1
      %p536 = por %p534, %p535
      %p538 = scmp.ne.s32.totalorder %s521, %s537
      %p539 = scmp.eq.s32.totalorder %s126, 0
      %p540 = por %p538, %p539
      %s541 = ssub.s32 %s120, %s127
      %p542 = scmp.eq.s32.totalorder %s541, 0
      %s544 = sadd.s32 %s543, 1
      %s545 = scalar_select %p542, %s543, %s544
      %p548 = pneg %p542
      %p549 = scmp.eq.s32.totalorder %s120, 1
      %p550 = por %p548, %p549
      %p551 = scmp.ne.s32.totalorder %s543, %s546
      %p552 = scmp.eq.s32.totalorder %s120, 0
      %p553 = por %p551, %p552
      %p554 = scmp.ne.s32.totalorder %s543, %s546
      %p555 = scmp.eq.s32.totalorder %s125, 1
      %p556 = por %p554, %p555
      %p557 = scmp.ne.s32.totalorder %s546, %s547
      %p558 = scmp.eq.s32.totalorder %s125, 0
      %p559 = por %p557, %p558
      %p560 = scmp.ne.s32.totalorder %s546, %s547
      %p561 = scmp.eq.s32.totalorder %s126, 1
      %p562 = por %p560, %p561
      %p564 = scmp.ne.s32.totalorder %s547, %s563
      %p565 = scmp.eq.s32.totalorder %s126, 0
      %p566 = por %p564, %p565
      %s567 = ssub.s32 %s120, %s127
      %p568 = scmp.eq.s32.totalorder %s567, 0
      %s570 = sadd.s32 %s569, 1
      %s571 = scalar_select %p568, %s569, %s570
      %p574 = pneg %p568
      %p575 = scmp.eq.s32.totalorder %s120, 1
      %p576 = por %p574, %p575
      %p577 = scmp.ne.s32.totalorder %s569, %s572
      %p578 = scmp.eq.s32.totalorder %s120, 0
      %p579 = por %p577, %p578
      %p580 = scmp.ne.s32.totalorder %s569, %s572
      %p581 = scmp.eq.s32.totalorder %s125, 1
      %p582 = por %p580, %p581
      %p583 = scmp.ne.s32.totalorder %s572, %s573
      %p584 = scmp.eq.s32.totalorder %s125, 0
      %p585 = por %p583, %p584
      %p586 = scmp.ne.s32.totalorder %s572, %s573
      %p587 = scmp.eq.s32.totalorder %s126, 1
      %p588 = por %p586, %p587
      %p590 = scmp.ne.s32.totalorder %s573, %s589
      %p591 = scmp.eq.s32.totalorder %s126, 0
      %p592 = por %p590, %p591
      %s593 = ssub.s32 %s120, %s127
      %p594 = scmp.eq.s32.totalorder %s593, 0
      %s596 = sadd.s32 %s595, 1
      %s597 = scalar_select %p594, %s595, %s596
      %p600 = pneg %p594
      %p601 = scmp.eq.s32.totalorder %s120, 1
      %p602 = por %p600, %p601
      %p603 = scmp.ne.s32.totalorder %s595, %s598
      %p604 = scmp.eq.s32.totalorder %s120, 0
      %p605 = por %p603, %p604
      %p606 = scmp.ne.s32.totalorder %s595, %s598
      %p607 = scmp.eq.s32.totalorder %s125, 1
      %p608 = por %p606, %p607
      %p609 = scmp.ne.s32.totalorder %s598, %s599
      %p610 = scmp.eq.s32.totalorder %s125, 0
      %p611 = por %p609, %p610
      %p612 = scmp.ne.s32.totalorder %s598, %s599
      %p613 = scmp.eq.s32.totalorder %s126, 1
      %p614 = por %p612, %p613
      %p616 = scmp.ne.s32.totalorder %s599, %s615
      %p617 = scmp.eq.s32.totalorder %s126, 0
      %p618 = por %p616, %p617
      %s619 = ssub.s32 %s120, %s127
      %p620 = scmp.eq.s32.totalorder %s619, 0
      %s622 = sadd.s32 %s621, 1
      %s623 = scalar_select %p620, %s621, %s622
      %p626 = pneg %p620
      %p627 = scmp.eq.s32.totalorder %s120, 1
      %p628 = por %p626, %p627
      %p629 = scmp.ne.s32.totalorder %s621, %s624
      %p630 = scmp.eq.s32.totalorder %s120, 0
      %p631 = por %p629, %p630
      %p632 = scmp.ne.s32.totalorder %s621, %s624
      %p633 = scmp.eq.s32.totalorder %s125, 1
      %p634 = por %p632, %p633
      %p635 = scmp.ne.s32.totalorder %s624, %s625
      %p636 = scmp.eq.s32.totalorder %s125, 0
      %p637 = por %p635, %p636
      %p638 = scmp.ne.s32.totalorder %s624, %s625
      %p639 = scmp.eq.s32.totalorder %s126, 1
      %p640 = por %p638, %p639
      %p642 = scmp.ne.s32.totalorder %s625, %s641
      %p643 = scmp.eq.s32.totalorder %s126, 0
      %p644 = por %p642, %p643
      %s645 = ssub.s32 %s120, %s127
      %p646 = scmp.eq.s32.totalorder %s645, 0
      %s648 = sadd.s32 %s647, 1
      %s649 = scalar_select %p646, %s647, %s648
      %p652 = pneg %p646
      %p653 = scmp.eq.s32.totalorder %s120, 1
      %p654 = por %p652, %p653
      %p655 = scmp.ne.s32.totalorder %s647, %s650
      %p656 = scmp.eq.s32.totalorder %s120, 0
      %p657 = por %p655, %p656
      %p658 = scmp.ne.s32.totalorder %s647, %s650
      %p659 = scmp.eq.s32.totalorder %s125, 1
      %p660 = por %p658, %p659
      %p661 = scmp.ne.s32.totalorder %s650, %s651
      %p662 = scmp.eq.s32.totalorder %s125, 0
      %p663 = por %p661, %p662
      %p664 = scmp.ne.s32.totalorder %s650, %s651
      %p665 = scmp.eq.s32.totalorder %s126, 1
      %p666 = por %p664, %p665
      %p668 = scmp.ne.s32.totalorder %s651, %s667
      %p669 = scmp.eq.s32.totalorder %s126, 0
      %p670 = por %p668, %p669
      %s671 = ssub.s32 %s120, %s127
      %p672 = scmp.eq.s32.totalorder %s671, 0
      %s674 = sadd.s32 %s673, 1
      %s675 = scalar_select %p672, %s673, %s674
      %p678 = pneg %p672
      %p679 = scmp.eq.s32.totalorder %s120, 1
      %p680 = por %p678, %p679
      %p681 = scmp.ne.s32.totalorder %s673, %s676
      %p682 = scmp.eq.s32.totalorder %s120, 0
      %p683 = por %p681, %p682
      %p684 = scmp.ne.s32.totalorder %s673, %s676
      %p685 = scmp.eq.s32.totalorder %s125, 1
      %p686 = por %p684, %p685
      %p687 = scmp.ne.s32.totalorder %s676, %s677
      %p688 = scmp.eq.s32.totalorder %s125, 0
      %p689 = por %p687, %p688
      %p690 = scmp.ne.s32.totalorder %s676, %s677
      %p691 = scmp.eq.s32.totalorder %s126, 1
      %p692 = por %p690, %p691
      %p694 = scmp.ne.s32.totalorder %s677, %s693
      %p695 = scmp.eq.s32.totalorder %s126, 0
      %p696 = por %p694, %p695
      %s697 = ssub.s32 %s120, %s127
      %p698 = scmp.eq.s32.totalorder %s697, 0
      %s700 = sadd.s32 %s699, 1
      %s701 = scalar_select %p698, %s699, %s700
      %p704 = pneg %p698
      %p705 = scmp.eq.s32.totalorder %s120, 1
      %p706 = por %p704, %p705
      %p707 = scmp.ne.s32.totalorder %s699, %s702
      %p708 = scmp.eq.s32.totalorder %s120, 0
      %p709 = por %p707, %p708
      %p710 = scmp.ne.s32.totalorder %s699, %s702
      %p711 = scmp.eq.s32.totalorder %s125, 1
      %p712 = por %p710, %p711
      %p713 = scmp.ne.s32.totalorder %s702, %s703
      %p714 = scmp.eq.s32.totalorder %s125, 0
      %p715 = por %p713, %p714
      %p716 = scmp.ne.s32.totalorder %s702, %s703
      %p717 = scmp.eq.s32.totalorder %s126, 1
      %p718 = por %p716, %p717
      %p720 = scmp.ne.s32.totalorder %s703, %s719
      %p721 = scmp.eq.s32.totalorder %s126, 0
      %p722 = por %p720, %p721
      %s723 = ssub.s32 %s120, %s127
      %p724 = scmp.eq.s32.totalorder %s723, 0
      %s726 = sadd.s32 %s725, 1
      %s727 = scalar_select %p724, %s725, %s726
      %p730 = pneg %p724
      %p731 = scmp.eq.s32.totalorder %s120, 1
      %p732 = por %p730, %p731
      %p733 = scmp.ne.s32.totalorder %s725, %s728
      %p734 = scmp.eq.s32.totalorder %s120, 0
      %p735 = por %p733, %p734
      %p736 = scmp.ne.s32.totalorder %s725, %s728
      %p737 = scmp.eq.s32.totalorder %s125, 1
      %p738 = por %p736, %p737
      %p739 = scmp.ne.s32.totalorder %s728, %s729
      %p740 = scmp.eq.s32.totalorder %s125, 0
      %p741 = por %p739, %p740
      %p742 = scmp.ne.s32.totalorder %s728, %s729
      %p743 = scmp.eq.s32.totalorder %s126, 1
      %p744 = por %p742, %p743
      %p746 = scmp.ne.s32.totalorder %s729, %s745
      %p747 = scmp.eq.s32.totalorder %s126, 0
      %p748 = por %p746, %p747
      %s749 = ssub.s32 %s120, %s127
      %p750 = scmp.eq.s32.totalorder %s749, 0
      %s752 = sadd.s32 %s751, 1
      %s753 = scalar_select %p750, %s751, %s752
      %p756 = pneg %p750
      %p757 = scmp.eq.s32.totalorder %s120, 1
      %p758 = por %p756, %p757
      %p759 = scmp.ne.s32.totalorder %s751, %s754
      %p760 = scmp.eq.s32.totalorder %s120, 0
      %p761 = por %p759, %p760
      %p762 = scmp.ne.s32.totalorder %s751, %s754
      %p763 = scmp.eq.s32.totalorder %s125, 1
      %p764 = por %p762, %p763
      %p765 = scmp.ne.s32.totalorder %s754, %s755
      %p766 = scmp.eq.s32.totalorder %s125, 0
      %p767 = por %p765, %p766
      %p768 = scmp.ne.s32.totalorder %s754, %s755
      %p769 = scmp.eq.s32.totalorder %s126, 1
      %p770 = por %p768, %p769
      %p772 = scmp.ne.s32.totalorder %s755, %s771
      %p773 = scmp.eq.s32.totalorder %s126, 0
      %p774 = por %p772, %p773
      %s775 = ssub.s32 %s120, %s127
      %p776 = scmp.eq.s32.totalorder %s775, 0
      %s778 = sadd.s32 %s777, 1
      %s779 = scalar_select %p776, %s777, %s778
      %p782 = pneg %p776
      %p783 = scmp.eq.s32.totalorder %s120, 1
      %p784 = por %p782, %p783
      %p785 = scmp.ne.s32.totalorder %s777, %s780
      %p786 = scmp.eq.s32.totalorder %s120, 0
      %p787 = por %p785, %p786
      %p788 = scmp.ne.s32.totalorder %s777, %s780
      %p789 = scmp.eq.s32.totalorder %s125, 1
      %p790 = por %p788, %p789
      %p791 = scmp.ne.s32.totalorder %s780, %s781
      %p792 = scmp.eq.s32.totalorder %s125, 0
      %p793 = por %p791, %p792
      %p794 = scmp.ne.s32.totalorder %s780, %s781
      %p795 = scmp.eq.s32.totalorder %s126, 1
      %p796 = por %p794, %p795
      %p798 = scmp.ne.s32.totalorder %s781, %s797
      %p799 = scmp.eq.s32.totalorder %s126, 0
      %p800 = por %p798, %p799
      %s801 = ssub.s32 %s120, %s127
      %p802 = scmp.eq.s32.totalorder %s801, 0
      %s804 = sadd.s32 %s803, 1
      %s805 = scalar_select %p802, %s803, %s804
      %p808 = pneg %p802
      %p809 = scmp.eq.s32.totalorder %s120, 1
      %p810 = por %p808, %p809
      %p811 = scmp.ne.s32.totalorder %s803, %s806
      %p812 = scmp.eq.s32.totalorder %s120, 0
      %p813 = por %p811, %p812
      %p814 = scmp.ne.s32.totalorder %s803, %s806
      %p815 = scmp.eq.s32.totalorder %s125, 1
      %p816 = por %p814, %p815
      %p817 = scmp.ne.s32.totalorder %s806, %s807
      %p818 = scmp.eq.s32.totalorder %s125, 0
      %p819 = por %p817, %p818
      %p820 = scmp.ne.s32.totalorder %s806, %s807
      %p821 = scmp.eq.s32.totalorder %s126, 1
      %p822 = por %p820, %p821
      %p824 = scmp.ne.s32.totalorder %s807, %s823
      %p825 = scmp.eq.s32.totalorder %s126, 0
      %p826 = por %p824, %p825
      %s827 = ssub.s32 %s120, %s127
      %p828 = scmp.eq.s32.totalorder %s827, 0
      %s830 = sadd.s32 %s829, 1
      %s831 = scalar_select %p828, %s829, %s830
      %p834 = pneg %p828
      %p835 = scmp.eq.s32.totalorder %s120, 1
      %p836 = por %p834, %p835
      %p837 = scmp.ne.s32.totalorder %s829, %s832
      %p838 = scmp.eq.s32.totalorder %s120, 0
      %p839 = por %p837, %p838
      %p840 = scmp.ne.s32.totalorder %s829, %s832
      %p841 = scmp.eq.s32.totalorder %s125, 1
      %p842 = por %p840, %p841
      %p843 = scmp.ne.s32.totalorder %s832, %s833
      %p844 = scmp.eq.s32.totalorder %s125, 0
      %p845 = por %p843, %p844
      %p846 = scmp.ne.s32.totalorder %s832, %s833
      %p847 = scmp.eq.s32.totalorder %s126, 1
      %p848 = por %p846, %p847
      %p850 = scmp.ne.s32.totalorder %s833, %s849
      %p851 = scmp.eq.s32.totalorder %s126, 0
      %p852 = por %p850, %p851
      %s853 = ssub.s32 %s120, %s127
      %p854 = scmp.eq.s32.totalorder %s853, 0
      %s856 = sadd.s32 %s855, 1
      %s857 = scalar_select %p854, %s855, %s856
      %p860 = pneg %p854
      %p861 = scmp.eq.s32.totalorder %s120, 1
      %p862 = por %p860, %p861
      %p863 = scmp.ne.s32.totalorder %s855, %s858
      %p864 = scmp.eq.s32.totalorder %s120, 0
      %p865 = por %p863, %p864
      %p866 = scmp.ne.s32.totalorder %s855, %s858
      %p867 = scmp.eq.s32.totalorder %s125, 1
      %p868 = por %p866, %p867
      %p869 = scmp.ne.s32.totalorder %s858, %s859
      %p870 = scmp.eq.s32.totalorder %s125, 0
      %p871 = por %p869, %p870
      %p872 = scmp.ne.s32.totalorder %s858, %s859
      %p873 = scmp.eq.s32.totalorder %s126, 1
      %p874 = por %p872, %p873
      %p876 = scmp.ne.s32.totalorder %s859, %s875
      %p877 = scmp.eq.s32.totalorder %s126, 0
      %p878 = por %p876, %p877
      %s879 = ssub.s32 %s120, %s127
      %p880 = scmp.eq.s32.totalorder %s879, 0
      %s882 = sadd.s32 %s881, 1
      %s883 = scalar_select %p880, %s881, %s882
      %p886 = pneg %p880
      %p887 = scmp.eq.s32.totalorder %s120, 1
      %p888 = por %p886, %p887
      %p889 = scmp.ne.s32.totalorder %s881, %s884
      %p890 = scmp.eq.s32.totalorder %s120, 0
      %p891 = por %p889, %p890
      %p892 = scmp.ne.s32.totalorder %s881, %s884
      %p893 = scmp.eq.s32.totalorder %s125, 1
      %p894 = por %p892, %p893
      %p895 = scmp.ne.s32.totalorder %s884, %s885
      %p896 = scmp.eq.s32.totalorder %s125, 0
      %p897 = por %p895, %p896
      %p898 = scmp.ne.s32.totalorder %s884, %s885
      %p899 = scmp.eq.s32.totalorder %s126, 1
      %p900 = por %p898, %p899
      %p902 = scmp.ne.s32.totalorder %s885, %s901
      %p903 = scmp.eq.s32.totalorder %s126, 0
      %p904 = por %p902, %p903
      %s905 = ssub.s32 %s120, %s127
      %p906 = scmp.eq.s32.totalorder %s905, 0
      %s908 = sadd.s32 %s907, 1
      %s909 = scalar_select %p906, %s907, %s908
      %p912 = pneg %p906
      %p913 = scmp.eq.s32.totalorder %s120, 1
      %p914 = por %p912, %p913
      %p915 = scmp.ne.s32.totalorder %s907, %s910
      %p916 = scmp.eq.s32.totalorder %s120, 0
      %p917 = por %p915, %p916
      %p918 = scmp.ne.s32.totalorder %s907, %s910
      %p919 = scmp.eq.s32.totalorder %s125, 1
      %p920 = por %p918, %p919
      %p921 = scmp.ne.s32.totalorder %s910, %s911
      %p922 = scmp.eq.s32.totalorder %s125, 0
      %p923 = por %p921, %p922
      %p924 = scmp.ne.s32.totalorder %s910, %s911
      %p925 = scmp.eq.s32.totalorder %s126, 1
      %p926 = por %p924, %p925
      %p928 = scmp.ne.s32.totalorder %s911, %s927
      %p929 = scmp.eq.s32.totalorder %s126, 0
      %p930 = por %p928, %p929
      %s931 = ssub.s32 %s120, %s127
      %p932 = scmp.eq.s32.totalorder %s931, 0
      %s934 = sadd.s32 %s933, 1
      %s935 = scalar_select %p932, %s933, %s934
      %p938 = pneg %p932
      %p939 = scmp.eq.s32.totalorder %s120, 1
      %p940 = por %p938, %p939
      %p941 = scmp.ne.s32.totalorder %s933, %s936
      %p942 = scmp.eq.s32.totalorder %s120, 0
      %p943 = por %p941, %p942
      %p944 = scmp.ne.s32.totalorder %s933, %s936
      %p945 = scmp.eq.s32.totalorder %s125, 1
      %p946 = por %p944, %p945
      %p947 = scmp.ne.s32.totalorder %s936, %s937
      %p948 = scmp.eq.s32.totalorder %s125, 0
      %p949 = por %p947, %p948
      %p950 = scmp.ne.s32.totalorder %s936, %s937
      %p951 = scmp.eq.s32.totalorder %s126, 1
      %p952 = por %p950, %p951
      %p954 = scmp.ne.s32.totalorder %s937, %s953
      %p955 = scmp.eq.s32.totalorder %s126, 0
      %p956 = por %p954, %p955
      %s957 = ssub.s32 %s120, %s127
      %p958 = scmp.eq.s32.totalorder %s957, 0
      %s960 = sadd.s32 %s959, 1
      %s961 = scalar_select %p958, %s959, %s960
      %p964 = pneg %p958
      %p965 = scmp.eq.s32.totalorder %s120, 1
      %p966 = por %p964, %p965
      %p967 = scmp.ne.s32.totalorder %s959, %s962
      %p968 = scmp.eq.s32.totalorder %s120, 0
      %p969 = por %p967, %p968
      %p970 = scmp.ne.s32.totalorder %s959, %s962
      %p971 = scmp.eq.s32.totalorder %s125, 1
      %p972 = por %p970, %p971
      %p973 = scmp.ne.s32.totalorder %s962, %s963
      %p974 = scmp.eq.s32.totalorder %s125, 0
      %p975 = por %p973, %p974
      %p976 = scmp.ne.s32.totalorder %s962, %s963
      %p977 = scmp.eq.s32.totalorder %s126, 1
      %p978 = por %p976, %p977
      %p980 = scmp.ne.s32.totalorder %s963, %s979
      %p981 = scmp.eq.s32.totalorder %s126, 0
      %p982 = por %p980, %p981
      %s984 = sadd.s32 %s983, 1
      %p987 = scmp.eq.s32.totalorder %s120, 1
      %p988 = scmp.ne.s32.totalorder %s983, %s985
      %p989 = scmp.eq.s32.totalorder %s120, 0
      %p990 = por %p988, %p989
      %p991 = scmp.ne.s32.totalorder %s983, %s985
      %p992 = scmp.eq.s32.totalorder %s125, 1
      %p993 = por %p991, %p992
      %p994 = scmp.ne.s32.totalorder %s985, %s986
      %p995 = scmp.eq.s32.totalorder %s125, 0
      %p996 = por %p994, %p995
      %p997 = scmp.ne.s32.totalorder %s985, %s986
      %p998 = scmp.eq.s32.totalorder %s126, 1
      %p999 = por %p997, %p998
      %p1001 = scmp.ne.s32.totalorder %s986, %s1000
      %p1002 = scmp.eq.s32.totalorder %s126, 0
      %p1003 = por %p1001, %p1002
      %s1005 = sadd.s32 %s1004, 1
      %p1008 = scmp.eq.s32.totalorder %s120, 1
      %p1009 = scmp.ne.s32.totalorder %s1004, %s1006
      %p1010 = scmp.eq.s32.totalorder %s120, 0
      %p1011 = por %p1009, %p1010
      %p1012 = scmp.ne.s32.totalorder %s1004, %s1006
      %p1013 = scmp.eq.s32.totalorder %s125, 1
      %p1014 = por %p1012, %p1013
      %p1015 = scmp.ne.s32.totalorder %s1006, %s1007
      %p1016 = scmp.eq.s32.totalorder %s125, 0
      %p1017 = por %p1015, %p1016
      %p1018 = scmp.ne.s32.totalorder %s1006, %s1007
      %p1019 = scmp.eq.s32.totalorder %s126, 1
      %p1020 = por %p1018, %p1019
      %p1022 = scmp.ne.s32.totalorder %s1007, %s1021
      %p1023 = scmp.eq.s32.totalorder %s126, 0
      %p1024 = por %p1022, %p1023
      %s1026 = sadd.s32 %s1025, 1
      %p1029 = scmp.eq.s32.totalorder %s120, 1
      %p1030 = scmp.ne.s32.totalorder %s1025, %s1027
      %p1031 = scmp.eq.s32.totalorder %s120, 0
      %p1032 = por %p1030, %p1031
      %p1033 = scmp.ne.s32.totalorder %s1025, %s1027
      %p1034 = scmp.eq.s32.totalorder %s125, 1
      %p1035 = por %p1033, %p1034
      %p1036 = scmp.ne.s32.totalorder %s1027, %s1028
      %p1037 = scmp.eq.s32.totalorder %s125, 0
      %p1038 = por %p1036, %p1037
      %p1039 = scmp.ne.s32.totalorder %s1027, %s1028
      %p1040 = scmp.eq.s32.totalorder %s126, 1
      %p1041 = por %p1039, %p1040
      %p1043 = scmp.ne.s32.totalorder %s1028, %s1042
      %p1044 = scmp.eq.s32.totalorder %s126, 0
      %p1045 = por %p1043, %p1044
      %p1046 = scmp.le.s32.totalorder 1, %s120
      %p1047 = scmp.lt.s32.totalorder %s120, 3
      %p1048 = pnand %p1046, %p1047
      %p1049 = pneg %p1048
      // Predicated region
      $region9: #{tpu_custom_call.1} parent=5 // pred_check
        _
      $region10: #{tpu_custom_call.1} parent=5 // pred_check_branch
        %1051 = sbr.rel (%p1048) target = $region12
      $region11: #{tpu_custom_call.1} parent=5 // pred_region
        %s1052 = ssub.s32 %s120, 1
        // Predicated region
        $region13: #{tpu_custom_call.1} parent=11 // pred_check
          %p1053 = pneg %p141
        $region14: #{tpu_custom_call.1} parent=11 // pred_check_branch
          %1055 = sbr.rel (%p1053) target = $region16
        $region15: #{tpu_custom_call.1} parent=11 // pred_region
          %1057 = vsyncadd [#allocation6], 0
          %s1059 = sshll.u32 %s1, 4
          %s1060 = int_to_ptr.hbm [resolvable:$true] %s1059
          %s1061 = sshll.u32 [#allocation5], 4
          %s1062 = int_to_ptr.vmem [resolvable:$true] %s1061
          %1064 = dma.hbm_to_vmem [thread:$0]  %s1060, 64, %s1062, [#allocation6]
        $region16: #{tpu_custom_call.1} parent=11 // pred_fallthru
          _
        // Predicated region
        $region17: #{tpu_custom_call.1} parent=11 // pred_check
          %p1065 = pneg %p162
        $region18: #{tpu_custom_call.1} parent=11 // pred_check_branch
          %1067 = sbr.rel (%p1065) target = $region20
        $region19: #{tpu_custom_call.1} parent=11 // pred_region
          %1069 = vsyncadd [#allocation9], 0
          %s1071 = sshll.u32 %s3, 4
          %s1072 = int_to_ptr.hbm [resolvable:$true] %s1071
          %s1073 = sshll.u32 [#allocation8], 4
          %s1074 = int_to_ptr.vmem [resolvable:$true] %s1073
          %1076 = dma.hbm_to_vmem [thread:$0]  %s1072, 32, %s1074, [#allocation9]
        $region20: #{tpu_custom_call.1} parent=11 // pred_fallthru
          _
        // Predicated region
        $region21: #{tpu_custom_call.1} parent=11 // pred_check
          %p1077 = pneg %p183
        $region22: #{tpu_custom_call.1} parent=11 // pred_check_branch
          %1079 = sbr.rel (%p1077) target = $region24
        $region23: #{tpu_custom_call.1} parent=11 // pred_region
          %1081 = vsyncadd [#allocation9], 0
          %s1083 = sshll.u32 %s5, 4
          %s1084 = int_to_ptr.hbm [resolvable:$true] %s1083
          %s1085 = sshll.u32 [#allocation10], 4
          %s1086 = int_to_ptr.vmem [resolvable:$true] %s1085
          %1088 = dma.hbm_to_vmem [thread:$0]  %s1084, 256, %s1086, [#allocation9]
        $region24: #{tpu_custom_call.1} parent=11 // pred_fallthru
          _
        // Predicated region
        $region25: #{tpu_custom_call.1} parent=11 // pred_check
          %p1089 = pneg %p204
        $region26: #{tpu_custom_call.1} parent=11 // pred_check_branch
          %1091 = sbr.rel (%p1089) target = $region28
        $region27: #{tpu_custom_call.1} parent=11 // pred_region
          %1093 = vsyncadd [#allocation12], 0
          %s1095 = sshll.u32 %s7, 4
          %s1096 = int_to_ptr.hbm [resolvable:$true] %s1095
          %s1097 = sshll.u32 [#allocation11], 4
          %s1098 = int_to_ptr.vmem [resolvable:$true] %s1097
          %1100 = dma.hbm_to_vmem [thread:$0]  %s1096, 32, %s1098, [#allocation12]
        $region28: #{tpu_custom_call.1} parent=11 // pred_fallthru
          _
        // Predicated region
        $region29: #{tpu_custom_call.1} parent=11 // pred_check
          %p1101 = pneg %p225
        $region30: #{tpu_custom_call.1} parent=11 // pred_check_branch
          %1103 = sbr.rel (%p1101) target = $region32
        $region31: #{tpu_custom_call.1} parent=11 // pred_region
          %1105 = vsyncadd [#allocation12], 0
          %s1107 = sshll.u32 %s9, 4
          %s1108 = int_to_ptr.hbm [resolvable:$true] %s1107
          %s1109 = sshll.u32 [#allocation13], 4
          %s1110 = int_to_ptr.vmem [resolvable:$true] %s1109
          %1112 = dma.hbm_to_vmem [thread:$0]  %s1108, 16, %s1110, [#allocation12]
        $region32: #{tpu_custom_call.1} parent=11 // pred_fallthru
          _
        // Predicated region
        $region33: #{tpu_custom_call.1} parent=11 // pred_check
          %p1113 = pneg %p246
        $region34: #{tpu_custom_call.1} parent=11 // pred_check_branch
          %1115 = sbr.rel (%p1113) target = $region36
        $region35: #{tpu_custom_call.1} parent=11 // pred_region
          %1117 = vsyncadd [#allocation15], 0
          %s1119 = sshll.u32 %s11, 4
          %s1120 = int_to_ptr.hbm [resolvable:$true] %s1119
          %s1121 = sshll.u32 [#allocation14], 4
          %s1122 = int_to_ptr.vmem [resolvable:$true] %s1121
          %1124 = dma.hbm_to_vmem [thread:$0]  %s1120, 128, %s1122, [#allocation15]
        $region36: #{tpu_custom_call.1} parent=11 // pred_fallthru
          _
        // Predicated region
        $region37: #{tpu_custom_call.1} parent=11 // pred_check
          %p1125 = pneg %p267
        $region38: #{tpu_custom_call.1} parent=11 // pred_check_branch
          %1127 = sbr.rel (%p1125) target = $region40
        $region39: #{tpu_custom_call.1} parent=11 // pred_region
          %1129 = vsyncadd [#allocation15], 0
          %s1131 = sshll.u32 %s13, 4
          %s1132 = int_to_ptr.hbm [resolvable:$true] %s1131
          %s1133 = sshll.u32 [#allocation16], 4
          %s1134 = int_to_ptr.vmem [resolvable:$true] %s1133
          %1136 = dma.hbm_to_vmem [thread:$0]  %s1132, 32, %s1134, [#allocation15]
        $region40: #{tpu_custom_call.1} parent=11 // pred_fallthru
          _
        // Predicated region
        $region41: #{tpu_custom_call.1} parent=11 // pred_check
          %p1137 = pneg %p288
        $region42: #{tpu_custom_call.1} parent=11 // pred_check_branch
          %1139 = sbr.rel (%p1137) target = $region44
        $region43: #{tpu_custom_call.1} parent=11 // pred_region
          %1141 = vsyncadd [#allocation18], 0
          %s1142 = sshll.u32 %s15, 4
          %s1143 = int_to_ptr.hbm [resolvable:$true] %s1142
          %s1144 = sshll.u32 [#allocation17], 4
          %s1145 = int_to_ptr.vmem [resolvable:$true] %s1144
          %1150 = dma.hbm_to_vmem [thread:$0]  %s1143, 4096, %s1145, [#allocation18], 128, 128, 8
        $region44: #{tpu_custom_call.1} parent=11 // pred_fallthru
          _
        // Predicated region
        $region45: #{tpu_custom_call.1} parent=11 // pred_check
          %p1151 = pneg %p309
        $region46: #{tpu_custom_call.1} parent=11 // pred_check_branch
          %1153 = sbr.rel (%p1151) target = $region48
        $region47: #{tpu_custom_call.1} parent=11 // pred_region
          %1155 = vsyncadd [#allocation18], 0
          %s1157 = sshll.u32 %s17, 4
          %s1158 = int_to_ptr.hbm [resolvable:$true] %s1157
          %s1159 = sshll.u32 [#allocation19], 4
          %s1160 = int_to_ptr.vmem [resolvable:$true] %s1159
          %1162 = dma.hbm_to_vmem [thread:$0]  %s1158, 32, %s1160, [#allocation18]
        $region48: #{tpu_custom_call.1} parent=11 // pred_fallthru
          _
        // Predicated region
        $region49: #{tpu_custom_call.1} parent=11 // pred_check
          %p1163 = pneg %p330
        $region50: #{tpu_custom_call.1} parent=11 // pred_check_branch
          %1165 = sbr.rel (%p1163) target = $region52
        $region51: #{tpu_custom_call.1} parent=11 // pred_region
          %1167 = vsyncadd [#allocation21], 0
          %s1168 = sshll.u32 %s19, 4
          %s1169 = int_to_ptr.hbm [resolvable:$true] %s1168
          %s1170 = sshll.u32 [#allocation20], 4
          %s1171 = int_to_ptr.vmem [resolvable:$true] %s1170
          %1176 = dma.hbm_to_vmem [thread:$0]  %s1169, 4096, %s1171, [#allocation21], 128, 128, 8
        $region52: #{tpu_custom_call.1} parent=11 // pred_fallthru
          _
        // Predicated region
        $region53: #{tpu_custom_call.1} parent=11 // pred_check
          %p1177 = pneg %p351
        $region54: #{tpu_custom_call.1} parent=11 // pred_check_branch
          %1179 = sbr.rel (%p1177) target = $region56
        $region55: #{tpu_custom_call.1} parent=11 // pred_region
          %1181 = vsyncadd [#allocation21], 0
          %s1183 = sshll.u32 %s21, 4
          %s1184 = int_to_ptr.hbm [resolvable:$true] %s1183
          %s1185 = sshll.u32 [#allocation22], 4
          %s1186 = int_to_ptr.vmem [resolvable:$true] %s1185
          %1188 = dma.hbm_to_vmem [thread:$0]  %s1184, 32, %s1186, [#allocation21]
        $region56: #{tpu_custom_call.1} parent=11 // pred_fallthru
          _
      $region12: #{tpu_custom_call.1} parent=5 // pred_fallthru
        _
      %p1189 = scmp.lt.s32.totalorder %s120, 2
      // Predicated region
      $region57: #{tpu_custom_call.1} parent=5 // pred_check
        %p1190 = pneg %p1189
      $region58: #{tpu_custom_call.1} parent=5 // pred_check_branch
        %1192 = sbr.rel (%p1190) target = $region60
      $region59: #{tpu_custom_call.1} parent=5 // pred_region
        // Predicated region
        $region61: #{tpu_custom_call.1} parent=59 // pred_check
          %p1193 = pneg %p371
        $region62: #{tpu_custom_call.1} parent=59 // pred_check_branch
          %1195 = sbr.rel (%p1193) target = $region64
        $region63: #{tpu_custom_call.1} parent=59 // pred_region
          %s1196 = sand.u32 %s120, 1
          %s1197 = scalar_lea.sflag [#allocation24], %s1196
          %s1198 = sand.u32 %s361, 1
          %s1199 = smul.addr %s1198, 2
          %s1200 = scalar_lea.vmem [#allocation23], %s1199
          %1202 = vsyncadd %s1197, 0
          %s1203 = smul.addr %s120, 2
          %s1204 = scalar_lea.hbm %s23, %s1203
          %s1206 = sshll.u32 %s1204, 4
          %s1207 = int_to_ptr.hbm [resolvable:$true] %s1206
          %s1208 = sshll.u32 %s1200, 4
          %s1209 = int_to_ptr.vmem [resolvable:$true] %s1208
          %1211 = dma.hbm_to_vmem [thread:$0]  %s1207, 32, %s1209, %s1197
        $region64: #{tpu_custom_call.1} parent=59 // pred_fallthru
          _
        // Predicated region
        $region65: #{tpu_custom_call.1} parent=59 // pred_check
          %p1212 = pneg %p397
        $region66: #{tpu_custom_call.1} parent=59 // pred_check_branch
          %1214 = sbr.rel (%p1212) target = $region68
        $region67: #{tpu_custom_call.1} parent=59 // pred_region
          %s1215 = sand.u32 %s120, 1
          %s1216 = scalar_lea.sflag [#allocation24], %s1215
          %s1217 = sand.u32 %s387, 1
          %s1218 = smul.addr %s1217, 2
          %s1219 = scalar_lea.vmem [#allocation25], %s1218
          %1221 = vsyncadd %s1216, 0
          %s1222 = smul.addr %s120, 2
          %s1223 = scalar_lea.hbm %s25, %s1222
          %s1225 = sshll.u32 %s1223, 4
          %s1226 = int_to_ptr.hbm [resolvable:$true] %s1225
          %s1227 = sshll.u32 %s1219, 4
          %s1228 = int_to_ptr.vmem [resolvable:$true] %s1227
          %1230 = dma.hbm_to_vmem [thread:$0]  %s1226, 32, %s1228, %s1216
        $region68: #{tpu_custom_call.1} parent=59 // pred_fallthru
          _
        // Predicated region
        $region69: #{tpu_custom_call.1} parent=59 // pred_check
          %p1231 = pneg %p423
        $region70: #{tpu_custom_call.1} parent=59 // pred_check_branch
          %1233 = sbr.rel (%p1231) target = $region72
        $region71: #{tpu_custom_call.1} parent=59 // pred_region
          %s1234 = sand.u32 %s120, 1
          %s1235 = scalar_lea.sflag [#allocation27], %s1234
          %s1236 = sand.u32 %s413, 1
          %s1237 = smul.addr %s1236, 768
          %s1238 = scalar_lea.vmem [#allocation26], %s1237
          %1240 = vsyncadd %s1235, 0
          %s1241 = smul.addr %s120, 192
          %s1242 = smul.addr %s1241, 4
          %s1243 = scalar_lea.hbm %s27, %s1242
          %s1244 = sshll.u32 %s1243, 4
          %s1245 = int_to_ptr.hbm [resolvable:$true] %s1244
          %s1246 = sshll.u32 %s1238, 4
          %s1247 = int_to_ptr.vmem [resolvable:$true] %s1246
          %1252 = dma.hbm_to_vmem [thread:$0]  %s1245, 12288, %s1247, %s1235, 384, 384, 24
        $region72: #{tpu_custom_call.1} parent=59 // pred_fallthru
          _
        // Predicated region
        $region73: #{tpu_custom_call.1} parent=59 // pred_check
          %p1253 = pneg %p449
        $region74: #{tpu_custom_call.1} parent=59 // pred_check_branch
          %1255 = sbr.rel (%p1253) target = $region76
        $region75: #{tpu_custom_call.1} parent=59 // pred_region
          %p1256 = scmp.lt.s32.totalorder %s120, 1
          %s1257 = scalar_select %p1256, %s120, 1
          %s1258 = smul.addr %s1257, 6
          %s1259 = scalar_lea.vmem %s29, %s1258
        $region76: #{tpu_custom_call.1} parent=59 // pred_fallthru
          _
        // Predicated region
        $region77: #{tpu_custom_call.1} parent=59 // pred_check
          %p1260 = pneg %p475
        $region78: #{tpu_custom_call.1} parent=59 // pred_check_branch
          %1262 = sbr.rel (%p1260) target = $region80
        $region79: #{tpu_custom_call.1} parent=59 // pred_region
          %s1263 = sand.u32 %s120, 1
          %s1264 = scalar_lea.sflag [#allocation27], %s1263
          %s1265 = sand.u32 %s465, 1
          %s1266 = smul.addr %s1265, 256
          %s1267 = scalar_lea.vmem [#allocation28], %s1266
          %1269 = vsyncadd %s1264, 0
          %s1270 = smul.addr %s120, 64
          %s1271 = smul.addr %s1270, 4
          %s1272 = scalar_lea.hbm %s31, %s1271
          %s1273 = sshll.u32 %s1272, 4
          %s1274 = int_to_ptr.hbm [resolvable:$true] %s1273
          %s1275 = sshll.u32 %s1267, 4
          %s1276 = int_to_ptr.vmem [resolvable:$true] %s1275
          %1281 = dma.hbm_to_vmem [thread:$0]  %s1274, 4096, %s1276, %s1264, 128, 128, 8
        $region80: #{tpu_custom_call.1} parent=59 // pred_fallthru
          _
        // Predicated region
        $region81: #{tpu_custom_call.1} parent=59 // pred_check
          %p1282 = pneg %p501
        $region82: #{tpu_custom_call.1} parent=59 // pred_check_branch
          %1284 = sbr.rel (%p1282) target = $region84
        $region83: #{tpu_custom_call.1} parent=59 // pred_region
          %s1285 = sand.u32 %s120, 1
          %s1286 = scalar_lea.sflag [#allocation30], %s1285
          %s1287 = sand.u32 %s491, 1
          %s1288 = smul.addr %s1287, 2
          %s1289 = scalar_lea.vmem [#allocation29], %s1288
          %1291 = vsyncadd %s1286, 0
          %s1292 = smul.addr %s120, 2
          %s1293 = scalar_lea.hbm %s33, %s1292
          %s1295 = sshll.u32 %s1293, 4
          %s1296 = int_to_ptr.hbm [resolvable:$true] %s1295
          %s1297 = sshll.u32 %s1289, 4
          %s1298 = int_to_ptr.vmem [resolvable:$true] %s1297
          %1300 = dma.hbm_to_vmem [thread:$0]  %s1296, 32, %s1298, %s1286
        $region84: #{tpu_custom_call.1} parent=59 // pred_fallthru
          _
        // Predicated region
        $region85: #{tpu_custom_call.1} parent=59 // pred_check
          %p1301 = pneg %p527
        $region86: #{tpu_custom_call.1} parent=59 // pred_check_branch
          %1303 = sbr.rel (%p1301) target = $region88
        $region87: #{tpu_custom_call.1} parent=59 // pred_region
          %s1304 = sand.u32 %s120, 1
          %s1305 = scalar_lea.sflag [#allocation30], %s1304
          %s1306 = sand.u32 %s517, 1
          %s1307 = smul.addr %s1306, 512
          %s1308 = scalar_lea.vmem [#allocation31], %s1307
          %1310 = vsyncadd %s1305, 0
          %s1311 = smul.addr %s120, 128
          %s1312 = smul.addr %s1311, 4
          %s1313 = scalar_lea.hbm %s35, %s1312
          %s1314 = sshll.u32 %s1313, 4
          %s1315 = int_to_ptr.hbm [resolvable:$true] %s1314
          %s1316 = sshll.u32 %s1308, 4
          %s1317 = int_to_ptr.vmem [resolvable:$true] %s1316
          %1322 = dma.hbm_to_vmem [thread:$0]  %s1315, 8192, %s1317, %s1305, 256, 256, 16
        $region88: #{tpu_custom_call.1} parent=59 // pred_fallthru
          _
        // Predicated region
        $region89: #{tpu_custom_call.1} parent=59 // pred_check
          %p1323 = pneg %p553
        $region90: #{tpu_custom_call.1} parent=59 // pred_check_branch
          %1325 = sbr.rel (%p1323) target = $region92
        $region91: #{tpu_custom_call.1} parent=59 // pred_region
          %s1326 = sand.u32 %s120, 1
          %s1327 = scalar_lea.sflag [#allocation33], %s1326
          %s1328 = sand.u32 %s543, 1
          %s1329 = smul.addr %s1328, 512
          %s1330 = scalar_lea.vmem [#allocation32], %s1329
          %1332 = vsyncadd %s1327, 0
          %s1333 = smul.addr %s120, 128
          %s1334 = smul.addr %s1333, 4
          %s1335 = scalar_lea.hbm %s37, %s1334
          %s1336 = sshll.u32 %s1335, 4
          %s1337 = int_to_ptr.hbm [resolvable:$true] %s1336
          %s1338 = sshll.u32 %s1330, 4
          %s1339 = int_to_ptr.vmem [resolvable:$true] %s1338
          %1344 = dma.hbm_to_vmem [thread:$0]  %s1337, 8192, %s1339, %s1327, 256, 256, 16
        $region92: #{tpu_custom_call.1} parent=59 // pred_fallthru
          _
        // Predicated region
        $region93: #{tpu_custom_call.1} parent=59 // pred_check
          %p1345 = pneg %p579
        $region94: #{tpu_custom_call.1} parent=59 // pred_check_branch
          %1347 = sbr.rel (%p1345) target = $region96
        $region95: #{tpu_custom_call.1} parent=59 // pred_region
          %s1348 = sand.u32 %s120, 1
          %s1349 = scalar_lea.sflag [#allocation33], %s1348
          %s1350 = sand.u32 %s569, 1
          %s1351 = smul.addr %s1350, 4
          %s1352 = scalar_lea.vmem [#allocation34], %s1351
          %1354 = vsyncadd %s1349, 0
          %s1355 = smul.addr %s120, 4
          %s1356 = scalar_lea.hbm %s39, %s1355
          %s1358 = sshll.u32 %s1356, 4
          %s1359 = int_to_ptr.hbm [resolvable:$true] %s1358
          %s1360 = sshll.u32 %s1352, 4
          %s1361 = int_to_ptr.vmem [resolvable:$true] %s1360
          %1363 = dma.hbm_to_vmem [thread:$0]  %s1359, 64, %s1361, %s1349
        $region96: #{tpu_custom_call.1} parent=59 // pred_fallthru
          _
        // Predicated region
        $region97: #{tpu_custom_call.1} parent=59 // pred_check
          %p1364 = pneg %p605
        $region98: #{tpu_custom_call.1} parent=59 // pred_check_branch
          %1366 = sbr.rel (%p1364) target = $region100
        $region99: #{tpu_custom_call.1} parent=59 // pred_region
          %s1367 = sand.u32 %s120, 1
          %s1368 = scalar_lea.sflag [#allocation36], %s1367
          %s1369 = sand.u32 %s595, 1
          %s1370 = smul.addr %s1369, 256
          %s1371 = scalar_lea.vmem [#allocation35], %s1370
          %1373 = vsyncadd %s1368, 0
          %s1374 = smul.addr %s120, 64
          %s1375 = smul.addr %s1374, 4
          %s1376 = scalar_lea.hbm %s41, %s1375
          %s1377 = sshll.u32 %s1376, 4
          %s1378 = int_to_ptr.hbm [resolvable:$true] %s1377
          %s1379 = sshll.u32 %s1371, 4
          %s1380 = int_to_ptr.vmem [resolvable:$true] %s1379
          %1385 = dma.hbm_to_vmem [thread:$0]  %s1378, 4096, %s1380, %s1368, 128, 128, 8
        $region100: #{tpu_custom_call.1} parent=59 // pred_fallthru
          _
        // Predicated region
        $region101: #{tpu_custom_call.1} parent=59 // pred_check
          %p1386 = pneg %p631
        $region102: #{tpu_custom_call.1} parent=59 // pred_check_branch
          %1388 = sbr.rel (%p1386) target = $region104
        $region103: #{tpu_custom_call.1} parent=59 // pred_region
          %s1389 = sand.u32 %s120, 1
          %s1390 = scalar_lea.sflag [#allocation36], %s1389
          %s1391 = sand.u32 %s621, 1
          %s1392 = smul.addr %s1391, 256
          %s1393 = scalar_lea.vmem [#allocation37], %s1392
          %1395 = vsyncadd %s1390, 0
          %s1396 = smul.addr %s120, 64
          %s1397 = smul.addr %s1396, 4
          %s1398 = scalar_lea.hbm %s43, %s1397
          %s1399 = sshll.u32 %s1398, 4
          %s1400 = int_to_ptr.hbm [resolvable:$true] %s1399
          %s1401 = sshll.u32 %s1393, 4
          %s1402 = int_to_ptr.vmem [resolvable:$true] %s1401
          %1407 = dma.hbm_to_vmem [thread:$0]  %s1400, 4096, %s1402, %s1390, 128, 128, 8
        $region104: #{tpu_custom_call.1} parent=59 // pred_fallthru
          _
        // Predicated region
        $region105: #{tpu_custom_call.1} parent=59 // pred_check
          %p1408 = pneg %p657
        $region106: #{tpu_custom_call.1} parent=59 // pred_check_branch
          %1410 = sbr.rel (%p1408) target = $region108
        $region107: #{tpu_custom_call.1} parent=59 // pred_region
          %s1411 = sand.u32 %s120, 1
          %s1412 = scalar_lea.sflag [#allocation39], %s1411
          %s1413 = sand.u32 %s647, 1
          %s1414 = smul.addr %s1413, 2
          %s1415 = scalar_lea.vmem [#allocation38], %s1414
          %1417 = vsyncadd %s1412, 0
          %s1418 = smul.addr %s120, 2
          %s1419 = scalar_lea.hbm %s45, %s1418
          %s1421 = sshll.u32 %s1419, 4
          %s1422 = int_to_ptr.hbm [resolvable:$true] %s1421
          %s1423 = sshll.u32 %s1415, 4
          %s1424 = int_to_ptr.vmem [resolvable:$true] %s1423
          %1426 = dma.hbm_to_vmem [thread:$0]  %s1422, 32, %s1424, %s1412
        $region108: #{tpu_custom_call.1} parent=59 // pred_fallthru
          _
        // Predicated region
        $region109: #{tpu_custom_call.1} parent=59 // pred_check
          %p1427 = pneg %p683
        $region110: #{tpu_custom_call.1} parent=59 // pred_check_branch
          %1429 = sbr.rel (%p1427) target = $region112
        $region111: #{tpu_custom_call.1} parent=59 // pred_region
          %s1430 = sand.u32 %s120, 1
          %s1431 = scalar_lea.sflag [#allocation39], %s1430
          %s1432 = sand.u32 %s673, 1
          %s1433 = smul.addr %s1432, 2
          %s1434 = scalar_lea.vmem [#allocation40], %s1433
          %1436 = vsyncadd %s1431, 0
          %s1437 = smul.addr %s120, 2
          %s1438 = scalar_lea.hbm %s47, %s1437
          %s1440 = sshll.u32 %s1438, 4
          %s1441 = int_to_ptr.hbm [resolvable:$true] %s1440
          %s1442 = sshll.u32 %s1434, 4
          %s1443 = int_to_ptr.vmem [resolvable:$true] %s1442
          %1445 = dma.hbm_to_vmem [thread:$0]  %s1441, 32, %s1443, %s1431
        $region112: #{tpu_custom_call.1} parent=59 // pred_fallthru
          _
        // Predicated region
        $region113: #{tpu_custom_call.1} parent=59 // pred_check
          %p1446 = pneg %p709
        $region114: #{tpu_custom_call.1} parent=59 // pred_check_branch
          %1448 = sbr.rel (%p1446) target = $region116
        $region115: #{tpu_custom_call.1} parent=59 // pred_region
          %s1449 = sand.u32 %s120, 1
          %s1450 = scalar_lea.sflag [#allocation42], %s1449
          %s1451 = sand.u32 %s699, 1
          %s1452 = smul.addr %s1451, 2
          %s1453 = scalar_lea.vmem [#allocation41], %s1452
          %1455 = vsyncadd %s1450, 0
          %s1456 = smul.addr %s120, 2
          %s1457 = scalar_lea.hbm %s49, %s1456
          %s1459 = sshll.u32 %s1457, 4
          %s1460 = int_to_ptr.hbm [resolvable:$true] %s1459
          %s1461 = sshll.u32 %s1453, 4
          %s1462 = int_to_ptr.vmem [resolvable:$true] %s1461
          %1464 = dma.hbm_to_vmem [thread:$0]  %s1460, 32, %s1462, %s1450
        $region116: #{tpu_custom_call.1} parent=59 // pred_fallthru
          _
        // Predicated region
        $region117: #{tpu_custom_call.1} parent=59 // pred_check
          %p1465 = pneg %p735
        $region118: #{tpu_custom_call.1} parent=59 // pred_check_branch
          %1467 = sbr.rel (%p1465) target = $region120
        $region119: #{tpu_custom_call.1} parent=59 // pred_region
          %s1468 = sand.u32 %s120, 1
          %s1469 = scalar_lea.sflag [#allocation42], %s1468
          %s1470 = sand.u32 %s725, 1
          %s1471 = smul.addr %s1470, 512
          %s1472 = scalar_lea.vmem [#allocation43], %s1471
          %1474 = vsyncadd %s1469, 0
          %s1475 = smul.addr %s120, 128
          %s1476 = smul.addr %s1475, 4
          %s1477 = scalar_lea.hbm %s51, %s1476
          %s1478 = sshll.u32 %s1477, 4
          %s1479 = int_to_ptr.hbm [resolvable:$true] %s1478
          %s1480 = sshll.u32 %s1472, 4
          %s1481 = int_to_ptr.vmem [resolvable:$true] %s1480
          %1486 = dma.hbm_to_vmem [thread:$0]  %s1479, 8192, %s1481, %s1469, 256, 256, 16
        $region120: #{tpu_custom_call.1} parent=59 // pred_fallthru
          _
        // Predicated region
        $region121: #{tpu_custom_call.1} parent=59 // pred_check
          %p1487 = pneg %p761
        $region122: #{tpu_custom_call.1} parent=59 // pred_check_branch
          %1489 = sbr.rel (%p1487) target = $region124
        $region123: #{tpu_custom_call.1} parent=59 // pred_region
          %p1490 = scmp.lt.s32.totalorder %s120, 1
          %s1491 = scalar_select %p1490, %s120, 1
          %s1492 = smul.addr %s1491, 4
          %s1493 = scalar_lea.vmem %s53, %s1492
        $region124: #{tpu_custom_call.1} parent=59 // pred_fallthru
          _
        // Predicated region
        $region125: #{tpu_custom_call.1} parent=59 // pred_check
          %p1494 = pneg %p787
        $region126: #{tpu_custom_call.1} parent=59 // pred_check_branch
          %1496 = sbr.rel (%p1494) target = $region128
        $region127: #{tpu_custom_call.1} parent=59 // pred_region
          %s1497 = sand.u32 %s120, 1
          %s1498 = scalar_lea.sflag [#allocation45], %s1497
          %s1499 = sand.u32 %s777, 1
          %s1500 = smul.addr %s1499, 512
          %s1501 = scalar_lea.vmem [#allocation44], %s1500
          %1503 = vsyncadd %s1498, 0
          %s1504 = smul.addr %s120, 128
          %s1505 = smul.addr %s1504, 4
          %s1506 = scalar_lea.hbm %s55, %s1505
          %s1507 = sshll.u32 %s1506, 4
          %s1508 = int_to_ptr.hbm [resolvable:$true] %s1507
          %s1509 = sshll.u32 %s1501, 4
          %s1510 = int_to_ptr.vmem [resolvable:$true] %s1509
          %1515 = dma.hbm_to_vmem [thread:$0]  %s1508, 8192, %s1510, %s1498, 128, 128, 8
        $region128: #{tpu_custom_call.1} parent=59 // pred_fallthru
          _
        // Predicated region
        $region129: #{tpu_custom_call.1} parent=59 // pred_check
          %p1516 = pneg %p813
        $region130: #{tpu_custom_call.1} parent=59 // pred_check_branch
          %1518 = sbr.rel (%p1516) target = $region132
        $region131: #{tpu_custom_call.1} parent=59 // pred_region
          %s1519 = sand.u32 %s120, 1
          %s1520 = scalar_lea.sflag [#allocation45], %s1519
          %s1521 = sand.u32 %s803, 1
          %s1522 = smul.addr %s1521, 2
          %s1523 = scalar_lea.vmem [#allocation46], %s1522
          %1525 = vsyncadd %s1520, 0
          %s1526 = smul.addr %s120, 2
          %s1527 = scalar_lea.hbm %s57, %s1526
          %s1529 = sshll.u32 %s1527, 4
          %s1530 = int_to_ptr.hbm [resolvable:$true] %s1529
          %s1531 = sshll.u32 %s1523, 4
          %s1532 = int_to_ptr.vmem [resolvable:$true] %s1531
          %1534 = dma.hbm_to_vmem [thread:$0]  %s1530, 32, %s1532, %s1520
        $region132: #{tpu_custom_call.1} parent=59 // pred_fallthru
          _
        // Predicated region
        $region133: #{tpu_custom_call.1} parent=59 // pred_check
          %p1535 = pneg %p839
        $region134: #{tpu_custom_call.1} parent=59 // pred_check_branch
          %1537 = sbr.rel (%p1535) target = $region136
        $region135: #{tpu_custom_call.1} parent=59 // pred_region
          %s1538 = sand.u32 %s120, 1
          %s1539 = scalar_lea.sflag [#allocation48], %s1538
          %s1540 = sand.u32 %s829, 1
          %s1541 = smul.addr %s1540, 512
          %s1542 = scalar_lea.vmem [#allocation47], %s1541
          %1544 = vsyncadd %s1539, 0
          %s1545 = smul.addr %s120, 128
          %s1546 = smul.addr %s1545, 4
          %s1547 = scalar_lea.hbm %s59, %s1546
          %s1548 = sshll.u32 %s1547, 4
          %s1549 = int_to_ptr.hbm [resolvable:$true] %s1548
          %s1550 = sshll.u32 %s1542, 4
          %s1551 = int_to_ptr.vmem [resolvable:$true] %s1550
          %1556 = dma.hbm_to_vmem [thread:$0]  %s1549, 8192, %s1551, %s1539, 256, 256, 16
        $region136: #{tpu_custom_call.1} parent=59 // pred_fallthru
          _
        // Predicated region
        $region137: #{tpu_custom_call.1} parent=59 // pred_check
          %p1557 = pneg %p865
        $region138: #{tpu_custom_call.1} parent=59 // pred_check_branch
          %1559 = sbr.rel (%p1557) target = $region140
        $region139: #{tpu_custom_call.1} parent=59 // pred_region
          %s1560 = sand.u32 %s120, 1
          %s1561 = scalar_lea.sflag [#allocation48], %s1560
          %s1562 = sand.u32 %s855, 1
          %s1563 = smul.addr %s1562, 512
          %s1564 = scalar_lea.vmem [#allocation49], %s1563
          %1566 = vsyncadd %s1561, 0
          %s1567 = smul.addr %s120, 128
          %s1568 = smul.addr %s1567, 4
          %s1569 = scalar_lea.hbm %s61, %s1568
          %s1570 = sshll.u32 %s1569, 4
          %s1571 = int_to_ptr.hbm [resolvable:$true] %s1570
          %s1572 = sshll.u32 %s1564, 4
          %s1573 = int_to_ptr.vmem [resolvable:$true] %s1572
          %1578 = dma.hbm_to_vmem [thread:$0]  %s1571, 8192, %s1573, %s1561, 256, 256, 16
        $region140: #{tpu_custom_call.1} parent=59 // pred_fallthru
          _
        // Predicated region
        $region141: #{tpu_custom_call.1} parent=59 // pred_check
          %p1579 = pneg %p891
        $region142: #{tpu_custom_call.1} parent=59 // pred_check_branch
          %1581 = sbr.rel (%p1579) target = $region144
        $region143: #{tpu_custom_call.1} parent=59 // pred_region
          %p1582 = scmp.lt.s32.totalorder %s120, 1
          %s1583 = scalar_select %p1582, %s120, 1
          %s1584 = smul.addr %s1583, 4
          %s1585 = scalar_lea.vmem %s63, %s1584
        $region144: #{tpu_custom_call.1} parent=59 // pred_fallthru
          _
        // Predicated region
        $region145: #{tpu_custom_call.1} parent=59 // pred_check
          %p1586 = pneg %p917
        $region146: #{tpu_custom_call.1} parent=59 // pred_check_branch
          %1588 = sbr.rel (%p1586) target = $region148
        $region147: #{tpu_custom_call.1} parent=59 // pred_region
          %s1589 = sand.u32 %s120, 1
          %s1590 = scalar_lea.sflag [#allocation51], %s1589
          %s1591 = sand.u32 %s907, 1
          %s1592 = smul.addr %s1591, 256
          %s1593 = scalar_lea.vmem [#allocation50], %s1592
          %1595 = vsyncadd %s1590, 0
          %s1596 = smul.addr %s120, 64
          %s1597 = smul.addr %s1596, 4
          %s1598 = scalar_lea.hbm %s65, %s1597
          %s1599 = sshll.u32 %s1598, 4
          %s1600 = int_to_ptr.hbm [resolvable:$true] %s1599
          %s1601 = sshll.u32 %s1593, 4
          %s1602 = int_to_ptr.vmem [resolvable:$true] %s1601
          %1607 = dma.hbm_to_vmem [thread:$0]  %s1600, 4096, %s1602, %s1590, 128, 128, 8
        $region148: #{tpu_custom_call.1} parent=59 // pred_fallthru
          _
        // Predicated region
        $region149: #{tpu_custom_call.1} parent=59 // pred_check
          %p1608 = pneg %p943
        $region150: #{tpu_custom_call.1} parent=59 // pred_check_branch
          %1610 = sbr.rel (%p1608) target = $region152
        $region151: #{tpu_custom_call.1} parent=59 // pred_region
          %s1611 = sand.u32 %s120, 1
          %s1612 = scalar_lea.sflag [#allocation51], %s1611
          %s1613 = sand.u32 %s933, 1
          %s1614 = smul.addr %s1613, 256
          %s1615 = scalar_lea.vmem [#allocation52], %s1614
          %1617 = vsyncadd %s1612, 0
          %s1618 = smul.addr %s120, 64
          %s1619 = smul.addr %s1618, 4
          %s1620 = scalar_lea.hbm %s67, %s1619
          %s1621 = sshll.u32 %s1620, 4
          %s1622 = int_to_ptr.hbm [resolvable:$true] %s1621
          %s1623 = sshll.u32 %s1615, 4
          %s1624 = int_to_ptr.vmem [resolvable:$true] %s1623
          %1629 = dma.hbm_to_vmem [thread:$0]  %s1622, 4096, %s1624, %s1612, 128, 128, 8
        $region152: #{tpu_custom_call.1} parent=59 // pred_fallthru
          _
        // Predicated region
        $region153: #{tpu_custom_call.1} parent=59 // pred_check
          %p1630 = pneg %p969
        $region154: #{tpu_custom_call.1} parent=59 // pred_check_branch
          %1632 = sbr.rel (%p1630) target = $region156
        $region155: #{tpu_custom_call.1} parent=59 // pred_region
          %p1633 = scmp.lt.s32.totalorder %s120, 1
          %s1634 = scalar_select %p1633, %s120, 1
          %s1635 = smul.addr %s1634, 2
          %s1636 = scalar_lea.vmem %s69, %s1635
        $region156: #{tpu_custom_call.1} parent=59 // pred_fallthru
          _
      $region60: #{tpu_custom_call.1} parent=5 // pred_fallthru
        _
      %p1637 = scmp.le.s32.totalorder 1, %s120
      %p1638 = scmp.lt.s32.totalorder %s120, 3
      %p1639 = pnand %p1637, %p1638
      %p1640 = pneg %p1639
      // Predicated region
      $region157: #{tpu_custom_call.1} parent=5 // pred_check
        _
      $region158: #{tpu_custom_call.1} parent=5 // pred_check_branch
        %1642 = sbr.rel (%p1639) target = $region160
      $region159: #{tpu_custom_call.1} parent=5 // pred_region
        %s1643 = ssub.s32 %s120, 1
        // Predicated region
        $region161: #{tpu_custom_call.1} parent=159 // pred_check
          %p1644 = pneg %p141
        $region162: #{tpu_custom_call.1} parent=159 // pred_check_branch
          %1646 = sbr.rel (%p1644) target = $region164
        $region163: #{tpu_custom_call.1} parent=159 // pred_region
          %1648 = dma.done [#allocation6], 64
        $region164: #{tpu_custom_call.1} parent=159 // pred_fallthru
          _
        // Predicated region
        $region165: #{tpu_custom_call.1} parent=159 // pred_check
          %p1649 = pneg %p162
        $region166: #{tpu_custom_call.1} parent=159 // pred_check_branch
          %1651 = sbr.rel (%p1649) target = $region168
        $region167: #{tpu_custom_call.1} parent=159 // pred_region
          %1653 = dma.done [#allocation9], 32
        $region168: #{tpu_custom_call.1} parent=159 // pred_fallthru
          _
        // Predicated region
        $region169: #{tpu_custom_call.1} parent=159 // pred_check
          %p1654 = pneg %p183
        $region170: #{tpu_custom_call.1} parent=159 // pred_check_branch
          %1656 = sbr.rel (%p1654) target = $region172
        $region171: #{tpu_custom_call.1} parent=159 // pred_region
          %1658 = dma.done [#allocation9], 256
        $region172: #{tpu_custom_call.1} parent=159 // pred_fallthru
          _
        // Predicated region
        $region173: #{tpu_custom_call.1} parent=159 // pred_check
          %p1659 = pneg %p204
        $region174: #{tpu_custom_call.1} parent=159 // pred_check_branch
          %1661 = sbr.rel (%p1659) target = $region176
        $region175: #{tpu_custom_call.1} parent=159 // pred_region
          %1663 = dma.done [#allocation12], 32
        $region176: #{tpu_custom_call.1} parent=159 // pred_fallthru
          _
        // Predicated region
        $region177: #{tpu_custom_call.1} parent=159 // pred_check
          %p1664 = pneg %p225
        $region178: #{tpu_custom_call.1} parent=159 // pred_check_branch
          %1666 = sbr.rel (%p1664) target = $region180
        $region179: #{tpu_custom_call.1} parent=159 // pred_region
          %1668 = dma.done [#allocation12], 16
        $region180: #{tpu_custom_call.1} parent=159 // pred_fallthru
          _
        // Predicated region
        $region181: #{tpu_custom_call.1} parent=159 // pred_check
          %p1669 = pneg %p246
        $region182: #{tpu_custom_call.1} parent=159 // pred_check_branch
          %1671 = sbr.rel (%p1669) target = $region184
        $region183: #{tpu_custom_call.1} parent=159 // pred_region
          %1673 = dma.done [#allocation15], 128
        $region184: #{tpu_custom_call.1} parent=159 // pred_fallthru
          _
        // Predicated region
        $region185: #{tpu_custom_call.1} parent=159 // pred_check
          %p1674 = pneg %p267
        $region186: #{tpu_custom_call.1} parent=159 // pred_check_branch
          %1676 = sbr.rel (%p1674) target = $region188
        $region187: #{tpu_custom_call.1} parent=159 // pred_region
          %1678 = dma.done [#allocation15], 32
        $region188: #{tpu_custom_call.1} parent=159 // pred_fallthru
          _
        // Predicated region
        $region189: #{tpu_custom_call.1} parent=159 // pred_check
          %p1679 = pneg %p288
        $region190: #{tpu_custom_call.1} parent=159 // pred_check_branch
          %1681 = sbr.rel (%p1679) target = $region192
        $region191: #{tpu_custom_call.1} parent=159 // pred_region
          %1683 = dma.done [#allocation18], 4096
        $region192: #{tpu_custom_call.1} parent=159 // pred_fallthru
          _
        // Predicated region
        $region193: #{tpu_custom_call.1} parent=159 // pred_check
          %p1684 = pneg %p309
        $region194: #{tpu_custom_call.1} parent=159 // pred_check_branch
          %1686 = sbr.rel (%p1684) target = $region196
        $region195: #{tpu_custom_call.1} parent=159 // pred_region
          %1688 = dma.done [#allocation18], 32
        $region196: #{tpu_custom_call.1} parent=159 // pred_fallthru
          _
        // Predicated region
        $region197: #{tpu_custom_call.1} parent=159 // pred_check
          %p1689 = pneg %p330
        $region198: #{tpu_custom_call.1} parent=159 // pred_check_branch
          %1691 = sbr.rel (%p1689) target = $region200
        $region199: #{tpu_custom_call.1} parent=159 // pred_region
          %1693 = dma.done [#allocation21], 4096
        $region200: #{tpu_custom_call.1} parent=159 // pred_fallthru
          _
        // Predicated region
        $region201: #{tpu_custom_call.1} parent=159 // pred_check
          %p1694 = pneg %p351
        $region202: #{tpu_custom_call.1} parent=159 // pred_check_branch
          %1696 = sbr.rel (%p1694) target = $region204
        $region203: #{tpu_custom_call.1} parent=159 // pred_region
          %1698 = dma.done [#allocation21], 32
        $region204: #{tpu_custom_call.1} parent=159 // pred_fallthru
          _
        %s1699 = sand.u32 %s125, 1
        %s1700 = scalar_lea.sflag [#allocation24], %s1699
        %s1701 = sand.u32 %s364, 1
        %s1702 = smul.addr %s1701, 2
        %s1703 = scalar_lea.vmem [#allocation23], %s1702
        // Predicated region
        $region205: #{tpu_custom_call.1} parent=159 // pred_check
          %p1704 = pneg %p377
        $region206: #{tpu_custom_call.1} parent=159 // pred_check_branch
          %1706 = sbr.rel (%p1704) target = $region208
        $region207: #{tpu_custom_call.1} parent=159 // pred_region
          %1708 = dma.done %s1700, 32
        $region208: #{tpu_custom_call.1} parent=159 // pred_fallthru
          _
        %s1709 = sand.u32 %s125, 1
        %s1710 = scalar_lea.sflag [#allocation24], %s1709
        %s1711 = sand.u32 %s390, 1
        %s1712 = smul.addr %s1711, 2
        %s1713 = scalar_lea.vmem [#allocation25], %s1712
        // Predicated region
        $region209: #{tpu_custom_call.1} parent=159 // pred_check
          %p1714 = pneg %p403
        $region210: #{tpu_custom_call.1} parent=159 // pred_check_branch
          %1716 = sbr.rel (%p1714) target = $region212
        $region211: #{tpu_custom_call.1} parent=159 // pred_region
          %1718 = dma.done %s1710, 32
        $region212: #{tpu_custom_call.1} parent=159 // pred_fallthru
          _
        %s1719 = sand.u32 %s125, 1
        %s1720 = scalar_lea.sflag [#allocation27], %s1719
        %s1721 = sand.u32 %s416, 1
        %s1722 = smul.addr %s1721, 768
        %s1723 = scalar_lea.vmem [#allocation26], %s1722
        // Predicated region
        $region213: #{tpu_custom_call.1} parent=159 // pred_check
          %p1724 = pneg %p429
        $region214: #{tpu_custom_call.1} parent=159 // pred_check_branch
          %1726 = sbr.rel (%p1724) target = $region216
        $region215: #{tpu_custom_call.1} parent=159 // pred_region
          %1728 = dma.done %s1720, 12288
        $region216: #{tpu_custom_call.1} parent=159 // pred_fallthru
          _
        %s1729 = sand.u32 %s125, 1
        %s1730 = scalar_lea.sflag [#allocation27], %s1729
        %s1731 = sand.u32 %s468, 1
        %s1732 = smul.addr %s1731, 256
        %s1733 = scalar_lea.vmem [#allocation28], %s1732
        // Predicated region
        $region217: #{tpu_custom_call.1} parent=159 // pred_check
          %p1734 = pneg %p481
        $region218: #{tpu_custom_call.1} parent=159 // pred_check_branch
          %1736 = sbr.rel (%p1734) target = $region220
        $region219: #{tpu_custom_call.1} parent=159 // pred_region
          %1738 = dma.done %s1730, 4096
        $region220: #{tpu_custom_call.1} parent=159 // pred_fallthru
          _
        %s1739 = sand.u32 %s125, 1
        %s1740 = scalar_lea.sflag [#allocation30], %s1739
        %s1741 = sand.u32 %s494, 1
        %s1742 = smul.addr %s1741, 2
        %s1743 = scalar_lea.vmem [#allocation29], %s1742
        // Predicated region
        $region221: #{tpu_custom_call.1} parent=159 // pred_check
          %p1744 = pneg %p507
        $region222: #{tpu_custom_call.1} parent=159 // pred_check_branch
          %1746 = sbr.rel (%p1744) target = $region224
        $region223: #{tpu_custom_call.1} parent=159 // pred_region
          %1748 = dma.done %s1740, 32
        $region224: #{tpu_custom_call.1} parent=159 // pred_fallthru
          _
        %s1749 = sand.u32 %s125, 1
        %s1750 = scalar_lea.sflag [#allocation30], %s1749
        %s1751 = sand.u32 %s520, 1
        %s1752 = smul.addr %s1751, 512
        %s1753 = scalar_lea.vmem [#allocation31], %s1752
        // Predicated region
        $region225: #{tpu_custom_call.1} parent=159 // pred_check
          %p1754 = pneg %p533
        $region226: #{tpu_custom_call.1} parent=159 // pred_check_branch
          %1756 = sbr.rel (%p1754) target = $region228
        $region227: #{tpu_custom_call.1} parent=159 // pred_region
          %1758 = dma.done %s1750, 8192
        $region228: #{tpu_custom_call.1} parent=159 // pred_fallthru
          _
        %s1759 = sand.u32 %s125, 1
        %s1760 = scalar_lea.sflag [#allocation33], %s1759
        %s1761 = sand.u32 %s546, 1
        %s1762 = smul.addr %s1761, 512
        %s1763 = scalar_lea.vmem [#allocation32], %s1762
        // Predicated region
        $region229: #{tpu_custom_call.1} parent=159 // pred_check
          %p1764 = pneg %p559
        $region230: #{tpu_custom_call.1} parent=159 // pred_check_branch
          %1766 = sbr.rel (%p1764) target = $region232
        $region231: #{tpu_custom_call.1} parent=159 // pred_region
          %1768 = dma.done %s1760, 8192
        $region232: #{tpu_custom_call.1} parent=159 // pred_fallthru
          _
        %s1769 = sand.u32 %s125, 1
        %s1770 = scalar_lea.sflag [#allocation33], %s1769
        %s1771 = sand.u32 %s572, 1
        %s1772 = smul.addr %s1771, 4
        %s1773 = scalar_lea.vmem [#allocation34], %s1772
        // Predicated region
        $region233: #{tpu_custom_call.1} parent=159 // pred_check
          %p1774 = pneg %p585
        $region234: #{tpu_custom_call.1} parent=159 // pred_check_branch
          %1776 = sbr.rel (%p1774) target = $region236
        $region235: #{tpu_custom_call.1} parent=159 // pred_region
          %1778 = dma.done %s1770, 64
        $region236: #{tpu_custom_call.1} parent=159 // pred_fallthru
          _
        %s1779 = sand.u32 %s125, 1
        %s1780 = scalar_lea.sflag [#allocation36], %s1779
        %s1781 = sand.u32 %s598, 1
        %s1782 = smul.addr %s1781, 256
        %s1783 = scalar_lea.vmem [#allocation35], %s1782
        // Predicated region
        $region237: #{tpu_custom_call.1} parent=159 // pred_check
          %p1784 = pneg %p611
        $region238: #{tpu_custom_call.1} parent=159 // pred_check_branch
          %1786 = sbr.rel (%p1784) target = $region240
        $region239: #{tpu_custom_call.1} parent=159 // pred_region
          %1788 = dma.done %s1780, 4096
        $region240: #{tpu_custom_call.1} parent=159 // pred_fallthru
          _
        %s1789 = sand.u32 %s125, 1
        %s1790 = scalar_lea.sflag [#allocation36], %s1789
        %s1791 = sand.u32 %s624, 1
        %s1792 = smul.addr %s1791, 256
        %s1793 = scalar_lea.vmem [#allocation37], %s1792
        // Predicated region
        $region241: #{tpu_custom_call.1} parent=159 // pred_check
          %p1794 = pneg %p637
        $region242: #{tpu_custom_call.1} parent=159 // pred_check_branch
          %1796 = sbr.rel (%p1794) target = $region244
        $region243: #{tpu_custom_call.1} parent=159 // pred_region
          %1798 = dma.done %s1790, 4096
        $region244: #{tpu_custom_call.1} parent=159 // pred_fallthru
          _
        %s1799 = sand.u32 %s125, 1
        %s1800 = scalar_lea.sflag [#allocation39], %s1799
        %s1801 = sand.u32 %s650, 1
        %s1802 = smul.addr %s1801, 2
        %s1803 = scalar_lea.vmem [#allocation38], %s1802
        // Predicated region
        $region245: #{tpu_custom_call.1} parent=159 // pred_check
          %p1804 = pneg %p663
        $region246: #{tpu_custom_call.1} parent=159 // pred_check_branch
          %1806 = sbr.rel (%p1804) target = $region248
        $region247: #{tpu_custom_call.1} parent=159 // pred_region
          %1808 = dma.done %s1800, 32
        $region248: #{tpu_custom_call.1} parent=159 // pred_fallthru
          _
        %s1809 = sand.u32 %s125, 1
        %s1810 = scalar_lea.sflag [#allocation39], %s1809
        %s1811 = sand.u32 %s676, 1
        %s1812 = smul.addr %s1811, 2
        %s1813 = scalar_lea.vmem [#allocation40], %s1812
        // Predicated region
        $region249: #{tpu_custom_call.1} parent=159 // pred_check
          %p1814 = pneg %p689
        $region250: #{tpu_custom_call.1} parent=159 // pred_check_branch
          %1816 = sbr.rel (%p1814) target = $region252
        $region251: #{tpu_custom_call.1} parent=159 // pred_region
          %1818 = dma.done %s1810, 32
        $region252: #{tpu_custom_call.1} parent=159 // pred_fallthru
          _
        %s1819 = sand.u32 %s125, 1
        %s1820 = scalar_lea.sflag [#allocation42], %s1819
        %s1821 = sand.u32 %s702, 1
        %s1822 = smul.addr %s1821, 2
        %s1823 = scalar_lea.vmem [#allocation41], %s1822
        // Predicated region
        $region253: #{tpu_custom_call.1} parent=159 // pred_check
          %p1824 = pneg %p715
        $region254: #{tpu_custom_call.1} parent=159 // pred_check_branch
          %1826 = sbr.rel (%p1824) target = $region256
        $region255: #{tpu_custom_call.1} parent=159 // pred_region
          %1828 = dma.done %s1820, 32
        $region256: #{tpu_custom_call.1} parent=159 // pred_fallthru
          _
        %s1829 = sand.u32 %s125, 1
        %s1830 = scalar_lea.sflag [#allocation42], %s1829
        %s1831 = sand.u32 %s728, 1
        %s1832 = smul.addr %s1831, 512
        %s1833 = scalar_lea.vmem [#allocation43], %s1832
        // Predicated region
        $region257: #{tpu_custom_call.1} parent=159 // pred_check
          %p1834 = pneg %p741
        $region258: #{tpu_custom_call.1} parent=159 // pred_check_branch
          %1836 = sbr.rel (%p1834) target = $region260
        $region259: #{tpu_custom_call.1} parent=159 // pred_region
          %1838 = dma.done %s1830, 8192
        $region260: #{tpu_custom_call.1} parent=159 // pred_fallthru
          _
        %s1839 = sand.u32 %s125, 1
        %s1840 = scalar_lea.sflag [#allocation45], %s1839
        %s1841 = sand.u32 %s780, 1
        %s1842 = smul.addr %s1841, 512
        %s1843 = scalar_lea.vmem [#allocation44], %s1842
        // Predicated region
        $region261: #{tpu_custom_call.1} parent=159 // pred_check
          %p1844 = pneg %p793
        $region262: #{tpu_custom_call.1} parent=159 // pred_check_branch
          %1846 = sbr.rel (%p1844) target = $region264
        $region263: #{tpu_custom_call.1} parent=159 // pred_region
          %1848 = dma.done %s1840, 8192
        $region264: #{tpu_custom_call.1} parent=159 // pred_fallthru
          _
        %s1849 = sand.u32 %s125, 1
        %s1850 = scalar_lea.sflag [#allocation45], %s1849
        %s1851 = sand.u32 %s806, 1
        %s1852 = smul.addr %s1851, 2
        %s1853 = scalar_lea.vmem [#allocation46], %s1852
        // Predicated region
        $region265: #{tpu_custom_call.1} parent=159 // pred_check
          %p1854 = pneg %p819
        $region266: #{tpu_custom_call.1} parent=159 // pred_check_branch
          %1856 = sbr.rel (%p1854) target = $region268
        $region267: #{tpu_custom_call.1} parent=159 // pred_region
          %1858 = dma.done %s1850, 32
        $region268: #{tpu_custom_call.1} parent=159 // pred_fallthru
          _
        %s1859 = sand.u32 %s125, 1
        %s1860 = scalar_lea.sflag [#allocation48], %s1859
        %s1861 = sand.u32 %s832, 1
        %s1862 = smul.addr %s1861, 512
        %s1863 = scalar_lea.vmem [#allocation47], %s1862
        // Predicated region
        $region269: #{tpu_custom_call.1} parent=159 // pred_check
          %p1864 = pneg %p845
        $region270: #{tpu_custom_call.1} parent=159 // pred_check_branch
          %1866 = sbr.rel (%p1864) target = $region272
        $region271: #{tpu_custom_call.1} parent=159 // pred_region
          %1868 = dma.done %s1860, 8192
        $region272: #{tpu_custom_call.1} parent=159 // pred_fallthru
          _
        %s1869 = sand.u32 %s125, 1
        %s1870 = scalar_lea.sflag [#allocation48], %s1869
        %s1871 = sand.u32 %s858, 1
        %s1872 = smul.addr %s1871, 512
        %s1873 = scalar_lea.vmem [#allocation49], %s1872
        // Predicated region
        $region273: #{tpu_custom_call.1} parent=159 // pred_check
          %p1874 = pneg %p871
        $region274: #{tpu_custom_call.1} parent=159 // pred_check_branch
          %1876 = sbr.rel (%p1874) target = $region276
        $region275: #{tpu_custom_call.1} parent=159 // pred_region
          %1878 = dma.done %s1870, 8192
        $region276: #{tpu_custom_call.1} parent=159 // pred_fallthru
          _
        %s1879 = sand.u32 %s125, 1
        %s1880 = scalar_lea.sflag [#allocation51], %s1879
        %s1881 = sand.u32 %s910, 1
        %s1882 = smul.addr %s1881, 256
        %s1883 = scalar_lea.vmem [#allocation50], %s1882
        // Predicated region
        $region277: #{tpu_custom_call.1} parent=159 // pred_check
          %p1884 = pneg %p923
        $region278: #{tpu_custom_call.1} parent=159 // pred_check_branch
          %1886 = sbr.rel (%p1884) target = $region280
        $region279: #{tpu_custom_call.1} parent=159 // pred_region
          %1888 = dma.done %s1880, 4096
        $region280: #{tpu_custom_call.1} parent=159 // pred_fallthru
          _
        %s1889 = sand.u32 %s125, 1
        %s1890 = scalar_lea.sflag [#allocation51], %s1889
        %s1891 = sand.u32 %s936, 1
        %s1892 = smul.addr %s1891, 256
        %s1893 = scalar_lea.vmem [#allocation52], %s1892
        // Predicated region
        $region281: #{tpu_custom_call.1} parent=159 // pred_check
          %p1894 = pneg %p949
        $region282: #{tpu_custom_call.1} parent=159 // pred_check_branch
          %1896 = sbr.rel (%p1894) target = $region284
        $region283: #{tpu_custom_call.1} parent=159 // pred_region
          %1898 = dma.done %s1890, 4096
        $region284: #{tpu_custom_call.1} parent=159 // pred_fallthru
          _
        %p1899 = pneg %p141
        %p1900 = pneg %p138
        %p1901 = pneg %p162
        %p1902 = pneg %p159
        %p1903 = pneg %p183
        %p1904 = pneg %p180
        %p1905 = pneg %p204
        %p1906 = pneg %p201
        %p1907 = pneg %p225
        %p1908 = pneg %p222
        %p1909 = pneg %p246
        %p1910 = pneg %p243
        %p1911 = pneg %p267
        %p1912 = pneg %p264
        %p1913 = pneg %p288
        %p1914 = pneg %p285
        %p1915 = pneg %p309
        %p1916 = pneg %p306
        %p1917 = pneg %p330
        %p1918 = pneg %p327
        %p1919 = pneg %p351
        %p1920 = pneg %p348
        %s1921 = sand.u32 %s125, 1
        %s1922 = scalar_lea.sflag [#allocation24], %s1921
        %s1923 = sand.u32 %s364, 1
        %s1924 = smul.addr %s1923, 2
        %s1925 = scalar_lea.vmem [#allocation23], %s1924
        %p1926 = pneg %p377
        %p1927 = pneg %p374
        %s1928 = sand.u32 %s125, 1
        %s1929 = scalar_lea.sflag [#allocation24], %s1928
        %s1930 = sand.u32 %s390, 1
        %s1931 = smul.addr %s1930, 2
        %s1932 = scalar_lea.vmem [#allocation25], %s1931
        %p1933 = pneg %p403
        %p1934 = pneg %p400
        %s1935 = sand.u32 %s125, 1
        %s1936 = scalar_lea.sflag [#allocation27], %s1935
        %s1937 = sand.u32 %s416, 1
        %s1938 = smul.addr %s1937, 768
        %s1939 = scalar_lea.vmem [#allocation26], %s1938
        %p1940 = pneg %p429
        %p1941 = pneg %p426
        %p1942 = scmp.lt.s32.totalorder %s125, 1
        %s1943 = scalar_select %p1942, %s125, 1
        %s1944 = smul.addr %s1943, 6
        %s1945 = scalar_lea.vmem %s29, %s1944
        %p1946 = pneg %p455
        %p1947 = pneg %p452
        %s1948 = sand.u32 %s125, 1
        %s1949 = scalar_lea.sflag [#allocation27], %s1948
        %s1950 = sand.u32 %s468, 1
        %s1951 = smul.addr %s1950, 256
        %s1952 = scalar_lea.vmem [#allocation28], %s1951
        %p1953 = pneg %p481
        %p1954 = pneg %p478
        %s1955 = sand.u32 %s125, 1
        %s1956 = scalar_lea.sflag [#allocation30], %s1955
        %s1957 = sand.u32 %s494, 1
        %s1958 = smul.addr %s1957, 2
        %s1959 = scalar_lea.vmem [#allocation29], %s1958
        %p1960 = pneg %p507
        %p1961 = pneg %p504
        %s1962 = sand.u32 %s125, 1
        %s1963 = scalar_lea.sflag [#allocation30], %s1962
        %s1964 = sand.u32 %s520, 1
        %s1965 = smul.addr %s1964, 512
        %s1966 = scalar_lea.vmem [#allocation31], %s1965
        %p1967 = pneg %p533
        %p1968 = pneg %p530
        %s1969 = sand.u32 %s125, 1
        %s1970 = scalar_lea.sflag [#allocation33], %s1969
        %s1971 = sand.u32 %s546, 1
        %s1972 = smul.addr %s1971, 512
        %s1973 = scalar_lea.vmem [#allocation32], %s1972
        %p1974 = pneg %p559
        %p1975 = pneg %p556
        %s1976 = sand.u32 %s125, 1
        %s1977 = scalar_lea.sflag [#allocation33], %s1976
        %s1978 = sand.u32 %s572, 1
        %s1979 = smul.addr %s1978, 4
        %s1980 = scalar_lea.vmem [#allocation34], %s1979
        %p1981 = pneg %p585
        %p1982 = pneg %p582
        %s1983 = sand.u32 %s125, 1
        %s1984 = scalar_lea.sflag [#allocation36], %s1983
        %s1985 = sand.u32 %s598, 1
        %s1986 = smul.addr %s1985, 256
        %s1987 = scalar_lea.vmem [#allocation35], %s1986
        %p1988 = pneg %p611
        %p1989 = pneg %p608
        %s1990 = sand.u32 %s125, 1
        %s1991 = scalar_lea.sflag [#allocation36], %s1990
        %s1992 = sand.u32 %s624, 1
        %s1993 = smul.addr %s1992, 256
        %s1994 = scalar_lea.vmem [#allocation37], %s1993
        %p1995 = pneg %p637
        %p1996 = pneg %p634
        %s1997 = sand.u32 %s125, 1
        %s1998 = scalar_lea.sflag [#allocation39], %s1997
        %s1999 = sand.u32 %s650, 1
        %s2000 = smul.addr %s1999, 2
        %s2001 = scalar_lea.vmem [#allocation38], %s2000
        %p2002 = pneg %p663
        %p2003 = pneg %p660
        %s2004 = sand.u32 %s125, 1
        %s2005 = scalar_lea.sflag [#allocation39], %s2004
        %s2006 = sand.u32 %s676, 1
        %s2007 = smul.addr %s2006, 2
        %s2008 = scalar_lea.vmem [#allocation40], %s2007
        %p2009 = pneg %p689
        %p2010 = pneg %p686
        %s2011 = sand.u32 %s125, 1
        %s2012 = scalar_lea.sflag [#allocation42], %s2011
        %s2013 = sand.u32 %s702, 1
        %s2014 = smul.addr %s2013, 2
        %s2015 = scalar_lea.vmem [#allocation41], %s2014
        %p2016 = pneg %p715
        %p2017 = pneg %p712
        %s2018 = sand.u32 %s125, 1
        %s2019 = scalar_lea.sflag [#allocation42], %s2018
        %s2020 = sand.u32 %s728, 1
        %s2021 = smul.addr %s2020, 512
        %s2022 = scalar_lea.vmem [#allocation43], %s2021
        %p2023 = pneg %p741
        %p2024 = pneg %p738
        %p2025 = scmp.lt.s32.totalorder %s125, 1
        %s2026 = scalar_select %p2025, %s125, 1
        %s2027 = smul.addr %s2026, 4
        %s2028 = scalar_lea.vmem %s53, %s2027
        %p2029 = pneg %p767
        %p2030 = pneg %p764
        %s2031 = sand.u32 %s125, 1
        %s2032 = scalar_lea.sflag [#allocation45], %s2031
        %s2033 = sand.u32 %s780, 1
        %s2034 = smul.addr %s2033, 512
        %s2035 = scalar_lea.vmem [#allocation44], %s2034
        %p2036 = pneg %p793
        %p2037 = pneg %p790
        %s2038 = sand.u32 %s125, 1
        %s2039 = scalar_lea.sflag [#allocation45], %s2038
        %s2040 = sand.u32 %s806, 1
        %s2041 = smul.addr %s2040, 2
        %s2042 = scalar_lea.vmem [#allocation46], %s2041
        %p2043 = pneg %p819
        %p2044 = pneg %p816
        %s2045 = sand.u32 %s125, 1
        %s2046 = scalar_lea.sflag [#allocation48], %s2045
        %s2047 = sand.u32 %s832, 1
        %s2048 = smul.addr %s2047, 512
        %s2049 = scalar_lea.vmem [#allocation47], %s2048
        %p2050 = pneg %p845
        %p2051 = pneg %p842
        %s2052 = sand.u32 %s125, 1
        %s2053 = scalar_lea.sflag [#allocation48], %s2052
        %s2054 = sand.u32 %s858, 1
        %s2055 = smul.addr %s2054, 512
        %s2056 = scalar_lea.vmem [#allocation49], %s2055
        %p2057 = pneg %p871
        %p2058 = pneg %p868
        %p2059 = scmp.lt.s32.totalorder %s125, 1
        %s2060 = scalar_select %p2059, %s125, 1
        %s2061 = smul.addr %s2060, 4
        %s2062 = scalar_lea.vmem %s63, %s2061
        %p2063 = pneg %p897
        %p2064 = pneg %p894
        %s2065 = sand.u32 %s125, 1
        %s2066 = scalar_lea.sflag [#allocation51], %s2065
        %s2067 = sand.u32 %s910, 1
        %s2068 = smul.addr %s2067, 256
        %s2069 = scalar_lea.vmem [#allocation50], %s2068
        %p2070 = pneg %p923
        %p2071 = pneg %p920
        %s2072 = sand.u32 %s125, 1
        %s2073 = scalar_lea.sflag [#allocation51], %s2072
        %s2074 = sand.u32 %s936, 1
        %s2075 = smul.addr %s2074, 256
        %s2076 = scalar_lea.vmem [#allocation52], %s2075
        %p2077 = pneg %p949
        %p2078 = pneg %p946
        %p2079 = scmp.lt.s32.totalorder %s125, 1
        %s2080 = scalar_select %p2079, %s125, 1
        %s2081 = smul.addr %s2080, 2
        %s2082 = scalar_lea.vmem %s69, %s2081
        %p2083 = pneg %p975
        %p2084 = pneg %p972
        %p2085 = pneg %p996
        %p2086 = pneg %p993
        %p2087 = pneg %p1017
        %p2088 = pneg %p1014
        %p2089 = pneg %p1038
        %p2090 = pneg %p1035
        %p2091 = scmp.lt.s32.totalorder %s125, 1
        %s2092 = scalar_select %p2091, %s125, 1
        %s2093 = smul.addr %s2092, 6
        %s2094 = scalar_lea.vmem %s29, %s2093
        %p2095 = scmp.lt.s32.totalorder %s125, 1
        %s2096 = scalar_select %p2095, %s125, 1
        %s2097 = smul.addr %s2096, 4
        %s2098 = scalar_lea.vmem %s53, %s2097
        %p2099 = scmp.lt.s32.totalorder %s125, 1
        %s2100 = scalar_select %p2099, %s125, 1
        %s2101 = smul.addr %s2100, 4
        %s2102 = scalar_lea.vmem %s63, %s2101
        %p2103 = scmp.lt.s32.totalorder %s125, 1
        %s2104 = scalar_select %p2103, %s125, 1
        %s2105 = smul.addr %s2104, 2
        %s2106 = scalar_lea.vmem %s69, %s2105
        %p2108 = scmp.eq.s32.totalorder %s125, 0
        // Predicated region
        $region285: #{tpu_custom_call.1} parent=159 // pred_check
          %p2109 = pneg %p2108
        $region286: #{tpu_custom_call.1} parent=159 // pred_check_branch
          %2111 = sbr.rel (%p2109) target = $region288
        $region287: #{tpu_custom_call.1} parent=159 // pred_region
          %v2112 = vld [vmem:[#allocation8] sm:$0x3]
          %v2113 = vunpack.c.0.s8 %v2112
          %v2114 = vcvt.s32.f32 %v2113
          %vm2115 = vcmp.gt.f32.partialorder %v2114, 0.0
          %v2116 = vsel %vm2115, 0.0, -1e+30
          %vm2117 = vcmask 64512
          %2118 = vst.msk [vmem:[#allocation3] sm:$0xff] %vm2117, %v2116
          %v2119 = vsel %vm2115, 1.0, 0.0
          %v2120 = vsel %vm2117, %v2119, -inf
          %2121 = vmax.xlane.f32.xlu0 %v2120
          %v2122 = vpop.xlane.xlu0 %2121
          %vm2123 = vcmask 7168
          %2124 = vst.msk [vmem:[#allocation4] sm:$0xff] %vm2123, %v2122
          %v2125 = vld [vmem:[#allocation5] sm:$0xf]
          %v2126 = vld [vmem:[#allocation14] sm:$0xff]
          %v2127 = vld [vmem:[#allocation16] sm:$0x3]
          %v2129 = vperm.slane %v2127, 0
          %v2130 = vperm.slane %v2127, 1
          %v2134 = vunpack.c.l.b16 %v2126
          %v2135 = vunpack.c.h.b16 %v2126
          %v2136 = vpack.c.b16 %v2134, %v2134
          %v2137 = vpack.c.b16 %v2135, %v2135
          %v2139 = vsel %vm2117, %v2125, 0
          %vm2141 = vcmask 1043456
          %v2143 = vsel %vm2141, %v2136, 0
          %v2146 = vsel %vm2141, %v2137, 0
          %2148 = vmatpush.bf16.msra.mxu0 0
          %2149 = vmatpush.bf16.msra.mxu0 0
          %2150 = vmatpush.bf16.msra.mxu0 0
          %2151 = vmatpush.bf16.msra.mxu0 0
          %2152 = vmatpush.bf16.msra.mxu0 0
          %2153 = vmatpush.bf16.msra.mxu0 0
          %2154 = vmatpush.bf16.msra.mxu0 0
          %2155 = vmatpush.bf16.msra.mxu0 %v2143
          %2156 = vmatmul.bf16.gmra.mxu0 %v2139
          %v2157 = vpop.f32.mrf.mxu0
          %v2158 = vadd.f32 %v2129, %v2157
          %v2159 = vpop.f32.mrf.mxu0
          %2160 = vdwg.mxu0
          %2161 = vmatpush.bf16.msra.mxu0 0
          %2162 = vmatpush.bf16.msra.mxu0 0
          %2163 = vmatpush.bf16.msra.mxu0 0
          %2164 = vmatpush.bf16.msra.mxu0 0
          %2165 = vmatpush.bf16.msra.mxu0 0
          %2166 = vmatpush.bf16.msra.mxu0 0
          %2167 = vmatpush.bf16.msra.mxu0 0
          %2168 = vmatpush.bf16.msra.mxu0 %v2146
          %2169 = vmatmul.bf16.gmra.mxu0 %v2139
          %v2170 = vpop.f32.mrf.mxu0
          %v2171 = vadd.f32 %v2130, %v2170
          %v2172 = vpop.f32.mrf.mxu0
          %2173 = vdwg.mxu0
          %2174 = vst [vmem:[#allocation2] sm:$0xff] %v2158
          %2175 = vst [vmem:[#allocation2 + $0x8] sm:$0xff] %v2171
        $region288: #{tpu_custom_call.1} parent=159 // pred_fallthru
          _
        %v2176 = vld [vmem:[#allocation2] sm:$0xff]
        %v2177 = vld [vmem:[#allocation2 + $0x8] sm:$0xff]
        %v2178 = vld [vmem:[#allocation10] sm:$0xff]
        %v2179 = vld [vmem:[#allocation10 + $0x8] sm:$0xff]
        %v2180 = vadd.f32 %v2176, %v2178
        %v2181 = vadd.f32 %v2177, %v2179
        %v2182 = vld [vmem:[%s1703] sm:$0x3]
        %v2183 = vld [vmem:[%s1713] sm:$0x3]
        %v2184 = vrot.slane %v2180, 4
        %v2185 = vadd.f32 %v2180, %v2184
        %v2186 = vrot.slane %v2185, 2
        %v2187 = vadd.f32 %v2185, %v2186
        %v2188 = vrot.slane %v2187, 1
        %v2189 = vadd.f32 %v2187, %v2188
        %v2190 = vrot.slane %v2181, 4
        %v2191 = vadd.f32 %v2181, %v2190
        %v2192 = vrot.slane %v2191, 2
        %v2193 = vadd.f32 %v2191, %v2192
        %v2194 = vrot.slane %v2193, 1
        %v2195 = vadd.f32 %v2193, %v2194
        %v2196 = vrcp.pop 8.0
        %v2197 = vmul.f32 8.0, %v2196
        %v2198 = vsub.f32 1.0, %v2197
        %v2199 = vmul.f32 %v2196, %v2198
        %v2200 = vadd.f32 %v2196, %v2199
        %vm2201 = vweird.f32 %v2196
        %v2202 = vsel %vm2201, %v2196, %v2200
        %v2203 = vmul.f32 %v2189, %v2202
        %v2204 = vmul.f32 %v2195, %v2202
        %v2205 = vsub.f32 %v2180, %v2203
        %v2206 = vsub.f32 %v2181, %v2204
        %v2207 = vmul.f32 %v2205, %v2205
        %v2208 = vmul.f32 %v2206, %v2206
        %v2209 = vrot.slane %v2207, 4
        %v2210 = vadd.f32 %v2207, %v2209
        %v2211 = vrot.slane %v2210, 2
        %v2212 = vadd.f32 %v2210, %v2211
        %v2213 = vrot.slane %v2212, 1
        %v2214 = vadd.f32 %v2212, %v2213
        %v2215 = vrot.slane %v2208, 4
        %v2216 = vadd.f32 %v2208, %v2215
        %v2217 = vrot.slane %v2216, 2
        %v2218 = vadd.f32 %v2216, %v2217
        %v2219 = vrot.slane %v2218, 1
        %v2220 = vadd.f32 %v2218, %v2219
        %v2221 = vmul.f32 %v2214, %v2202
        %v2222 = vmul.f32 %v2220, %v2202
        %v2223 = vadd.f32 %v2221, 1e-05
        %v2224 = vadd.f32 %v2222, 1e-05
        %v2225 = vrsqrt.pop %v2223
        %v2226 = vmul.f32 %v2225, %v2223
        %v2227 = vmul.f32 %v2226, %v2225
        %v2228 = vmul.f32 0.5, %v2227
        %v2229 = vsub.f32 1.5, %v2228
        %v2230 = vmul.f32 %v2225, %v2229
        %vm2231 = vweird.f32 %v2223
        %vm2232 = vweird.f32 %v2225
        %vm2233 = vmor %vm2231, %vm2232
        %v2234 = vsel %vm2233, %v2225, %v2230
        %v2235 = vrsqrt.pop %v2224
        %v2236 = vmul.f32 %v2235, %v2224
        %v2237 = vmul.f32 %v2236, %v2235
        %v2238 = vmul.f32 0.5, %v2237
        %v2239 = vsub.f32 1.5, %v2238
        %v2240 = vmul.f32 %v2235, %v2239
        %vm2241 = vweird.f32 %v2224
        %vm2242 = vweird.f32 %v2235
        %vm2243 = vmor %vm2241, %vm2242
        %v2244 = vsel %vm2243, %v2235, %v2240
        %v2245 = vmul.f32 %v2205, %v2234
        %v2246 = vmul.f32 %v2206, %v2244
        %v2248 = vperm.slane %v2182, 0
        %v2249 = vperm.slane %v2182, 1
        %v2252 = vmul.f32 %v2245, %v2248
        %v2253 = vmul.f32 %v2246, %v2249
        %v2255 = vperm.slane %v2183, 0
        %v2256 = vperm.slane %v2183, 1
        %v2259 = vadd.f32 %v2252, %v2255
        %v2260 = vadd.f32 %v2253, %v2256
        %v2261 = vpack.c.bf16 %v2259, %v2259
        %v2262 = vpack.c.bf16 %v2260, %v2260
        %v2263 = vld [vmem:[%s1723] sm:$0xff]
        %v2264 = vld [vmem:[%s1723 + $0x8] sm:$0xff]
        %v2265 = vld [vmem:[%s1723 + $0x10] sm:$0xff]
        %v2266 = vld [vmem:[%s1723 + $0x18] sm:$0xff]
        %v2267 = vld [vmem:[%s1723 + $0x20] sm:$0xff]
        %v2268 = vld [vmem:[%s1723 + $0x28] sm:$0xff]
        %v2269 = vld [vmem:[%s1723 + $0x30] sm:$0xff]
        %v2270 = vld [vmem:[%s1723 + $0x38] sm:$0xff]
        %v2271 = vld [vmem:[%s1723 + $0x40] sm:$0xff]
        %v2272 = vld [vmem:[%s1723 + $0x48] sm:$0xff]
        %v2273 = vld [vmem:[%s1723 + $0x50] sm:$0xff]
        %v2274 = vld [vmem:[%s1723 + $0x58] sm:$0xff]
        %v2275 = vld [vmem:[%s1723 + $0x60] sm:$0xff]
        %v2276 = vld [vmem:[%s1723 + $0x68] sm:$0xff]
        %v2277 = vld [vmem:[%s1723 + $0x70] sm:$0xff]
        %v2278 = vld [vmem:[%s1723 + $0x78] sm:$0xff]
        %v2279 = vld [vmem:[%s1723 + $0x80] sm:$0xff]
        %v2280 = vld [vmem:[%s1723 + $0x88] sm:$0xff]
        %v2281 = vld [vmem:[%s1723 + $0x90] sm:$0xff]
        %v2282 = vld [vmem:[%s1723 + $0x98] sm:$0xff]
        %v2283 = vld [vmem:[%s1723 + $0xa0] sm:$0xff]
        %v2284 = vld [vmem:[%s1723 + $0xa8] sm:$0xff]
        %v2285 = vld [vmem:[%s1723 + $0xb0] sm:$0xff]
        %v2286 = vld [vmem:[%s1723 + $0xb8] sm:$0xff]
        %v2287 = vld [vmem:[%s1723 + $0xc0] sm:$0xff]
        %v2288 = vld [vmem:[%s1723 + $0xc8] sm:$0xff]
        %v2289 = vld [vmem:[%s1723 + $0xd0] sm:$0xff]
        %v2290 = vld [vmem:[%s1723 + $0xd8] sm:$0xff]
        %v2291 = vld [vmem:[%s1723 + $0xe0] sm:$0xff]
        %v2292 = vld [vmem:[%s1723 + $0xe8] sm:$0xff]
        %v2293 = vld [vmem:[%s1723 + $0xf0] sm:$0xff]
        %v2294 = vld [vmem:[%s1723 + $0xf8] sm:$0xff]
        %v2295 = vld [vmem:[%s1723 + $0x100] sm:$0xff]
        %v2296 = vld [vmem:[%s1723 + $0x108] sm:$0xff]
        %v2297 = vld [vmem:[%s1723 + $0x110] sm:$0xff]
        %v2298 = vld [vmem:[%s1723 + $0x118] sm:$0xff]
        %v2299 = vld [vmem:[%s1723 + $0x120] sm:$0xff]
        %v2300 = vld [vmem:[%s1723 + $0x128] sm:$0xff]
        %v2301 = vld [vmem:[%s1723 + $0x130] sm:$0xff]
        %v2302 = vld [vmem:[%s1723 + $0x138] sm:$0xff]
        %v2303 = vld [vmem:[%s1723 + $0x140] sm:$0xff]
        %v2304 = vld [vmem:[%s1723 + $0x148] sm:$0xff]
        %v2305 = vld [vmem:[%s1723 + $0x150] sm:$0xff]
        %v2306 = vld [vmem:[%s1723 + $0x158] sm:$0xff]
        %v2307 = vld [vmem:[%s1723 + $0x160] sm:$0xff]
        %v2308 = vld [vmem:[%s1723 + $0x168] sm:$0xff]
        %v2309 = vld [vmem:[%s1723 + $0x170] sm:$0xff]
        %v2310 = vld [vmem:[%s1723 + $0x178] sm:$0xff]
        %v2311 = vld [vmem:[%s1723 + $0x180] sm:$0xff]
        %v2312 = vld [vmem:[%s1723 + $0x188] sm:$0xff]
        %v2313 = vld [vmem:[%s1723 + $0x190] sm:$0xff]
        %v2314 = vld [vmem:[%s1723 + $0x198] sm:$0xff]
        %v2315 = vld [vmem:[%s1723 + $0x1a0] sm:$0xff]
        %v2316 = vld [vmem:[%s1723 + $0x1a8] sm:$0xff]
        %v2317 = vld [vmem:[%s1723 + $0x1b0] sm:$0xff]
        %v2318 = vld [vmem:[%s1723 + $0x1b8] sm:$0xff]
        %v2319 = vld [vmem:[%s1723 + $0x1c0] sm:$0xff]
        %v2320 = vld [vmem:[%s1723 + $0x1c8] sm:$0xff]
        %v2321 = vld [vmem:[%s1723 + $0x1d0] sm:$0xff]
        %v2322 = vld [vmem:[%s1723 + $0x1d8] sm:$0xff]
        %v2323 = vld [vmem:[%s1723 + $0x1e0] sm:$0xff]
        %v2324 = vld [vmem:[%s1723 + $0x1e8] sm:$0xff]
        %v2325 = vld [vmem:[%s1723 + $0x1f0] sm:$0xff]
        %v2326 = vld [vmem:[%s1723 + $0x1f8] sm:$0xff]
        %v2327 = vld [vmem:[%s1723 + $0x200] sm:$0xff]
        %v2328 = vld [vmem:[%s1723 + $0x208] sm:$0xff]
        %v2329 = vld [vmem:[%s1723 + $0x210] sm:$0xff]
        %v2330 = vld [vmem:[%s1723 + $0x218] sm:$0xff]
        %v2331 = vld [vmem:[%s1723 + $0x220] sm:$0xff]
        %v2332 = vld [vmem:[%s1723 + $0x228] sm:$0xff]
        %v2333 = vld [vmem:[%s1723 + $0x230] sm:$0xff]
        %v2334 = vld [vmem:[%s1723 + $0x238] sm:$0xff]
        %v2335 = vld [vmem:[%s1723 + $0x240] sm:$0xff]
        %v2336 = vld [vmem:[%s1723 + $0x248] sm:$0xff]
        %v2337 = vld [vmem:[%s1723 + $0x250] sm:$0xff]
        %v2338 = vld [vmem:[%s1723 + $0x258] sm:$0xff]
        %v2339 = vld [vmem:[%s1723 + $0x260] sm:$0xff]
        %v2340 = vld [vmem:[%s1723 + $0x268] sm:$0xff]
        %v2341 = vld [vmem:[%s1723 + $0x270] sm:$0xff]
        %v2342 = vld [vmem:[%s1723 + $0x278] sm:$0xff]
        %v2343 = vld [vmem:[%s1723 + $0x280] sm:$0xff]
        %v2344 = vld [vmem:[%s1723 + $0x288] sm:$0xff]
        %v2345 = vld [vmem:[%s1723 + $0x290] sm:$0xff]
        %v2346 = vld [vmem:[%s1723 + $0x298] sm:$0xff]
        %v2347 = vld [vmem:[%s1723 + $0x2a0] sm:$0xff]
        %v2348 = vld [vmem:[%s1723 + $0x2a8] sm:$0xff]
        %v2349 = vld [vmem:[%s1723 + $0x2b0] sm:$0xff]
        %v2350 = vld [vmem:[%s1723 + $0x2b8] sm:$0xff]
        %v2351 = vld [vmem:[%s1723 + $0x2c0] sm:$0xff]
        %v2352 = vld [vmem:[%s1723 + $0x2c8] sm:$0xff]
        %v2353 = vld [vmem:[%s1723 + $0x2d0] sm:$0xff]
        %v2354 = vld [vmem:[%s1723 + $0x2d8] sm:$0xff]
        %v2355 = vld [vmem:[%s1723 + $0x2e0] sm:$0xff]
        %v2356 = vld [vmem:[%s1723 + $0x2e8] sm:$0xff]
        %v2357 = vld [vmem:[%s1723 + $0x2f0] sm:$0xff]
        %v2358 = vld [vmem:[%s1723 + $0x2f8] sm:$0xff]
        %v2359 = vld [vmem:[%s2094] sm:$0x3f]
        %v2361 = vperm.slane %v2359, 0
        %v2362 = vperm.slane %v2359, 1
        %v2363 = vperm.slane %v2359, 2
        %v2364 = vperm.slane %v2359, 3
        %v2365 = vperm.slane %v2359, 4
        %v2366 = vperm.slane %v2359, 5
        %v2469 = vunpack.c.l.b16 %v2263
        %v2470 = vunpack.c.h.b16 %v2263
        %v2471 = vunpack.c.l.b16 %v2264
        %v2472 = vunpack.c.h.b16 %v2264
        %v2473 = vunpack.c.l.b16 %v2265
        %v2474 = vunpack.c.h.b16 %v2265
        %v2475 = vunpack.c.l.b16 %v2266
        %v2476 = vunpack.c.h.b16 %v2266
        %v2477 = vunpack.c.l.b16 %v2267
        %v2478 = vunpack.c.h.b16 %v2267
        %v2479 = vunpack.c.l.b16 %v2268
        %v2480 = vunpack.c.h.b16 %v2268
        %v2481 = vunpack.c.l.b16 %v2269
        %v2482 = vunpack.c.h.b16 %v2269
        %v2483 = vunpack.c.l.b16 %v2270
        %v2484 = vunpack.c.h.b16 %v2270
        %v2485 = vunpack.c.l.b16 %v2271
        %v2486 = vunpack.c.h.b16 %v2271
        %v2487 = vunpack.c.l.b16 %v2272
        %v2488 = vunpack.c.h.b16 %v2272
        %v2489 = vunpack.c.l.b16 %v2273
        %v2490 = vunpack.c.h.b16 %v2273
        %v2491 = vunpack.c.l.b16 %v2274
        %v2492 = vunpack.c.h.b16 %v2274
        %v2493 = vunpack.c.l.b16 %v2275
        %v2494 = vunpack.c.h.b16 %v2275
        %v2495 = vunpack.c.l.b16 %v2276
        %v2496 = vunpack.c.h.b16 %v2276
        %v2497 = vunpack.c.l.b16 %v2277
        %v2498 = vunpack.c.h.b16 %v2277
        %v2499 = vunpack.c.l.b16 %v2278
        %v2500 = vunpack.c.h.b16 %v2278
        %v2501 = vunpack.c.l.b16 %v2279
        %v2502 = vunpack.c.h.b16 %v2279
        %v2503 = vunpack.c.l.b16 %v2280
        %v2504 = vunpack.c.h.b16 %v2280
        %v2505 = vunpack.c.l.b16 %v2281
        %v2506 = vunpack.c.h.b16 %v2281
        %v2507 = vunpack.c.l.b16 %v2282
        %v2508 = vunpack.c.h.b16 %v2282
        %v2509 = vunpack.c.l.b16 %v2283
        %v2510 = vunpack.c.h.b16 %v2283
        %v2511 = vunpack.c.l.b16 %v2284
        %v2512 = vunpack.c.h.b16 %v2284
        %v2513 = vunpack.c.l.b16 %v2285
        %v2514 = vunpack.c.h.b16 %v2285
        %v2515 = vunpack.c.l.b16 %v2286
        %v2516 = vunpack.c.h.b16 %v2286
        %v2517 = vunpack.c.l.b16 %v2287
        %v2518 = vunpack.c.h.b16 %v2287
        %v2519 = vunpack.c.l.b16 %v2288
        %v2520 = vunpack.c.h.b16 %v2288
        %v2521 = vunpack.c.l.b16 %v2289
        %v2522 = vunpack.c.h.b16 %v2289
        %v2523 = vunpack.c.l.b16 %v2290
        %v2524 = vunpack.c.h.b16 %v2290
        %v2525 = vunpack.c.l.b16 %v2291
        %v2526 = vunpack.c.h.b16 %v2291
        %v2527 = vunpack.c.l.b16 %v2292
        %v2528 = vunpack.c.h.b16 %v2292
        %v2529 = vunpack.c.l.b16 %v2293
        %v2530 = vunpack.c.h.b16 %v2293
        %v2531 = vunpack.c.l.b16 %v2294
        %v2532 = vunpack.c.h.b16 %v2294
        %v2533 = vunpack.c.l.b16 %v2295
        %v2534 = vunpack.c.h.b16 %v2295
        %v2535 = vunpack.c.l.b16 %v2296
        %v2536 = vunpack.c.h.b16 %v2296
        %v2537 = vunpack.c.l.b16 %v2297
        %v2538 = vunpack.c.h.b16 %v2297
        %v2539 = vunpack.c.l.b16 %v2298
        %v2540 = vunpack.c.h.b16 %v2298
        %v2541 = vunpack.c.l.b16 %v2299
        %v2542 = vunpack.c.h.b16 %v2299
        %v2543 = vunpack.c.l.b16 %v2300
        %v2544 = vunpack.c.h.b16 %v2300
        %v2545 = vunpack.c.l.b16 %v2301
        %v2546 = vunpack.c.h.b16 %v2301
        %v2547 = vunpack.c.l.b16 %v2302
        %v2548 = vunpack.c.h.b16 %v2302
        %v2549 = vunpack.c.l.b16 %v2303
        %v2550 = vunpack.c.h.b16 %v2303
        %v2551 = vunpack.c.l.b16 %v2304
        %v2552 = vunpack.c.h.b16 %v2304
        %v2553 = vunpack.c.l.b16 %v2305
        %v2554 = vunpack.c.h.b16 %v2305
        %v2555 = vunpack.c.l.b16 %v2306
        %v2556 = vunpack.c.h.b16 %v2306
        %v2557 = vunpack.c.l.b16 %v2307
        %v2558 = vunpack.c.h.b16 %v2307
        %v2559 = vunpack.c.l.b16 %v2308
        %v2560 = vunpack.c.h.b16 %v2308
        %v2561 = vunpack.c.l.b16 %v2309
        %v2562 = vunpack.c.h.b16 %v2309
        %v2563 = vunpack.c.l.b16 %v2310
        %v2564 = vunpack.c.h.b16 %v2310
        %v2565 = vunpack.c.l.b16 %v2311
        %v2566 = vunpack.c.h.b16 %v2311
        %v2567 = vunpack.c.l.b16 %v2312
        %v2568 = vunpack.c.h.b16 %v2312
        %v2569 = vunpack.c.l.b16 %v2313
        %v2570 = vunpack.c.h.b16 %v2313
        %v2571 = vunpack.c.l.b16 %v2314
        %v2572 = vunpack.c.h.b16 %v2314
        %v2573 = vunpack.c.l.b16 %v2315
        %v2574 = vunpack.c.h.b16 %v2315
        %v2575 = vunpack.c.l.b16 %v2316
        %v2576 = vunpack.c.h.b16 %v2316
        %v2577 = vunpack.c.l.b16 %v2317
        %v2578 = vunpack.c.h.b16 %v2317
        %v2579 = vunpack.c.l.b16 %v2318
        %v2580 = vunpack.c.h.b16 %v2318
        %v2581 = vunpack.c.l.b16 %v2319
        %v2582 = vunpack.c.h.b16 %v2319
        %v2583 = vunpack.c.l.b16 %v2320
        %v2584 = vunpack.c.h.b16 %v2320
        %v2585 = vunpack.c.l.b16 %v2321
        %v2586 = vunpack.c.h.b16 %v2321
        %v2587 = vunpack.c.l.b16 %v2322
        %v2588 = vunpack.c.h.b16 %v2322
        %v2589 = vunpack.c.l.b16 %v2323
        %v2590 = vunpack.c.h.b16 %v2323
        %v2591 = vunpack.c.l.b16 %v2324
        %v2592 = vunpack.c.h.b16 %v2324
        %v2593 = vunpack.c.l.b16 %v2325
        %v2594 = vunpack.c.h.b16 %v2325
        %v2595 = vunpack.c.l.b16 %v2326
        %v2596 = vunpack.c.h.b16 %v2326
        %v2597 = vunpack.c.l.b16 %v2327
        %v2598 = vunpack.c.h.b16 %v2327
        %v2599 = vunpack.c.l.b16 %v2328
        %v2600 = vunpack.c.h.b16 %v2328
        %v2601 = vunpack.c.l.b16 %v2329
        %v2602 = vunpack.c.h.b16 %v2329
        %v2603 = vunpack.c.l.b16 %v2330
        %v2604 = vunpack.c.h.b16 %v2330
        %v2605 = vunpack.c.l.b16 %v2331
        %v2606 = vunpack.c.h.b16 %v2331
        %v2607 = vunpack.c.l.b16 %v2332
        %v2608 = vunpack.c.h.b16 %v2332
        %v2609 = vunpack.c.l.b16 %v2333
        %v2610 = vunpack.c.h.b16 %v2333
        %v2611 = vunpack.c.l.b16 %v2334
        %v2612 = vunpack.c.h.b16 %v2334
        %v2613 = vunpack.c.l.b16 %v2335
        %v2614 = vunpack.c.h.b16 %v2335
        %v2615 = vunpack.c.l.b16 %v2336
        %v2616 = vunpack.c.h.b16 %v2336
        %v2617 = vunpack.c.l.b16 %v2337
        %v2618 = vunpack.c.h.b16 %v2337
        %v2619 = vunpack.c.l.b16 %v2338
        %v2620 = vunpack.c.h.b16 %v2338
        %v2621 = vunpack.c.l.b16 %v2339
        %v2622 = vunpack.c.h.b16 %v2339
        %v2623 = vunpack.c.l.b16 %v2340
        %v2624 = vunpack.c.h.b16 %v2340
        %v2625 = vunpack.c.l.b16 %v2341
        %v2626 = vunpack.c.h.b16 %v2341
        %v2627 = vunpack.c.l.b16 %v2342
        %v2628 = vunpack.c.h.b16 %v2342
        %v2629 = vunpack.c.l.b16 %v2343
        %v2630 = vunpack.c.h.b16 %v2343
        %v2631 = vunpack.c.l.b16 %v2344
        %v2632 = vunpack.c.h.b16 %v2344
        %v2633 = vunpack.c.l.b16 %v2345
        %v2634 = vunpack.c.h.b16 %v2345
        %v2635 = vunpack.c.l.b16 %v2346
        %v2636 = vunpack.c.h.b16 %v2346
        %v2637 = vunpack.c.l.b16 %v2347
        %v2638 = vunpack.c.h.b16 %v2347
        %v2639 = vunpack.c.l.b16 %v2348
        %v2640 = vunpack.c.h.b16 %v2348
        %v2641 = vunpack.c.l.b16 %v2349
        %v2642 = vunpack.c.h.b16 %v2349
        %v2643 = vunpack.c.l.b16 %v2350
        %v2644 = vunpack.c.h.b16 %v2350
        %v2645 = vunpack.c.l.b16 %v2351
        %v2646 = vunpack.c.h.b16 %v2351
        %v2647 = vunpack.c.l.b16 %v2352
        %v2648 = vunpack.c.h.b16 %v2352
        %v2649 = vunpack.c.l.b16 %v2353
        %v2650 = vunpack.c.h.b16 %v2353
        %v2651 = vunpack.c.l.b16 %v2354
        %v2652 = vunpack.c.h.b16 %v2354
        %v2653 = vunpack.c.l.b16 %v2355
        %v2654 = vunpack.c.h.b16 %v2355
        %v2655 = vunpack.c.l.b16 %v2356
        %v2656 = vunpack.c.h.b16 %v2356
        %v2657 = vunpack.c.l.b16 %v2357
        %v2658 = vunpack.c.h.b16 %v2357
        %v2659 = vunpack.c.l.b16 %v2358
        %v2660 = vunpack.c.h.b16 %v2358
        %v2661 = vpack.c.b16 %v2475, %v2469
        %v2662 = vpack.c.b16 %v2476, %v2470
        %v2663 = vpack.c.b16 %v2477, %v2471
        %v2664 = vpack.c.b16 %v2478, %v2472
        %v2665 = vpack.c.b16 %v2479, %v2473
        %v2666 = vpack.c.b16 %v2480, %v2474
        %v2667 = vpack.c.b16 %v2487, %v2481
        %v2668 = vpack.c.b16 %v2488, %v2482
        %v2669 = vpack.c.b16 %v2489, %v2483
        %v2670 = vpack.c.b16 %v2490, %v2484
        %v2671 = vpack.c.b16 %v2491, %v2485
        %v2672 = vpack.c.b16 %v2492, %v2486
        %v2673 = vpack.c.b16 %v2499, %v2493
        %v2674 = vpack.c.b16 %v2500, %v2494
        %v2675 = vpack.c.b16 %v2501, %v2495
        %v2676 = vpack.c.b16 %v2502, %v2496
        %v2677 = vpack.c.b16 %v2503, %v2497
        %v2678 = vpack.c.b16 %v2504, %v2498
        %v2679 = vpack.c.b16 %v2511, %v2505
        %v2680 = vpack.c.b16 %v2512, %v2506
        %v2681 = vpack.c.b16 %v2513, %v2507
        %v2682 = vpack.c.b16 %v2514, %v2508
        %v2683 = vpack.c.b16 %v2515, %v2509
        %v2684 = vpack.c.b16 %v2516, %v2510
        %v2685 = vpack.c.b16 %v2523, %v2517
        %v2686 = vpack.c.b16 %v2524, %v2518
        %v2687 = vpack.c.b16 %v2525, %v2519
        %v2688 = vpack.c.b16 %v2526, %v2520
        %v2689 = vpack.c.b16 %v2527, %v2521
        %v2690 = vpack.c.b16 %v2528, %v2522
        %v2691 = vpack.c.b16 %v2535, %v2529
        %v2692 = vpack.c.b16 %v2536, %v2530
        %v2693 = vpack.c.b16 %v2537, %v2531
        %v2694 = vpack.c.b16 %v2538, %v2532
        %v2695 = vpack.c.b16 %v2539, %v2533
        %v2696 = vpack.c.b16 %v2540, %v2534
        %v2697 = vpack.c.b16 %v2547, %v2541
        %v2698 = vpack.c.b16 %v2548, %v2542
        %v2699 = vpack.c.b16 %v2549, %v2543
        %v2700 = vpack.c.b16 %v2550, %v2544
        %v2701 = vpack.c.b16 %v2551, %v2545
        %v2702 = vpack.c.b16 %v2552, %v2546
        %v2703 = vpack.c.b16 %v2559, %v2553
        %v2704 = vpack.c.b16 %v2560, %v2554
        %v2705 = vpack.c.b16 %v2561, %v2555
        %v2706 = vpack.c.b16 %v2562, %v2556
        %v2707 = vpack.c.b16 %v2563, %v2557
        %v2708 = vpack.c.b16 %v2564, %v2558
        %v2709 = vpack.c.b16 %v2571, %v2565
        %v2710 = vpack.c.b16 %v2572, %v2566
        %v2711 = vpack.c.b16 %v2573, %v2567
        %v2712 = vpack.c.b16 %v2574, %v2568
        %v2713 = vpack.c.b16 %v2575, %v2569
        %v2714 = vpack.c.b16 %v2576, %v2570
        %v2715 = vpack.c.b16 %v2583, %v2577
        %v2716 = vpack.c.b16 %v2584, %v2578
        %v2717 = vpack.c.b16 %v2585, %v2579
        %v2718 = vpack.c.b16 %v2586, %v2580
        %v2719 = vpack.c.b16 %v2587, %v2581
        %v2720 = vpack.c.b16 %v2588, %v2582
        %v2721 = vpack.c.b16 %v2595, %v2589
        %v2722 = vpack.c.b16 %v2596, %v2590
        %v2723 = vpack.c.b16 %v2597, %v2591
        %v2724 = vpack.c.b16 %v2598, %v2592
        %v2725 = vpack.c.b16 %v2599, %v2593
        %v2726 = vpack.c.b16 %v2600, %v2594
        %v2727 = vpack.c.b16 %v2607, %v2601
        %v2728 = vpack.c.b16 %v2608, %v2602
        %v2729 = vpack.c.b16 %v2609, %v2603
        %v2730 = vpack.c.b16 %v2610, %v2604
        %v2731 = vpack.c.b16 %v2611, %v2605
        %v2732 = vpack.c.b16 %v2612, %v2606
        %v2733 = vpack.c.b16 %v2619, %v2613
        %v2734 = vpack.c.b16 %v2620, %v2614
        %v2735 = vpack.c.b16 %v2621, %v2615
        %v2736 = vpack.c.b16 %v2622, %v2616
        %v2737 = vpack.c.b16 %v2623, %v2617
        %v2738 = vpack.c.b16 %v2624, %v2618
        %v2739 = vpack.c.b16 %v2631, %v2625
        %v2740 = vpack.c.b16 %v2632, %v2626
        %v2741 = vpack.c.b16 %v2633, %v2627
        %v2742 = vpack.c.b16 %v2634, %v2628
        %v2743 = vpack.c.b16 %v2635, %v2629
        %v2744 = vpack.c.b16 %v2636, %v2630
        %v2745 = vpack.c.b16 %v2643, %v2637
        %v2746 = vpack.c.b16 %v2644, %v2638
        %v2747 = vpack.c.b16 %v2645, %v2639
        %v2748 = vpack.c.b16 %v2646, %v2640
        %v2749 = vpack.c.b16 %v2647, %v2641
        %v2750 = vpack.c.b16 %v2648, %v2642
        %v2751 = vpack.c.b16 %v2655, %v2649
        %v2752 = vpack.c.b16 %v2656, %v2650
        %v2753 = vpack.c.b16 %v2657, %v2651
        %v2754 = vpack.c.b16 %v2658, %v2652
        %v2755 = vpack.c.b16 %v2659, %v2653
        %v2756 = vpack.c.b16 %v2660, %v2654
        %2853 = vmatpush.bf16.msra.mxu0 %v2703
        %2854 = vmatpush.bf16.msra.mxu0 %v2697
        %2855 = vmatpush.bf16.msra.mxu0 %v2691
        %2856 = vmatpush.bf16.msra.mxu0 %v2685
        %2857 = vmatpush.bf16.msra.mxu0 %v2679
        %2858 = vmatpush.bf16.msra.mxu0 %v2673
        %2859 = vmatpush.bf16.msra.mxu0 %v2667
        %2860 = vmatpush.bf16.msra.mxu0 %v2661
        %2861 = vmatmul.bf16.gmra.mxu0 %v2261
        %v2862 = vpop.f32.mrf.mxu0
        %v2863 = vadd.f32 %v2361, %v2862
        %v2864 = vpop.f32.mrf.mxu0
        %2865 = vdwg.mxu0
        %2866 = vmatpush.bf16.msra.mxu0 %v2751
        %2867 = vmatpush.bf16.msra.mxu0 %v2745
        %2868 = vmatpush.bf16.msra.mxu0 %v2739
        %2869 = vmatpush.bf16.msra.mxu0 %v2733
        %2870 = vmatpush.bf16.msra.mxu0 %v2727
        %2871 = vmatpush.bf16.msra.mxu0 %v2721
        %2872 = vmatpush.bf16.msra.mxu0 %v2715
        %2873 = vmatpush.bf16.msra.mxu0 %v2709
        %2874 = vmatmul.bf16.gmra.mxu0 %v2262
        %v2875 = vpop.f32.mrf.mxu0
        %v2876 = vadd.f32 %v2863, %v2875
        %v2877 = vpop.f32.mrf.mxu0
        %2878 = vdwg.mxu0
        %2879 = vmatpush.bf16.msra.mxu0 %v2704
        %2880 = vmatpush.bf16.msra.mxu0 %v2698
        %2881 = vmatpush.bf16.msra.mxu0 %v2692
        %2882 = vmatpush.bf16.msra.mxu0 %v2686
        %2883 = vmatpush.bf16.msra.mxu0 %v2680
        %2884 = vmatpush.bf16.msra.mxu0 %v2674
        %2885 = vmatpush.bf16.msra.mxu0 %v2668
        %2886 = vmatpush.bf16.msra.mxu0 %v2662
        %2887 = vmatmul.bf16.gmra.mxu0 %v2261
        %v2888 = vpop.f32.mrf.mxu0
        %v2889 = vadd.f32 %v2362, %v2888
        %v2890 = vpop.f32.mrf.mxu0
        %2891 = vdwg.mxu0
        %2892 = vmatpush.bf16.msra.mxu0 %v2752
        %2893 = vmatpush.bf16.msra.mxu0 %v2746
        %2894 = vmatpush.bf16.msra.mxu0 %v2740
        %2895 = vmatpush.bf16.msra.mxu0 %v2734
        %2896 = vmatpush.bf16.msra.mxu0 %v2728
        %2897 = vmatpush.bf16.msra.mxu0 %v2722
        %2898 = vmatpush.bf16.msra.mxu0 %v2716
        %2899 = vmatpush.bf16.msra.mxu0 %v2710
        %2900 = vmatmul.bf16.gmra.mxu0 %v2262
        %v2901 = vpop.f32.mrf.mxu0
        %v2902 = vadd.f32 %v2889, %v2901
        %v2903 = vpop.f32.mrf.mxu0
        %2904 = vdwg.mxu0
        %2905 = vmatpush.bf16.msra.mxu0 %v2705
        %2906 = vmatpush.bf16.msra.mxu0 %v2699
        %2907 = vmatpush.bf16.msra.mxu0 %v2693
        %2908 = vmatpush.bf16.msra.mxu0 %v2687
        %2909 = vmatpush.bf16.msra.mxu0 %v2681
        %2910 = vmatpush.bf16.msra.mxu0 %v2675
        %2911 = vmatpush.bf16.msra.mxu0 %v2669
        %2912 = vmatpush.bf16.msra.mxu0 %v2663
        %2913 = vmatmul.bf16.gmra.mxu0 %v2261
        %v2914 = vpop.f32.mrf.mxu0
        %v2915 = vadd.f32 %v2363, %v2914
        %v2916 = vpop.f32.mrf.mxu0
        %2917 = vdwg.mxu0
        %2918 = vmatpush.bf16.msra.mxu0 %v2753
        %2919 = vmatpush.bf16.msra.mxu0 %v2747
        %2920 = vmatpush.bf16.msra.mxu0 %v2741
        %2921 = vmatpush.bf16.msra.mxu0 %v2735
        %2922 = vmatpush.bf16.msra.mxu0 %v2729
        %2923 = vmatpush.bf16.msra.mxu0 %v2723
        %2924 = vmatpush.bf16.msra.mxu0 %v2717
        %2925 = vmatpush.bf16.msra.mxu0 %v2711
        %2926 = vmatmul.bf16.gmra.mxu0 %v2262
        %v2927 = vpop.f32.mrf.mxu0
        %v2928 = vadd.f32 %v2915, %v2927
        %v2929 = vpop.f32.mrf.mxu0
        %2930 = vdwg.mxu0
        %2931 = vmatpush.bf16.msra.mxu0 %v2706
        %2932 = vmatpush.bf16.msra.mxu0 %v2700
        %2933 = vmatpush.bf16.msra.mxu0 %v2694
        %2934 = vmatpush.bf16.msra.mxu0 %v2688
        %2935 = vmatpush.bf16.msra.mxu0 %v2682
        %2936 = vmatpush.bf16.msra.mxu0 %v2676
        %2937 = vmatpush.bf16.msra.mxu0 %v2670
        %2938 = vmatpush.bf16.msra.mxu0 %v2664
        %2939 = vmatmul.bf16.gmra.mxu0 %v2261
        %v2940 = vpop.f32.mrf.mxu0
        %v2941 = vadd.f32 %v2364, %v2940
        %v2942 = vpop.f32.mrf.mxu0
        %2943 = vdwg.mxu0
        %2944 = vmatpush.bf16.msra.mxu0 %v2754
        %2945 = vmatpush.bf16.msra.mxu0 %v2748
        %2946 = vmatpush.bf16.msra.mxu0 %v2742
        %2947 = vmatpush.bf16.msra.mxu0 %v2736
        %2948 = vmatpush.bf16.msra.mxu0 %v2730
        %2949 = vmatpush.bf16.msra.mxu0 %v2724
        %2950 = vmatpush.bf16.msra.mxu0 %v2718
        %2951 = vmatpush.bf16.msra.mxu0 %v2712
        %2952 = vmatmul.bf16.gmra.mxu0 %v2262
        %v2953 = vpop.f32.mrf.mxu0
        %v2954 = vadd.f32 %v2941, %v2953
        %v2955 = vpop.f32.mrf.mxu0
        %2956 = vdwg.mxu0
        %2957 = vmatpush.bf16.msra.mxu0 %v2707
        %2958 = vmatpush.bf16.msra.mxu0 %v2701
        %2959 = vmatpush.bf16.msra.mxu0 %v2695
        %2960 = vmatpush.bf16.msra.mxu0 %v2689
        %2961 = vmatpush.bf16.msra.mxu0 %v2683
        %2962 = vmatpush.bf16.msra.mxu0 %v2677
        %2963 = vmatpush.bf16.msra.mxu0 %v2671
        %2964 = vmatpush.bf16.msra.mxu0 %v2665
        %2965 = vmatmul.bf16.gmra.mxu0 %v2261
        %v2966 = vpop.f32.mrf.mxu0
        %v2967 = vadd.f32 %v2365, %v2966
        %v2968 = vpop.f32.mrf.mxu0
        %2969 = vdwg.mxu0
        %2970 = vmatpush.bf16.msra.mxu0 %v2755
        %2971 = vmatpush.bf16.msra.mxu0 %v2749
        %2972 = vmatpush.bf16.msra.mxu0 %v2743
        %2973 = vmatpush.bf16.msra.mxu0 %v2737
        %2974 = vmatpush.bf16.msra.mxu0 %v2731
        %2975 = vmatpush.bf16.msra.mxu0 %v2725
        %2976 = vmatpush.bf16.msra.mxu0 %v2719
        %2977 = vmatpush.bf16.msra.mxu0 %v2713
        %2978 = vmatmul.bf16.gmra.mxu0 %v2262
        %v2979 = vpop.f32.mrf.mxu0
        %v2980 = vadd.f32 %v2967, %v2979
        %v2981 = vpop.f32.mrf.mxu0
        %2982 = vdwg.mxu0
        %2983 = vmatpush.bf16.msra.mxu0 %v2708
        %2984 = vmatpush.bf16.msra.mxu0 %v2702
        %2985 = vmatpush.bf16.msra.mxu0 %v2696
        %2986 = vmatpush.bf16.msra.mxu0 %v2690
        %2987 = vmatpush.bf16.msra.mxu0 %v2684
        %2988 = vmatpush.bf16.msra.mxu0 %v2678
        %2989 = vmatpush.bf16.msra.mxu0 %v2672
        %2990 = vmatpush.bf16.msra.mxu0 %v2666
        %2991 = vmatmul.bf16.gmra.mxu0 %v2261
        %v2992 = vpop.f32.mrf.mxu0
        %v2993 = vadd.f32 %v2366, %v2992
        %v2994 = vpop.f32.mrf.mxu0
        %2995 = vdwg.mxu0
        %2996 = vmatpush.bf16.msra.mxu0 %v2756
        %2997 = vmatpush.bf16.msra.mxu0 %v2750
        %2998 = vmatpush.bf16.msra.mxu0 %v2744
        %2999 = vmatpush.bf16.msra.mxu0 %v2738
        %3000 = vmatpush.bf16.msra.mxu0 %v2732
        %3001 = vmatpush.bf16.msra.mxu0 %v2726
        %3002 = vmatpush.bf16.msra.mxu0 %v2720
        %3003 = vmatpush.bf16.msra.mxu0 %v2714
        %3004 = vmatmul.bf16.gmra.mxu0 %v2262
        %v3005 = vpop.f32.mrf.mxu0
        %v3006 = vadd.f32 %v2993, %v3005
        %v3007 = vpop.f32.mrf.mxu0
        %3008 = vdwg.mxu0
        %v3009 = vld [vmem:[#allocation3] sm:$0xff]
        %v3010 = vpack.c.bf16 %v2876, %v2876
        %v3011 = vpack.c.bf16 %v2928, %v2928
        %v3012 = vpack.c.bf16 %v2980, %v2980
        %3013 = vmatpush.bf16.xpose.msra.mxu0 0
        %3014 = vmatpush.bf16.xpose.msra.mxu0 0
        %3015 = vmatpush.bf16.xpose.msra.mxu0 0
        %3016 = vmatpush.bf16.xpose.msra.mxu0 0
        %3017 = vmatpush.bf16.xpose.msra.mxu0 0
        %3018 = vmatpush.bf16.xpose.msra.mxu0 0
        %3019 = vmatpush.bf16.xpose.msra.mxu0 0
        %3020 = vmatpush.bf16.xpose.msra.mxu0 %v3011
        %3021 = vmatmul.bf16.gmra.mxu0 %v3010
        %v3022 = vpop.f32.mrf.mxu0
        %v3023 = vadd.f32 %v3009, %v3022
        %v3024 = vpop.f32.mrf.mxu0
        %3025 = vdwg.mxu0
        %vm3026 = vcmask 64512
        %v3027 = vsel %vm3026, %v3023, -inf
        %3028 = vmax.xlane.f32.xlu0 %v3027
        %v3029 = vpop.xlane.xlu0 %3028
        %v3030 = vsub.f32 %v3023, %v3029
        %v3031 = vmul.f32 %v3030, 1.442695
        %v3032 = vpow.pop %v3031
        %v3033 = vsel %vm3026, %v3032, 0.0
        %3034 = vadd.xlane.f32.xlu0 %v3033
        %v3035 = vpop.xlane.xlu0 %3034
        %v3036 = vpack.c.bf16 %v3032, %v3032
        %v3038 = vsel %vm3026, %v3036, 0
        %vm3040 = vcmask 1043456
        %v3042 = vsel %vm3040, %v3012, 0
        %3044 = vmatpush.bf16.msra.mxu0 0
        %3045 = vmatpush.bf16.msra.mxu0 0
        %3046 = vmatpush.bf16.msra.mxu0 0
        %3047 = vmatpush.bf16.msra.mxu0 0
        %3048 = vmatpush.bf16.msra.mxu0 0
        %3049 = vmatpush.bf16.msra.mxu0 0
        %3050 = vmatpush.bf16.msra.mxu0 0
        %3051 = vmatpush.bf16.msra.mxu0 %v3042
        %3052 = vmatmul.bf16.gmra.mxu0 %v3038
        %v3053 = vpop.f32.mrf.mxu0
        %v3054 = vadd.f32 0.0, %v3053
        %v3055 = vpop.f32.mrf.mxu0
        %3056 = vdwg.mxu0
        %v3057 = vmax.f32 %v3035, 1e-30
        %v3058 = vrcp.pop %v3057
        %v3059 = vmul.f32 %v3054, %v3058
        %v3060 = vpack.c.bf16 %v2902, %v2902
        %v3061 = vpack.c.bf16 %v2954, %v2954
        %v3062 = vpack.c.bf16 %v3006, %v3006
        %3063 = vmatpush.bf16.xpose.msra.mxu0 0
        %3064 = vmatpush.bf16.xpose.msra.mxu0 0
        %3065 = vmatpush.bf16.xpose.msra.mxu0 0
        %3066 = vmatpush.bf16.xpose.msra.mxu0 0
        %3067 = vmatpush.bf16.xpose.msra.mxu0 0
        %3068 = vmatpush.bf16.xpose.msra.mxu0 0
        %3069 = vmatpush.bf16.xpose.msra.mxu0 0
        %3070 = vmatpush.bf16.xpose.msra.mxu0 %v3061
        %3071 = vmatmul.bf16.gmra.mxu0 %v3060
        %v3072 = vpop.f32.mrf.mxu0
        %v3073 = vadd.f32 %v3009, %v3072
        %v3074 = vpop.f32.mrf.mxu0
        %3075 = vdwg.mxu0
        %v3076 = vsel %vm3026, %v3073, -inf
        %3077 = vmax.xlane.f32.xlu0 %v3076
        %v3078 = vpop.xlane.xlu0 %3077
        %v3079 = vsub.f32 %v3073, %v3078
        %v3080 = vmul.f32 %v3079, 1.442695
        %v3081 = vpow.pop %v3080
        %v3082 = vsel %vm3026, %v3081, 0.0
        %3083 = vadd.xlane.f32.xlu0 %v3082
        %v3084 = vpop.xlane.xlu0 %3083
        %v3085 = vpack.c.bf16 %v3081, %v3081
        %v3087 = vsel %vm3026, %v3085, 0
        %v3090 = vsel %vm3040, %v3062, 0
        %3092 = vmatpush.bf16.msra.mxu0 0
        %3093 = vmatpush.bf16.msra.mxu0 0
        %3094 = vmatpush.bf16.msra.mxu0 0
        %3095 = vmatpush.bf16.msra.mxu0 0
        %3096 = vmatpush.bf16.msra.mxu0 0
        %3097 = vmatpush.bf16.msra.mxu0 0
        %3098 = vmatpush.bf16.msra.mxu0 0
        %3099 = vmatpush.bf16.msra.mxu0 %v3090
        %3100 = vmatmul.bf16.gmra.mxu0 %v3087
        %v3101 = vpop.f32.mrf.mxu0
        %v3102 = vadd.f32 0.0, %v3101
        %v3103 = vpop.f32.mrf.mxu0
        %3104 = vdwg.mxu0
        %v3105 = vmax.f32 %v3084, 1e-30
        %v3106 = vrcp.pop %v3105
        %v3107 = vmul.f32 %v3102, %v3106
        %v3108 = vld [vmem:[#allocation4] sm:$0xff]
        %3110 = vset.pattern.permute.xlu0 0
        %3111 = vperm.xlu0 %3110, %v3108
        %v3112 = vpop.permute.xlu0 %3111
        %v3114 = vmul.f32 %v3059, %v3112
        %v3115 = vmul.f32 %v3107, %v3112
        %v3116 = vpack.c.bf16 %v3114, %v3114
        %v3117 = vpack.c.bf16 %v3115, %v3115
        %v3118 = vld [vmem:[%s1733] sm:$0xff]
        %v3119 = vld [vmem:[%s1733 + $0x8] sm:$0xff]
        %v3120 = vld [vmem:[%s1733 + $0x10] sm:$0xff]
        %v3121 = vld [vmem:[%s1733 + $0x18] sm:$0xff]
        %v3122 = vld [vmem:[%s1733 + $0x20] sm:$0xff]
        %v3123 = vld [vmem:[%s1733 + $0x28] sm:$0xff]
        %v3124 = vld [vmem:[%s1733 + $0x30] sm:$0xff]
        %v3125 = vld [vmem:[%s1733 + $0x38] sm:$0xff]
        %v3126 = vld [vmem:[%s1733 + $0x40] sm:$0xff]
        %v3127 = vld [vmem:[%s1733 + $0x48] sm:$0xff]
        %v3128 = vld [vmem:[%s1733 + $0x50] sm:$0xff]
        %v3129 = vld [vmem:[%s1733 + $0x58] sm:$0xff]
        %v3130 = vld [vmem:[%s1733 + $0x60] sm:$0xff]
        %v3131 = vld [vmem:[%s1733 + $0x68] sm:$0xff]
        %v3132 = vld [vmem:[%s1733 + $0x70] sm:$0xff]
        %v3133 = vld [vmem:[%s1733 + $0x78] sm:$0xff]
        %v3134 = vld [vmem:[%s1733 + $0x80] sm:$0xff]
        %v3135 = vld [vmem:[%s1733 + $0x88] sm:$0xff]
        %v3136 = vld [vmem:[%s1733 + $0x90] sm:$0xff]
        %v3137 = vld [vmem:[%s1733 + $0x98] sm:$0xff]
        %v3138 = vld [vmem:[%s1733 + $0xa0] sm:$0xff]
        %v3139 = vld [vmem:[%s1733 + $0xa8] sm:$0xff]
        %v3140 = vld [vmem:[%s1733 + $0xb0] sm:$0xff]
        %v3141 = vld [vmem:[%s1733 + $0xb8] sm:$0xff]
        %v3142 = vld [vmem:[%s1733 + $0xc0] sm:$0xff]
        %v3143 = vld [vmem:[%s1733 + $0xc8] sm:$0xff]
        %v3144 = vld [vmem:[%s1733 + $0xd0] sm:$0xff]
        %v3145 = vld [vmem:[%s1733 + $0xd8] sm:$0xff]
        %v3146 = vld [vmem:[%s1733 + $0xe0] sm:$0xff]
        %v3147 = vld [vmem:[%s1733 + $0xe8] sm:$0xff]
        %v3148 = vld [vmem:[%s1733 + $0xf0] sm:$0xff]
        %v3149 = vld [vmem:[%s1733 + $0xf8] sm:$0xff]
        %v3150 = vld [vmem:[%s1743] sm:$0x3]
        %v3152 = vperm.slane %v3150, 0
        %v3153 = vperm.slane %v3150, 1
        %v3188 = vunpack.c.l.b16 %v3118
        %v3189 = vunpack.c.h.b16 %v3118
        %v3190 = vunpack.c.l.b16 %v3119
        %v3191 = vunpack.c.h.b16 %v3119
        %v3192 = vunpack.c.l.b16 %v3120
        %v3193 = vunpack.c.h.b16 %v3120
        %v3194 = vunpack.c.l.b16 %v3121
        %v3195 = vunpack.c.h.b16 %v3121
        %v3196 = vunpack.c.l.b16 %v3122
        %v3197 = vunpack.c.h.b16 %v3122
        %v3198 = vunpack.c.l.b16 %v3123
        %v3199 = vunpack.c.h.b16 %v3123
        %v3200 = vunpack.c.l.b16 %v3124
        %v3201 = vunpack.c.h.b16 %v3124
        %v3202 = vunpack.c.l.b16 %v3125
        %v3203 = vunpack.c.h.b16 %v3125
        %v3204 = vunpack.c.l.b16 %v3126
        %v3205 = vunpack.c.h.b16 %v3126
        %v3206 = vunpack.c.l.b16 %v3127
        %v3207 = vunpack.c.h.b16 %v3127
        %v3208 = vunpack.c.l.b16 %v3128
        %v3209 = vunpack.c.h.b16 %v3128
        %v3210 = vunpack.c.l.b16 %v3129
        %v3211 = vunpack.c.h.b16 %v3129
        %v3212 = vunpack.c.l.b16 %v3130
        %v3213 = vunpack.c.h.b16 %v3130
        %v3214 = vunpack.c.l.b16 %v3131
        %v3215 = vunpack.c.h.b16 %v3131
        %v3216 = vunpack.c.l.b16 %v3132
        %v3217 = vunpack.c.h.b16 %v3132
        %v3218 = vunpack.c.l.b16 %v3133
        %v3219 = vunpack.c.h.b16 %v3133
        %v3220 = vunpack.c.l.b16 %v3134
        %v3221 = vunpack.c.h.b16 %v3134
        %v3222 = vunpack.c.l.b16 %v3135
        %v3223 = vunpack.c.h.b16 %v3135
        %v3224 = vunpack.c.l.b16 %v3136
        %v3225 = vunpack.c.h.b16 %v3136
        %v3226 = vunpack.c.l.b16 %v3137
        %v3227 = vunpack.c.h.b16 %v3137
        %v3228 = vunpack.c.l.b16 %v3138
        %v3229 = vunpack.c.h.b16 %v3138
        %v3230 = vunpack.c.l.b16 %v3139
        %v3231 = vunpack.c.h.b16 %v3139
        %v3232 = vunpack.c.l.b16 %v3140
        %v3233 = vunpack.c.h.b16 %v3140
        %v3234 = vunpack.c.l.b16 %v3141
        %v3235 = vunpack.c.h.b16 %v3141
        %v3236 = vunpack.c.l.b16 %v3142
        %v3237 = vunpack.c.h.b16 %v3142
        %v3238 = vunpack.c.l.b16 %v3143
        %v3239 = vunpack.c.h.b16 %v3143
        %v3240 = vunpack.c.l.b16 %v3144
        %v3241 = vunpack.c.h.b16 %v3144
        %v3242 = vunpack.c.l.b16 %v3145
        %v3243 = vunpack.c.h.b16 %v3145
        %v3244 = vunpack.c.l.b16 %v3146
        %v3245 = vunpack.c.h.b16 %v3146
        %v3246 = vunpack.c.l.b16 %v3147
        %v3247 = vunpack.c.h.b16 %v3147
        %v3248 = vunpack.c.l.b16 %v3148
        %v3249 = vunpack.c.h.b16 %v3148
        %v3250 = vunpack.c.l.b16 %v3149
        %v3251 = vunpack.c.h.b16 %v3149
        %v3252 = vpack.c.b16 %v3190, %v3188
        %v3253 = vpack.c.b16 %v3191, %v3189
        %v3254 = vpack.c.b16 %v3194, %v3192
        %v3255 = vpack.c.b16 %v3195, %v3193
        %v3256 = vpack.c.b16 %v3198, %v3196
        %v3257 = vpack.c.b16 %v3199, %v3197
        %v3258 = vpack.c.b16 %v3202, %v3200
        %v3259 = vpack.c.b16 %v3203, %v3201
        %v3260 = vpack.c.b16 %v3206, %v3204
        %v3261 = vpack.c.b16 %v3207, %v3205
        %v3262 = vpack.c.b16 %v3210, %v3208
        %v3263 = vpack.c.b16 %v3211, %v3209
        %v3264 = vpack.c.b16 %v3214, %v3212
        %v3265 = vpack.c.b16 %v3215, %v3213
        %v3266 = vpack.c.b16 %v3218, %v3216
        %v3267 = vpack.c.b16 %v3219, %v3217
        %v3268 = vpack.c.b16 %v3222, %v3220
        %v3269 = vpack.c.b16 %v3223, %v3221
        %v3270 = vpack.c.b16 %v3226, %v3224
        %v3271 = vpack.c.b16 %v3227, %v3225
        %v3272 = vpack.c.b16 %v3230, %v3228
        %v3273 = vpack.c.b16 %v3231, %v3229
        %v3274 = vpack.c.b16 %v3234, %v3232
        %v3275 = vpack.c.b16 %v3235, %v3233
        %v3276 = vpack.c.b16 %v3238, %v3236
        %v3277 = vpack.c.b16 %v3239, %v3237
        %v3278 = vpack.c.b16 %v3242, %v3240
        %v3279 = vpack.c.b16 %v3243, %v3241
        %v3280 = vpack.c.b16 %v3246, %v3244
        %v3281 = vpack.c.b16 %v3247, %v3245
        %v3282 = vpack.c.b16 %v3250, %v3248
        %v3283 = vpack.c.b16 %v3251, %v3249
        %3316 = vmatpush.bf16.msra.mxu0 %v3266
        %3317 = vmatpush.bf16.msra.mxu0 %v3264
        %3318 = vmatpush.bf16.msra.mxu0 %v3262
        %3319 = vmatpush.bf16.msra.mxu0 %v3260
        %3320 = vmatpush.bf16.msra.mxu0 %v3258
        %3321 = vmatpush.bf16.msra.mxu0 %v3256
        %3322 = vmatpush.bf16.msra.mxu0 %v3254
        %3323 = vmatpush.bf16.msra.mxu0 %v3252
        %3324 = vmatmul.bf16.gmra.mxu0 %v3116
        %v3325 = vpop.f32.mrf.mxu0
        %v3326 = vadd.f32 %v3152, %v3325
        %v3327 = vpop.f32.mrf.mxu0
        %3328 = vdwg.mxu0
        %3329 = vmatpush.bf16.msra.mxu0 %v3282
        %3330 = vmatpush.bf16.msra.mxu0 %v3280
        %3331 = vmatpush.bf16.msra.mxu0 %v3278
        %3332 = vmatpush.bf16.msra.mxu0 %v3276
        %3333 = vmatpush.bf16.msra.mxu0 %v3274
        %3334 = vmatpush.bf16.msra.mxu0 %v3272
        %3335 = vmatpush.bf16.msra.mxu0 %v3270
        %3336 = vmatpush.bf16.msra.mxu0 %v3268
        %3337 = vmatmul.bf16.gmra.mxu0 %v3117
        %v3338 = vpop.f32.mrf.mxu0
        %v3339 = vadd.f32 %v3326, %v3338
        %v3340 = vpop.f32.mrf.mxu0
        %3341 = vdwg.mxu0
        %3342 = vmatpush.bf16.msra.mxu0 %v3267
        %3343 = vmatpush.bf16.msra.mxu0 %v3265
        %3344 = vmatpush.bf16.msra.mxu0 %v3263
        %3345 = vmatpush.bf16.msra.mxu0 %v3261
        %3346 = vmatpush.bf16.msra.mxu0 %v3259
        %3347 = vmatpush.bf16.msra.mxu0 %v3257
        %3348 = vmatpush.bf16.msra.mxu0 %v3255
        %3349 = vmatpush.bf16.msra.mxu0 %v3253
        %3350 = vmatmul.bf16.gmra.mxu0 %v3116
        %v3351 = vpop.f32.mrf.mxu0
        %v3352 = vadd.f32 %v3153, %v3351
        %v3353 = vpop.f32.mrf.mxu0
        %3354 = vdwg.mxu0
        %3355 = vmatpush.bf16.msra.mxu0 %v3283
        %3356 = vmatpush.bf16.msra.mxu0 %v3281
        %3357 = vmatpush.bf16.msra.mxu0 %v3279
        %3358 = vmatpush.bf16.msra.mxu0 %v3277
        %3359 = vmatpush.bf16.msra.mxu0 %v3275
        %3360 = vmatpush.bf16.msra.mxu0 %v3273
        %3361 = vmatpush.bf16.msra.mxu0 %v3271
        %3362 = vmatpush.bf16.msra.mxu0 %v3269
        %3363 = vmatmul.bf16.gmra.mxu0 %v3117
        %v3364 = vpop.f32.mrf.mxu0
        %v3365 = vadd.f32 %v3352, %v3364
        %v3366 = vpop.f32.mrf.mxu0
        %3367 = vdwg.mxu0
        %v3368 = vmax.f32 %v3339, 0.0
        %v3369 = vmax.f32 %v3365, 0.0
        %v3370 = vld [vmem:[%s1753] sm:$0xff]
        %v3371 = vld [vmem:[%s1753 + $0x8] sm:$0xff]
        %v3372 = vld [vmem:[%s1753 + $0x10] sm:$0xff]
        %v3373 = vld [vmem:[%s1753 + $0x18] sm:$0xff]
        %v3374 = vld [vmem:[%s1753 + $0x20] sm:$0xff]
        %v3375 = vld [vmem:[%s1753 + $0x28] sm:$0xff]
        %v3376 = vld [vmem:[%s1753 + $0x30] sm:$0xff]
        %v3377 = vld [vmem:[%s1753 + $0x38] sm:$0xff]
        %v3378 = vld [vmem:[%s1753 + $0x40] sm:$0xff]
        %v3379 = vld [vmem:[%s1753 + $0x48] sm:$0xff]
        %v3380 = vld [vmem:[%s1753 + $0x50] sm:$0xff]
        %v3381 = vld [vmem:[%s1753 + $0x58] sm:$0xff]
        %v3382 = vld [vmem:[%s1753 + $0x60] sm:$0xff]
        %v3383 = vld [vmem:[%s1753 + $0x68] sm:$0xff]
        %v3384 = vld [vmem:[%s1753 + $0x70] sm:$0xff]
        %v3385 = vld [vmem:[%s1753 + $0x78] sm:$0xff]
        %v3386 = vld [vmem:[%s1753 + $0x80] sm:$0xff]
        %v3387 = vld [vmem:[%s1753 + $0x88] sm:$0xff]
        %v3388 = vld [vmem:[%s1753 + $0x90] sm:$0xff]
        %v3389 = vld [vmem:[%s1753 + $0x98] sm:$0xff]
        %v3390 = vld [vmem:[%s1753 + $0xa0] sm:$0xff]
        %v3391 = vld [vmem:[%s1753 + $0xa8] sm:$0xff]
        %v3392 = vld [vmem:[%s1753 + $0xb0] sm:$0xff]
        %v3393 = vld [vmem:[%s1753 + $0xb8] sm:$0xff]
        %v3394 = vld [vmem:[%s1753 + $0xc0] sm:$0xff]
        %v3395 = vld [vmem:[%s1753 + $0xc8] sm:$0xff]
        %v3396 = vld [vmem:[%s1753 + $0xd0] sm:$0xff]
        %v3397 = vld [vmem:[%s1753 + $0xd8] sm:$0xff]
        %v3398 = vld [vmem:[%s1753 + $0xe0] sm:$0xff]
        %v3399 = vld [vmem:[%s1753 + $0xe8] sm:$0xff]
        %v3400 = vld [vmem:[%s1753 + $0xf0] sm:$0xff]
        %v3401 = vld [vmem:[%s1753 + $0xf8] sm:$0xff]
        %v3402 = vld [vmem:[%s1753 + $0x100] sm:$0xff]
        %v3403 = vld [vmem:[%s1753 + $0x108] sm:$0xff]
        %v3404 = vld [vmem:[%s1753 + $0x110] sm:$0xff]
        %v3405 = vld [vmem:[%s1753 + $0x118] sm:$0xff]
        %v3406 = vld [vmem:[%s1753 + $0x120] sm:$0xff]
        %v3407 = vld [vmem:[%s1753 + $0x128] sm:$0xff]
        %v3408 = vld [vmem:[%s1753 + $0x130] sm:$0xff]
        %v3409 = vld [vmem:[%s1753 + $0x138] sm:$0xff]
        %v3410 = vld [vmem:[%s1753 + $0x140] sm:$0xff]
        %v3411 = vld [vmem:[%s1753 + $0x148] sm:$0xff]
        %v3412 = vld [vmem:[%s1753 + $0x150] sm:$0xff]
        %v3413 = vld [vmem:[%s1753 + $0x158] sm:$0xff]
        %v3414 = vld [vmem:[%s1753 + $0x160] sm:$0xff]
        %v3415 = vld [vmem:[%s1753 + $0x168] sm:$0xff]
        %v3416 = vld [vmem:[%s1753 + $0x170] sm:$0xff]
        %v3417 = vld [vmem:[%s1753 + $0x178] sm:$0xff]
        %v3418 = vld [vmem:[%s1753 + $0x180] sm:$0xff]
        %v3419 = vld [vmem:[%s1753 + $0x188] sm:$0xff]
        %v3420 = vld [vmem:[%s1753 + $0x190] sm:$0xff]
        %v3421 = vld [vmem:[%s1753 + $0x198] sm:$0xff]
        %v3422 = vld [vmem:[%s1753 + $0x1a0] sm:$0xff]
        %v3423 = vld [vmem:[%s1753 + $0x1a8] sm:$0xff]
        %v3424 = vld [vmem:[%s1753 + $0x1b0] sm:$0xff]
        %v3425 = vld [vmem:[%s1753 + $0x1b8] sm:$0xff]
        %v3426 = vld [vmem:[%s1753 + $0x1c0] sm:$0xff]
        %v3427 = vld [vmem:[%s1753 + $0x1c8] sm:$0xff]
        %v3428 = vld [vmem:[%s1753 + $0x1d0] sm:$0xff]
        %v3429 = vld [vmem:[%s1753 + $0x1d8] sm:$0xff]
        %v3430 = vld [vmem:[%s1753 + $0x1e0] sm:$0xff]
        %v3431 = vld [vmem:[%s1753 + $0x1e8] sm:$0xff]
        %v3432 = vld [vmem:[%s1753 + $0x1f0] sm:$0xff]
        %v3433 = vld [vmem:[%s1753 + $0x1f8] sm:$0xff]
        %v3434 = vld [vmem:[%s1763] sm:$0xff]
        %v3435 = vld [vmem:[%s1763 + $0x8] sm:$0xff]
        %v3436 = vld [vmem:[%s1763 + $0x10] sm:$0xff]
        %v3437 = vld [vmem:[%s1763 + $0x18] sm:$0xff]
        %v3438 = vld [vmem:[%s1763 + $0x20] sm:$0xff]
        %v3439 = vld [vmem:[%s1763 + $0x28] sm:$0xff]
        %v3440 = vld [vmem:[%s1763 + $0x30] sm:$0xff]
        %v3441 = vld [vmem:[%s1763 + $0x38] sm:$0xff]
        %v3442 = vld [vmem:[%s1763 + $0x40] sm:$0xff]
        %v3443 = vld [vmem:[%s1763 + $0x48] sm:$0xff]
        %v3444 = vld [vmem:[%s1763 + $0x50] sm:$0xff]
        %v3445 = vld [vmem:[%s1763 + $0x58] sm:$0xff]
        %v3446 = vld [vmem:[%s1763 + $0x60] sm:$0xff]
        %v3447 = vld [vmem:[%s1763 + $0x68] sm:$0xff]
        %v3448 = vld [vmem:[%s1763 + $0x70] sm:$0xff]
        %v3449 = vld [vmem:[%s1763 + $0x78] sm:$0xff]
        %v3450 = vld [vmem:[%s1763 + $0x80] sm:$0xff]
        %v3451 = vld [vmem:[%s1763 + $0x88] sm:$0xff]
        %v3452 = vld [vmem:[%s1763 + $0x90] sm:$0xff]
        %v3453 = vld [vmem:[%s1763 + $0x98] sm:$0xff]
        %v3454 = vld [vmem:[%s1763 + $0xa0] sm:$0xff]
        %v3455 = vld [vmem:[%s1763 + $0xa8] sm:$0xff]
        %v3456 = vld [vmem:[%s1763 + $0xb0] sm:$0xff]
        %v3457 = vld [vmem:[%s1763 + $0xb8] sm:$0xff]
        %v3458 = vld [vmem:[%s1763 + $0xc0] sm:$0xff]
        %v3459 = vld [vmem:[%s1763 + $0xc8] sm:$0xff]
        %v3460 = vld [vmem:[%s1763 + $0xd0] sm:$0xff]
        %v3461 = vld [vmem:[%s1763 + $0xd8] sm:$0xff]
        %v3462 = vld [vmem:[%s1763 + $0xe0] sm:$0xff]
        %v3463 = vld [vmem:[%s1763 + $0xe8] sm:$0xff]
        %v3464 = vld [vmem:[%s1763 + $0xf0] sm:$0xff]
        %v3465 = vld [vmem:[%s1763 + $0xf8] sm:$0xff]
        %v3466 = vld [vmem:[%s1763 + $0x100] sm:$0xff]
        %v3467 = vld [vmem:[%s1763 + $0x108] sm:$0xff]
        %v3468 = vld [vmem:[%s1763 + $0x110] sm:$0xff]
        %v3469 = vld [vmem:[%s1763 + $0x118] sm:$0xff]
        %v3470 = vld [vmem:[%s1763 + $0x120] sm:$0xff]
        %v3471 = vld [vmem:[%s1763 + $0x128] sm:$0xff]
        %v3472 = vld [vmem:[%s1763 + $0x130] sm:$0xff]
        %v3473 = vld [vmem:[%s1763 + $0x138] sm:$0xff]
        %v3474 = vld [vmem:[%s1763 + $0x140] sm:$0xff]
        %v3475 = vld [vmem:[%s1763 + $0x148] sm:$0xff]
        %v3476 = vld [vmem:[%s1763 + $0x150] sm:$0xff]
        %v3477 = vld [vmem:[%s1763 + $0x158] sm:$0xff]
        %v3478 = vld [vmem:[%s1763 + $0x160] sm:$0xff]
        %v3479 = vld [vmem:[%s1763 + $0x168] sm:$0xff]
        %v3480 = vld [vmem:[%s1763 + $0x170] sm:$0xff]
        %v3481 = vld [vmem:[%s1763 + $0x178] sm:$0xff]
        %v3482 = vld [vmem:[%s1763 + $0x180] sm:$0xff]
        %v3483 = vld [vmem:[%s1763 + $0x188] sm:$0xff]
        %v3484 = vld [vmem:[%s1763 + $0x190] sm:$0xff]
        %v3485 = vld [vmem:[%s1763 + $0x198] sm:$0xff]
        %v3486 = vld [vmem:[%s1763 + $0x1a0] sm:$0xff]
        %v3487 = vld [vmem:[%s1763 + $0x1a8] sm:$0xff]
        %v3488 = vld [vmem:[%s1763 + $0x1b0] sm:$0xff]
        %v3489 = vld [vmem:[%s1763 + $0x1b8] sm:$0xff]
        %v3490 = vld [vmem:[%s1763 + $0x1c0] sm:$0xff]
        %v3491 = vld [vmem:[%s1763 + $0x1c8] sm:$0xff]
        %v3492 = vld [vmem:[%s1763 + $0x1d0] sm:$0xff]
        %v3493 = vld [vmem:[%s1763 + $0x1d8] sm:$0xff]
        %v3494 = vld [vmem:[%s1763 + $0x1e0] sm:$0xff]
        %v3495 = vld [vmem:[%s1763 + $0x1e8] sm:$0xff]
        %v3496 = vld [vmem:[%s1763 + $0x1f0] sm:$0xff]
        %v3497 = vld [vmem:[%s1763 + $0x1f8] sm:$0xff]
        %v3498 = vld [vmem:[%s1773] sm:$0xf]
        %v3499 = vld [vmem:[%s1783] sm:$0xff]
        %v3500 = vld [vmem:[%s1783 + $0x8] sm:$0xff]
        %v3501 = vld [vmem:[%s1783 + $0x10] sm:$0xff]
        %v3502 = vld [vmem:[%s1783 + $0x18] sm:$0xff]
        %v3503 = vld [vmem:[%s1783 + $0x20] sm:$0xff]
        %v3504 = vld [vmem:[%s1783 + $0x28] sm:$0xff]
        %v3505 = vld [vmem:[%s1783 + $0x30] sm:$0xff]
        %v3506 = vld [vmem:[%s1783 + $0x38] sm:$0xff]
        %v3507 = vld [vmem:[%s1783 + $0x40] sm:$0xff]
        %v3508 = vld [vmem:[%s1783 + $0x48] sm:$0xff]
        %v3509 = vld [vmem:[%s1783 + $0x50] sm:$0xff]
        %v3510 = vld [vmem:[%s1783 + $0x58] sm:$0xff]
        %v3511 = vld [vmem:[%s1783 + $0x60] sm:$0xff]
        %v3512 = vld [vmem:[%s1783 + $0x68] sm:$0xff]
        %v3513 = vld [vmem:[%s1783 + $0x70] sm:$0xff]
        %v3514 = vld [vmem:[%s1783 + $0x78] sm:$0xff]
        %v3515 = vld [vmem:[%s1783 + $0x80] sm:$0xff]
        %v3516 = vld [vmem:[%s1783 + $0x88] sm:$0xff]
        %v3517 = vld [vmem:[%s1783 + $0x90] sm:$0xff]
        %v3518 = vld [vmem:[%s1783 + $0x98] sm:$0xff]
        %v3519 = vld [vmem:[%s1783 + $0xa0] sm:$0xff]
        %v3520 = vld [vmem:[%s1783 + $0xa8] sm:$0xff]
        %v3521 = vld [vmem:[%s1783 + $0xb0] sm:$0xff]
        %v3522 = vld [vmem:[%s1783 + $0xb8] sm:$0xff]
        %v3523 = vld [vmem:[%s1783 + $0xc0] sm:$0xff]
        %v3524 = vld [vmem:[%s1783 + $0xc8] sm:$0xff]
        %v3525 = vld [vmem:[%s1783 + $0xd0] sm:$0xff]
        %v3526 = vld [vmem:[%s1783 + $0xd8] sm:$0xff]
        %v3527 = vld [vmem:[%s1783 + $0xe0] sm:$0xff]
        %v3528 = vld [vmem:[%s1783 + $0xe8] sm:$0xff]
        %v3529 = vld [vmem:[%s1783 + $0xf0] sm:$0xff]
        %v3530 = vld [vmem:[%s1783 + $0xf8] sm:$0xff]
        %v3531 = vld [vmem:[%s1793] sm:$0xff]
        %v3532 = vld [vmem:[%s1793 + $0x8] sm:$0xff]
        %v3533 = vld [vmem:[%s1793 + $0x10] sm:$0xff]
        %v3534 = vld [vmem:[%s1793 + $0x18] sm:$0xff]
        %v3535 = vld [vmem:[%s1793 + $0x20] sm:$0xff]
        %v3536 = vld [vmem:[%s1793 + $0x28] sm:$0xff]
        %v3537 = vld [vmem:[%s1793 + $0x30] sm:$0xff]
        %v3538 = vld [vmem:[%s1793 + $0x38] sm:$0xff]
        %v3539 = vld [vmem:[%s1793 + $0x40] sm:$0xff]
        %v3540 = vld [vmem:[%s1793 + $0x48] sm:$0xff]
        %v3541 = vld [vmem:[%s1793 + $0x50] sm:$0xff]
        %v3542 = vld [vmem:[%s1793 + $0x58] sm:$0xff]
        %v3543 = vld [vmem:[%s1793 + $0x60] sm:$0xff]
        %v3544 = vld [vmem:[%s1793 + $0x68] sm:$0xff]
        %v3545 = vld [vmem:[%s1793 + $0x70] sm:$0xff]
        %v3546 = vld [vmem:[%s1793 + $0x78] sm:$0xff]
        %v3547 = vld [vmem:[%s1793 + $0x80] sm:$0xff]
        %v3548 = vld [vmem:[%s1793 + $0x88] sm:$0xff]
        %v3549 = vld [vmem:[%s1793 + $0x90] sm:$0xff]
        %v3550 = vld [vmem:[%s1793 + $0x98] sm:$0xff]
        %v3551 = vld [vmem:[%s1793 + $0xa0] sm:$0xff]
        %v3552 = vld [vmem:[%s1793 + $0xa8] sm:$0xff]
        %v3553 = vld [vmem:[%s1793 + $0xb0] sm:$0xff]
        %v3554 = vld [vmem:[%s1793 + $0xb8] sm:$0xff]
        %v3555 = vld [vmem:[%s1793 + $0xc0] sm:$0xff]
        %v3556 = vld [vmem:[%s1793 + $0xc8] sm:$0xff]
        %v3557 = vld [vmem:[%s1793 + $0xd0] sm:$0xff]
        %v3558 = vld [vmem:[%s1793 + $0xd8] sm:$0xff]
        %v3559 = vld [vmem:[%s1793 + $0xe0] sm:$0xff]
        %v3560 = vld [vmem:[%s1793 + $0xe8] sm:$0xff]
        %v3561 = vld [vmem:[%s1793 + $0xf0] sm:$0xff]
        %v3562 = vld [vmem:[%s1793 + $0xf8] sm:$0xff]
        %v3563 = vld [vmem:[%s1803] sm:$0x3]
        %v3564 = vpack.c.bf16 %v3368, %v3368
        %v3565 = vpack.c.bf16 %v3369, %v3369
        %v3566 = vpack.c.bf16 %v2180, %v2180
        %v3567 = vpack.c.bf16 %v2181, %v2181
        %v3632 = vunpack.c.l.b16 %v3434
        %v3633 = vunpack.c.h.b16 %v3434
        %v3634 = vunpack.c.l.b16 %v3435
        %v3635 = vunpack.c.h.b16 %v3435
        %v3636 = vunpack.c.l.b16 %v3436
        %v3637 = vunpack.c.h.b16 %v3436
        %v3638 = vunpack.c.l.b16 %v3437
        %v3639 = vunpack.c.h.b16 %v3437
        %v3640 = vunpack.c.l.b16 %v3438
        %v3641 = vunpack.c.h.b16 %v3438
        %v3642 = vunpack.c.l.b16 %v3439
        %v3643 = vunpack.c.h.b16 %v3439
        %v3644 = vunpack.c.l.b16 %v3440
        %v3645 = vunpack.c.h.b16 %v3440
        %v3646 = vunpack.c.l.b16 %v3441
        %v3647 = vunpack.c.h.b16 %v3441
        %v3648 = vunpack.c.l.b16 %v3442
        %v3649 = vunpack.c.h.b16 %v3442
        %v3650 = vunpack.c.l.b16 %v3443
        %v3651 = vunpack.c.h.b16 %v3443
        %v3652 = vunpack.c.l.b16 %v3444
        %v3653 = vunpack.c.h.b16 %v3444
        %v3654 = vunpack.c.l.b16 %v3445
        %v3655 = vunpack.c.h.b16 %v3445
        %v3656 = vunpack.c.l.b16 %v3446
        %v3657 = vunpack.c.h.b16 %v3446
        %v3658 = vunpack.c.l.b16 %v3447
        %v3659 = vunpack.c.h.b16 %v3447
        %v3660 = vunpack.c.l.b16 %v3448
        %v3661 = vunpack.c.h.b16 %v3448
        %v3662 = vunpack.c.l.b16 %v3449
        %v3663 = vunpack.c.h.b16 %v3449
        %v3664 = vunpack.c.l.b16 %v3450
        %v3665 = vunpack.c.h.b16 %v3450
        %v3666 = vunpack.c.l.b16 %v3451
        %v3667 = vunpack.c.h.b16 %v3451
        %v3668 = vunpack.c.l.b16 %v3452
        %v3669 = vunpack.c.h.b16 %v3452
        %v3670 = vunpack.c.l.b16 %v3453
        %v3671 = vunpack.c.h.b16 %v3453
        %v3672 = vunpack.c.l.b16 %v3454
        %v3673 = vunpack.c.h.b16 %v3454
        %v3674 = vunpack.c.l.b16 %v3455
        %v3675 = vunpack.c.h.b16 %v3455
        %v3676 = vunpack.c.l.b16 %v3456
        %v3677 = vunpack.c.h.b16 %v3456
        %v3678 = vunpack.c.l.b16 %v3457
        %v3679 = vunpack.c.h.b16 %v3457
        %v3680 = vunpack.c.l.b16 %v3458
        %v3681 = vunpack.c.h.b16 %v3458
        %v3682 = vunpack.c.l.b16 %v3459
        %v3683 = vunpack.c.h.b16 %v3459
        %v3684 = vunpack.c.l.b16 %v3460
        %v3685 = vunpack.c.h.b16 %v3460
        %v3686 = vunpack.c.l.b16 %v3461
        %v3687 = vunpack.c.h.b16 %v3461
        %v3688 = vunpack.c.l.b16 %v3462
        %v3689 = vunpack.c.h.b16 %v3462
        %v3690 = vunpack.c.l.b16 %v3463
        %v3691 = vunpack.c.h.b16 %v3463
        %v3692 = vunpack.c.l.b16 %v3464
        %v3693 = vunpack.c.h.b16 %v3464
        %v3694 = vunpack.c.l.b16 %v3465
        %v3695 = vunpack.c.h.b16 %v3465
        %v3696 = vunpack.c.l.b16 %v3466
        %v3697 = vunpack.c.h.b16 %v3466
        %v3698 = vunpack.c.l.b16 %v3467
        %v3699 = vunpack.c.h.b16 %v3467
        %v3700 = vunpack.c.l.b16 %v3468
        %v3701 = vunpack.c.h.b16 %v3468
        %v3702 = vunpack.c.l.b16 %v3469
        %v3703 = vunpack.c.h.b16 %v3469
        %v3704 = vunpack.c.l.b16 %v3470
        %v3705 = vunpack.c.h.b16 %v3470
        %v3706 = vunpack.c.l.b16 %v3471
        %v3707 = vunpack.c.h.b16 %v3471
        %v3708 = vunpack.c.l.b16 %v3472
        %v3709 = vunpack.c.h.b16 %v3472
        %v3710 = vunpack.c.l.b16 %v3473
        %v3711 = vunpack.c.h.b16 %v3473
        %v3712 = vunpack.c.l.b16 %v3474
        %v3713 = vunpack.c.h.b16 %v3474
        %v3714 = vunpack.c.l.b16 %v3475
        %v3715 = vunpack.c.h.b16 %v3475
        %v3716 = vunpack.c.l.b16 %v3476
        %v3717 = vunpack.c.h.b16 %v3476
        %v3718 = vunpack.c.l.b16 %v3477
        %v3719 = vunpack.c.h.b16 %v3477
        %v3720 = vunpack.c.l.b16 %v3478
        %v3721 = vunpack.c.h.b16 %v3478
        %v3722 = vunpack.c.l.b16 %v3479
        %v3723 = vunpack.c.h.b16 %v3479
        %v3724 = vunpack.c.l.b16 %v3480
        %v3725 = vunpack.c.h.b16 %v3480
        %v3726 = vunpack.c.l.b16 %v3481
        %v3727 = vunpack.c.h.b16 %v3481
        %v3728 = vunpack.c.l.b16 %v3482
        %v3729 = vunpack.c.h.b16 %v3482
        %v3730 = vunpack.c.l.b16 %v3483
        %v3731 = vunpack.c.h.b16 %v3483
        %v3732 = vunpack.c.l.b16 %v3484
        %v3733 = vunpack.c.h.b16 %v3484
        %v3734 = vunpack.c.l.b16 %v3485
        %v3735 = vunpack.c.h.b16 %v3485
        %v3736 = vunpack.c.l.b16 %v3486
        %v3737 = vunpack.c.h.b16 %v3486
        %v3738 = vunpack.c.l.b16 %v3487
        %v3739 = vunpack.c.h.b16 %v3487
        %v3740 = vunpack.c.l.b16 %v3488
        %v3741 = vunpack.c.h.b16 %v3488
        %v3742 = vunpack.c.l.b16 %v3489
        %v3743 = vunpack.c.h.b16 %v3489
        %v3744 = vunpack.c.l.b16 %v3490
        %v3745 = vunpack.c.h.b16 %v3490
        %v3746 = vunpack.c.l.b16 %v3491
        %v3747 = vunpack.c.h.b16 %v3491
        %v3748 = vunpack.c.l.b16 %v3492
        %v3749 = vunpack.c.h.b16 %v3492
        %v3750 = vunpack.c.l.b16 %v3493
        %v3751 = vunpack.c.h.b16 %v3493
        %v3752 = vunpack.c.l.b16 %v3494
        %v3753 = vunpack.c.h.b16 %v3494
        %v3754 = vunpack.c.l.b16 %v3495
        %v3755 = vunpack.c.h.b16 %v3495
        %v3756 = vunpack.c.l.b16 %v3496
        %v3757 = vunpack.c.h.b16 %v3496
        %v3758 = vunpack.c.l.b16 %v3497
        %v3759 = vunpack.c.h.b16 %v3497
        %v3760 = vpack.c.b16 %v3636, %v3632
        %v3761 = vpack.c.b16 %v3637, %v3633
        %v3762 = vpack.c.b16 %v3638, %v3634
        %v3763 = vpack.c.b16 %v3639, %v3635
        %v3764 = vpack.c.b16 %v3644, %v3640
        %v3765 = vpack.c.b16 %v3645, %v3641
        %v3766 = vpack.c.b16 %v3646, %v3642
        %v3767 = vpack.c.b16 %v3647, %v3643
        %v3768 = vpack.c.b16 %v3652, %v3648
        %v3769 = vpack.c.b16 %v3653, %v3649
        %v3770 = vpack.c.b16 %v3654, %v3650
        %v3771 = vpack.c.b16 %v3655, %v3651
        %v3772 = vpack.c.b16 %v3660, %v3656
        %v3773 = vpack.c.b16 %v3661, %v3657
        %v3774 = vpack.c.b16 %v3662, %v3658
        %v3775 = vpack.c.b16 %v3663, %v3659
        %v3776 = vpack.c.b16 %v3668, %v3664
        %v3777 = vpack.c.b16 %v3669, %v3665
        %v3778 = vpack.c.b16 %v3670, %v3666
        %v3779 = vpack.c.b16 %v3671, %v3667
        %v3780 = vpack.c.b16 %v3676, %v3672
        %v3781 = vpack.c.b16 %v3677, %v3673
        %v3782 = vpack.c.b16 %v3678, %v3674
        %v3783 = vpack.c.b16 %v3679, %v3675
        %v3784 = vpack.c.b16 %v3684, %v3680
        %v3785 = vpack.c.b16 %v3685, %v3681
        %v3786 = vpack.c.b16 %v3686, %v3682
        %v3787 = vpack.c.b16 %v3687, %v3683
        %v3788 = vpack.c.b16 %v3692, %v3688
        %v3789 = vpack.c.b16 %v3693, %v3689
        %v3790 = vpack.c.b16 %v3694, %v3690
        %v3791 = vpack.c.b16 %v3695, %v3691
        %v3792 = vpack.c.b16 %v3700, %v3696
        %v3793 = vpack.c.b16 %v3701, %v3697
        %v3794 = vpack.c.b16 %v3702, %v3698
        %v3795 = vpack.c.b16 %v3703, %v3699
        %v3796 = vpack.c.b16 %v3708, %v3704
        %v3797 = vpack.c.b16 %v3709, %v3705
        %v3798 = vpack.c.b16 %v3710, %v3706
        %v3799 = vpack.c.b16 %v3711, %v3707
        %v3800 = vpack.c.b16 %v3716, %v3712
        %v3801 = vpack.c.b16 %v3717, %v3713
        %v3802 = vpack.c.b16 %v3718, %v3714
        %v3803 = vpack.c.b16 %v3719, %v3715
        %v3804 = vpack.c.b16 %v3724, %v3720
        %v3805 = vpack.c.b16 %v3725, %v3721
        %v3806 = vpack.c.b16 %v3726, %v3722
        %v3807 = vpack.c.b16 %v3727, %v3723
        %v3808 = vpack.c.b16 %v3732, %v3728
        %v3809 = vpack.c.b16 %v3733, %v3729
        %v3810 = vpack.c.b16 %v3734, %v3730
        %v3811 = vpack.c.b16 %v3735, %v3731
        %v3812 = vpack.c.b16 %v3740, %v3736
        %v3813 = vpack.c.b16 %v3741, %v3737
        %v3814 = vpack.c.b16 %v3742, %v3738
        %v3815 = vpack.c.b16 %v3743, %v3739
        %v3816 = vpack.c.b16 %v3748, %v3744
        %v3817 = vpack.c.b16 %v3749, %v3745
        %v3818 = vpack.c.b16 %v3750, %v3746
        %v3819 = vpack.c.b16 %v3751, %v3747
        %v3820 = vpack.c.b16 %v3756, %v3752
        %v3821 = vpack.c.b16 %v3757, %v3753
        %v3822 = vpack.c.b16 %v3758, %v3754
        %v3823 = vpack.c.b16 %v3759, %v3755
        %3888 = vmatpush.bf16.msra.mxu0 %v3788
        %3889 = vmatpush.bf16.msra.mxu0 %v3784
        %3890 = vmatpush.bf16.msra.mxu0 %v3780
        %3891 = vmatpush.bf16.msra.mxu0 %v3776
        %3892 = vmatpush.bf16.msra.mxu0 %v3772
        %3893 = vmatpush.bf16.msra.mxu0 %v3768
        %3894 = vmatpush.bf16.msra.mxu0 %v3764
        %3895 = vmatpush.bf16.msra.mxu0 %v3760
        %3896 = vmatmul.bf16.gmra.mxu0 %v3566
        %v3897 = vpop.f32.mrf.mxu0
        %v3898 = vadd.f32 0.0, %v3897
        %v3899 = vpop.f32.mrf.mxu0
        %3900 = vdwg.mxu0
        %3901 = vmatpush.bf16.msra.mxu0 %v3820
        %3902 = vmatpush.bf16.msra.mxu0 %v3816
        %3903 = vmatpush.bf16.msra.mxu0 %v3812
        %3904 = vmatpush.bf16.msra.mxu0 %v3808
        %3905 = vmatpush.bf16.msra.mxu0 %v3804
        %3906 = vmatpush.bf16.msra.mxu0 %v3800
        %3907 = vmatpush.bf16.msra.mxu0 %v3796
        %3908 = vmatpush.bf16.msra.mxu0 %v3792
        %3909 = vmatmul.bf16.gmra.mxu0 %v3567
        %v3910 = vpop.f32.mrf.mxu0
        %v3911 = vadd.f32 %v3898, %v3910
        %v3912 = vpop.f32.mrf.mxu0
        %3913 = vdwg.mxu0
        %3914 = vmatpush.bf16.msra.mxu0 %v3789
        %3915 = vmatpush.bf16.msra.mxu0 %v3785
        %3916 = vmatpush.bf16.msra.mxu0 %v3781
        %3917 = vmatpush.bf16.msra.mxu0 %v3777
        %3918 = vmatpush.bf16.msra.mxu0 %v3773
        %3919 = vmatpush.bf16.msra.mxu0 %v3769
        %3920 = vmatpush.bf16.msra.mxu0 %v3765
        %3921 = vmatpush.bf16.msra.mxu0 %v3761
        %3922 = vmatmul.bf16.gmra.mxu0 %v3566
        %v3923 = vpop.f32.mrf.mxu0
        %v3924 = vadd.f32 0.0, %v3923
        %v3925 = vpop.f32.mrf.mxu0
        %3926 = vdwg.mxu0
        %3927 = vmatpush.bf16.msra.mxu0 %v3821
        %3928 = vmatpush.bf16.msra.mxu0 %v3817
        %3929 = vmatpush.bf16.msra.mxu0 %v3813
        %3930 = vmatpush.bf16.msra.mxu0 %v3809
        %3931 = vmatpush.bf16.msra.mxu0 %v3805
        %3932 = vmatpush.bf16.msra.mxu0 %v3801
        %3933 = vmatpush.bf16.msra.mxu0 %v3797
        %3934 = vmatpush.bf16.msra.mxu0 %v3793
        %3935 = vmatmul.bf16.gmra.mxu0 %v3567
        %v3936 = vpop.f32.mrf.mxu0
        %v3937 = vadd.f32 %v3924, %v3936
        %v3938 = vpop.f32.mrf.mxu0
        %3939 = vdwg.mxu0
        %3940 = vmatpush.bf16.msra.mxu0 %v3790
        %3941 = vmatpush.bf16.msra.mxu0 %v3786
        %3942 = vmatpush.bf16.msra.mxu0 %v3782
        %3943 = vmatpush.bf16.msra.mxu0 %v3778
        %3944 = vmatpush.bf16.msra.mxu0 %v3774
        %3945 = vmatpush.bf16.msra.mxu0 %v3770
        %3946 = vmatpush.bf16.msra.mxu0 %v3766
        %3947 = vmatpush.bf16.msra.mxu0 %v3762
        %3948 = vmatmul.bf16.gmra.mxu0 %v3566
        %v3949 = vpop.f32.mrf.mxu0
        %v3950 = vadd.f32 0.0, %v3949
        %v3951 = vpop.f32.mrf.mxu0
        %3952 = vdwg.mxu0
        %3953 = vmatpush.bf16.msra.mxu0 %v3822
        %3954 = vmatpush.bf16.msra.mxu0 %v3818
        %3955 = vmatpush.bf16.msra.mxu0 %v3814
        %3956 = vmatpush.bf16.msra.mxu0 %v3810
        %3957 = vmatpush.bf16.msra.mxu0 %v3806
        %3958 = vmatpush.bf16.msra.mxu0 %v3802
        %3959 = vmatpush.bf16.msra.mxu0 %v3798
        %3960 = vmatpush.bf16.msra.mxu0 %v3794
        %3961 = vmatmul.bf16.gmra.mxu0 %v3567
        %v3962 = vpop.f32.mrf.mxu0
        %v3963 = vadd.f32 %v3950, %v3962
        %v3964 = vpop.f32.mrf.mxu0
        %3965 = vdwg.mxu0
        %3966 = vmatpush.bf16.msra.mxu0 %v3791
        %3967 = vmatpush.bf16.msra.mxu0 %v3787
        %3968 = vmatpush.bf16.msra.mxu0 %v3783
        %3969 = vmatpush.bf16.msra.mxu0 %v3779
        %3970 = vmatpush.bf16.msra.mxu0 %v3775
        %3971 = vmatpush.bf16.msra.mxu0 %v3771
        %3972 = vmatpush.bf16.msra.mxu0 %v3767
        %3973 = vmatpush.bf16.msra.mxu0 %v3763
        %3974 = vmatmul.bf16.gmra.mxu0 %v3566
        %v3975 = vpop.f32.mrf.mxu0
        %v3976 = vadd.f32 0.0, %v3975
        %v3977 = vpop.f32.mrf.mxu0
        %3978 = vdwg.mxu0
        %3979 = vmatpush.bf16.msra.mxu0 %v3823
        %3980 = vmatpush.bf16.msra.mxu0 %v3819
        %3981 = vmatpush.bf16.msra.mxu0 %v3815
        %3982 = vmatpush.bf16.msra.mxu0 %v3811
        %3983 = vmatpush.bf16.msra.mxu0 %v3807
        %3984 = vmatpush.bf16.msra.mxu0 %v3803
        %3985 = vmatpush.bf16.msra.mxu0 %v3799
        %3986 = vmatpush.bf16.msra.mxu0 %v3795
        %3987 = vmatmul.bf16.gmra.mxu0 %v3567
        %v3988 = vpop.f32.mrf.mxu0
        %v3989 = vadd.f32 %v3976, %v3988
        %v3990 = vpop.f32.mrf.mxu0
        %3991 = vdwg.mxu0
        %v4056 = vunpack.c.l.b16 %v3370
        %v4057 = vunpack.c.h.b16 %v3370
        %v4058 = vunpack.c.l.b16 %v3371
        %v4059 = vunpack.c.h.b16 %v3371
        %v4060 = vunpack.c.l.b16 %v3372
        %v4061 = vunpack.c.h.b16 %v3372
        %v4062 = vunpack.c.l.b16 %v3373
        %v4063 = vunpack.c.h.b16 %v3373
        %v4064 = vunpack.c.l.b16 %v3374
        %v4065 = vunpack.c.h.b16 %v3374
        %v4066 = vunpack.c.l.b16 %v3375
        %v4067 = vunpack.c.h.b16 %v3375
        %v4068 = vunpack.c.l.b16 %v3376
        %v4069 = vunpack.c.h.b16 %v3376
        %v4070 = vunpack.c.l.b16 %v3377
        %v4071 = vunpack.c.h.b16 %v3377
        %v4072 = vunpack.c.l.b16 %v3378
        %v4073 = vunpack.c.h.b16 %v3378
        %v4074 = vunpack.c.l.b16 %v3379
        %v4075 = vunpack.c.h.b16 %v3379
        %v4076 = vunpack.c.l.b16 %v3380
        %v4077 = vunpack.c.h.b16 %v3380
        %v4078 = vunpack.c.l.b16 %v3381
        %v4079 = vunpack.c.h.b16 %v3381
        %v4080 = vunpack.c.l.b16 %v3382
        %v4081 = vunpack.c.h.b16 %v3382
        %v4082 = vunpack.c.l.b16 %v3383
        %v4083 = vunpack.c.h.b16 %v3383
        %v4084 = vunpack.c.l.b16 %v3384
        %v4085 = vunpack.c.h.b16 %v3384
        %v4086 = vunpack.c.l.b16 %v3385
        %v4087 = vunpack.c.h.b16 %v3385
        %v4088 = vunpack.c.l.b16 %v3386
        %v4089 = vunpack.c.h.b16 %v3386
        %v4090 = vunpack.c.l.b16 %v3387
        %v4091 = vunpack.c.h.b16 %v3387
        %v4092 = vunpack.c.l.b16 %v3388
        %v4093 = vunpack.c.h.b16 %v3388
        %v4094 = vunpack.c.l.b16 %v3389
        %v4095 = vunpack.c.h.b16 %v3389
        %v4096 = vunpack.c.l.b16 %v3390
        %v4097 = vunpack.c.h.b16 %v3390
        %v4098 = vunpack.c.l.b16 %v3391
        %v4099 = vunpack.c.h.b16 %v3391
        %v4100 = vunpack.c.l.b16 %v3392
        %v4101 = vunpack.c.h.b16 %v3392
        %v4102 = vunpack.c.l.b16 %v3393
        %v4103 = vunpack.c.h.b16 %v3393
        %v4104 = vunpack.c.l.b16 %v3394
        %v4105 = vunpack.c.h.b16 %v3394
        %v4106 = vunpack.c.l.b16 %v3395
        %v4107 = vunpack.c.h.b16 %v3395
        %v4108 = vunpack.c.l.b16 %v3396
        %v4109 = vunpack.c.h.b16 %v3396
        %v4110 = vunpack.c.l.b16 %v3397
        %v4111 = vunpack.c.h.b16 %v3397
        %v4112 = vunpack.c.l.b16 %v3398
        %v4113 = vunpack.c.h.b16 %v3398
        %v4114 = vunpack.c.l.b16 %v3399
        %v4115 = vunpack.c.h.b16 %v3399
        %v4116 = vunpack.c.l.b16 %v3400
        %v4117 = vunpack.c.h.b16 %v3400
        %v4118 = vunpack.c.l.b16 %v3401
        %v4119 = vunpack.c.h.b16 %v3401
        %v4120 = vunpack.c.l.b16 %v3402
        %v4121 = vunpack.c.h.b16 %v3402
        %v4122 = vunpack.c.l.b16 %v3403
        %v4123 = vunpack.c.h.b16 %v3403
        %v4124 = vunpack.c.l.b16 %v3404
        %v4125 = vunpack.c.h.b16 %v3404
        %v4126 = vunpack.c.l.b16 %v3405
        %v4127 = vunpack.c.h.b16 %v3405
        %v4128 = vunpack.c.l.b16 %v3406
        %v4129 = vunpack.c.h.b16 %v3406
        %v4130 = vunpack.c.l.b16 %v3407
        %v4131 = vunpack.c.h.b16 %v3407
        %v4132 = vunpack.c.l.b16 %v3408
        %v4133 = vunpack.c.h.b16 %v3408
        %v4134 = vunpack.c.l.b16 %v3409
        %v4135 = vunpack.c.h.b16 %v3409
        %v4136 = vunpack.c.l.b16 %v3410
        %v4137 = vunpack.c.h.b16 %v3410
        %v4138 = vunpack.c.l.b16 %v3411
        %v4139 = vunpack.c.h.b16 %v3411
        %v4140 = vunpack.c.l.b16 %v3412
        %v4141 = vunpack.c.h.b16 %v3412
        %v4142 = vunpack.c.l.b16 %v3413
        %v4143 = vunpack.c.h.b16 %v3413
        %v4144 = vunpack.c.l.b16 %v3414
        %v4145 = vunpack.c.h.b16 %v3414
        %v4146 = vunpack.c.l.b16 %v3415
        %v4147 = vunpack.c.h.b16 %v3415
        %v4148 = vunpack.c.l.b16 %v3416
        %v4149 = vunpack.c.h.b16 %v3416
        %v4150 = vunpack.c.l.b16 %v3417
        %v4151 = vunpack.c.h.b16 %v3417
        %v4152 = vunpack.c.l.b16 %v3418
        %v4153 = vunpack.c.h.b16 %v3418
        %v4154 = vunpack.c.l.b16 %v3419
        %v4155 = vunpack.c.h.b16 %v3419
        %v4156 = vunpack.c.l.b16 %v3420
        %v4157 = vunpack.c.h.b16 %v3420
        %v4158 = vunpack.c.l.b16 %v3421
        %v4159 = vunpack.c.h.b16 %v3421
        %v4160 = vunpack.c.l.b16 %v3422
        %v4161 = vunpack.c.h.b16 %v3422
        %v4162 = vunpack.c.l.b16 %v3423
        %v4163 = vunpack.c.h.b16 %v3423
        %v4164 = vunpack.c.l.b16 %v3424
        %v4165 = vunpack.c.h.b16 %v3424
        %v4166 = vunpack.c.l.b16 %v3425
        %v4167 = vunpack.c.h.b16 %v3425
        %v4168 = vunpack.c.l.b16 %v3426
        %v4169 = vunpack.c.h.b16 %v3426
        %v4170 = vunpack.c.l.b16 %v3427
        %v4171 = vunpack.c.h.b16 %v3427
        %v4172 = vunpack.c.l.b16 %v3428
        %v4173 = vunpack.c.h.b16 %v3428
        %v4174 = vunpack.c.l.b16 %v3429
        %v4175 = vunpack.c.h.b16 %v3429
        %v4176 = vunpack.c.l.b16 %v3430
        %v4177 = vunpack.c.h.b16 %v3430
        %v4178 = vunpack.c.l.b16 %v3431
        %v4179 = vunpack.c.h.b16 %v3431
        %v4180 = vunpack.c.l.b16 %v3432
        %v4181 = vunpack.c.h.b16 %v3432
        %v4182 = vunpack.c.l.b16 %v3433
        %v4183 = vunpack.c.h.b16 %v3433
        %v4184 = vpack.c.b16 %v4060, %v4056
        %v4185 = vpack.c.b16 %v4061, %v4057
        %v4186 = vpack.c.b16 %v4062, %v4058
        %v4187 = vpack.c.b16 %v4063, %v4059
        %v4188 = vpack.c.b16 %v4068, %v4064
        %v4189 = vpack.c.b16 %v4069, %v4065
        %v4190 = vpack.c.b16 %v4070, %v4066
        %v4191 = vpack.c.b16 %v4071, %v4067
        %v4192 = vpack.c.b16 %v4076, %v4072
        %v4193 = vpack.c.b16 %v4077, %v4073
        %v4194 = vpack.c.b16 %v4078, %v4074
        %v4195 = vpack.c.b16 %v4079, %v4075
        %v4196 = vpack.c.b16 %v4084, %v4080
        %v4197 = vpack.c.b16 %v4085, %v4081
        %v4198 = vpack.c.b16 %v4086, %v4082
        %v4199 = vpack.c.b16 %v4087, %v4083
        %v4200 = vpack.c.b16 %v4092, %v4088
        %v4201 = vpack.c.b16 %v4093, %v4089
        %v4202 = vpack.c.b16 %v4094, %v4090
        %v4203 = vpack.c.b16 %v4095, %v4091
        %v4204 = vpack.c.b16 %v4100, %v4096
        %v4205 = vpack.c.b16 %v4101, %v4097
        %v4206 = vpack.c.b16 %v4102, %v4098
        %v4207 = vpack.c.b16 %v4103, %v4099
        %v4208 = vpack.c.b16 %v4108, %v4104
        %v4209 = vpack.c.b16 %v4109, %v4105
        %v4210 = vpack.c.b16 %v4110, %v4106
        %v4211 = vpack.c.b16 %v4111, %v4107
        %v4212 = vpack.c.b16 %v4116, %v4112
        %v4213 = vpack.c.b16 %v4117, %v4113
        %v4214 = vpack.c.b16 %v4118, %v4114
        %v4215 = vpack.c.b16 %v4119, %v4115
        %v4216 = vpack.c.b16 %v4124, %v4120
        %v4217 = vpack.c.b16 %v4125, %v4121
        %v4218 = vpack.c.b16 %v4126, %v4122
        %v4219 = vpack.c.b16 %v4127, %v4123
        %v4220 = vpack.c.b16 %v4132, %v4128
        %v4221 = vpack.c.b16 %v4133, %v4129
        %v4222 = vpack.c.b16 %v4134, %v4130
        %v4223 = vpack.c.b16 %v4135, %v4131
        %v4224 = vpack.c.b16 %v4140, %v4136
        %v4225 = vpack.c.b16 %v4141, %v4137
        %v4226 = vpack.c.b16 %v4142, %v4138
        %v4227 = vpack.c.b16 %v4143, %v4139
        %v4228 = vpack.c.b16 %v4148, %v4144
        %v4229 = vpack.c.b16 %v4149, %v4145
        %v4230 = vpack.c.b16 %v4150, %v4146
        %v4231 = vpack.c.b16 %v4151, %v4147
        %v4232 = vpack.c.b16 %v4156, %v4152
        %v4233 = vpack.c.b16 %v4157, %v4153
        %v4234 = vpack.c.b16 %v4158, %v4154
        %v4235 = vpack.c.b16 %v4159, %v4155
        %v4236 = vpack.c.b16 %v4164, %v4160
        %v4237 = vpack.c.b16 %v4165, %v4161
        %v4238 = vpack.c.b16 %v4166, %v4162
        %v4239 = vpack.c.b16 %v4167, %v4163
        %v4240 = vpack.c.b16 %v4172, %v4168
        %v4241 = vpack.c.b16 %v4173, %v4169
        %v4242 = vpack.c.b16 %v4174, %v4170
        %v4243 = vpack.c.b16 %v4175, %v4171
        %v4244 = vpack.c.b16 %v4180, %v4176
        %v4245 = vpack.c.b16 %v4181, %v4177
        %v4246 = vpack.c.b16 %v4182, %v4178
        %v4247 = vpack.c.b16 %v4183, %v4179
        %4312 = vmatpush.bf16.msra.mxu0 %v4212
        %4313 = vmatpush.bf16.msra.mxu0 %v4208
        %4314 = vmatpush.bf16.msra.mxu0 %v4204
        %4315 = vmatpush.bf16.msra.mxu0 %v4200
        %4316 = vmatpush.bf16.msra.mxu0 %v4196
        %4317 = vmatpush.bf16.msra.mxu0 %v4192
        %4318 = vmatpush.bf16.msra.mxu0 %v4188
        %4319 = vmatpush.bf16.msra.mxu0 %v4184
        %4320 = vmatmul.bf16.gmra.mxu0 %v3564
        %v4321 = vpop.f32.mrf.mxu0
        %v4322 = vadd.f32 %v3911, %v4321
        %v4323 = vpop.f32.mrf.mxu0
        %4324 = vdwg.mxu0
        %4325 = vmatpush.bf16.msra.mxu0 %v4244
        %4326 = vmatpush.bf16.msra.mxu0 %v4240
        %4327 = vmatpush.bf16.msra.mxu0 %v4236
        %4328 = vmatpush.bf16.msra.mxu0 %v4232
        %4329 = vmatpush.bf16.msra.mxu0 %v4228
        %4330 = vmatpush.bf16.msra.mxu0 %v4224
        %4331 = vmatpush.bf16.msra.mxu0 %v4220
        %4332 = vmatpush.bf16.msra.mxu0 %v4216
        %4333 = vmatmul.bf16.gmra.mxu0 %v3565
        %v4334 = vpop.f32.mrf.mxu0
        %v4335 = vadd.f32 %v4322, %v4334
        %v4336 = vpop.f32.mrf.mxu0
        %4337 = vdwg.mxu0
        %4338 = vmatpush.bf16.msra.mxu0 %v4213
        %4339 = vmatpush.bf16.msra.mxu0 %v4209
        %4340 = vmatpush.bf16.msra.mxu0 %v4205
        %4341 = vmatpush.bf16.msra.mxu0 %v4201
        %4342 = vmatpush.bf16.msra.mxu0 %v4197
        %4343 = vmatpush.bf16.msra.mxu0 %v4193
        %4344 = vmatpush.bf16.msra.mxu0 %v4189
        %4345 = vmatpush.bf16.msra.mxu0 %v4185
        %4346 = vmatmul.bf16.gmra.mxu0 %v3564
        %v4347 = vpop.f32.mrf.mxu0
        %v4348 = vadd.f32 %v3937, %v4347
        %v4349 = vpop.f32.mrf.mxu0
        %4350 = vdwg.mxu0
        %4351 = vmatpush.bf16.msra.mxu0 %v4245
        %4352 = vmatpush.bf16.msra.mxu0 %v4241
        %4353 = vmatpush.bf16.msra.mxu0 %v4237
        %4354 = vmatpush.bf16.msra.mxu0 %v4233
        %4355 = vmatpush.bf16.msra.mxu0 %v4229
        %4356 = vmatpush.bf16.msra.mxu0 %v4225
        %4357 = vmatpush.bf16.msra.mxu0 %v4221
        %4358 = vmatpush.bf16.msra.mxu0 %v4217
        %4359 = vmatmul.bf16.gmra.mxu0 %v3565
        %v4360 = vpop.f32.mrf.mxu0
        %v4361 = vadd.f32 %v4348, %v4360
        %v4362 = vpop.f32.mrf.mxu0
        %4363 = vdwg.mxu0
        %4364 = vmatpush.bf16.msra.mxu0 %v4214
        %4365 = vmatpush.bf16.msra.mxu0 %v4210
        %4366 = vmatpush.bf16.msra.mxu0 %v4206
        %4367 = vmatpush.bf16.msra.mxu0 %v4202
        %4368 = vmatpush.bf16.msra.mxu0 %v4198
        %4369 = vmatpush.bf16.msra.mxu0 %v4194
        %4370 = vmatpush.bf16.msra.mxu0 %v4190
        %4371 = vmatpush.bf16.msra.mxu0 %v4186
        %4372 = vmatmul.bf16.gmra.mxu0 %v3564
        %v4373 = vpop.f32.mrf.mxu0
        %v4374 = vadd.f32 %v3963, %v4373
        %v4375 = vpop.f32.mrf.mxu0
        %4376 = vdwg.mxu0
        %4377 = vmatpush.bf16.msra.mxu0 %v4246
        %4378 = vmatpush.bf16.msra.mxu0 %v4242
        %4379 = vmatpush.bf16.msra.mxu0 %v4238
        %4380 = vmatpush.bf16.msra.mxu0 %v4234
        %4381 = vmatpush.bf16.msra.mxu0 %v4230
        %4382 = vmatpush.bf16.msra.mxu0 %v4226
        %4383 = vmatpush.bf16.msra.mxu0 %v4222
        %4384 = vmatpush.bf16.msra.mxu0 %v4218
        %4385 = vmatmul.bf16.gmra.mxu0 %v3565
        %v4386 = vpop.f32.mrf.mxu0
        %v4387 = vadd.f32 %v4374, %v4386
        %v4388 = vpop.f32.mrf.mxu0
        %4389 = vdwg.mxu0
        %4390 = vmatpush.bf16.msra.mxu0 %v4215
        %4391 = vmatpush.bf16.msra.mxu0 %v4211
        %4392 = vmatpush.bf16.msra.mxu0 %v4207
        %4393 = vmatpush.bf16.msra.mxu0 %v4203
        %4394 = vmatpush.bf16.msra.mxu0 %v4199
        %4395 = vmatpush.bf16.msra.mxu0 %v4195
        %4396 = vmatpush.bf16.msra.mxu0 %v4191
        %4397 = vmatpush.bf16.msra.mxu0 %v4187
        %4398 = vmatmul.bf16.gmra.mxu0 %v3564
        %v4399 = vpop.f32.mrf.mxu0
        %v4400 = vadd.f32 %v3989, %v4399
        %v4401 = vpop.f32.mrf.mxu0
        %4402 = vdwg.mxu0
        %4403 = vmatpush.bf16.msra.mxu0 %v4247
        %4404 = vmatpush.bf16.msra.mxu0 %v4243
        %4405 = vmatpush.bf16.msra.mxu0 %v4239
        %4406 = vmatpush.bf16.msra.mxu0 %v4235
        %4407 = vmatpush.bf16.msra.mxu0 %v4231
        %4408 = vmatpush.bf16.msra.mxu0 %v4227
        %4409 = vmatpush.bf16.msra.mxu0 %v4223
        %4410 = vmatpush.bf16.msra.mxu0 %v4219
        %4411 = vmatmul.bf16.gmra.mxu0 %v3565
        %v4412 = vpop.f32.mrf.mxu0
        %v4413 = vadd.f32 %v4400, %v4412
        %v4414 = vpop.f32.mrf.mxu0
        %4415 = vdwg.mxu0
        %v4417 = vperm.slane %v3498, 0
        %v4418 = vperm.slane %v3498, 1
        %v4419 = vperm.slane %v3498, 2
        %v4420 = vperm.slane %v3498, 3
        %v4425 = vadd.f32 %v4335, %v4417
        %v4426 = vadd.f32 %v4361, %v4418
        %v4427 = vadd.f32 %v4387, %v4419
        %v4428 = vadd.f32 %v4413, %v4420
        %v4429 = vxor.u32 %v4425, 2147483648
        %v4430 = vxor.u32 %v4426, 2147483648
        %v4431 = vmul.f32 %v4429, 1.442695
        %v4432 = vpow.pop %v4431
        %v4433 = vmul.f32 %v4430, 1.442695
        %v4434 = vpow.pop %v4433
        %v4435 = vadd.f32 %v4432, 1.0
        %v4436 = vadd.f32 %v4434, 1.0
        %v4437 = vrcp.pop %v4435
        %v4438 = vmul.f32 %v4435, %v4437
        %v4439 = vsub.f32 1.0, %v4438
        %v4440 = vmul.f32 %v4437, %v4439
        %v4441 = vadd.f32 %v4437, %v4440
        %vm4442 = vweird.f32 %v4435
        %vm4443 = vweird.f32 %v4437
        %vm4444 = vmor %vm4442, %vm4443
        %v4445 = vsel %vm4444, %v4437, %v4441
        %v4446 = vand.u32 2147483647, %v4435
        %vm4447 = vcmp.eq.f32.partialorder %v4446, 8.507059e+37
        %v4448 = vand.u32 %v4435, 2147483648
        %v4449 = vor.u32 1.1754944e-38, %v4448
        %v4450 = vsel %vm4447, %v4449, %v4445
        %v4451 = vmul.f32 1.0, %v4450
        %v4452 = vrcp.pop %v4436
        %v4453 = vmul.f32 %v4436, %v4452
        %v4454 = vsub.f32 1.0, %v4453
        %v4455 = vmul.f32 %v4452, %v4454
        %v4456 = vadd.f32 %v4452, %v4455
        %vm4457 = vweird.f32 %v4436
        %vm4458 = vweird.f32 %v4452
        %vm4459 = vmor %vm4457, %vm4458
        %v4460 = vsel %vm4459, %v4452, %v4456
        %v4461 = vand.u32 2147483647, %v4436
        %vm4462 = vcmp.eq.f32.partialorder %v4461, 8.507059e+37
        %v4463 = vand.u32 %v4436, 2147483648
        %v4464 = vor.u32 1.1754944e-38, %v4463
        %v4465 = vsel %vm4462, %v4464, %v4460
        %v4466 = vmul.f32 1.0, %v4465
        %v4467 = vsub.f32 %v4427, 0.1
        %v4468 = vsub.f32 %v4428, 0.1
        %v4469 = vxor.u32 %v4467, 2147483648
        %v4470 = vxor.u32 %v4468, 2147483648
        %v4471 = vmul.f32 %v4469, 1.442695
        %v4472 = vpow.pop %v4471
        %v4473 = vmul.f32 %v4470, 1.442695
        %v4474 = vpow.pop %v4473
        %v4475 = vadd.f32 %v4472, 1.0
        %v4476 = vadd.f32 %v4474, 1.0
        %v4477 = vrcp.pop %v4475
        %v4478 = vmul.f32 %v4475, %v4477
        %v4479 = vsub.f32 1.0, %v4478
        %v4480 = vmul.f32 %v4477, %v4479
        %v4481 = vadd.f32 %v4477, %v4480
        %vm4482 = vweird.f32 %v4475
        %vm4483 = vweird.f32 %v4477
        %vm4484 = vmor %vm4482, %vm4483
        %v4485 = vsel %vm4484, %v4477, %v4481
        %v4486 = vand.u32 2147483647, %v4475
        %vm4487 = vcmp.eq.f32.partialorder %v4486, 8.507059e+37
        %v4488 = vand.u32 %v4475, 2147483648
        %v4489 = vor.u32 1.1754944e-38, %v4488
        %v4490 = vsel %vm4487, %v4489, %v4485
        %v4491 = vmul.f32 1.0, %v4490
        %v4492 = vrcp.pop %v4476
        %v4493 = vmul.f32 %v4476, %v4492
        %v4494 = vsub.f32 1.0, %v4493
        %v4495 = vmul.f32 %v4492, %v4494
        %v4496 = vadd.f32 %v4492, %v4495
        %vm4497 = vweird.f32 %v4476
        %vm4498 = vweird.f32 %v4492
        %vm4499 = vmor %vm4497, %vm4498
        %v4500 = vsel %vm4499, %v4492, %v4496
        %v4501 = vand.u32 2147483647, %v4476
        %vm4502 = vcmp.eq.f32.partialorder %v4501, 8.507059e+37
        %v4503 = vand.u32 %v4476, 2147483648
        %v4504 = vor.u32 1.1754944e-38, %v4503
        %v4505 = vsel %vm4502, %v4504, %v4500
        %v4506 = vmul.f32 1.0, %v4505
        %v4507 = vmul.f32 %v4451, %v2180
        %v4508 = vmul.f32 %v4466, %v2181
        %v4509 = vpack.c.bf16 %v4507, %v4507
        %v4510 = vpack.c.bf16 %v4508, %v4508
        %v4543 = vunpack.c.l.b16 %v3531
        %v4544 = vunpack.c.h.b16 %v3531
        %v4545 = vunpack.c.l.b16 %v3532
        %v4546 = vunpack.c.h.b16 %v3532
        %v4547 = vunpack.c.l.b16 %v3533
        %v4548 = vunpack.c.h.b16 %v3533
        %v4549 = vunpack.c.l.b16 %v3534
        %v4550 = vunpack.c.h.b16 %v3534
        %v4551 = vunpack.c.l.b16 %v3535
        %v4552 = vunpack.c.h.b16 %v3535
        %v4553 = vunpack.c.l.b16 %v3536
        %v4554 = vunpack.c.h.b16 %v3536
        %v4555 = vunpack.c.l.b16 %v3537
        %v4556 = vunpack.c.h.b16 %v3537
        %v4557 = vunpack.c.l.b16 %v3538
        %v4558 = vunpack.c.h.b16 %v3538
        %v4559 = vunpack.c.l.b16 %v3539
        %v4560 = vunpack.c.h.b16 %v3539
        %v4561 = vunpack.c.l.b16 %v3540
        %v4562 = vunpack.c.h.b16 %v3540
        %v4563 = vunpack.c.l.b16 %v3541
        %v4564 = vunpack.c.h.b16 %v3541
        %v4565 = vunpack.c.l.b16 %v3542
        %v4566 = vunpack.c.h.b16 %v3542
        %v4567 = vunpack.c.l.b16 %v3543
        %v4568 = vunpack.c.h.b16 %v3543
        %v4569 = vunpack.c.l.b16 %v3544
        %v4570 = vunpack.c.h.b16 %v3544
        %v4571 = vunpack.c.l.b16 %v3545
        %v4572 = vunpack.c.h.b16 %v3545
        %v4573 = vunpack.c.l.b16 %v3546
        %v4574 = vunpack.c.h.b16 %v3546
        %v4575 = vunpack.c.l.b16 %v3547
        %v4576 = vunpack.c.h.b16 %v3547
        %v4577 = vunpack.c.l.b16 %v3548
        %v4578 = vunpack.c.h.b16 %v3548
        %v4579 = vunpack.c.l.b16 %v3549
        %v4580 = vunpack.c.h.b16 %v3549
        %v4581 = vunpack.c.l.b16 %v3550
        %v4582 = vunpack.c.h.b16 %v3550
        %v4583 = vunpack.c.l.b16 %v3551
        %v4584 = vunpack.c.h.b16 %v3551
        %v4585 = vunpack.c.l.b16 %v3552
        %v4586 = vunpack.c.h.b16 %v3552
        %v4587 = vunpack.c.l.b16 %v3553
        %v4588 = vunpack.c.h.b16 %v3553
        %v4589 = vunpack.c.l.b16 %v3554
        %v4590 = vunpack.c.h.b16 %v3554
        %v4591 = vunpack.c.l.b16 %v3555
        %v4592 = vunpack.c.h.b16 %v3555
        %v4593 = vunpack.c.l.b16 %v3556
        %v4594 = vunpack.c.h.b16 %v3556
        %v4595 = vunpack.c.l.b16 %v3557
        %v4596 = vunpack.c.h.b16 %v3557
        %v4597 = vunpack.c.l.b16 %v3558
        %v4598 = vunpack.c.h.b16 %v3558
        %v4599 = vunpack.c.l.b16 %v3559
        %v4600 = vunpack.c.h.b16 %v3559
        %v4601 = vunpack.c.l.b16 %v3560
        %v4602 = vunpack.c.h.b16 %v3560
        %v4603 = vunpack.c.l.b16 %v3561
        %v4604 = vunpack.c.h.b16 %v3561
        %v4605 = vunpack.c.l.b16 %v3562
        %v4606 = vunpack.c.h.b16 %v3562
        %v4607 = vpack.c.b16 %v4545, %v4543
        %v4608 = vpack.c.b16 %v4546, %v4544
        %v4609 = vpack.c.b16 %v4549, %v4547
        %v4610 = vpack.c.b16 %v4550, %v4548
        %v4611 = vpack.c.b16 %v4553, %v4551
        %v4612 = vpack.c.b16 %v4554, %v4552
        %v4613 = vpack.c.b16 %v4557, %v4555
        %v4614 = vpack.c.b16 %v4558, %v4556
        %v4615 = vpack.c.b16 %v4561, %v4559
        %v4616 = vpack.c.b16 %v4562, %v4560
        %v4617 = vpack.c.b16 %v4565, %v4563
        %v4618 = vpack.c.b16 %v4566, %v4564
        %v4619 = vpack.c.b16 %v4569, %v4567
        %v4620 = vpack.c.b16 %v4570, %v4568
        %v4621 = vpack.c.b16 %v4573, %v4571
        %v4622 = vpack.c.b16 %v4574, %v4572
        %v4623 = vpack.c.b16 %v4577, %v4575
        %v4624 = vpack.c.b16 %v4578, %v4576
        %v4625 = vpack.c.b16 %v4581, %v4579
        %v4626 = vpack.c.b16 %v4582, %v4580
        %v4627 = vpack.c.b16 %v4585, %v4583
        %v4628 = vpack.c.b16 %v4586, %v4584
        %v4629 = vpack.c.b16 %v4589, %v4587
        %v4630 = vpack.c.b16 %v4590, %v4588
        %v4631 = vpack.c.b16 %v4593, %v4591
        %v4632 = vpack.c.b16 %v4594, %v4592
        %v4633 = vpack.c.b16 %v4597, %v4595
        %v4634 = vpack.c.b16 %v4598, %v4596
        %v4635 = vpack.c.b16 %v4601, %v4599
        %v4636 = vpack.c.b16 %v4602, %v4600
        %v4637 = vpack.c.b16 %v4605, %v4603
        %v4638 = vpack.c.b16 %v4606, %v4604
        %4671 = vmatpush.bf16.msra.mxu0 %v4621
        %4672 = vmatpush.bf16.msra.mxu0 %v4619
        %4673 = vmatpush.bf16.msra.mxu0 %v4617
        %4674 = vmatpush.bf16.msra.mxu0 %v4615
        %4675 = vmatpush.bf16.msra.mxu0 %v4613
        %4676 = vmatpush.bf16.msra.mxu0 %v4611
        %4677 = vmatpush.bf16.msra.mxu0 %v4609
        %4678 = vmatpush.bf16.msra.mxu0 %v4607
        %4679 = vmatmul.bf16.gmra.mxu0 %v4509
        %v4680 = vpop.f32.mrf.mxu0
        %v4681 = vadd.f32 0.0, %v4680
        %v4682 = vpop.f32.mrf.mxu0
        %4683 = vdwg.mxu0
        %4684 = vmatpush.bf16.msra.mxu0 %v4637
        %4685 = vmatpush.bf16.msra.mxu0 %v4635
        %4686 = vmatpush.bf16.msra.mxu0 %v4633
        %4687 = vmatpush.bf16.msra.mxu0 %v4631
        %4688 = vmatpush.bf16.msra.mxu0 %v4629
        %4689 = vmatpush.bf16.msra.mxu0 %v4627
        %4690 = vmatpush.bf16.msra.mxu0 %v4625
        %4691 = vmatpush.bf16.msra.mxu0 %v4623
        %4692 = vmatmul.bf16.gmra.mxu0 %v4510
        %v4693 = vpop.f32.mrf.mxu0
        %v4694 = vadd.f32 %v4681, %v4693
        %v4695 = vpop.f32.mrf.mxu0
        %4696 = vdwg.mxu0
        %4697 = vmatpush.bf16.msra.mxu0 %v4622
        %4698 = vmatpush.bf16.msra.mxu0 %v4620
        %4699 = vmatpush.bf16.msra.mxu0 %v4618
        %4700 = vmatpush.bf16.msra.mxu0 %v4616
        %4701 = vmatpush.bf16.msra.mxu0 %v4614
        %4702 = vmatpush.bf16.msra.mxu0 %v4612
        %4703 = vmatpush.bf16.msra.mxu0 %v4610
        %4704 = vmatpush.bf16.msra.mxu0 %v4608
        %4705 = vmatmul.bf16.gmra.mxu0 %v4509
        %v4706 = vpop.f32.mrf.mxu0
        %v4707 = vadd.f32 0.0, %v4706
        %v4708 = vpop.f32.mrf.mxu0
        %4709 = vdwg.mxu0
        %4710 = vmatpush.bf16.msra.mxu0 %v4638
        %4711 = vmatpush.bf16.msra.mxu0 %v4636
        %4712 = vmatpush.bf16.msra.mxu0 %v4634
        %4713 = vmatpush.bf16.msra.mxu0 %v4632
        %4714 = vmatpush.bf16.msra.mxu0 %v4630
        %4715 = vmatpush.bf16.msra.mxu0 %v4628
        %4716 = vmatpush.bf16.msra.mxu0 %v4626
        %4717 = vmatpush.bf16.msra.mxu0 %v4624
        %4718 = vmatmul.bf16.gmra.mxu0 %v4510
        %v4719 = vpop.f32.mrf.mxu0
        %v4720 = vadd.f32 %v4707, %v4719
        %v4721 = vpop.f32.mrf.mxu0
        %4722 = vdwg.mxu0
        %v4755 = vunpack.c.l.b16 %v3499
        %v4756 = vunpack.c.h.b16 %v3499
        %v4757 = vunpack.c.l.b16 %v3500
        %v4758 = vunpack.c.h.b16 %v3500
        %v4759 = vunpack.c.l.b16 %v3501
        %v4760 = vunpack.c.h.b16 %v3501
        %v4761 = vunpack.c.l.b16 %v3502
        %v4762 = vunpack.c.h.b16 %v3502
        %v4763 = vunpack.c.l.b16 %v3503
        %v4764 = vunpack.c.h.b16 %v3503
        %v4765 = vunpack.c.l.b16 %v3504
        %v4766 = vunpack.c.h.b16 %v3504
        %v4767 = vunpack.c.l.b16 %v3505
        %v4768 = vunpack.c.h.b16 %v3505
        %v4769 = vunpack.c.l.b16 %v3506
        %v4770 = vunpack.c.h.b16 %v3506
        %v4771 = vunpack.c.l.b16 %v3507
        %v4772 = vunpack.c.h.b16 %v3507
        %v4773 = vunpack.c.l.b16 %v3508
        %v4774 = vunpack.c.h.b16 %v3508
        %v4775 = vunpack.c.l.b16 %v3509
        %v4776 = vunpack.c.h.b16 %v3509
        %v4777 = vunpack.c.l.b16 %v3510
        %v4778 = vunpack.c.h.b16 %v3510
        %v4779 = vunpack.c.l.b16 %v3511
        %v4780 = vunpack.c.h.b16 %v3511
        %v4781 = vunpack.c.l.b16 %v3512
        %v4782 = vunpack.c.h.b16 %v3512
        %v4783 = vunpack.c.l.b16 %v3513
        %v4784 = vunpack.c.h.b16 %v3513
        %v4785 = vunpack.c.l.b16 %v3514
        %v4786 = vunpack.c.h.b16 %v3514
        %v4787 = vunpack.c.l.b16 %v3515
        %v4788 = vunpack.c.h.b16 %v3515
        %v4789 = vunpack.c.l.b16 %v3516
        %v4790 = vunpack.c.h.b16 %v3516
        %v4791 = vunpack.c.l.b16 %v3517
        %v4792 = vunpack.c.h.b16 %v3517
        %v4793 = vunpack.c.l.b16 %v3518
        %v4794 = vunpack.c.h.b16 %v3518
        %v4795 = vunpack.c.l.b16 %v3519
        %v4796 = vunpack.c.h.b16 %v3519
        %v4797 = vunpack.c.l.b16 %v3520
        %v4798 = vunpack.c.h.b16 %v3520
        %v4799 = vunpack.c.l.b16 %v3521
        %v4800 = vunpack.c.h.b16 %v3521
        %v4801 = vunpack.c.l.b16 %v3522
        %v4802 = vunpack.c.h.b16 %v3522
        %v4803 = vunpack.c.l.b16 %v3523
        %v4804 = vunpack.c.h.b16 %v3523
        %v4805 = vunpack.c.l.b16 %v3524
        %v4806 = vunpack.c.h.b16 %v3524
        %v4807 = vunpack.c.l.b16 %v3525
        %v4808 = vunpack.c.h.b16 %v3525
        %v4809 = vunpack.c.l.b16 %v3526
        %v4810 = vunpack.c.h.b16 %v3526
        %v4811 = vunpack.c.l.b16 %v3527
        %v4812 = vunpack.c.h.b16 %v3527
        %v4813 = vunpack.c.l.b16 %v3528
        %v4814 = vunpack.c.h.b16 %v3528
        %v4815 = vunpack.c.l.b16 %v3529
        %v4816 = vunpack.c.h.b16 %v3529
        %v4817 = vunpack.c.l.b16 %v3530
        %v4818 = vunpack.c.h.b16 %v3530
        %v4819 = vpack.c.b16 %v4757, %v4755
        %v4820 = vpack.c.b16 %v4758, %v4756
        %v4821 = vpack.c.b16 %v4761, %v4759
        %v4822 = vpack.c.b16 %v4762, %v4760
        %v4823 = vpack.c.b16 %v4765, %v4763
        %v4824 = vpack.c.b16 %v4766, %v4764
        %v4825 = vpack.c.b16 %v4769, %v4767
        %v4826 = vpack.c.b16 %v4770, %v4768
        %v4827 = vpack.c.b16 %v4773, %v4771
        %v4828 = vpack.c.b16 %v4774, %v4772
        %v4829 = vpack.c.b16 %v4777, %v4775
        %v4830 = vpack.c.b16 %v4778, %v4776
        %v4831 = vpack.c.b16 %v4781, %v4779
        %v4832 = vpack.c.b16 %v4782, %v4780
        %v4833 = vpack.c.b16 %v4785, %v4783
        %v4834 = vpack.c.b16 %v4786, %v4784
        %v4835 = vpack.c.b16 %v4789, %v4787
        %v4836 = vpack.c.b16 %v4790, %v4788
        %v4837 = vpack.c.b16 %v4793, %v4791
        %v4838 = vpack.c.b16 %v4794, %v4792
        %v4839 = vpack.c.b16 %v4797, %v4795
        %v4840 = vpack.c.b16 %v4798, %v4796
        %v4841 = vpack.c.b16 %v4801, %v4799
        %v4842 = vpack.c.b16 %v4802, %v4800
        %v4843 = vpack.c.b16 %v4805, %v4803
        %v4844 = vpack.c.b16 %v4806, %v4804
        %v4845 = vpack.c.b16 %v4809, %v4807
        %v4846 = vpack.c.b16 %v4810, %v4808
        %v4847 = vpack.c.b16 %v4813, %v4811
        %v4848 = vpack.c.b16 %v4814, %v4812
        %v4849 = vpack.c.b16 %v4817, %v4815
        %v4850 = vpack.c.b16 %v4818, %v4816
        %4883 = vmatpush.bf16.msra.mxu0 %v4833
        %4884 = vmatpush.bf16.msra.mxu0 %v4831
        %4885 = vmatpush.bf16.msra.mxu0 %v4829
        %4886 = vmatpush.bf16.msra.mxu0 %v4827
        %4887 = vmatpush.bf16.msra.mxu0 %v4825
        %4888 = vmatpush.bf16.msra.mxu0 %v4823
        %4889 = vmatpush.bf16.msra.mxu0 %v4821
        %4890 = vmatpush.bf16.msra.mxu0 %v4819
        %4891 = vmatmul.bf16.gmra.mxu0 %v3564
        %v4892 = vpop.f32.mrf.mxu0
        %v4893 = vadd.f32 %v4694, %v4892
        %v4894 = vpop.f32.mrf.mxu0
        %4895 = vdwg.mxu0
        %4896 = vmatpush.bf16.msra.mxu0 %v4849
        %4897 = vmatpush.bf16.msra.mxu0 %v4847
        %4898 = vmatpush.bf16.msra.mxu0 %v4845
        %4899 = vmatpush.bf16.msra.mxu0 %v4843
        %4900 = vmatpush.bf16.msra.mxu0 %v4841
        %4901 = vmatpush.bf16.msra.mxu0 %v4839
        %4902 = vmatpush.bf16.msra.mxu0 %v4837
        %4903 = vmatpush.bf16.msra.mxu0 %v4835
        %4904 = vmatmul.bf16.gmra.mxu0 %v3565
        %v4905 = vpop.f32.mrf.mxu0
        %v4906 = vadd.f32 %v4893, %v4905
        %v4907 = vpop.f32.mrf.mxu0
        %4908 = vdwg.mxu0
        %4909 = vmatpush.bf16.msra.mxu0 %v4834
        %4910 = vmatpush.bf16.msra.mxu0 %v4832
        %4911 = vmatpush.bf16.msra.mxu0 %v4830
        %4912 = vmatpush.bf16.msra.mxu0 %v4828
        %4913 = vmatpush.bf16.msra.mxu0 %v4826
        %4914 = vmatpush.bf16.msra.mxu0 %v4824
        %4915 = vmatpush.bf16.msra.mxu0 %v4822
        %4916 = vmatpush.bf16.msra.mxu0 %v4820
        %4917 = vmatmul.bf16.gmra.mxu0 %v3564
        %v4918 = vpop.f32.mrf.mxu0
        %v4919 = vadd.f32 %v4720, %v4918
        %v4920 = vpop.f32.mrf.mxu0
        %4921 = vdwg.mxu0
        %4922 = vmatpush.bf16.msra.mxu0 %v4850
        %4923 = vmatpush.bf16.msra.mxu0 %v4848
        %4924 = vmatpush.bf16.msra.mxu0 %v4846
        %4925 = vmatpush.bf16.msra.mxu0 %v4844
        %4926 = vmatpush.bf16.msra.mxu0 %v4842
        %4927 = vmatpush.bf16.msra.mxu0 %v4840
        %4928 = vmatpush.bf16.msra.mxu0 %v4838
        %4929 = vmatpush.bf16.msra.mxu0 %v4836
        %4930 = vmatmul.bf16.gmra.mxu0 %v3565
        %v4931 = vpop.f32.mrf.mxu0
        %v4932 = vadd.f32 %v4919, %v4931
        %v4933 = vpop.f32.mrf.mxu0
        %4934 = vdwg.mxu0
        %v4936 = vperm.slane %v3563, 0
        %v4937 = vperm.slane %v3563, 1
        %v4940 = vadd.f32 %v4906, %v4936
        %v4941 = vadd.f32 %v4932, %v4937
        %v4942 = vtanh.pop %v4940
        %v4943 = vtanh.pop %v4941
        %v4944 = vsub.f32 1.0, %v4491
        %v4945 = vsub.f32 1.0, %v4506
        %v4946 = vmul.f32 %v4944, %v2180
        %v4947 = vmul.f32 %v4945, %v2181
        %v4948 = vmul.f32 %v4491, %v4942
        %v4949 = vmul.f32 %v4506, %v4943
        %v4950 = vadd.f32 %v4946, %v4948
        %v4951 = vadd.f32 %v4947, %v4949
        %v4952 = vld [vmem:[%s1813] sm:$0x3]
        %v4953 = vld [vmem:[%s1823] sm:$0x3]
        %v4954 = vrot.slane %v4950, 4
        %v4955 = vadd.f32 %v4950, %v4954
        %v4956 = vrot.slane %v4955, 2
        %v4957 = vadd.f32 %v4955, %v4956
        %v4958 = vrot.slane %v4957, 1
        %v4959 = vadd.f32 %v4957, %v4958
        %v4960 = vrot.slane %v4951, 4
        %v4961 = vadd.f32 %v4951, %v4960
        %v4962 = vrot.slane %v4961, 2
        %v4963 = vadd.f32 %v4961, %v4962
        %v4964 = vrot.slane %v4963, 1
        %v4965 = vadd.f32 %v4963, %v4964
        %v4966 = vmul.f32 %v4959, %v2202
        %v4967 = vmul.f32 %v4965, %v2202
        %v4968 = vsub.f32 %v4950, %v4966
        %v4969 = vsub.f32 %v4951, %v4967
        %v4970 = vmul.f32 %v4968, %v4968
        %v4971 = vmul.f32 %v4969, %v4969
        %v4972 = vrot.slane %v4970, 4
        %v4973 = vadd.f32 %v4970, %v4972
        %v4974 = vrot.slane %v4973, 2
        %v4975 = vadd.f32 %v4973, %v4974
        %v4976 = vrot.slane %v4975, 1
        %v4977 = vadd.f32 %v4975, %v4976
        %v4978 = vrot.slane %v4971, 4
        %v4979 = vadd.f32 %v4971, %v4978
        %v4980 = vrot.slane %v4979, 2
        %v4981 = vadd.f32 %v4979, %v4980
        %v4982 = vrot.slane %v4981, 1
        %v4983 = vadd.f32 %v4981, %v4982
        %v4984 = vmul.f32 %v4977, %v2202
        %v4985 = vmul.f32 %v4983, %v2202
        %v4986 = vadd.f32 %v4984, 1e-05
        %v4987 = vadd.f32 %v4985, 1e-05
        %v4988 = vrsqrt.pop %v4986
        %v4989 = vmul.f32 %v4988, %v4986
        %v4990 = vmul.f32 %v4989, %v4988
        %v4991 = vmul.f32 0.5, %v4990
        %v4992 = vsub.f32 1.5, %v4991
        %v4993 = vmul.f32 %v4988, %v4992
        %vm4994 = vweird.f32 %v4986
        %vm4995 = vweird.f32 %v4988
        %vm4996 = vmor %vm4994, %vm4995
        %v4997 = vsel %vm4996, %v4988, %v4993
        %v4998 = vrsqrt.pop %v4987
        %v4999 = vmul.f32 %v4998, %v4987
        %v5000 = vmul.f32 %v4999, %v4998
        %v5001 = vmul.f32 0.5, %v5000
        %v5002 = vsub.f32 1.5, %v5001
        %v5003 = vmul.f32 %v4998, %v5002
        %vm5004 = vweird.f32 %v4987
        %vm5005 = vweird.f32 %v4998
        %vm5006 = vmor %vm5004, %vm5005
        %v5007 = vsel %vm5006, %v4998, %v5003
        %v5008 = vmul.f32 %v4968, %v4997
        %v5009 = vmul.f32 %v4969, %v5007
        %v5011 = vperm.slane %v4952, 0
        %v5012 = vperm.slane %v4952, 1
        %v5015 = vmul.f32 %v5008, %v5011
        %v5016 = vmul.f32 %v5009, %v5012
        %v5018 = vperm.slane %v4953, 0
        %v5019 = vperm.slane %v4953, 1
        %v5022 = vadd.f32 %v5015, %v5018
        %v5023 = vadd.f32 %v5016, %v5019
        %v5024 = vpack.c.bf16 %v5022, %v5022
        %v5025 = vpack.c.bf16 %v5023, %v5023
        %v5026 = vld [vmem:[%s1833] sm:$0xff]
        %v5027 = vld [vmem:[%s1833 + $0x8] sm:$0xff]
        %v5028 = vld [vmem:[%s1833 + $0x10] sm:$0xff]
        %v5029 = vld [vmem:[%s1833 + $0x18] sm:$0xff]
        %v5030 = vld [vmem:[%s1833 + $0x20] sm:$0xff]
        %v5031 = vld [vmem:[%s1833 + $0x28] sm:$0xff]
        %v5032 = vld [vmem:[%s1833 + $0x30] sm:$0xff]
        %v5033 = vld [vmem:[%s1833 + $0x38] sm:$0xff]
        %v5034 = vld [vmem:[%s1833 + $0x40] sm:$0xff]
        %v5035 = vld [vmem:[%s1833 + $0x48] sm:$0xff]
        %v5036 = vld [vmem:[%s1833 + $0x50] sm:$0xff]
        %v5037 = vld [vmem:[%s1833 + $0x58] sm:$0xff]
        %v5038 = vld [vmem:[%s1833 + $0x60] sm:$0xff]
        %v5039 = vld [vmem:[%s1833 + $0x68] sm:$0xff]
        %v5040 = vld [vmem:[%s1833 + $0x70] sm:$0xff]
        %v5041 = vld [vmem:[%s1833 + $0x78] sm:$0xff]
        %v5042 = vld [vmem:[%s1833 + $0x80] sm:$0xff]
        %v5043 = vld [vmem:[%s1833 + $0x88] sm:$0xff]
        %v5044 = vld [vmem:[%s1833 + $0x90] sm:$0xff]
        %v5045 = vld [vmem:[%s1833 + $0x98] sm:$0xff]
        %v5046 = vld [vmem:[%s1833 + $0xa0] sm:$0xff]
        %v5047 = vld [vmem:[%s1833 + $0xa8] sm:$0xff]
        %v5048 = vld [vmem:[%s1833 + $0xb0] sm:$0xff]
        %v5049 = vld [vmem:[%s1833 + $0xb8] sm:$0xff]
        %v5050 = vld [vmem:[%s1833 + $0xc0] sm:$0xff]
        %v5051 = vld [vmem:[%s1833 + $0xc8] sm:$0xff]
        %v5052 = vld [vmem:[%s1833 + $0xd0] sm:$0xff]
        %v5053 = vld [vmem:[%s1833 + $0xd8] sm:$0xff]
        %v5054 = vld [vmem:[%s1833 + $0xe0] sm:$0xff]
        %v5055 = vld [vmem:[%s1833 + $0xe8] sm:$0xff]
        %v5056 = vld [vmem:[%s1833 + $0xf0] sm:$0xff]
        %v5057 = vld [vmem:[%s1833 + $0xf8] sm:$0xff]
        %v5058 = vld [vmem:[%s1833 + $0x100] sm:$0xff]
        %v5059 = vld [vmem:[%s1833 + $0x108] sm:$0xff]
        %v5060 = vld [vmem:[%s1833 + $0x110] sm:$0xff]
        %v5061 = vld [vmem:[%s1833 + $0x118] sm:$0xff]
        %v5062 = vld [vmem:[%s1833 + $0x120] sm:$0xff]
        %v5063 = vld [vmem:[%s1833 + $0x128] sm:$0xff]
        %v5064 = vld [vmem:[%s1833 + $0x130] sm:$0xff]
        %v5065 = vld [vmem:[%s1833 + $0x138] sm:$0xff]
        %v5066 = vld [vmem:[%s1833 + $0x140] sm:$0xff]
        %v5067 = vld [vmem:[%s1833 + $0x148] sm:$0xff]
        %v5068 = vld [vmem:[%s1833 + $0x150] sm:$0xff]
        %v5069 = vld [vmem:[%s1833 + $0x158] sm:$0xff]
        %v5070 = vld [vmem:[%s1833 + $0x160] sm:$0xff]
        %v5071 = vld [vmem:[%s1833 + $0x168] sm:$0xff]
        %v5072 = vld [vmem:[%s1833 + $0x170] sm:$0xff]
        %v5073 = vld [vmem:[%s1833 + $0x178] sm:$0xff]
        %v5074 = vld [vmem:[%s1833 + $0x180] sm:$0xff]
        %v5075 = vld [vmem:[%s1833 + $0x188] sm:$0xff]
        %v5076 = vld [vmem:[%s1833 + $0x190] sm:$0xff]
        %v5077 = vld [vmem:[%s1833 + $0x198] sm:$0xff]
        %v5078 = vld [vmem:[%s1833 + $0x1a0] sm:$0xff]
        %v5079 = vld [vmem:[%s1833 + $0x1a8] sm:$0xff]
        %v5080 = vld [vmem:[%s1833 + $0x1b0] sm:$0xff]
        %v5081 = vld [vmem:[%s1833 + $0x1b8] sm:$0xff]
        %v5082 = vld [vmem:[%s1833 + $0x1c0] sm:$0xff]
        %v5083 = vld [vmem:[%s1833 + $0x1c8] sm:$0xff]
        %v5084 = vld [vmem:[%s1833 + $0x1d0] sm:$0xff]
        %v5085 = vld [vmem:[%s1833 + $0x1d8] sm:$0xff]
        %v5086 = vld [vmem:[%s1833 + $0x1e0] sm:$0xff]
        %v5087 = vld [vmem:[%s1833 + $0x1e8] sm:$0xff]
        %v5088 = vld [vmem:[%s1833 + $0x1f0] sm:$0xff]
        %v5089 = vld [vmem:[%s1833 + $0x1f8] sm:$0xff]
        %v5090 = vld [vmem:[%s2098] sm:$0xf]
        %v5092 = vperm.slane %v5090, 0
        %v5093 = vperm.slane %v5090, 1
        %v5094 = vperm.slane %v5090, 2
        %v5095 = vperm.slane %v5090, 3
        %v5164 = vunpack.c.l.b16 %v5026
        %v5165 = vunpack.c.h.b16 %v5026
        %v5166 = vunpack.c.l.b16 %v5027
        %v5167 = vunpack.c.h.b16 %v5027
        %v5168 = vunpack.c.l.b16 %v5028
        %v5169 = vunpack.c.h.b16 %v5028
        %v5170 = vunpack.c.l.b16 %v5029
        %v5171 = vunpack.c.h.b16 %v5029
        %v5172 = vunpack.c.l.b16 %v5030
        %v5173 = vunpack.c.h.b16 %v5030
        %v5174 = vunpack.c.l.b16 %v5031
        %v5175 = vunpack.c.h.b16 %v5031
        %v5176 = vunpack.c.l.b16 %v5032
        %v5177 = vunpack.c.h.b16 %v5032
        %v5178 = vunpack.c.l.b16 %v5033
        %v5179 = vunpack.c.h.b16 %v5033
        %v5180 = vunpack.c.l.b16 %v5034
        %v5181 = vunpack.c.h.b16 %v5034
        %v5182 = vunpack.c.l.b16 %v5035
        %v5183 = vunpack.c.h.b16 %v5035
        %v5184 = vunpack.c.l.b16 %v5036
        %v5185 = vunpack.c.h.b16 %v5036
        %v5186 = vunpack.c.l.b16 %v5037
        %v5187 = vunpack.c.h.b16 %v5037
        %v5188 = vunpack.c.l.b16 %v5038
        %v5189 = vunpack.c.h.b16 %v5038
        %v5190 = vunpack.c.l.b16 %v5039
        %v5191 = vunpack.c.h.b16 %v5039
        %v5192 = vunpack.c.l.b16 %v5040
        %v5193 = vunpack.c.h.b16 %v5040
        %v5194 = vunpack.c.l.b16 %v5041
        %v5195 = vunpack.c.h.b16 %v5041
        %v5196 = vunpack.c.l.b16 %v5042
        %v5197 = vunpack.c.h.b16 %v5042
        %v5198 = vunpack.c.l.b16 %v5043
        %v5199 = vunpack.c.h.b16 %v5043
        %v5200 = vunpack.c.l.b16 %v5044
        %v5201 = vunpack.c.h.b16 %v5044
        %v5202 = vunpack.c.l.b16 %v5045
        %v5203 = vunpack.c.h.b16 %v5045
        %v5204 = vunpack.c.l.b16 %v5046
        %v5205 = vunpack.c.h.b16 %v5046
        %v5206 = vunpack.c.l.b16 %v5047
        %v5207 = vunpack.c.h.b16 %v5047
        %v5208 = vunpack.c.l.b16 %v5048
        %v5209 = vunpack.c.h.b16 %v5048
        %v5210 = vunpack.c.l.b16 %v5049
        %v5211 = vunpack.c.h.b16 %v5049
        %v5212 = vunpack.c.l.b16 %v5050
        %v5213 = vunpack.c.h.b16 %v5050
        %v5214 = vunpack.c.l.b16 %v5051
        %v5215 = vunpack.c.h.b16 %v5051
        %v5216 = vunpack.c.l.b16 %v5052
        %v5217 = vunpack.c.h.b16 %v5052
        %v5218 = vunpack.c.l.b16 %v5053
        %v5219 = vunpack.c.h.b16 %v5053
        %v5220 = vunpack.c.l.b16 %v5054
        %v5221 = vunpack.c.h.b16 %v5054
        %v5222 = vunpack.c.l.b16 %v5055
        %v5223 = vunpack.c.h.b16 %v5055
        %v5224 = vunpack.c.l.b16 %v5056
        %v5225 = vunpack.c.h.b16 %v5056
        %v5226 = vunpack.c.l.b16 %v5057
        %v5227 = vunpack.c.h.b16 %v5057
        %v5228 = vunpack.c.l.b16 %v5058
        %v5229 = vunpack.c.h.b16 %v5058
        %v5230 = vunpack.c.l.b16 %v5059
        %v5231 = vunpack.c.h.b16 %v5059
        %v5232 = vunpack.c.l.b16 %v5060
        %v5233 = vunpack.c.h.b16 %v5060
        %v5234 = vunpack.c.l.b16 %v5061
        %v5235 = vunpack.c.h.b16 %v5061
        %v5236 = vunpack.c.l.b16 %v5062
        %v5237 = vunpack.c.h.b16 %v5062
        %v5238 = vunpack.c.l.b16 %v5063
        %v5239 = vunpack.c.h.b16 %v5063
        %v5240 = vunpack.c.l.b16 %v5064
        %v5241 = vunpack.c.h.b16 %v5064
        %v5242 = vunpack.c.l.b16 %v5065
        %v5243 = vunpack.c.h.b16 %v5065
        %v5244 = vunpack.c.l.b16 %v5066
        %v5245 = vunpack.c.h.b16 %v5066
        %v5246 = vunpack.c.l.b16 %v5067
        %v5247 = vunpack.c.h.b16 %v5067
        %v5248 = vunpack.c.l.b16 %v5068
        %v5249 = vunpack.c.h.b16 %v5068
        %v5250 = vunpack.c.l.b16 %v5069
        %v5251 = vunpack.c.h.b16 %v5069
        %v5252 = vunpack.c.l.b16 %v5070
        %v5253 = vunpack.c.h.b16 %v5070
        %v5254 = vunpack.c.l.b16 %v5071
        %v5255 = vunpack.c.h.b16 %v5071
        %v5256 = vunpack.c.l.b16 %v5072
        %v5257 = vunpack.c.h.b16 %v5072
        %v5258 = vunpack.c.l.b16 %v5073
        %v5259 = vunpack.c.h.b16 %v5073
        %v5260 = vunpack.c.l.b16 %v5074
        %v5261 = vunpack.c.h.b16 %v5074
        %v5262 = vunpack.c.l.b16 %v5075
        %v5263 = vunpack.c.h.b16 %v5075
        %v5264 = vunpack.c.l.b16 %v5076
        %v5265 = vunpack.c.h.b16 %v5076
        %v5266 = vunpack.c.l.b16 %v5077
        %v5267 = vunpack.c.h.b16 %v5077
        %v5268 = vunpack.c.l.b16 %v5078
        %v5269 = vunpack.c.h.b16 %v5078
        %v5270 = vunpack.c.l.b16 %v5079
        %v5271 = vunpack.c.h.b16 %v5079
        %v5272 = vunpack.c.l.b16 %v5080
        %v5273 = vunpack.c.h.b16 %v5080
        %v5274 = vunpack.c.l.b16 %v5081
        %v5275 = vunpack.c.h.b16 %v5081
        %v5276 = vunpack.c.l.b16 %v5082
        %v5277 = vunpack.c.h.b16 %v5082
        %v5278 = vunpack.c.l.b16 %v5083
        %v5279 = vunpack.c.h.b16 %v5083
        %v5280 = vunpack.c.l.b16 %v5084
        %v5281 = vunpack.c.h.b16 %v5084
        %v5282 = vunpack.c.l.b16 %v5085
        %v5283 = vunpack.c.h.b16 %v5085
        %v5284 = vunpack.c.l.b16 %v5086
        %v5285 = vunpack.c.h.b16 %v5086
        %v5286 = vunpack.c.l.b16 %v5087
        %v5287 = vunpack.c.h.b16 %v5087
        %v5288 = vunpack.c.l.b16 %v5088
        %v5289 = vunpack.c.h.b16 %v5088
        %v5290 = vunpack.c.l.b16 %v5089
        %v5291 = vunpack.c.h.b16 %v5089
        %v5292 = vpack.c.b16 %v5168, %v5164
        %v5293 = vpack.c.b16 %v5169, %v5165
        %v5294 = vpack.c.b16 %v5170, %v5166
        %v5295 = vpack.c.b16 %v5171, %v5167
        %v5296 = vpack.c.b16 %v5176, %v5172
        %v5297 = vpack.c.b16 %v5177, %v5173
        %v5298 = vpack.c.b16 %v5178, %v5174
        %v5299 = vpack.c.b16 %v5179, %v5175
        %v5300 = vpack.c.b16 %v5184, %v5180
        %v5301 = vpack.c.b16 %v5185, %v5181
        %v5302 = vpack.c.b16 %v5186, %v5182
        %v5303 = vpack.c.b16 %v5187, %v5183
        %v5304 = vpack.c.b16 %v5192, %v5188
        %v5305 = vpack.c.b16 %v5193, %v5189
        %v5306 = vpack.c.b16 %v5194, %v5190
        %v5307 = vpack.c.b16 %v5195, %v5191
        %v5308 = vpack.c.b16 %v5200, %v5196
        %v5309 = vpack.c.b16 %v5201, %v5197
        %v5310 = vpack.c.b16 %v5202, %v5198
        %v5311 = vpack.c.b16 %v5203, %v5199
        %v5312 = vpack.c.b16 %v5208, %v5204
        %v5313 = vpack.c.b16 %v5209, %v5205
        %v5314 = vpack.c.b16 %v5210, %v5206
        %v5315 = vpack.c.b16 %v5211, %v5207
        %v5316 = vpack.c.b16 %v5216, %v5212
        %v5317 = vpack.c.b16 %v5217, %v5213
        %v5318 = vpack.c.b16 %v5218, %v5214
        %v5319 = vpack.c.b16 %v5219, %v5215
        %v5320 = vpack.c.b16 %v5224, %v5220
        %v5321 = vpack.c.b16 %v5225, %v5221
        %v5322 = vpack.c.b16 %v5226, %v5222
        %v5323 = vpack.c.b16 %v5227, %v5223
        %v5324 = vpack.c.b16 %v5232, %v5228
        %v5325 = vpack.c.b16 %v5233, %v5229
        %v5326 = vpack.c.b16 %v5234, %v5230
        %v5327 = vpack.c.b16 %v5235, %v5231
        %v5328 = vpack.c.b16 %v5240, %v5236
        %v5329 = vpack.c.b16 %v5241, %v5237
        %v5330 = vpack.c.b16 %v5242, %v5238
        %v5331 = vpack.c.b16 %v5243, %v5239
        %v5332 = vpack.c.b16 %v5248, %v5244
        %v5333 = vpack.c.b16 %v5249, %v5245
        %v5334 = vpack.c.b16 %v5250, %v5246
        %v5335 = vpack.c.b16 %v5251, %v5247
        %v5336 = vpack.c.b16 %v5256, %v5252
        %v5337 = vpack.c.b16 %v5257, %v5253
        %v5338 = vpack.c.b16 %v5258, %v5254
        %v5339 = vpack.c.b16 %v5259, %v5255
        %v5340 = vpack.c.b16 %v5264, %v5260
        %v5341 = vpack.c.b16 %v5265, %v5261
        %v5342 = vpack.c.b16 %v5266, %v5262
        %v5343 = vpack.c.b16 %v5267, %v5263
        %v5344 = vpack.c.b16 %v5272, %v5268
        %v5345 = vpack.c.b16 %v5273, %v5269
        %v5346 = vpack.c.b16 %v5274, %v5270
        %v5347 = vpack.c.b16 %v5275, %v5271
        %v5348 = vpack.c.b16 %v5280, %v5276
        %v5349 = vpack.c.b16 %v5281, %v5277
        %v5350 = vpack.c.b16 %v5282, %v5278
        %v5351 = vpack.c.b16 %v5283, %v5279
        %v5352 = vpack.c.b16 %v5288, %v5284
        %v5353 = vpack.c.b16 %v5289, %v5285
        %v5354 = vpack.c.b16 %v5290, %v5286
        %v5355 = vpack.c.b16 %v5291, %v5287
        %5420 = vmatpush.bf16.msra.mxu0 %v5320
        %5421 = vmatpush.bf16.msra.mxu0 %v5316
        %5422 = vmatpush.bf16.msra.mxu0 %v5312
        %5423 = vmatpush.bf16.msra.mxu0 %v5308
        %5424 = vmatpush.bf16.msra.mxu0 %v5304
        %5425 = vmatpush.bf16.msra.mxu0 %v5300
        %5426 = vmatpush.bf16.msra.mxu0 %v5296
        %5427 = vmatpush.bf16.msra.mxu0 %v5292
        %5428 = vmatmul.bf16.gmra.mxu0 %v5024
        %v5429 = vpop.f32.mrf.mxu0
        %v5430 = vadd.f32 %v5092, %v5429
        %v5431 = vpop.f32.mrf.mxu0
        %5432 = vdwg.mxu0
        %5433 = vmatpush.bf16.msra.mxu0 %v5352
        %5434 = vmatpush.bf16.msra.mxu0 %v5348
        %5435 = vmatpush.bf16.msra.mxu0 %v5344
        %5436 = vmatpush.bf16.msra.mxu0 %v5340
        %5437 = vmatpush.bf16.msra.mxu0 %v5336
        %5438 = vmatpush.bf16.msra.mxu0 %v5332
        %5439 = vmatpush.bf16.msra.mxu0 %v5328
        %5440 = vmatpush.bf16.msra.mxu0 %v5324
        %5441 = vmatmul.bf16.gmra.mxu0 %v5025
        %v5442 = vpop.f32.mrf.mxu0
        %v5443 = vadd.f32 %v5430, %v5442
        %v5444 = vpop.f32.mrf.mxu0
        %5445 = vdwg.mxu0
        %5446 = vmatpush.bf16.msra.mxu0 %v5321
        %5447 = vmatpush.bf16.msra.mxu0 %v5317
        %5448 = vmatpush.bf16.msra.mxu0 %v5313
        %5449 = vmatpush.bf16.msra.mxu0 %v5309
        %5450 = vmatpush.bf16.msra.mxu0 %v5305
        %5451 = vmatpush.bf16.msra.mxu0 %v5301
        %5452 = vmatpush.bf16.msra.mxu0 %v5297
        %5453 = vmatpush.bf16.msra.mxu0 %v5293
        %5454 = vmatmul.bf16.gmra.mxu0 %v5024
        %v5455 = vpop.f32.mrf.mxu0
        %v5456 = vadd.f32 %v5093, %v5455
        %v5457 = vpop.f32.mrf.mxu0
        %5458 = vdwg.mxu0
        %5459 = vmatpush.bf16.msra.mxu0 %v5353
        %5460 = vmatpush.bf16.msra.mxu0 %v5349
        %5461 = vmatpush.bf16.msra.mxu0 %v5345
        %5462 = vmatpush.bf16.msra.mxu0 %v5341
        %5463 = vmatpush.bf16.msra.mxu0 %v5337
        %5464 = vmatpush.bf16.msra.mxu0 %v5333
        %5465 = vmatpush.bf16.msra.mxu0 %v5329
        %5466 = vmatpush.bf16.msra.mxu0 %v5325
        %5467 = vmatmul.bf16.gmra.mxu0 %v5025
        %v5468 = vpop.f32.mrf.mxu0
        %v5469 = vadd.f32 %v5456, %v5468
        %v5470 = vpop.f32.mrf.mxu0
        %5471 = vdwg.mxu0
        %5472 = vmatpush.bf16.msra.mxu0 %v5322
        %5473 = vmatpush.bf16.msra.mxu0 %v5318
        %5474 = vmatpush.bf16.msra.mxu0 %v5314
        %5475 = vmatpush.bf16.msra.mxu0 %v5310
        %5476 = vmatpush.bf16.msra.mxu0 %v5306
        %5477 = vmatpush.bf16.msra.mxu0 %v5302
        %5478 = vmatpush.bf16.msra.mxu0 %v5298
        %5479 = vmatpush.bf16.msra.mxu0 %v5294
        %5480 = vmatmul.bf16.gmra.mxu0 %v5024
        %v5481 = vpop.f32.mrf.mxu0
        %v5482 = vadd.f32 %v5094, %v5481
        %v5483 = vpop.f32.mrf.mxu0
        %5484 = vdwg.mxu0
        %5485 = vmatpush.bf16.msra.mxu0 %v5354
        %5486 = vmatpush.bf16.msra.mxu0 %v5350
        %5487 = vmatpush.bf16.msra.mxu0 %v5346
        %5488 = vmatpush.bf16.msra.mxu0 %v5342
        %5489 = vmatpush.bf16.msra.mxu0 %v5338
        %5490 = vmatpush.bf16.msra.mxu0 %v5334
        %5491 = vmatpush.bf16.msra.mxu0 %v5330
        %5492 = vmatpush.bf16.msra.mxu0 %v5326
        %5493 = vmatmul.bf16.gmra.mxu0 %v5025
        %v5494 = vpop.f32.mrf.mxu0
        %v5495 = vadd.f32 %v5482, %v5494
        %v5496 = vpop.f32.mrf.mxu0
        %5497 = vdwg.mxu0
        %5498 = vmatpush.bf16.msra.mxu0 %v5323
        %5499 = vmatpush.bf16.msra.mxu0 %v5319
        %5500 = vmatpush.bf16.msra.mxu0 %v5315
        %5501 = vmatpush.bf16.msra.mxu0 %v5311
        %5502 = vmatpush.bf16.msra.mxu0 %v5307
        %5503 = vmatpush.bf16.msra.mxu0 %v5303
        %5504 = vmatpush.bf16.msra.mxu0 %v5299
        %5505 = vmatpush.bf16.msra.mxu0 %v5295
        %5506 = vmatmul.bf16.gmra.mxu0 %v5024
        %v5507 = vpop.f32.mrf.mxu0
        %v5508 = vadd.f32 %v5095, %v5507
        %v5509 = vpop.f32.mrf.mxu0
        %5510 = vdwg.mxu0
        %5511 = vmatpush.bf16.msra.mxu0 %v5355
        %5512 = vmatpush.bf16.msra.mxu0 %v5351
        %5513 = vmatpush.bf16.msra.mxu0 %v5347
        %5514 = vmatpush.bf16.msra.mxu0 %v5343
        %5515 = vmatpush.bf16.msra.mxu0 %v5339
        %5516 = vmatpush.bf16.msra.mxu0 %v5335
        %5517 = vmatpush.bf16.msra.mxu0 %v5331
        %5518 = vmatpush.bf16.msra.mxu0 %v5327
        %5519 = vmatmul.bf16.gmra.mxu0 %v5025
        %v5520 = vpop.f32.mrf.mxu0
        %v5521 = vadd.f32 %v5508, %v5520
        %v5522 = vpop.f32.mrf.mxu0
        %5523 = vdwg.mxu0
        %v5524 = vmax.f32 %v5443, 0.0
        %v5525 = vmax.f32 %v5469, 0.0
        %v5526 = vmax.f32 %v5495, 0.0
        %v5527 = vmax.f32 %v5521, 0.0
        %v5528 = vpack.c.bf16 %v5524, %v5524
        %v5529 = vpack.c.bf16 %v5525, %v5525
        %v5530 = vpack.c.bf16 %v5526, %v5526
        %v5531 = vpack.c.bf16 %v5527, %v5527
        %v5532 = vld [vmem:[%s1843] sm:$0xff]
        %v5533 = vld [vmem:[%s1843 + $0x8] sm:$0xff]
        %v5534 = vld [vmem:[%s1843 + $0x10] sm:$0xff]
        %v5535 = vld [vmem:[%s1843 + $0x18] sm:$0xff]
        %v5536 = vld [vmem:[%s1843 + $0x20] sm:$0xff]
        %v5537 = vld [vmem:[%s1843 + $0x28] sm:$0xff]
        %v5538 = vld [vmem:[%s1843 + $0x30] sm:$0xff]
        %v5539 = vld [vmem:[%s1843 + $0x38] sm:$0xff]
        %v5540 = vld [vmem:[%s1843 + $0x40] sm:$0xff]
        %v5541 = vld [vmem:[%s1843 + $0x48] sm:$0xff]
        %v5542 = vld [vmem:[%s1843 + $0x50] sm:$0xff]
        %v5543 = vld [vmem:[%s1843 + $0x58] sm:$0xff]
        %v5544 = vld [vmem:[%s1843 + $0x60] sm:$0xff]
        %v5545 = vld [vmem:[%s1843 + $0x68] sm:$0xff]
        %v5546 = vld [vmem:[%s1843 + $0x70] sm:$0xff]
        %v5547 = vld [vmem:[%s1843 + $0x78] sm:$0xff]
        %v5548 = vld [vmem:[%s1843 + $0x80] sm:$0xff]
        %v5549 = vld [vmem:[%s1843 + $0x88] sm:$0xff]
        %v5550 = vld [vmem:[%s1843 + $0x90] sm:$0xff]
        %v5551 = vld [vmem:[%s1843 + $0x98] sm:$0xff]
        %v5552 = vld [vmem:[%s1843 + $0xa0] sm:$0xff]
        %v5553 = vld [vmem:[%s1843 + $0xa8] sm:$0xff]
        %v5554 = vld [vmem:[%s1843 + $0xb0] sm:$0xff]
        %v5555 = vld [vmem:[%s1843 + $0xb8] sm:$0xff]
        %v5556 = vld [vmem:[%s1843 + $0xc0] sm:$0xff]
        %v5557 = vld [vmem:[%s1843 + $0xc8] sm:$0xff]
        %v5558 = vld [vmem:[%s1843 + $0xd0] sm:$0xff]
        %v5559 = vld [vmem:[%s1843 + $0xd8] sm:$0xff]
        %v5560 = vld [vmem:[%s1843 + $0xe0] sm:$0xff]
        %v5561 = vld [vmem:[%s1843 + $0xe8] sm:$0xff]
        %v5562 = vld [vmem:[%s1843 + $0xf0] sm:$0xff]
        %v5563 = vld [vmem:[%s1843 + $0xf8] sm:$0xff]
        %v5564 = vld [vmem:[%s1843 + $0x100] sm:$0xff]
        %v5565 = vld [vmem:[%s1843 + $0x108] sm:$0xff]
        %v5566 = vld [vmem:[%s1843 + $0x110] sm:$0xff]
        %v5567 = vld [vmem:[%s1843 + $0x118] sm:$0xff]
        %v5568 = vld [vmem:[%s1843 + $0x120] sm:$0xff]
        %v5569 = vld [vmem:[%s1843 + $0x128] sm:$0xff]
        %v5570 = vld [vmem:[%s1843 + $0x130] sm:$0xff]
        %v5571 = vld [vmem:[%s1843 + $0x138] sm:$0xff]
        %v5572 = vld [vmem:[%s1843 + $0x140] sm:$0xff]
        %v5573 = vld [vmem:[%s1843 + $0x148] sm:$0xff]
        %v5574 = vld [vmem:[%s1843 + $0x150] sm:$0xff]
        %v5575 = vld [vmem:[%s1843 + $0x158] sm:$0xff]
        %v5576 = vld [vmem:[%s1843 + $0x160] sm:$0xff]
        %v5577 = vld [vmem:[%s1843 + $0x168] sm:$0xff]
        %v5578 = vld [vmem:[%s1843 + $0x170] sm:$0xff]
        %v5579 = vld [vmem:[%s1843 + $0x178] sm:$0xff]
        %v5580 = vld [vmem:[%s1843 + $0x180] sm:$0xff]
        %v5581 = vld [vmem:[%s1843 + $0x188] sm:$0xff]
        %v5582 = vld [vmem:[%s1843 + $0x190] sm:$0xff]
        %v5583 = vld [vmem:[%s1843 + $0x198] sm:$0xff]
        %v5584 = vld [vmem:[%s1843 + $0x1a0] sm:$0xff]
        %v5585 = vld [vmem:[%s1843 + $0x1a8] sm:$0xff]
        %v5586 = vld [vmem:[%s1843 + $0x1b0] sm:$0xff]
        %v5587 = vld [vmem:[%s1843 + $0x1b8] sm:$0xff]
        %v5588 = vld [vmem:[%s1843 + $0x1c0] sm:$0xff]
        %v5589 = vld [vmem:[%s1843 + $0x1c8] sm:$0xff]
        %v5590 = vld [vmem:[%s1843 + $0x1d0] sm:$0xff]
        %v5591 = vld [vmem:[%s1843 + $0x1d8] sm:$0xff]
        %v5592 = vld [vmem:[%s1843 + $0x1e0] sm:$0xff]
        %v5593 = vld [vmem:[%s1843 + $0x1e8] sm:$0xff]
        %v5594 = vld [vmem:[%s1843 + $0x1f0] sm:$0xff]
        %v5595 = vld [vmem:[%s1843 + $0x1f8] sm:$0xff]
        %v5596 = vld [vmem:[%s1853] sm:$0x3]
        %v5598 = vperm.slane %v5596, 0
        %v5599 = vperm.slane %v5596, 1
        %v5666 = vunpack.c.l.b16 %v5532
        %v5667 = vunpack.c.h.b16 %v5532
        %v5668 = vunpack.c.l.b16 %v5533
        %v5669 = vunpack.c.h.b16 %v5533
        %v5670 = vunpack.c.l.b16 %v5534
        %v5671 = vunpack.c.h.b16 %v5534
        %v5672 = vunpack.c.l.b16 %v5535
        %v5673 = vunpack.c.h.b16 %v5535
        %v5674 = vunpack.c.l.b16 %v5536
        %v5675 = vunpack.c.h.b16 %v5536
        %v5676 = vunpack.c.l.b16 %v5537
        %v5677 = vunpack.c.h.b16 %v5537
        %v5678 = vunpack.c.l.b16 %v5538
        %v5679 = vunpack.c.h.b16 %v5538
        %v5680 = vunpack.c.l.b16 %v5539
        %v5681 = vunpack.c.h.b16 %v5539
        %v5682 = vunpack.c.l.b16 %v5540
        %v5683 = vunpack.c.h.b16 %v5540
        %v5684 = vunpack.c.l.b16 %v5541
        %v5685 = vunpack.c.h.b16 %v5541
        %v5686 = vunpack.c.l.b16 %v5542
        %v5687 = vunpack.c.h.b16 %v5542
        %v5688 = vunpack.c.l.b16 %v5543
        %v5689 = vunpack.c.h.b16 %v5543
        %v5690 = vunpack.c.l.b16 %v5544
        %v5691 = vunpack.c.h.b16 %v5544
        %v5692 = vunpack.c.l.b16 %v5545
        %v5693 = vunpack.c.h.b16 %v5545
        %v5694 = vunpack.c.l.b16 %v5546
        %v5695 = vunpack.c.h.b16 %v5546
        %v5696 = vunpack.c.l.b16 %v5547
        %v5697 = vunpack.c.h.b16 %v5547
        %v5698 = vunpack.c.l.b16 %v5548
        %v5699 = vunpack.c.h.b16 %v5548
        %v5700 = vunpack.c.l.b16 %v5549
        %v5701 = vunpack.c.h.b16 %v5549
        %v5702 = vunpack.c.l.b16 %v5550
        %v5703 = vunpack.c.h.b16 %v5550
        %v5704 = vunpack.c.l.b16 %v5551
        %v5705 = vunpack.c.h.b16 %v5551
        %v5706 = vunpack.c.l.b16 %v5552
        %v5707 = vunpack.c.h.b16 %v5552
        %v5708 = vunpack.c.l.b16 %v5553
        %v5709 = vunpack.c.h.b16 %v5553
        %v5710 = vunpack.c.l.b16 %v5554
        %v5711 = vunpack.c.h.b16 %v5554
        %v5712 = vunpack.c.l.b16 %v5555
        %v5713 = vunpack.c.h.b16 %v5555
        %v5714 = vunpack.c.l.b16 %v5556
        %v5715 = vunpack.c.h.b16 %v5556
        %v5716 = vunpack.c.l.b16 %v5557
        %v5717 = vunpack.c.h.b16 %v5557
        %v5718 = vunpack.c.l.b16 %v5558
        %v5719 = vunpack.c.h.b16 %v5558
        %v5720 = vunpack.c.l.b16 %v5559
        %v5721 = vunpack.c.h.b16 %v5559
        %v5722 = vunpack.c.l.b16 %v5560
        %v5723 = vunpack.c.h.b16 %v5560
        %v5724 = vunpack.c.l.b16 %v5561
        %v5725 = vunpack.c.h.b16 %v5561
        %v5726 = vunpack.c.l.b16 %v5562
        %v5727 = vunpack.c.h.b16 %v5562
        %v5728 = vunpack.c.l.b16 %v5563
        %v5729 = vunpack.c.h.b16 %v5563
        %v5730 = vunpack.c.l.b16 %v5564
        %v5731 = vunpack.c.h.b16 %v5564
        %v5732 = vunpack.c.l.b16 %v5565
        %v5733 = vunpack.c.h.b16 %v5565
        %v5734 = vunpack.c.l.b16 %v5566
        %v5735 = vunpack.c.h.b16 %v5566
        %v5736 = vunpack.c.l.b16 %v5567
        %v5737 = vunpack.c.h.b16 %v5567
        %v5738 = vunpack.c.l.b16 %v5568
        %v5739 = vunpack.c.h.b16 %v5568
        %v5740 = vunpack.c.l.b16 %v5569
        %v5741 = vunpack.c.h.b16 %v5569
        %v5742 = vunpack.c.l.b16 %v5570
        %v5743 = vunpack.c.h.b16 %v5570
        %v5744 = vunpack.c.l.b16 %v5571
        %v5745 = vunpack.c.h.b16 %v5571
        %v5746 = vunpack.c.l.b16 %v5572
        %v5747 = vunpack.c.h.b16 %v5572
        %v5748 = vunpack.c.l.b16 %v5573
        %v5749 = vunpack.c.h.b16 %v5573
        %v5750 = vunpack.c.l.b16 %v5574
        %v5751 = vunpack.c.h.b16 %v5574
        %v5752 = vunpack.c.l.b16 %v5575
        %v5753 = vunpack.c.h.b16 %v5575
        %v5754 = vunpack.c.l.b16 %v5576
        %v5755 = vunpack.c.h.b16 %v5576
        %v5756 = vunpack.c.l.b16 %v5577
        %v5757 = vunpack.c.h.b16 %v5577
        %v5758 = vunpack.c.l.b16 %v5578
        %v5759 = vunpack.c.h.b16 %v5578
        %v5760 = vunpack.c.l.b16 %v5579
        %v5761 = vunpack.c.h.b16 %v5579
        %v5762 = vunpack.c.l.b16 %v5580
        %v5763 = vunpack.c.h.b16 %v5580
        %v5764 = vunpack.c.l.b16 %v5581
        %v5765 = vunpack.c.h.b16 %v5581
        %v5766 = vunpack.c.l.b16 %v5582
        %v5767 = vunpack.c.h.b16 %v5582
        %v5768 = vunpack.c.l.b16 %v5583
        %v5769 = vunpack.c.h.b16 %v5583
        %v5770 = vunpack.c.l.b16 %v5584
        %v5771 = vunpack.c.h.b16 %v5584
        %v5772 = vunpack.c.l.b16 %v5585
        %v5773 = vunpack.c.h.b16 %v5585
        %v5774 = vunpack.c.l.b16 %v5586
        %v5775 = vunpack.c.h.b16 %v5586
        %v5776 = vunpack.c.l.b16 %v5587
        %v5777 = vunpack.c.h.b16 %v5587
        %v5778 = vunpack.c.l.b16 %v5588
        %v5779 = vunpack.c.h.b16 %v5588
        %v5780 = vunpack.c.l.b16 %v5589
        %v5781 = vunpack.c.h.b16 %v5589
        %v5782 = vunpack.c.l.b16 %v5590
        %v5783 = vunpack.c.h.b16 %v5590
        %v5784 = vunpack.c.l.b16 %v5591
        %v5785 = vunpack.c.h.b16 %v5591
        %v5786 = vunpack.c.l.b16 %v5592
        %v5787 = vunpack.c.h.b16 %v5592
        %v5788 = vunpack.c.l.b16 %v5593
        %v5789 = vunpack.c.h.b16 %v5593
        %v5790 = vunpack.c.l.b16 %v5594
        %v5791 = vunpack.c.h.b16 %v5594
        %v5792 = vunpack.c.l.b16 %v5595
        %v5793 = vunpack.c.h.b16 %v5595
        %v5794 = vpack.c.b16 %v5668, %v5666
        %v5795 = vpack.c.b16 %v5669, %v5667
        %v5796 = vpack.c.b16 %v5672, %v5670
        %v5797 = vpack.c.b16 %v5673, %v5671
        %v5798 = vpack.c.b16 %v5676, %v5674
        %v5799 = vpack.c.b16 %v5677, %v5675
        %v5800 = vpack.c.b16 %v5680, %v5678
        %v5801 = vpack.c.b16 %v5681, %v5679
        %v5802 = vpack.c.b16 %v5684, %v5682
        %v5803 = vpack.c.b16 %v5685, %v5683
        %v5804 = vpack.c.b16 %v5688, %v5686
        %v5805 = vpack.c.b16 %v5689, %v5687
        %v5806 = vpack.c.b16 %v5692, %v5690
        %v5807 = vpack.c.b16 %v5693, %v5691
        %v5808 = vpack.c.b16 %v5696, %v5694
        %v5809 = vpack.c.b16 %v5697, %v5695
        %v5810 = vpack.c.b16 %v5700, %v5698
        %v5811 = vpack.c.b16 %v5701, %v5699
        %v5812 = vpack.c.b16 %v5704, %v5702
        %v5813 = vpack.c.b16 %v5705, %v5703
        %v5814 = vpack.c.b16 %v5708, %v5706
        %v5815 = vpack.c.b16 %v5709, %v5707
        %v5816 = vpack.c.b16 %v5712, %v5710
        %v5817 = vpack.c.b16 %v5713, %v5711
        %v5818 = vpack.c.b16 %v5716, %v5714
        %v5819 = vpack.c.b16 %v5717, %v5715
        %v5820 = vpack.c.b16 %v5720, %v5718
        %v5821 = vpack.c.b16 %v5721, %v5719
        %v5822 = vpack.c.b16 %v5724, %v5722
        %v5823 = vpack.c.b16 %v5725, %v5723
        %v5824 = vpack.c.b16 %v5728, %v5726
        %v5825 = vpack.c.b16 %v5729, %v5727
        %v5826 = vpack.c.b16 %v5732, %v5730
        %v5827 = vpack.c.b16 %v5733, %v5731
        %v5828 = vpack.c.b16 %v5736, %v5734
        %v5829 = vpack.c.b16 %v5737, %v5735
        %v5830 = vpack.c.b16 %v5740, %v5738
        %v5831 = vpack.c.b16 %v5741, %v5739
        %v5832 = vpack.c.b16 %v5744, %v5742
        %v5833 = vpack.c.b16 %v5745, %v5743
        %v5834 = vpack.c.b16 %v5748, %v5746
        %v5835 = vpack.c.b16 %v5749, %v5747
        %v5836 = vpack.c.b16 %v5752, %v5750
        %v5837 = vpack.c.b16 %v5753, %v5751
        %v5838 = vpack.c.b16 %v5756, %v5754
        %v5839 = vpack.c.b16 %v5757, %v5755
        %v5840 = vpack.c.b16 %v5760, %v5758
        %v5841 = vpack.c.b16 %v5761, %v5759
        %v5842 = vpack.c.b16 %v5764, %v5762
        %v5843 = vpack.c.b16 %v5765, %v5763
        %v5844 = vpack.c.b16 %v5768, %v5766
        %v5845 = vpack.c.b16 %v5769, %v5767
        %v5846 = vpack.c.b16 %v5772, %v5770
        %v5847 = vpack.c.b16 %v5773, %v5771
        %v5848 = vpack.c.b16 %v5776, %v5774
        %v5849 = vpack.c.b16 %v5777, %v5775
        %v5850 = vpack.c.b16 %v5780, %v5778
        %v5851 = vpack.c.b16 %v5781, %v5779
        %v5852 = vpack.c.b16 %v5784, %v5782
        %v5853 = vpack.c.b16 %v5785, %v5783
        %v5854 = vpack.c.b16 %v5788, %v5786
        %v5855 = vpack.c.b16 %v5789, %v5787
        %v5856 = vpack.c.b16 %v5792, %v5790
        %v5857 = vpack.c.b16 %v5793, %v5791
        %5922 = vmatpush.bf16.msra.mxu0 %v5808
        %5923 = vmatpush.bf16.msra.mxu0 %v5806
        %5924 = vmatpush.bf16.msra.mxu0 %v5804
        %5925 = vmatpush.bf16.msra.mxu0 %v5802
        %5926 = vmatpush.bf16.msra.mxu0 %v5800
        %5927 = vmatpush.bf16.msra.mxu0 %v5798
        %5928 = vmatpush.bf16.msra.mxu0 %v5796
        %5929 = vmatpush.bf16.msra.mxu0 %v5794
        %5930 = vmatmul.bf16.gmra.mxu0 %v5528
        %v5931 = vpop.f32.mrf.mxu0
        %v5932 = vadd.f32 %v5598, %v5931
        %v5933 = vpop.f32.mrf.mxu0
        %5934 = vdwg.mxu0
        %5935 = vmatpush.bf16.msra.mxu0 %v5824
        %5936 = vmatpush.bf16.msra.mxu0 %v5822
        %5937 = vmatpush.bf16.msra.mxu0 %v5820
        %5938 = vmatpush.bf16.msra.mxu0 %v5818
        %5939 = vmatpush.bf16.msra.mxu0 %v5816
        %5940 = vmatpush.bf16.msra.mxu0 %v5814
        %5941 = vmatpush.bf16.msra.mxu0 %v5812
        %5942 = vmatpush.bf16.msra.mxu0 %v5810
        %5943 = vmatmul.bf16.gmra.mxu0 %v5529
        %v5944 = vpop.f32.mrf.mxu0
        %v5945 = vadd.f32 %v5932, %v5944
        %v5946 = vpop.f32.mrf.mxu0
        %5947 = vdwg.mxu0
        %5948 = vmatpush.bf16.msra.mxu0 %v5840
        %5949 = vmatpush.bf16.msra.mxu0 %v5838
        %5950 = vmatpush.bf16.msra.mxu0 %v5836
        %5951 = vmatpush.bf16.msra.mxu0 %v5834
        %5952 = vmatpush.bf16.msra.mxu0 %v5832
        %5953 = vmatpush.bf16.msra.mxu0 %v5830
        %5954 = vmatpush.bf16.msra.mxu0 %v5828
        %5955 = vmatpush.bf16.msra.mxu0 %v5826
        %5956 = vmatmul.bf16.gmra.mxu0 %v5530
        %v5957 = vpop.f32.mrf.mxu0
        %v5958 = vadd.f32 %v5945, %v5957
        %v5959 = vpop.f32.mrf.mxu0
        %5960 = vdwg.mxu0
        %5961 = vmatpush.bf16.msra.mxu0 %v5856
        %5962 = vmatpush.bf16.msra.mxu0 %v5854
        %5963 = vmatpush.bf16.msra.mxu0 %v5852
        %5964 = vmatpush.bf16.msra.mxu0 %v5850
        %5965 = vmatpush.bf16.msra.mxu0 %v5848
        %5966 = vmatpush.bf16.msra.mxu0 %v5846
        %5967 = vmatpush.bf16.msra.mxu0 %v5844
        %5968 = vmatpush.bf16.msra.mxu0 %v5842
        %5969 = vmatmul.bf16.gmra.mxu0 %v5531
        %v5970 = vpop.f32.mrf.mxu0
        %v5971 = vadd.f32 %v5958, %v5970
        %v5972 = vpop.f32.mrf.mxu0
        %5973 = vdwg.mxu0
        %5974 = vmatpush.bf16.msra.mxu0 %v5809
        %5975 = vmatpush.bf16.msra.mxu0 %v5807
        %5976 = vmatpush.bf16.msra.mxu0 %v5805
        %5977 = vmatpush.bf16.msra.mxu0 %v5803
        %5978 = vmatpush.bf16.msra.mxu0 %v5801
        %5979 = vmatpush.bf16.msra.mxu0 %v5799
        %5980 = vmatpush.bf16.msra.mxu0 %v5797
        %5981 = vmatpush.bf16.msra.mxu0 %v5795
        %5982 = vmatmul.bf16.gmra.mxu0 %v5528
        %v5983 = vpop.f32.mrf.mxu0
        %v5984 = vadd.f32 %v5599, %v5983
        %v5985 = vpop.f32.mrf.mxu0
        %5986 = vdwg.mxu0
        %5987 = vmatpush.bf16.msra.mxu0 %v5825
        %5988 = vmatpush.bf16.msra.mxu0 %v5823
        %5989 = vmatpush.bf16.msra.mxu0 %v5821
        %5990 = vmatpush.bf16.msra.mxu0 %v5819
        %5991 = vmatpush.bf16.msra.mxu0 %v5817
        %5992 = vmatpush.bf16.msra.mxu0 %v5815
        %5993 = vmatpush.bf16.msra.mxu0 %v5813
        %5994 = vmatpush.bf16.msra.mxu0 %v5811
        %5995 = vmatmul.bf16.gmra.mxu0 %v5529
        %v5996 = vpop.f32.mrf.mxu0
        %v5997 = vadd.f32 %v5984, %v5996
        %v5998 = vpop.f32.mrf.mxu0
        %5999 = vdwg.mxu0
        %6000 = vmatpush.bf16.msra.mxu0 %v5841
        %6001 = vmatpush.bf16.msra.mxu0 %v5839
        %6002 = vmatpush.bf16.msra.mxu0 %v5837
        %6003 = vmatpush.bf16.msra.mxu0 %v5835
        %6004 = vmatpush.bf16.msra.mxu0 %v5833
        %6005 = vmatpush.bf16.msra.mxu0 %v5831
        %6006 = vmatpush.bf16.msra.mxu0 %v5829
        %6007 = vmatpush.bf16.msra.mxu0 %v5827
        %6008 = vmatmul.bf16.gmra.mxu0 %v5530
        %v6009 = vpop.f32.mrf.mxu0
        %v6010 = vadd.f32 %v5997, %v6009
        %v6011 = vpop.f32.mrf.mxu0
        %6012 = vdwg.mxu0
        %6013 = vmatpush.bf16.msra.mxu0 %v5857
        %6014 = vmatpush.bf16.msra.mxu0 %v5855
        %6015 = vmatpush.bf16.msra.mxu0 %v5853
        %6016 = vmatpush.bf16.msra.mxu0 %v5851
        %6017 = vmatpush.bf16.msra.mxu0 %v5849
        %6018 = vmatpush.bf16.msra.mxu0 %v5847
        %6019 = vmatpush.bf16.msra.mxu0 %v5845
        %6020 = vmatpush.bf16.msra.mxu0 %v5843
        %6021 = vmatmul.bf16.gmra.mxu0 %v5531
        %v6022 = vpop.f32.mrf.mxu0
        %v6023 = vadd.f32 %v6010, %v6022
        %v6024 = vpop.f32.mrf.mxu0
        %6025 = vdwg.mxu0
        %v6026 = vmax.f32 %v5971, 0.0
        %v6027 = vmax.f32 %v6023, 0.0
        %v6028 = vld [vmem:[%s1863] sm:$0xff]
        %v6029 = vld [vmem:[%s1863 + $0x8] sm:$0xff]
        %v6030 = vld [vmem:[%s1863 + $0x10] sm:$0xff]
        %v6031 = vld [vmem:[%s1863 + $0x18] sm:$0xff]
        %v6032 = vld [vmem:[%s1863 + $0x20] sm:$0xff]
        %v6033 = vld [vmem:[%s1863 + $0x28] sm:$0xff]
        %v6034 = vld [vmem:[%s1863 + $0x30] sm:$0xff]
        %v6035 = vld [vmem:[%s1863 + $0x38] sm:$0xff]
        %v6036 = vld [vmem:[%s1863 + $0x40] sm:$0xff]
        %v6037 = vld [vmem:[%s1863 + $0x48] sm:$0xff]
        %v6038 = vld [vmem:[%s1863 + $0x50] sm:$0xff]
        %v6039 = vld [vmem:[%s1863 + $0x58] sm:$0xff]
        %v6040 = vld [vmem:[%s1863 + $0x60] sm:$0xff]
        %v6041 = vld [vmem:[%s1863 + $0x68] sm:$0xff]
        %v6042 = vld [vmem:[%s1863 + $0x70] sm:$0xff]
        %v6043 = vld [vmem:[%s1863 + $0x78] sm:$0xff]
        %v6044 = vld [vmem:[%s1863 + $0x80] sm:$0xff]
        %v6045 = vld [vmem:[%s1863 + $0x88] sm:$0xff]
        %v6046 = vld [vmem:[%s1863 + $0x90] sm:$0xff]
        %v6047 = vld [vmem:[%s1863 + $0x98] sm:$0xff]
        %v6048 = vld [vmem:[%s1863 + $0xa0] sm:$0xff]
        %v6049 = vld [vmem:[%s1863 + $0xa8] sm:$0xff]
        %v6050 = vld [vmem:[%s1863 + $0xb0] sm:$0xff]
        %v6051 = vld [vmem:[%s1863 + $0xb8] sm:$0xff]
        %v6052 = vld [vmem:[%s1863 + $0xc0] sm:$0xff]
        %v6053 = vld [vmem:[%s1863 + $0xc8] sm:$0xff]
        %v6054 = vld [vmem:[%s1863 + $0xd0] sm:$0xff]
        %v6055 = vld [vmem:[%s1863 + $0xd8] sm:$0xff]
        %v6056 = vld [vmem:[%s1863 + $0xe0] sm:$0xff]
        %v6057 = vld [vmem:[%s1863 + $0xe8] sm:$0xff]
        %v6058 = vld [vmem:[%s1863 + $0xf0] sm:$0xff]
        %v6059 = vld [vmem:[%s1863 + $0xf8] sm:$0xff]
        %v6060 = vld [vmem:[%s1863 + $0x100] sm:$0xff]
        %v6061 = vld [vmem:[%s1863 + $0x108] sm:$0xff]
        %v6062 = vld [vmem:[%s1863 + $0x110] sm:$0xff]
        %v6063 = vld [vmem:[%s1863 + $0x118] sm:$0xff]
        %v6064 = vld [vmem:[%s1863 + $0x120] sm:$0xff]
        %v6065 = vld [vmem:[%s1863 + $0x128] sm:$0xff]
        %v6066 = vld [vmem:[%s1863 + $0x130] sm:$0xff]
        %v6067 = vld [vmem:[%s1863 + $0x138] sm:$0xff]
        %v6068 = vld [vmem:[%s1863 + $0x140] sm:$0xff]
        %v6069 = vld [vmem:[%s1863 + $0x148] sm:$0xff]
        %v6070 = vld [vmem:[%s1863 + $0x150] sm:$0xff]
        %v6071 = vld [vmem:[%s1863 + $0x158] sm:$0xff]
        %v6072 = vld [vmem:[%s1863 + $0x160] sm:$0xff]
        %v6073 = vld [vmem:[%s1863 + $0x168] sm:$0xff]
        %v6074 = vld [vmem:[%s1863 + $0x170] sm:$0xff]
        %v6075 = vld [vmem:[%s1863 + $0x178] sm:$0xff]
        %v6076 = vld [vmem:[%s1863 + $0x180] sm:$0xff]
        %v6077 = vld [vmem:[%s1863 + $0x188] sm:$0xff]
        %v6078 = vld [vmem:[%s1863 + $0x190] sm:$0xff]
        %v6079 = vld [vmem:[%s1863 + $0x198] sm:$0xff]
        %v6080 = vld [vmem:[%s1863 + $0x1a0] sm:$0xff]
        %v6081 = vld [vmem:[%s1863 + $0x1a8] sm:$0xff]
        %v6082 = vld [vmem:[%s1863 + $0x1b0] sm:$0xff]
        %v6083 = vld [vmem:[%s1863 + $0x1b8] sm:$0xff]
        %v6084 = vld [vmem:[%s1863 + $0x1c0] sm:$0xff]
        %v6085 = vld [vmem:[%s1863 + $0x1c8] sm:$0xff]
        %v6086 = vld [vmem:[%s1863 + $0x1d0] sm:$0xff]
        %v6087 = vld [vmem:[%s1863 + $0x1d8] sm:$0xff]
        %v6088 = vld [vmem:[%s1863 + $0x1e0] sm:$0xff]
        %v6089 = vld [vmem:[%s1863 + $0x1e8] sm:$0xff]
        %v6090 = vld [vmem:[%s1863 + $0x1f0] sm:$0xff]
        %v6091 = vld [vmem:[%s1863 + $0x1f8] sm:$0xff]
        %v6092 = vld [vmem:[%s1873] sm:$0xff]
        %v6093 = vld [vmem:[%s1873 + $0x8] sm:$0xff]
        %v6094 = vld [vmem:[%s1873 + $0x10] sm:$0xff]
        %v6095 = vld [vmem:[%s1873 + $0x18] sm:$0xff]
        %v6096 = vld [vmem:[%s1873 + $0x20] sm:$0xff]
        %v6097 = vld [vmem:[%s1873 + $0x28] sm:$0xff]
        %v6098 = vld [vmem:[%s1873 + $0x30] sm:$0xff]
        %v6099 = vld [vmem:[%s1873 + $0x38] sm:$0xff]
        %v6100 = vld [vmem:[%s1873 + $0x40] sm:$0xff]
        %v6101 = vld [vmem:[%s1873 + $0x48] sm:$0xff]
        %v6102 = vld [vmem:[%s1873 + $0x50] sm:$0xff]
        %v6103 = vld [vmem:[%s1873 + $0x58] sm:$0xff]
        %v6104 = vld [vmem:[%s1873 + $0x60] sm:$0xff]
        %v6105 = vld [vmem:[%s1873 + $0x68] sm:$0xff]
        %v6106 = vld [vmem:[%s1873 + $0x70] sm:$0xff]
        %v6107 = vld [vmem:[%s1873 + $0x78] sm:$0xff]
        %v6108 = vld [vmem:[%s1873 + $0x80] sm:$0xff]
        %v6109 = vld [vmem:[%s1873 + $0x88] sm:$0xff]
        %v6110 = vld [vmem:[%s1873 + $0x90] sm:$0xff]
        %v6111 = vld [vmem:[%s1873 + $0x98] sm:$0xff]
        %v6112 = vld [vmem:[%s1873 + $0xa0] sm:$0xff]
        %v6113 = vld [vmem:[%s1873 + $0xa8] sm:$0xff]
        %v6114 = vld [vmem:[%s1873 + $0xb0] sm:$0xff]
        %v6115 = vld [vmem:[%s1873 + $0xb8] sm:$0xff]
        %v6116 = vld [vmem:[%s1873 + $0xc0] sm:$0xff]
        %v6117 = vld [vmem:[%s1873 + $0xc8] sm:$0xff]
        %v6118 = vld [vmem:[%s1873 + $0xd0] sm:$0xff]
        %v6119 = vld [vmem:[%s1873 + $0xd8] sm:$0xff]
        %v6120 = vld [vmem:[%s1873 + $0xe0] sm:$0xff]
        %v6121 = vld [vmem:[%s1873 + $0xe8] sm:$0xff]
        %v6122 = vld [vmem:[%s1873 + $0xf0] sm:$0xff]
        %v6123 = vld [vmem:[%s1873 + $0xf8] sm:$0xff]
        %v6124 = vld [vmem:[%s1873 + $0x100] sm:$0xff]
        %v6125 = vld [vmem:[%s1873 + $0x108] sm:$0xff]
        %v6126 = vld [vmem:[%s1873 + $0x110] sm:$0xff]
        %v6127 = vld [vmem:[%s1873 + $0x118] sm:$0xff]
        %v6128 = vld [vmem:[%s1873 + $0x120] sm:$0xff]
        %v6129 = vld [vmem:[%s1873 + $0x128] sm:$0xff]
        %v6130 = vld [vmem:[%s1873 + $0x130] sm:$0xff]
        %v6131 = vld [vmem:[%s1873 + $0x138] sm:$0xff]
        %v6132 = vld [vmem:[%s1873 + $0x140] sm:$0xff]
        %v6133 = vld [vmem:[%s1873 + $0x148] sm:$0xff]
        %v6134 = vld [vmem:[%s1873 + $0x150] sm:$0xff]
        %v6135 = vld [vmem:[%s1873 + $0x158] sm:$0xff]
        %v6136 = vld [vmem:[%s1873 + $0x160] sm:$0xff]
        %v6137 = vld [vmem:[%s1873 + $0x168] sm:$0xff]
        %v6138 = vld [vmem:[%s1873 + $0x170] sm:$0xff]
        %v6139 = vld [vmem:[%s1873 + $0x178] sm:$0xff]
        %v6140 = vld [vmem:[%s1873 + $0x180] sm:$0xff]
        %v6141 = vld [vmem:[%s1873 + $0x188] sm:$0xff]
        %v6142 = vld [vmem:[%s1873 + $0x190] sm:$0xff]
        %v6143 = vld [vmem:[%s1873 + $0x198] sm:$0xff]
        %v6144 = vld [vmem:[%s1873 + $0x1a0] sm:$0xff]
        %v6145 = vld [vmem:[%s1873 + $0x1a8] sm:$0xff]
        %v6146 = vld [vmem:[%s1873 + $0x1b0] sm:$0xff]
        %v6147 = vld [vmem:[%s1873 + $0x1b8] sm:$0xff]
        %v6148 = vld [vmem:[%s1873 + $0x1c0] sm:$0xff]
        %v6149 = vld [vmem:[%s1873 + $0x1c8] sm:$0xff]
        %v6150 = vld [vmem:[%s1873 + $0x1d0] sm:$0xff]
        %v6151 = vld [vmem:[%s1873 + $0x1d8] sm:$0xff]
        %v6152 = vld [vmem:[%s1873 + $0x1e0] sm:$0xff]
        %v6153 = vld [vmem:[%s1873 + $0x1e8] sm:$0xff]
        %v6154 = vld [vmem:[%s1873 + $0x1f0] sm:$0xff]
        %v6155 = vld [vmem:[%s1873 + $0x1f8] sm:$0xff]
        %v6156 = vld [vmem:[%s2102] sm:$0xf]
        %v6157 = vld [vmem:[%s1883] sm:$0xff]
        %v6158 = vld [vmem:[%s1883 + $0x8] sm:$0xff]
        %v6159 = vld [vmem:[%s1883 + $0x10] sm:$0xff]
        %v6160 = vld [vmem:[%s1883 + $0x18] sm:$0xff]
        %v6161 = vld [vmem:[%s1883 + $0x20] sm:$0xff]
        %v6162 = vld [vmem:[%s1883 + $0x28] sm:$0xff]
        %v6163 = vld [vmem:[%s1883 + $0x30] sm:$0xff]
        %v6164 = vld [vmem:[%s1883 + $0x38] sm:$0xff]
        %v6165 = vld [vmem:[%s1883 + $0x40] sm:$0xff]
        %v6166 = vld [vmem:[%s1883 + $0x48] sm:$0xff]
        %v6167 = vld [vmem:[%s1883 + $0x50] sm:$0xff]
        %v6168 = vld [vmem:[%s1883 + $0x58] sm:$0xff]
        %v6169 = vld [vmem:[%s1883 + $0x60] sm:$0xff]
        %v6170 = vld [vmem:[%s1883 + $0x68] sm:$0xff]
        %v6171 = vld [vmem:[%s1883 + $0x70] sm:$0xff]
        %v6172 = vld [vmem:[%s1883 + $0x78] sm:$0xff]
        %v6173 = vld [vmem:[%s1883 + $0x80] sm:$0xff]
        %v6174 = vld [vmem:[%s1883 + $0x88] sm:$0xff]
        %v6175 = vld [vmem:[%s1883 + $0x90] sm:$0xff]
        %v6176 = vld [vmem:[%s1883 + $0x98] sm:$0xff]
        %v6177 = vld [vmem:[%s1883 + $0xa0] sm:$0xff]
        %v6178 = vld [vmem:[%s1883 + $0xa8] sm:$0xff]
        %v6179 = vld [vmem:[%s1883 + $0xb0] sm:$0xff]
        %v6180 = vld [vmem:[%s1883 + $0xb8] sm:$0xff]
        %v6181 = vld [vmem:[%s1883 + $0xc0] sm:$0xff]
        %v6182 = vld [vmem:[%s1883 + $0xc8] sm:$0xff]
        %v6183 = vld [vmem:[%s1883 + $0xd0] sm:$0xff]
        %v6184 = vld [vmem:[%s1883 + $0xd8] sm:$0xff]
        %v6185 = vld [vmem:[%s1883 + $0xe0] sm:$0xff]
        %v6186 = vld [vmem:[%s1883 + $0xe8] sm:$0xff]
        %v6187 = vld [vmem:[%s1883 + $0xf0] sm:$0xff]
        %v6188 = vld [vmem:[%s1883 + $0xf8] sm:$0xff]
        %v6189 = vld [vmem:[%s1893] sm:$0xff]
        %v6190 = vld [vmem:[%s1893 + $0x8] sm:$0xff]
        %v6191 = vld [vmem:[%s1893 + $0x10] sm:$0xff]
        %v6192 = vld [vmem:[%s1893 + $0x18] sm:$0xff]
        %v6193 = vld [vmem:[%s1893 + $0x20] sm:$0xff]
        %v6194 = vld [vmem:[%s1893 + $0x28] sm:$0xff]
        %v6195 = vld [vmem:[%s1893 + $0x30] sm:$0xff]
        %v6196 = vld [vmem:[%s1893 + $0x38] sm:$0xff]
        %v6197 = vld [vmem:[%s1893 + $0x40] sm:$0xff]
        %v6198 = vld [vmem:[%s1893 + $0x48] sm:$0xff]
        %v6199 = vld [vmem:[%s1893 + $0x50] sm:$0xff]
        %v6200 = vld [vmem:[%s1893 + $0x58] sm:$0xff]
        %v6201 = vld [vmem:[%s1893 + $0x60] sm:$0xff]
        %v6202 = vld [vmem:[%s1893 + $0x68] sm:$0xff]
        %v6203 = vld [vmem:[%s1893 + $0x70] sm:$0xff]
        %v6204 = vld [vmem:[%s1893 + $0x78] sm:$0xff]
        %v6205 = vld [vmem:[%s1893 + $0x80] sm:$0xff]
        %v6206 = vld [vmem:[%s1893 + $0x88] sm:$0xff]
        %v6207 = vld [vmem:[%s1893 + $0x90] sm:$0xff]
        %v6208 = vld [vmem:[%s1893 + $0x98] sm:$0xff]
        %v6209 = vld [vmem:[%s1893 + $0xa0] sm:$0xff]
        %v6210 = vld [vmem:[%s1893 + $0xa8] sm:$0xff]
        %v6211 = vld [vmem:[%s1893 + $0xb0] sm:$0xff]
        %v6212 = vld [vmem:[%s1893 + $0xb8] sm:$0xff]
        %v6213 = vld [vmem:[%s1893 + $0xc0] sm:$0xff]
        %v6214 = vld [vmem:[%s1893 + $0xc8] sm:$0xff]
        %v6215 = vld [vmem:[%s1893 + $0xd0] sm:$0xff]
        %v6216 = vld [vmem:[%s1893 + $0xd8] sm:$0xff]
        %v6217 = vld [vmem:[%s1893 + $0xe0] sm:$0xff]
        %v6218 = vld [vmem:[%s1893 + $0xe8] sm:$0xff]
        %v6219 = vld [vmem:[%s1893 + $0xf0] sm:$0xff]
        %v6220 = vld [vmem:[%s1893 + $0xf8] sm:$0xff]
        %v6221 = vld [vmem:[%s2106] sm:$0x3]
        %v6222 = vpack.c.bf16 %v6026, %v6026
        %v6223 = vpack.c.bf16 %v6027, %v6027
        %v6224 = vpack.c.bf16 %v4950, %v4950
        %v6225 = vpack.c.bf16 %v4951, %v4951
        %v6290 = vunpack.c.l.b16 %v6092
        %v6291 = vunpack.c.h.b16 %v6092
        %v6292 = vunpack.c.l.b16 %v6093
        %v6293 = vunpack.c.h.b16 %v6093
        %v6294 = vunpack.c.l.b16 %v6094
        %v6295 = vunpack.c.h.b16 %v6094
        %v6296 = vunpack.c.l.b16 %v6095
        %v6297 = vunpack.c.h.b16 %v6095
        %v6298 = vunpack.c.l.b16 %v6096
        %v6299 = vunpack.c.h.b16 %v6096
        %v6300 = vunpack.c.l.b16 %v6097
        %v6301 = vunpack.c.h.b16 %v6097
        %v6302 = vunpack.c.l.b16 %v6098
        %v6303 = vunpack.c.h.b16 %v6098
        %v6304 = vunpack.c.l.b16 %v6099
        %v6305 = vunpack.c.h.b16 %v6099
        %v6306 = vunpack.c.l.b16 %v6100
        %v6307 = vunpack.c.h.b16 %v6100
        %v6308 = vunpack.c.l.b16 %v6101
        %v6309 = vunpack.c.h.b16 %v6101
        %v6310 = vunpack.c.l.b16 %v6102
        %v6311 = vunpack.c.h.b16 %v6102
        %v6312 = vunpack.c.l.b16 %v6103
        %v6313 = vunpack.c.h.b16 %v6103
        %v6314 = vunpack.c.l.b16 %v6104
        %v6315 = vunpack.c.h.b16 %v6104
        %v6316 = vunpack.c.l.b16 %v6105
        %v6317 = vunpack.c.h.b16 %v6105
        %v6318 = vunpack.c.l.b16 %v6106
        %v6319 = vunpack.c.h.b16 %v6106
        %v6320 = vunpack.c.l.b16 %v6107
        %v6321 = vunpack.c.h.b16 %v6107
        %v6322 = vunpack.c.l.b16 %v6108
        %v6323 = vunpack.c.h.b16 %v6108
        %v6324 = vunpack.c.l.b16 %v6109
        %v6325 = vunpack.c.h.b16 %v6109
        %v6326 = vunpack.c.l.b16 %v6110
        %v6327 = vunpack.c.h.b16 %v6110
        %v6328 = vunpack.c.l.b16 %v6111
        %v6329 = vunpack.c.h.b16 %v6111
        %v6330 = vunpack.c.l.b16 %v6112
        %v6331 = vunpack.c.h.b16 %v6112
        %v6332 = vunpack.c.l.b16 %v6113
        %v6333 = vunpack.c.h.b16 %v6113
        %v6334 = vunpack.c.l.b16 %v6114
        %v6335 = vunpack.c.h.b16 %v6114
        %v6336 = vunpack.c.l.b16 %v6115
        %v6337 = vunpack.c.h.b16 %v6115
        %v6338 = vunpack.c.l.b16 %v6116
        %v6339 = vunpack.c.h.b16 %v6116
        %v6340 = vunpack.c.l.b16 %v6117
        %v6341 = vunpack.c.h.b16 %v6117
        %v6342 = vunpack.c.l.b16 %v6118
        %v6343 = vunpack.c.h.b16 %v6118
        %v6344 = vunpack.c.l.b16 %v6119
        %v6345 = vunpack.c.h.b16 %v6119
        %v6346 = vunpack.c.l.b16 %v6120
        %v6347 = vunpack.c.h.b16 %v6120
        %v6348 = vunpack.c.l.b16 %v6121
        %v6349 = vunpack.c.h.b16 %v6121
        %v6350 = vunpack.c.l.b16 %v6122
        %v6351 = vunpack.c.h.b16 %v6122
        %v6352 = vunpack.c.l.b16 %v6123
        %v6353 = vunpack.c.h.b16 %v6123
        %v6354 = vunpack.c.l.b16 %v6124
        %v6355 = vunpack.c.h.b16 %v6124
        %v6356 = vunpack.c.l.b16 %v6125
        %v6357 = vunpack.c.h.b16 %v6125
        %v6358 = vunpack.c.l.b16 %v6126
        %v6359 = vunpack.c.h.b16 %v6126
        %v6360 = vunpack.c.l.b16 %v6127
        %v6361 = vunpack.c.h.b16 %v6127
        %v6362 = vunpack.c.l.b16 %v6128
        %v6363 = vunpack.c.h.b16 %v6128
        %v6364 = vunpack.c.l.b16 %v6129
        %v6365 = vunpack.c.h.b16 %v6129
        %v6366 = vunpack.c.l.b16 %v6130
        %v6367 = vunpack.c.h.b16 %v6130
        %v6368 = vunpack.c.l.b16 %v6131
        %v6369 = vunpack.c.h.b16 %v6131
        %v6370 = vunpack.c.l.b16 %v6132
        %v6371 = vunpack.c.h.b16 %v6132
        %v6372 = vunpack.c.l.b16 %v6133
        %v6373 = vunpack.c.h.b16 %v6133
        %v6374 = vunpack.c.l.b16 %v6134
        %v6375 = vunpack.c.h.b16 %v6134
        %v6376 = vunpack.c.l.b16 %v6135
        %v6377 = vunpack.c.h.b16 %v6135
        %v6378 = vunpack.c.l.b16 %v6136
        %v6379 = vunpack.c.h.b16 %v6136
        %v6380 = vunpack.c.l.b16 %v6137
        %v6381 = vunpack.c.h.b16 %v6137
        %v6382 = vunpack.c.l.b16 %v6138
        %v6383 = vunpack.c.h.b16 %v6138
        %v6384 = vunpack.c.l.b16 %v6139
        %v6385 = vunpack.c.h.b16 %v6139
        %v6386 = vunpack.c.l.b16 %v6140
        %v6387 = vunpack.c.h.b16 %v6140
        %v6388 = vunpack.c.l.b16 %v6141
        %v6389 = vunpack.c.h.b16 %v6141
        %v6390 = vunpack.c.l.b16 %v6142
        %v6391 = vunpack.c.h.b16 %v6142
        %v6392 = vunpack.c.l.b16 %v6143
        %v6393 = vunpack.c.h.b16 %v6143
        %v6394 = vunpack.c.l.b16 %v6144
        %v6395 = vunpack.c.h.b16 %v6144
        %v6396 = vunpack.c.l.b16 %v6145
        %v6397 = vunpack.c.h.b16 %v6145
        %v6398 = vunpack.c.l.b16 %v6146
        %v6399 = vunpack.c.h.b16 %v6146
        %v6400 = vunpack.c.l.b16 %v6147
        %v6401 = vunpack.c.h.b16 %v6147
        %v6402 = vunpack.c.l.b16 %v6148
        %v6403 = vunpack.c.h.b16 %v6148
        %v6404 = vunpack.c.l.b16 %v6149
        %v6405 = vunpack.c.h.b16 %v6149
        %v6406 = vunpack.c.l.b16 %v6150
        %v6407 = vunpack.c.h.b16 %v6150
        %v6408 = vunpack.c.l.b16 %v6151
        %v6409 = vunpack.c.h.b16 %v6151
        %v6410 = vunpack.c.l.b16 %v6152
        %v6411 = vunpack.c.h.b16 %v6152
        %v6412 = vunpack.c.l.b16 %v6153
        %v6413 = vunpack.c.h.b16 %v6153
        %v6414 = vunpack.c.l.b16 %v6154
        %v6415 = vunpack.c.h.b16 %v6154
        %v6416 = vunpack.c.l.b16 %v6155
        %v6417 = vunpack.c.h.b16 %v6155
        %v6418 = vpack.c.b16 %v6294, %v6290
        %v6419 = vpack.c.b16 %v6295, %v6291
        %v6420 = vpack.c.b16 %v6296, %v6292
        %v6421 = vpack.c.b16 %v6297, %v6293
        %v6422 = vpack.c.b16 %v6302, %v6298
        %v6423 = vpack.c.b16 %v6303, %v6299
        %v6424 = vpack.c.b16 %v6304, %v6300
        %v6425 = vpack.c.b16 %v6305, %v6301
        %v6426 = vpack.c.b16 %v6310, %v6306
        %v6427 = vpack.c.b16 %v6311, %v6307
        %v6428 = vpack.c.b16 %v6312, %v6308
        %v6429 = vpack.c.b16 %v6313, %v6309
        %v6430 = vpack.c.b16 %v6318, %v6314
        %v6431 = vpack.c.b16 %v6319, %v6315
        %v6432 = vpack.c.b16 %v6320, %v6316
        %v6433 = vpack.c.b16 %v6321, %v6317
        %v6434 = vpack.c.b16 %v6326, %v6322
        %v6435 = vpack.c.b16 %v6327, %v6323
        %v6436 = vpack.c.b16 %v6328, %v6324
        %v6437 = vpack.c.b16 %v6329, %v6325
        %v6438 = vpack.c.b16 %v6334, %v6330
        %v6439 = vpack.c.b16 %v6335, %v6331
        %v6440 = vpack.c.b16 %v6336, %v6332
        %v6441 = vpack.c.b16 %v6337, %v6333
        %v6442 = vpack.c.b16 %v6342, %v6338
        %v6443 = vpack.c.b16 %v6343, %v6339
        %v6444 = vpack.c.b16 %v6344, %v6340
        %v6445 = vpack.c.b16 %v6345, %v6341
        %v6446 = vpack.c.b16 %v6350, %v6346
        %v6447 = vpack.c.b16 %v6351, %v6347
        %v6448 = vpack.c.b16 %v6352, %v6348
        %v6449 = vpack.c.b16 %v6353, %v6349
        %v6450 = vpack.c.b16 %v6358, %v6354
        %v6451 = vpack.c.b16 %v6359, %v6355
        %v6452 = vpack.c.b16 %v6360, %v6356
        %v6453 = vpack.c.b16 %v6361, %v6357
        %v6454 = vpack.c.b16 %v6366, %v6362
        %v6455 = vpack.c.b16 %v6367, %v6363
        %v6456 = vpack.c.b16 %v6368, %v6364
        %v6457 = vpack.c.b16 %v6369, %v6365
        %v6458 = vpack.c.b16 %v6374, %v6370
        %v6459 = vpack.c.b16 %v6375, %v6371
        %v6460 = vpack.c.b16 %v6376, %v6372
        %v6461 = vpack.c.b16 %v6377, %v6373
        %v6462 = vpack.c.b16 %v6382, %v6378
        %v6463 = vpack.c.b16 %v6383, %v6379
        %v6464 = vpack.c.b16 %v6384, %v6380
        %v6465 = vpack.c.b16 %v6385, %v6381
        %v6466 = vpack.c.b16 %v6390, %v6386
        %v6467 = vpack.c.b16 %v6391, %v6387
        %v6468 = vpack.c.b16 %v6392, %v6388
        %v6469 = vpack.c.b16 %v6393, %v6389
        %v6470 = vpack.c.b16 %v6398, %v6394
        %v6471 = vpack.c.b16 %v6399, %v6395
        %v6472 = vpack.c.b16 %v6400, %v6396
        %v6473 = vpack.c.b16 %v6401, %v6397
        %v6474 = vpack.c.b16 %v6406, %v6402
        %v6475 = vpack.c.b16 %v6407, %v6403
        %v6476 = vpack.c.b16 %v6408, %v6404
        %v6477 = vpack.c.b16 %v6409, %v6405
        %v6478 = vpack.c.b16 %v6414, %v6410
        %v6479 = vpack.c.b16 %v6415, %v6411
        %v6480 = vpack.c.b16 %v6416, %v6412
        %v6481 = vpack.c.b16 %v6417, %v6413
        %6546 = vmatpush.bf16.msra.mxu0 %v6446
        %6547 = vmatpush.bf16.msra.mxu0 %v6442
        %6548 = vmatpush.bf16.msra.mxu0 %v6438
        %6549 = vmatpush.bf16.msra.mxu0 %v6434
        %6550 = vmatpush.bf16.msra.mxu0 %v6430
        %6551 = vmatpush.bf16.msra.mxu0 %v6426
        %6552 = vmatpush.bf16.msra.mxu0 %v6422
        %6553 = vmatpush.bf16.msra.mxu0 %v6418
        %6554 = vmatmul.bf16.gmra.mxu0 %v6224
        %v6555 = vpop.f32.mrf.mxu0
        %v6556 = vadd.f32 0.0, %v6555
        %v6557 = vpop.f32.mrf.mxu0
        %6558 = vdwg.mxu0
        %6559 = vmatpush.bf16.msra.mxu0 %v6478
        %6560 = vmatpush.bf16.msra.mxu0 %v6474
        %6561 = vmatpush.bf16.msra.mxu0 %v6470
        %6562 = vmatpush.bf16.msra.mxu0 %v6466
        %6563 = vmatpush.bf16.msra.mxu0 %v6462
        %6564 = vmatpush.bf16.msra.mxu0 %v6458
        %6565 = vmatpush.bf16.msra.mxu0 %v6454
        %6566 = vmatpush.bf16.msra.mxu0 %v6450
        %6567 = vmatmul.bf16.gmra.mxu0 %v6225
        %v6568 = vpop.f32.mrf.mxu0
        %v6569 = vadd.f32 %v6556, %v6568
        %v6570 = vpop.f32.mrf.mxu0
        %6571 = vdwg.mxu0
        %6572 = vmatpush.bf16.msra.mxu0 %v6447
        %6573 = vmatpush.bf16.msra.mxu0 %v6443
        %6574 = vmatpush.bf16.msra.mxu0 %v6439
        %6575 = vmatpush.bf16.msra.mxu0 %v6435
        %6576 = vmatpush.bf16.msra.mxu0 %v6431
        %6577 = vmatpush.bf16.msra.mxu0 %v6427
        %6578 = vmatpush.bf16.msra.mxu0 %v6423
        %6579 = vmatpush.bf16.msra.mxu0 %v6419
        %6580 = vmatmul.bf16.gmra.mxu0 %v6224
        %v6581 = vpop.f32.mrf.mxu0
        %v6582 = vadd.f32 0.0, %v6581
        %v6583 = vpop.f32.mrf.mxu0
        %6584 = vdwg.mxu0
        %6585 = vmatpush.bf16.msra.mxu0 %v6479
        %6586 = vmatpush.bf16.msra.mxu0 %v6475
        %6587 = vmatpush.bf16.msra.mxu0 %v6471
        %6588 = vmatpush.bf16.msra.mxu0 %v6467
        %6589 = vmatpush.bf16.msra.mxu0 %v6463
        %6590 = vmatpush.bf16.msra.mxu0 %v6459
        %6591 = vmatpush.bf16.msra.mxu0 %v6455
        %6592 = vmatpush.bf16.msra.mxu0 %v6451
        %6593 = vmatmul.bf16.gmra.mxu0 %v6225
        %v6594 = vpop.f32.mrf.mxu0
        %v6595 = vadd.f32 %v6582, %v6594
        %v6596 = vpop.f32.mrf.mxu0
        %6597 = vdwg.mxu0
        %6598 = vmatpush.bf16.msra.mxu0 %v6448
        %6599 = vmatpush.bf16.msra.mxu0 %v6444
        %6600 = vmatpush.bf16.msra.mxu0 %v6440
        %6601 = vmatpush.bf16.msra.mxu0 %v6436
        %6602 = vmatpush.bf16.msra.mxu0 %v6432
        %6603 = vmatpush.bf16.msra.mxu0 %v6428
        %6604 = vmatpush.bf16.msra.mxu0 %v6424
        %6605 = vmatpush.bf16.msra.mxu0 %v6420
        %6606 = vmatmul.bf16.gmra.mxu0 %v6224
        %v6607 = vpop.f32.mrf.mxu0
        %v6608 = vadd.f32 0.0, %v6607
        %v6609 = vpop.f32.mrf.mxu0
        %6610 = vdwg.mxu0
        %6611 = vmatpush.bf16.msra.mxu0 %v6480
        %6612 = vmatpush.bf16.msra.mxu0 %v6476
        %6613 = vmatpush.bf16.msra.mxu0 %v6472
        %6614 = vmatpush.bf16.msra.mxu0 %v6468
        %6615 = vmatpush.bf16.msra.mxu0 %v6464
        %6616 = vmatpush.bf16.msra.mxu0 %v6460
        %6617 = vmatpush.bf16.msra.mxu0 %v6456
        %6618 = vmatpush.bf16.msra.mxu0 %v6452
        %6619 = vmatmul.bf16.gmra.mxu0 %v6225
        %v6620 = vpop.f32.mrf.mxu0
        %v6621 = vadd.f32 %v6608, %v6620
        %v6622 = vpop.f32.mrf.mxu0
        %6623 = vdwg.mxu0
        %6624 = vmatpush.bf16.msra.mxu0 %v6449
        %6625 = vmatpush.bf16.msra.mxu0 %v6445
        %6626 = vmatpush.bf16.msra.mxu0 %v6441
        %6627 = vmatpush.bf16.msra.mxu0 %v6437
        %6628 = vmatpush.bf16.msra.mxu0 %v6433
        %6629 = vmatpush.bf16.msra.mxu0 %v6429
        %6630 = vmatpush.bf16.msra.mxu0 %v6425
        %6631 = vmatpush.bf16.msra.mxu0 %v6421
        %6632 = vmatmul.bf16.gmra.mxu0 %v6224
        %v6633 = vpop.f32.mrf.mxu0
        %v6634 = vadd.f32 0.0, %v6633
        %v6635 = vpop.f32.mrf.mxu0
        %6636 = vdwg.mxu0
        %6637 = vmatpush.bf16.msra.mxu0 %v6481
        %6638 = vmatpush.bf16.msra.mxu0 %v6477
        %6639 = vmatpush.bf16.msra.mxu0 %v6473
        %6640 = vmatpush.bf16.msra.mxu0 %v6469
        %6641 = vmatpush.bf16.msra.mxu0 %v6465
        %6642 = vmatpush.bf16.msra.mxu0 %v6461
        %6643 = vmatpush.bf16.msra.mxu0 %v6457
        %6644 = vmatpush.bf16.msra.mxu0 %v6453
        %6645 = vmatmul.bf16.gmra.mxu0 %v6225
        %v6646 = vpop.f32.mrf.mxu0
        %v6647 = vadd.f32 %v6634, %v6646
        %v6648 = vpop.f32.mrf.mxu0
        %6649 = vdwg.mxu0
        %v6714 = vunpack.c.l.b16 %v6028
        %v6715 = vunpack.c.h.b16 %v6028
        %v6716 = vunpack.c.l.b16 %v6029
        %v6717 = vunpack.c.h.b16 %v6029
        %v6718 = vunpack.c.l.b16 %v6030
        %v6719 = vunpack.c.h.b16 %v6030
        %v6720 = vunpack.c.l.b16 %v6031
        %v6721 = vunpack.c.h.b16 %v6031
        %v6722 = vunpack.c.l.b16 %v6032
        %v6723 = vunpack.c.h.b16 %v6032
        %v6724 = vunpack.c.l.b16 %v6033
        %v6725 = vunpack.c.h.b16 %v6033
        %v6726 = vunpack.c.l.b16 %v6034
        %v6727 = vunpack.c.h.b16 %v6034
        %v6728 = vunpack.c.l.b16 %v6035
        %v6729 = vunpack.c.h.b16 %v6035
        %v6730 = vunpack.c.l.b16 %v6036
        %v6731 = vunpack.c.h.b16 %v6036
        %v6732 = vunpack.c.l.b16 %v6037
        %v6733 = vunpack.c.h.b16 %v6037
        %v6734 = vunpack.c.l.b16 %v6038
        %v6735 = vunpack.c.h.b16 %v6038
        %v6736 = vunpack.c.l.b16 %v6039
        %v6737 = vunpack.c.h.b16 %v6039
        %v6738 = vunpack.c.l.b16 %v6040
        %v6739 = vunpack.c.h.b16 %v6040
        %v6740 = vunpack.c.l.b16 %v6041
        %v6741 = vunpack.c.h.b16 %v6041
        %v6742 = vunpack.c.l.b16 %v6042
        %v6743 = vunpack.c.h.b16 %v6042
        %v6744 = vunpack.c.l.b16 %v6043
        %v6745 = vunpack.c.h.b16 %v6043
        %v6746 = vunpack.c.l.b16 %v6044
        %v6747 = vunpack.c.h.b16 %v6044
        %v6748 = vunpack.c.l.b16 %v6045
        %v6749 = vunpack.c.h.b16 %v6045
        %v6750 = vunpack.c.l.b16 %v6046
        %v6751 = vunpack.c.h.b16 %v6046
        %v6752 = vunpack.c.l.b16 %v6047
        %v6753 = vunpack.c.h.b16 %v6047
        %v6754 = vunpack.c.l.b16 %v6048
        %v6755 = vunpack.c.h.b16 %v6048
        %v6756 = vunpack.c.l.b16 %v6049
        %v6757 = vunpack.c.h.b16 %v6049
        %v6758 = vunpack.c.l.b16 %v6050
        %v6759 = vunpack.c.h.b16 %v6050
        %v6760 = vunpack.c.l.b16 %v6051
        %v6761 = vunpack.c.h.b16 %v6051
        %v6762 = vunpack.c.l.b16 %v6052
        %v6763 = vunpack.c.h.b16 %v6052
        %v6764 = vunpack.c.l.b16 %v6053
        %v6765 = vunpack.c.h.b16 %v6053
        %v6766 = vunpack.c.l.b16 %v6054
        %v6767 = vunpack.c.h.b16 %v6054
        %v6768 = vunpack.c.l.b16 %v6055
        %v6769 = vunpack.c.h.b16 %v6055
        %v6770 = vunpack.c.l.b16 %v6056
        %v6771 = vunpack.c.h.b16 %v6056
        %v6772 = vunpack.c.l.b16 %v6057
        %v6773 = vunpack.c.h.b16 %v6057
        %v6774 = vunpack.c.l.b16 %v6058
        %v6775 = vunpack.c.h.b16 %v6058
        %v6776 = vunpack.c.l.b16 %v6059
        %v6777 = vunpack.c.h.b16 %v6059
        %v6778 = vunpack.c.l.b16 %v6060
        %v6779 = vunpack.c.h.b16 %v6060
        %v6780 = vunpack.c.l.b16 %v6061
        %v6781 = vunpack.c.h.b16 %v6061
        %v6782 = vunpack.c.l.b16 %v6062
        %v6783 = vunpack.c.h.b16 %v6062
        %v6784 = vunpack.c.l.b16 %v6063
        %v6785 = vunpack.c.h.b16 %v6063
        %v6786 = vunpack.c.l.b16 %v6064
        %v6787 = vunpack.c.h.b16 %v6064
        %v6788 = vunpack.c.l.b16 %v6065
        %v6789 = vunpack.c.h.b16 %v6065
        %v6790 = vunpack.c.l.b16 %v6066
        %v6791 = vunpack.c.h.b16 %v6066
        %v6792 = vunpack.c.l.b16 %v6067
        %v6793 = vunpack.c.h.b16 %v6067
        %v6794 = vunpack.c.l.b16 %v6068
        %v6795 = vunpack.c.h.b16 %v6068
        %v6796 = vunpack.c.l.b16 %v6069
        %v6797 = vunpack.c.h.b16 %v6069
        %v6798 = vunpack.c.l.b16 %v6070
        %v6799 = vunpack.c.h.b16 %v6070
        %v6800 = vunpack.c.l.b16 %v6071
        %v6801 = vunpack.c.h.b16 %v6071
        %v6802 = vunpack.c.l.b16 %v6072
        %v6803 = vunpack.c.h.b16 %v6072
        %v6804 = vunpack.c.l.b16 %v6073
        %v6805 = vunpack.c.h.b16 %v6073
        %v6806 = vunpack.c.l.b16 %v6074
        %v6807 = vunpack.c.h.b16 %v6074
        %v6808 = vunpack.c.l.b16 %v6075
        %v6809 = vunpack.c.h.b16 %v6075
        %v6810 = vunpack.c.l.b16 %v6076
        %v6811 = vunpack.c.h.b16 %v6076
        %v6812 = vunpack.c.l.b16 %v6077
        %v6813 = vunpack.c.h.b16 %v6077
        %v6814 = vunpack.c.l.b16 %v6078
        %v6815 = vunpack.c.h.b16 %v6078
        %v6816 = vunpack.c.l.b16 %v6079
        %v6817 = vunpack.c.h.b16 %v6079
        %v6818 = vunpack.c.l.b16 %v6080
        %v6819 = vunpack.c.h.b16 %v6080
        %v6820 = vunpack.c.l.b16 %v6081
        %v6821 = vunpack.c.h.b16 %v6081
        %v6822 = vunpack.c.l.b16 %v6082
        %v6823 = vunpack.c.h.b16 %v6082
        %v6824 = vunpack.c.l.b16 %v6083
        %v6825 = vunpack.c.h.b16 %v6083
        %v6826 = vunpack.c.l.b16 %v6084
        %v6827 = vunpack.c.h.b16 %v6084
        %v6828 = vunpack.c.l.b16 %v6085
        %v6829 = vunpack.c.h.b16 %v6085
        %v6830 = vunpack.c.l.b16 %v6086
        %v6831 = vunpack.c.h.b16 %v6086
        %v6832 = vunpack.c.l.b16 %v6087
        %v6833 = vunpack.c.h.b16 %v6087
        %v6834 = vunpack.c.l.b16 %v6088
        %v6835 = vunpack.c.h.b16 %v6088
        %v6836 = vunpack.c.l.b16 %v6089
        %v6837 = vunpack.c.h.b16 %v6089
        %v6838 = vunpack.c.l.b16 %v6090
        %v6839 = vunpack.c.h.b16 %v6090
        %v6840 = vunpack.c.l.b16 %v6091
        %v6841 = vunpack.c.h.b16 %v6091
        %v6842 = vpack.c.b16 %v6718, %v6714
        %v6843 = vpack.c.b16 %v6719, %v6715
        %v6844 = vpack.c.b16 %v6720, %v6716
        %v6845 = vpack.c.b16 %v6721, %v6717
        %v6846 = vpack.c.b16 %v6726, %v6722
        %v6847 = vpack.c.b16 %v6727, %v6723
        %v6848 = vpack.c.b16 %v6728, %v6724
        %v6849 = vpack.c.b16 %v6729, %v6725
        %v6850 = vpack.c.b16 %v6734, %v6730
        %v6851 = vpack.c.b16 %v6735, %v6731
        %v6852 = vpack.c.b16 %v6736, %v6732
        %v6853 = vpack.c.b16 %v6737, %v6733
        %v6854 = vpack.c.b16 %v6742, %v6738
        %v6855 = vpack.c.b16 %v6743, %v6739
        %v6856 = vpack.c.b16 %v6744, %v6740
        %v6857 = vpack.c.b16 %v6745, %v6741
        %v6858 = vpack.c.b16 %v6750, %v6746
        %v6859 = vpack.c.b16 %v6751, %v6747
        %v6860 = vpack.c.b16 %v6752, %v6748
        %v6861 = vpack.c.b16 %v6753, %v6749
        %v6862 = vpack.c.b16 %v6758, %v6754
        %v6863 = vpack.c.b16 %v6759, %v6755
        %v6864 = vpack.c.b16 %v6760, %v6756
        %v6865 = vpack.c.b16 %v6761, %v6757
        %v6866 = vpack.c.b16 %v6766, %v6762
        %v6867 = vpack.c.b16 %v6767, %v6763
        %v6868 = vpack.c.b16 %v6768, %v6764
        %v6869 = vpack.c.b16 %v6769, %v6765
        %v6870 = vpack.c.b16 %v6774, %v6770
        %v6871 = vpack.c.b16 %v6775, %v6771
        %v6872 = vpack.c.b16 %v6776, %v6772
        %v6873 = vpack.c.b16 %v6777, %v6773
        %v6874 = vpack.c.b16 %v6782, %v6778
        %v6875 = vpack.c.b16 %v6783, %v6779
        %v6876 = vpack.c.b16 %v6784, %v6780
        %v6877 = vpack.c.b16 %v6785, %v6781
        %v6878 = vpack.c.b16 %v6790, %v6786
        %v6879 = vpack.c.b16 %v6791, %v6787
        %v6880 = vpack.c.b16 %v6792, %v6788
        %v6881 = vpack.c.b16 %v6793, %v6789
        %v6882 = vpack.c.b16 %v6798, %v6794
        %v6883 = vpack.c.b16 %v6799, %v6795
        %v6884 = vpack.c.b16 %v6800, %v6796
        %v6885 = vpack.c.b16 %v6801, %v6797
        %v6886 = vpack.c.b16 %v6806, %v6802
        %v6887 = vpack.c.b16 %v6807, %v6803
        %v6888 = vpack.c.b16 %v6808, %v6804
        %v6889 = vpack.c.b16 %v6809, %v6805
        %v6890 = vpack.c.b16 %v6814, %v6810
        %v6891 = vpack.c.b16 %v6815, %v6811
        %v6892 = vpack.c.b16 %v6816, %v6812
        %v6893 = vpack.c.b16 %v6817, %v6813
        %v6894 = vpack.c.b16 %v6822, %v6818
        %v6895 = vpack.c.b16 %v6823, %v6819
        %v6896 = vpack.c.b16 %v6824, %v6820
        %v6897 = vpack.c.b16 %v6825, %v6821
        %v6898 = vpack.c.b16 %v6830, %v6826
        %v6899 = vpack.c.b16 %v6831, %v6827
        %v6900 = vpack.c.b16 %v6832, %v6828
        %v6901 = vpack.c.b16 %v6833, %v6829
        %v6902 = vpack.c.b16 %v6838, %v6834
        %v6903 = vpack.c.b16 %v6839, %v6835
        %v6904 = vpack.c.b16 %v6840, %v6836
        %v6905 = vpack.c.b16 %v6841, %v6837
        %6970 = vmatpush.bf16.msra.mxu0 %v6870
        %6971 = vmatpush.bf16.msra.mxu0 %v6866
        %6972 = vmatpush.bf16.msra.mxu0 %v6862
        %6973 = vmatpush.bf16.msra.mxu0 %v6858
        %6974 = vmatpush.bf16.msra.mxu0 %v6854
        %6975 = vmatpush.bf16.msra.mxu0 %v6850
        %6976 = vmatpush.bf16.msra.mxu0 %v6846
        %6977 = vmatpush.bf16.msra.mxu0 %v6842
        %6978 = vmatmul.bf16.gmra.mxu0 %v6222
        %v6979 = vpop.f32.mrf.mxu0
        %v6980 = vadd.f32 %v6569, %v6979
        %v6981 = vpop.f32.mrf.mxu0
        %6982 = vdwg.mxu0
        %6983 = vmatpush.bf16.msra.mxu0 %v6902
        %6984 = vmatpush.bf16.msra.mxu0 %v6898
        %6985 = vmatpush.bf16.msra.mxu0 %v6894
        %6986 = vmatpush.bf16.msra.mxu0 %v6890
        %6987 = vmatpush.bf16.msra.mxu0 %v6886
        %6988 = vmatpush.bf16.msra.mxu0 %v6882
        %6989 = vmatpush.bf16.msra.mxu0 %v6878
        %6990 = vmatpush.bf16.msra.mxu0 %v6874
        %6991 = vmatmul.bf16.gmra.mxu0 %v6223
        %v6992 = vpop.f32.mrf.mxu0
        %v6993 = vadd.f32 %v6980, %v6992
        %v6994 = vpop.f32.mrf.mxu0
        %6995 = vdwg.mxu0
        %6996 = vmatpush.bf16.msra.mxu0 %v6871
        %6997 = vmatpush.bf16.msra.mxu0 %v6867
        %6998 = vmatpush.bf16.msra.mxu0 %v6863
        %6999 = vmatpush.bf16.msra.mxu0 %v6859
        %7000 = vmatpush.bf16.msra.mxu0 %v6855
        %7001 = vmatpush.bf16.msra.mxu0 %v6851
        %7002 = vmatpush.bf16.msra.mxu0 %v6847
        %7003 = vmatpush.bf16.msra.mxu0 %v6843
        %7004 = vmatmul.bf16.gmra.mxu0 %v6222
        %v7005 = vpop.f32.mrf.mxu0
        %v7006 = vadd.f32 %v6595, %v7005
        %v7007 = vpop.f32.mrf.mxu0
        %7008 = vdwg.mxu0
        %7009 = vmatpush.bf16.msra.mxu0 %v6903
        %7010 = vmatpush.bf16.msra.mxu0 %v6899
        %7011 = vmatpush.bf16.msra.mxu0 %v6895
        %7012 = vmatpush.bf16.msra.mxu0 %v6891
        %7013 = vmatpush.bf16.msra.mxu0 %v6887
        %7014 = vmatpush.bf16.msra.mxu0 %v6883
        %7015 = vmatpush.bf16.msra.mxu0 %v6879
        %7016 = vmatpush.bf16.msra.mxu0 %v6875
        %7017 = vmatmul.bf16.gmra.mxu0 %v6223
        %v7018 = vpop.f32.mrf.mxu0
        %v7019 = vadd.f32 %v7006, %v7018
        %v7020 = vpop.f32.mrf.mxu0
        %7021 = vdwg.mxu0
        %7022 = vmatpush.bf16.msra.mxu0 %v6872
        %7023 = vmatpush.bf16.msra.mxu0 %v6868
        %7024 = vmatpush.bf16.msra.mxu0 %v6864
        %7025 = vmatpush.bf16.msra.mxu0 %v6860
        %7026 = vmatpush.bf16.msra.mxu0 %v6856
        %7027 = vmatpush.bf16.msra.mxu0 %v6852
        %7028 = vmatpush.bf16.msra.mxu0 %v6848
        %7029 = vmatpush.bf16.msra.mxu0 %v6844
        %7030 = vmatmul.bf16.gmra.mxu0 %v6222
        %v7031 = vpop.f32.mrf.mxu0
        %v7032 = vadd.f32 %v6621, %v7031
        %v7033 = vpop.f32.mrf.mxu0
        %7034 = vdwg.mxu0
        %7035 = vmatpush.bf16.msra.mxu0 %v6904
        %7036 = vmatpush.bf16.msra.mxu0 %v6900
        %7037 = vmatpush.bf16.msra.mxu0 %v6896
        %7038 = vmatpush.bf16.msra.mxu0 %v6892
        %7039 = vmatpush.bf16.msra.mxu0 %v6888
        %7040 = vmatpush.bf16.msra.mxu0 %v6884
        %7041 = vmatpush.bf16.msra.mxu0 %v6880
        %7042 = vmatpush.bf16.msra.mxu0 %v6876
        %7043 = vmatmul.bf16.gmra.mxu0 %v6223
        %v7044 = vpop.f32.mrf.mxu0
        %v7045 = vadd.f32 %v7032, %v7044
        %v7046 = vpop.f32.mrf.mxu0
        %7047 = vdwg.mxu0
        %7048 = vmatpush.bf16.msra.mxu0 %v6873
        %7049 = vmatpush.bf16.msra.mxu0 %v6869
        %7050 = vmatpush.bf16.msra.mxu0 %v6865
        %7051 = vmatpush.bf16.msra.mxu0 %v6861
        %7052 = vmatpush.bf16.msra.mxu0 %v6857
        %7053 = vmatpush.bf16.msra.mxu0 %v6853
        %7054 = vmatpush.bf16.msra.mxu0 %v6849
        %7055 = vmatpush.bf16.msra.mxu0 %v6845
        %7056 = vmatmul.bf16.gmra.mxu0 %v6222
        %v7057 = vpop.f32.mrf.mxu0
        %v7058 = vadd.f32 %v6647, %v7057
        %v7059 = vpop.f32.mrf.mxu0
        %7060 = vdwg.mxu0
        %7061 = vmatpush.bf16.msra.mxu0 %v6905
        %7062 = vmatpush.bf16.msra.mxu0 %v6901
        %7063 = vmatpush.bf16.msra.mxu0 %v6897
        %7064 = vmatpush.bf16.msra.mxu0 %v6893
        %7065 = vmatpush.bf16.msra.mxu0 %v6889
        %7066 = vmatpush.bf16.msra.mxu0 %v6885
        %7067 = vmatpush.bf16.msra.mxu0 %v6881
        %7068 = vmatpush.bf16.msra.mxu0 %v6877
        %7069 = vmatmul.bf16.gmra.mxu0 %v6223
        %v7070 = vpop.f32.mrf.mxu0
        %v7071 = vadd.f32 %v7058, %v7070
        %v7072 = vpop.f32.mrf.mxu0
        %7073 = vdwg.mxu0
        %v7075 = vperm.slane %v6156, 0
        %v7076 = vperm.slane %v6156, 1
        %v7077 = vperm.slane %v6156, 2
        %v7078 = vperm.slane %v6156, 3
        %v7083 = vadd.f32 %v6993, %v7075
        %v7084 = vadd.f32 %v7019, %v7076
        %v7085 = vadd.f32 %v7045, %v7077
        %v7086 = vadd.f32 %v7071, %v7078
        %v7087 = vxor.u32 %v7083, 2147483648
        %v7088 = vxor.u32 %v7084, 2147483648
        %v7089 = vmul.f32 %v7087, 1.442695
        %v7090 = vpow.pop %v7089
        %v7091 = vmul.f32 %v7088, 1.442695
        %v7092 = vpow.pop %v7091
        %v7093 = vadd.f32 %v7090, 1.0
        %v7094 = vadd.f32 %v7092, 1.0
        %v7095 = vrcp.pop %v7093
        %v7096 = vmul.f32 %v7093, %v7095
        %v7097 = vsub.f32 1.0, %v7096
        %v7098 = vmul.f32 %v7095, %v7097
        %v7099 = vadd.f32 %v7095, %v7098
        %vm7100 = vweird.f32 %v7093
        %vm7101 = vweird.f32 %v7095
        %vm7102 = vmor %vm7100, %vm7101
        %v7103 = vsel %vm7102, %v7095, %v7099
        %v7104 = vand.u32 2147483647, %v7093
        %vm7105 = vcmp.eq.f32.partialorder %v7104, 8.507059e+37
        %v7106 = vand.u32 %v7093, 2147483648
        %v7107 = vor.u32 1.1754944e-38, %v7106
        %v7108 = vsel %vm7105, %v7107, %v7103
        %v7109 = vmul.f32 1.0, %v7108
        %v7110 = vrcp.pop %v7094
        %v7111 = vmul.f32 %v7094, %v7110
        %v7112 = vsub.f32 1.0, %v7111
        %v7113 = vmul.f32 %v7110, %v7112
        %v7114 = vadd.f32 %v7110, %v7113
        %vm7115 = vweird.f32 %v7094
        %vm7116 = vweird.f32 %v7110
        %vm7117 = vmor %vm7115, %vm7116
        %v7118 = vsel %vm7117, %v7110, %v7114
        %v7119 = vand.u32 2147483647, %v7094
        %vm7120 = vcmp.eq.f32.partialorder %v7119, 8.507059e+37
        %v7121 = vand.u32 %v7094, 2147483648
        %v7122 = vor.u32 1.1754944e-38, %v7121
        %v7123 = vsel %vm7120, %v7122, %v7118
        %v7124 = vmul.f32 1.0, %v7123
        %v7125 = vsub.f32 %v7085, 0.1
        %v7126 = vsub.f32 %v7086, 0.1
        %v7127 = vxor.u32 %v7125, 2147483648
        %v7128 = vxor.u32 %v7126, 2147483648
        %v7129 = vmul.f32 %v7127, 1.442695
        %v7130 = vpow.pop %v7129
        %v7131 = vmul.f32 %v7128, 1.442695
        %v7132 = vpow.pop %v7131
        %v7133 = vadd.f32 %v7130, 1.0
        %v7134 = vadd.f32 %v7132, 1.0
        %v7135 = vrcp.pop %v7133
        %v7136 = vmul.f32 %v7133, %v7135
        %v7137 = vsub.f32 1.0, %v7136
        %v7138 = vmul.f32 %v7135, %v7137
        %v7139 = vadd.f32 %v7135, %v7138
        %vm7140 = vweird.f32 %v7133
        %vm7141 = vweird.f32 %v7135
        %vm7142 = vmor %vm7140, %vm7141
        %v7143 = vsel %vm7142, %v7135, %v7139
        %v7144 = vand.u32 2147483647, %v7133
        %vm7145 = vcmp.eq.f32.partialorder %v7144, 8.507059e+37
        %v7146 = vand.u32 %v7133, 2147483648
        %v7147 = vor.u32 1.1754944e-38, %v7146
        %v7148 = vsel %vm7145, %v7147, %v7143
        %v7149 = vmul.f32 1.0, %v7148
        %v7150 = vrcp.pop %v7134
        %v7151 = vmul.f32 %v7134, %v7150
        %v7152 = vsub.f32 1.0, %v7151
        %v7153 = vmul.f32 %v7150, %v7152
        %v7154 = vadd.f32 %v7150, %v7153
        %vm7155 = vweird.f32 %v7134
        %vm7156 = vweird.f32 %v7150
        %vm7157 = vmor %vm7155, %vm7156
        %v7158 = vsel %vm7157, %v7150, %v7154
        %v7159 = vand.u32 2147483647, %v7134
        %vm7160 = vcmp.eq.f32.partialorder %v7159, 8.507059e+37
        %v7161 = vand.u32 %v7134, 2147483648
        %v7162 = vor.u32 1.1754944e-38, %v7161
        %v7163 = vsel %vm7160, %v7162, %v7158
        %v7164 = vmul.f32 1.0, %v7163
        %v7165 = vmul.f32 %v7109, %v4950
        %v7166 = vmul.f32 %v7124, %v4951
        %v7167 = vpack.c.bf16 %v7165, %v7165
        %v7168 = vpack.c.bf16 %v7166, %v7166
        %v7201 = vunpack.c.l.b16 %v6189
        %v7202 = vunpack.c.h.b16 %v6189
        %v7203 = vunpack.c.l.b16 %v6190
        %v7204 = vunpack.c.h.b16 %v6190
        %v7205 = vunpack.c.l.b16 %v6191
        %v7206 = vunpack.c.h.b16 %v6191
        %v7207 = vunpack.c.l.b16 %v6192
        %v7208 = vunpack.c.h.b16 %v6192
        %v7209 = vunpack.c.l.b16 %v6193
        %v7210 = vunpack.c.h.b16 %v6193
        %v7211 = vunpack.c.l.b16 %v6194
        %v7212 = vunpack.c.h.b16 %v6194
        %v7213 = vunpack.c.l.b16 %v6195
        %v7214 = vunpack.c.h.b16 %v6195
        %v7215 = vunpack.c.l.b16 %v6196
        %v7216 = vunpack.c.h.b16 %v6196
        %v7217 = vunpack.c.l.b16 %v6197
        %v7218 = vunpack.c.h.b16 %v6197
        %v7219 = vunpack.c.l.b16 %v6198
        %v7220 = vunpack.c.h.b16 %v6198
        %v7221 = vunpack.c.l.b16 %v6199
        %v7222 = vunpack.c.h.b16 %v6199
        %v7223 = vunpack.c.l.b16 %v6200
        %v7224 = vunpack.c.h.b16 %v6200
        %v7225 = vunpack.c.l.b16 %v6201
        %v7226 = vunpack.c.h.b16 %v6201
        %v7227 = vunpack.c.l.b16 %v6202
        %v7228 = vunpack.c.h.b16 %v6202
        %v7229 = vunpack.c.l.b16 %v6203
        %v7230 = vunpack.c.h.b16 %v6203
        %v7231 = vunpack.c.l.b16 %v6204
        %v7232 = vunpack.c.h.b16 %v6204
        %v7233 = vunpack.c.l.b16 %v6205
        %v7234 = vunpack.c.h.b16 %v6205
        %v7235 = vunpack.c.l.b16 %v6206
        %v7236 = vunpack.c.h.b16 %v6206
        %v7237 = vunpack.c.l.b16 %v6207
        %v7238 = vunpack.c.h.b16 %v6207
        %v7239 = vunpack.c.l.b16 %v6208
        %v7240 = vunpack.c.h.b16 %v6208
        %v7241 = vunpack.c.l.b16 %v6209
        %v7242 = vunpack.c.h.b16 %v6209
        %v7243 = vunpack.c.l.b16 %v6210
        %v7244 = vunpack.c.h.b16 %v6210
        %v7245 = vunpack.c.l.b16 %v6211
        %v7246 = vunpack.c.h.b16 %v6211
        %v7247 = vunpack.c.l.b16 %v6212
        %v7248 = vunpack.c.h.b16 %v6212
        %v7249 = vunpack.c.l.b16 %v6213
        %v7250 = vunpack.c.h.b16 %v6213
        %v7251 = vunpack.c.l.b16 %v6214
        %v7252 = vunpack.c.h.b16 %v6214
        %v7253 = vunpack.c.l.b16 %v6215
        %v7254 = vunpack.c.h.b16 %v6215
        %v7255 = vunpack.c.l.b16 %v6216
        %v7256 = vunpack.c.h.b16 %v6216
        %v7257 = vunpack.c.l.b16 %v6217
        %v7258 = vunpack.c.h.b16 %v6217
        %v7259 = vunpack.c.l.b16 %v6218
        %v7260 = vunpack.c.h.b16 %v6218
        %v7261 = vunpack.c.l.b16 %v6219
        %v7262 = vunpack.c.h.b16 %v6219
        %v7263 = vunpack.c.l.b16 %v6220
        %v7264 = vunpack.c.h.b16 %v6220
        %v7265 = vpack.c.b16 %v7203, %v7201
        %v7266 = vpack.c.b16 %v7204, %v7202
        %v7267 = vpack.c.b16 %v7207, %v7205
        %v7268 = vpack.c.b16 %v7208, %v7206
        %v7269 = vpack.c.b16 %v7211, %v7209
        %v7270 = vpack.c.b16 %v7212, %v7210
        %v7271 = vpack.c.b16 %v7215, %v7213
        %v7272 = vpack.c.b16 %v7216, %v7214
        %v7273 = vpack.c.b16 %v7219, %v7217
        %v7274 = vpack.c.b16 %v7220, %v7218
        %v7275 = vpack.c.b16 %v7223, %v7221
        %v7276 = vpack.c.b16 %v7224, %v7222
        %v7277 = vpack.c.b16 %v7227, %v7225
        %v7278 = vpack.c.b16 %v7228, %v7226
        %v7279 = vpack.c.b16 %v7231, %v7229
        %v7280 = vpack.c.b16 %v7232, %v7230
        %v7281 = vpack.c.b16 %v7235, %v7233
        %v7282 = vpack.c.b16 %v7236, %v7234
        %v7283 = vpack.c.b16 %v7239, %v7237
        %v7284 = vpack.c.b16 %v7240, %v7238
        %v7285 = vpack.c.b16 %v7243, %v7241
        %v7286 = vpack.c.b16 %v7244, %v7242
        %v7287 = vpack.c.b16 %v7247, %v7245
        %v7288 = vpack.c.b16 %v7248, %v7246
        %v7289 = vpack.c.b16 %v7251, %v7249
        %v7290 = vpack.c.b16 %v7252, %v7250
        %v7291 = vpack.c.b16 %v7255, %v7253
        %v7292 = vpack.c.b16 %v7256, %v7254
        %v7293 = vpack.c.b16 %v7259, %v7257
        %v7294 = vpack.c.b16 %v7260, %v7258
        %v7295 = vpack.c.b16 %v7263, %v7261
        %v7296 = vpack.c.b16 %v7264, %v7262
        %7329 = vmatpush.bf16.msra.mxu0 %v7279
        %7330 = vmatpush.bf16.msra.mxu0 %v7277
        %7331 = vmatpush.bf16.msra.mxu0 %v7275
        %7332 = vmatpush.bf16.msra.mxu0 %v7273
        %7333 = vmatpush.bf16.msra.mxu0 %v7271
        %7334 = vmatpush.bf16.msra.mxu0 %v7269
        %7335 = vmatpush.bf16.msra.mxu0 %v7267
        %7336 = vmatpush.bf16.msra.mxu0 %v7265
        %7337 = vmatmul.bf16.gmra.mxu0 %v7167
        %v7338 = vpop.f32.mrf.mxu0
        %v7339 = vadd.f32 0.0, %v7338
        %v7340 = vpop.f32.mrf.mxu0
        %7341 = vdwg.mxu0
        %7342 = vmatpush.bf16.msra.mxu0 %v7295
        %7343 = vmatpush.bf16.msra.mxu0 %v7293
        %7344 = vmatpush.bf16.msra.mxu0 %v7291
        %7345 = vmatpush.bf16.msra.mxu0 %v7289
        %7346 = vmatpush.bf16.msra.mxu0 %v7287
        %7347 = vmatpush.bf16.msra.mxu0 %v7285
        %7348 = vmatpush.bf16.msra.mxu0 %v7283
        %7349 = vmatpush.bf16.msra.mxu0 %v7281
        %7350 = vmatmul.bf16.gmra.mxu0 %v7168
        %v7351 = vpop.f32.mrf.mxu0
        %v7352 = vadd.f32 %v7339, %v7351
        %v7353 = vpop.f32.mrf.mxu0
        %7354 = vdwg.mxu0
        %7355 = vmatpush.bf16.msra.mxu0 %v7280
        %7356 = vmatpush.bf16.msra.mxu0 %v7278
        %7357 = vmatpush.bf16.msra.mxu0 %v7276
        %7358 = vmatpush.bf16.msra.mxu0 %v7274
        %7359 = vmatpush.bf16.msra.mxu0 %v7272
        %7360 = vmatpush.bf16.msra.mxu0 %v7270
        %7361 = vmatpush.bf16.msra.mxu0 %v7268
        %7362 = vmatpush.bf16.msra.mxu0 %v7266
        %7363 = vmatmul.bf16.gmra.mxu0 %v7167
        %v7364 = vpop.f32.mrf.mxu0
        %v7365 = vadd.f32 0.0, %v7364
        %v7366 = vpop.f32.mrf.mxu0
        %7367 = vdwg.mxu0
        %7368 = vmatpush.bf16.msra.mxu0 %v7296
        %7369 = vmatpush.bf16.msra.mxu0 %v7294
        %7370 = vmatpush.bf16.msra.mxu0 %v7292
        %7371 = vmatpush.bf16.msra.mxu0 %v7290
        %7372 = vmatpush.bf16.msra.mxu0 %v7288
        %7373 = vmatpush.bf16.msra.mxu0 %v7286
        %7374 = vmatpush.bf16.msra.mxu0 %v7284
        %7375 = vmatpush.bf16.msra.mxu0 %v7282
        %7376 = vmatmul.bf16.gmra.mxu0 %v7168
        %v7377 = vpop.f32.mrf.mxu0
        %v7378 = vadd.f32 %v7365, %v7377
        %v7379 = vpop.f32.mrf.mxu0
        %7380 = vdwg.mxu0
        %v7413 = vunpack.c.l.b16 %v6157
        %v7414 = vunpack.c.h.b16 %v6157
        %v7415 = vunpack.c.l.b16 %v6158
        %v7416 = vunpack.c.h.b16 %v6158
        %v7417 = vunpack.c.l.b16 %v6159
        %v7418 = vunpack.c.h.b16 %v6159
        %v7419 = vunpack.c.l.b16 %v6160
        %v7420 = vunpack.c.h.b16 %v6160
        %v7421 = vunpack.c.l.b16 %v6161
        %v7422 = vunpack.c.h.b16 %v6161
        %v7423 = vunpack.c.l.b16 %v6162
        %v7424 = vunpack.c.h.b16 %v6162
        %v7425 = vunpack.c.l.b16 %v6163
        %v7426 = vunpack.c.h.b16 %v6163
        %v7427 = vunpack.c.l.b16 %v6164
        %v7428 = vunpack.c.h.b16 %v6164
        %v7429 = vunpack.c.l.b16 %v6165
        %v7430 = vunpack.c.h.b16 %v6165
        %v7431 = vunpack.c.l.b16 %v6166
        %v7432 = vunpack.c.h.b16 %v6166
        %v7433 = vunpack.c.l.b16 %v6167
        %v7434 = vunpack.c.h.b16 %v6167
        %v7435 = vunpack.c.l.b16 %v6168
        %v7436 = vunpack.c.h.b16 %v6168
        %v7437 = vunpack.c.l.b16 %v6169
        %v7438 = vunpack.c.h.b16 %v6169
        %v7439 = vunpack.c.l.b16 %v6170
        %v7440 = vunpack.c.h.b16 %v6170
        %v7441 = vunpack.c.l.b16 %v6171
        %v7442 = vunpack.c.h.b16 %v6171
        %v7443 = vunpack.c.l.b16 %v6172
        %v7444 = vunpack.c.h.b16 %v6172
        %v7445 = vunpack.c.l.b16 %v6173
        %v7446 = vunpack.c.h.b16 %v6173
        %v7447 = vunpack.c.l.b16 %v6174
        %v7448 = vunpack.c.h.b16 %v6174
        %v7449 = vunpack.c.l.b16 %v6175
        %v7450 = vunpack.c.h.b16 %v6175
        %v7451 = vunpack.c.l.b16 %v6176
        %v7452 = vunpack.c.h.b16 %v6176
        %v7453 = vunpack.c.l.b16 %v6177
        %v7454 = vunpack.c.h.b16 %v6177
        %v7455 = vunpack.c.l.b16 %v6178
        %v7456 = vunpack.c.h.b16 %v6178
        %v7457 = vunpack.c.l.b16 %v6179
        %v7458 = vunpack.c.h.b16 %v6179
        %v7459 = vunpack.c.l.b16 %v6180
        %v7460 = vunpack.c.h.b16 %v6180
        %v7461 = vunpack.c.l.b16 %v6181
        %v7462 = vunpack.c.h.b16 %v6181
        %v7463 = vunpack.c.l.b16 %v6182
        %v7464 = vunpack.c.h.b16 %v6182
        %v7465 = vunpack.c.l.b16 %v6183
        %v7466 = vunpack.c.h.b16 %v6183
        %v7467 = vunpack.c.l.b16 %v6184
        %v7468 = vunpack.c.h.b16 %v6184
        %v7469 = vunpack.c.l.b16 %v6185
        %v7470 = vunpack.c.h.b16 %v6185
        %v7471 = vunpack.c.l.b16 %v6186
        %v7472 = vunpack.c.h.b16 %v6186
        %v7473 = vunpack.c.l.b16 %v6187
        %v7474 = vunpack.c.h.b16 %v6187
        %v7475 = vunpack.c.l.b16 %v6188
        %v7476 = vunpack.c.h.b16 %v6188
        %v7477 = vpack.c.b16 %v7415, %v7413
        %v7478 = vpack.c.b16 %v7416, %v7414
        %v7479 = vpack.c.b16 %v7419, %v7417
        %v7480 = vpack.c.b16 %v7420, %v7418
        %v7481 = vpack.c.b16 %v7423, %v7421
        %v7482 = vpack.c.b16 %v7424, %v7422
        %v7483 = vpack.c.b16 %v7427, %v7425
        %v7484 = vpack.c.b16 %v7428, %v7426
        %v7485 = vpack.c.b16 %v7431, %v7429
        %v7486 = vpack.c.b16 %v7432, %v7430
        %v7487 = vpack.c.b16 %v7435, %v7433
        %v7488 = vpack.c.b16 %v7436, %v7434
        %v7489 = vpack.c.b16 %v7439, %v7437
        %v7490 = vpack.c.b16 %v7440, %v7438
        %v7491 = vpack.c.b16 %v7443, %v7441
        %v7492 = vpack.c.b16 %v7444, %v7442
        %v7493 = vpack.c.b16 %v7447, %v7445
        %v7494 = vpack.c.b16 %v7448, %v7446
        %v7495 = vpack.c.b16 %v7451, %v7449
        %v7496 = vpack.c.b16 %v7452, %v7450
        %v7497 = vpack.c.b16 %v7455, %v7453
        %v7498 = vpack.c.b16 %v7456, %v7454
        %v7499 = vpack.c.b16 %v7459, %v7457
        %v7500 = vpack.c.b16 %v7460, %v7458
        %v7501 = vpack.c.b16 %v7463, %v7461
        %v7502 = vpack.c.b16 %v7464, %v7462
        %v7503 = vpack.c.b16 %v7467, %v7465
        %v7504 = vpack.c.b16 %v7468, %v7466
        %v7505 = vpack.c.b16 %v7471, %v7469
        %v7506 = vpack.c.b16 %v7472, %v7470
        %v7507 = vpack.c.b16 %v7475, %v7473
        %v7508 = vpack.c.b16 %v7476, %v7474
        %7541 = vmatpush.bf16.msra.mxu0 %v7491
        %7542 = vmatpush.bf16.msra.mxu0 %v7489
        %7543 = vmatpush.bf16.msra.mxu0 %v7487
        %7544 = vmatpush.bf16.msra.mxu0 %v7485
        %7545 = vmatpush.bf16.msra.mxu0 %v7483
        %7546 = vmatpush.bf16.msra.mxu0 %v7481
        %7547 = vmatpush.bf16.msra.mxu0 %v7479
        %7548 = vmatpush.bf16.msra.mxu0 %v7477
        %7549 = vmatmul.bf16.gmra.mxu0 %v6222
        %v7550 = vpop.f32.mrf.mxu0
        %v7551 = vadd.f32 %v7352, %v7550
        %v7552 = vpop.f32.mrf.mxu0
        %7553 = vdwg.mxu0
        %7554 = vmatpush.bf16.msra.mxu0 %v7507
        %7555 = vmatpush.bf16.msra.mxu0 %v7505
        %7556 = vmatpush.bf16.msra.mxu0 %v7503
        %7557 = vmatpush.bf16.msra.mxu0 %v7501
        %7558 = vmatpush.bf16.msra.mxu0 %v7499
        %7559 = vmatpush.bf16.msra.mxu0 %v7497
        %7560 = vmatpush.bf16.msra.mxu0 %v7495
        %7561 = vmatpush.bf16.msra.mxu0 %v7493
        %7562 = vmatmul.bf16.gmra.mxu0 %v6223
        %v7563 = vpop.f32.mrf.mxu0
        %v7564 = vadd.f32 %v7551, %v7563
        %v7565 = vpop.f32.mrf.mxu0
        %7566 = vdwg.mxu0
        %7567 = vmatpush.bf16.msra.mxu0 %v7492
        %7568 = vmatpush.bf16.msra.mxu0 %v7490
        %7569 = vmatpush.bf16.msra.mxu0 %v7488
        %7570 = vmatpush.bf16.msra.mxu0 %v7486
        %7571 = vmatpush.bf16.msra.mxu0 %v7484
        %7572 = vmatpush.bf16.msra.mxu0 %v7482
        %7573 = vmatpush.bf16.msra.mxu0 %v7480
        %7574 = vmatpush.bf16.msra.mxu0 %v7478
        %7575 = vmatmul.bf16.gmra.mxu0 %v6222
        %v7576 = vpop.f32.mrf.mxu0
        %v7577 = vadd.f32 %v7378, %v7576
        %v7578 = vpop.f32.mrf.mxu0
        %7579 = vdwg.mxu0
        %7580 = vmatpush.bf16.msra.mxu0 %v7508
        %7581 = vmatpush.bf16.msra.mxu0 %v7506
        %7582 = vmatpush.bf16.msra.mxu0 %v7504
        %7583 = vmatpush.bf16.msra.mxu0 %v7502
        %7584 = vmatpush.bf16.msra.mxu0 %v7500
        %7585 = vmatpush.bf16.msra.mxu0 %v7498
        %7586 = vmatpush.bf16.msra.mxu0 %v7496
        %7587 = vmatpush.bf16.msra.mxu0 %v7494
        %7588 = vmatmul.bf16.gmra.mxu0 %v6223
        %v7589 = vpop.f32.mrf.mxu0
        %v7590 = vadd.f32 %v7577, %v7589
        %v7591 = vpop.f32.mrf.mxu0
        %7592 = vdwg.mxu0
        %v7594 = vperm.slane %v6221, 0
        %v7595 = vperm.slane %v6221, 1
        %v7598 = vadd.f32 %v7564, %v7594
        %v7599 = vadd.f32 %v7590, %v7595
        %v7600 = vtanh.pop %v7598
        %v7601 = vtanh.pop %v7599
        %v7602 = vsub.f32 1.0, %v7149
        %v7603 = vsub.f32 1.0, %v7164
        %v7604 = vmul.f32 %v7602, %v4950
        %v7605 = vmul.f32 %v7603, %v4951
        %v7606 = vmul.f32 %v7149, %v7600
        %v7607 = vmul.f32 %v7164, %v7601
        %v7608 = vadd.f32 %v7604, %v7606
        %v7609 = vadd.f32 %v7605, %v7607
        %7610 = vst [vmem:[#allocation2] sm:$0xff] %v7608
        %7611 = vst [vmem:[#allocation2 + $0x8] sm:$0xff] %v7609
        %p7612 = scmp.eq.s32.totalorder %s125, 1
        // Predicated region
        $region289: #{tpu_custom_call.1} parent=159 // pred_check
          %p7613 = pneg %p7612
        $region290: #{tpu_custom_call.1} parent=159 // pred_check_branch
          %7615 = sbr.rel (%p7613) target = $region292
        $region291: #{tpu_custom_call.1} parent=159 // pred_region
          %v7616 = vld [vmem:[#allocation2] sm:$0xff]
          %v7617 = vld [vmem:[#allocation2 + $0x8] sm:$0xff]
          %7618 = vst [vmem:[#allocation53] sm:$0xff] %v7616
          %7619 = vst [vmem:[#allocation53 + $0x8] sm:$0xff] %v7617
          %v7620 = vld [vmem:[#allocation11] sm:$0x3]
          %v7621 = vperm.slane %v7620, 0
          %v7622 = vlaneseq
          %v7623 = vshrl.u32 %v7622, 7
          %7625 = vset.pattern.permute.xlu0 %v7623
          %7626 = vperm.xlu0 %7625, %v7621
          %v7627 = vpop.permute.xlu0 %7626
          %v7628 = vperm.slane %v7620, 1
          %v7629 = vlaneseq
          %v7630 = vshrl.u32 %v7629, 7
          %7632 = vset.pattern.permute.xlu0 %v7630
          %7633 = vperm.xlu0 %7632, %v7628
          %v7634 = vpop.permute.xlu0 %7633
          %vm7635 = vcmp.gt.f32.partialorder %v7627, 0.0
          %vm7636 = vcmp.gt.f32.partialorder %v7634, 0.0
          %v7637 = vsel %vm7635, 1, 0
          %v7638 = vsel %vm7636, 1, 0
          %vm7639 = vcmp.eq.s32.totalorder %v7637, 1
          %vm7640 = vcmp.eq.s32.totalorder %v7638, 1
          %v7641 = vsel %vm7639, %v7616, -1e+30
          %v7642 = vsel %vm7639, %v7617, -1e+30
          %v7643 = vsel %vm7640, %v7616, -1e+30
          %v7644 = vsel %vm7640, %v7617, -1e+30
          %v7645 = vrot.slane %v7641, 4
          %v7646 = vmax.f32 %v7641, %v7645
          %v7647 = vrot.slane %v7646, 2
          %v7648 = vmax.f32 %v7646, %v7647
          %v7649 = vrot.slane %v7648, 1
          %v7650 = vmax.f32 %v7648, %v7649
          %v7651 = vrot.slane %v7642, 4
          %v7652 = vmax.f32 %v7642, %v7651
          %v7653 = vrot.slane %v7652, 2
          %v7654 = vmax.f32 %v7652, %v7653
          %v7655 = vrot.slane %v7654, 1
          %v7656 = vmax.f32 %v7654, %v7655
          %v7657 = vrot.slane %v7643, 4
          %v7658 = vmax.f32 %v7643, %v7657
          %v7659 = vrot.slane %v7658, 2
          %v7660 = vmax.f32 %v7658, %v7659
          %v7661 = vrot.slane %v7660, 1
          %v7662 = vmax.f32 %v7660, %v7661
          %v7663 = vrot.slane %v7644, 4
          %v7664 = vmax.f32 %v7644, %v7663
          %v7665 = vrot.slane %v7664, 2
          %v7666 = vmax.f32 %v7664, %v7665
          %v7667 = vrot.slane %v7666, 1
          %v7668 = vmax.f32 %v7666, %v7667
          %vm7669 = vcmask 58368
          %v7670 = vsel %vm7669, %v7620, 0.0
          %7671 = vadd.xlane.f32.xlu0 %v7670
          %v7672 = vpop.xlane.xlu0 %7671
          %vm7673 = vcmp.gt.f32.partialorder %v7672, 0.0
          %v7674 = vsel %vm7673, 1, 0
          %vm7675 = vcmp.eq.s32.totalorder %v7674, 1
          %vm7680 = vcmask 1041409
          %v7681 = vsel %vm7680, %v7662, %v7650
          %v7682 = vsel %vm7680, %v7668, %v7656
          %v7685 = vsel %vm7675, %v7681, 0.0
          %v7686 = vsel %vm7675, %v7682, 0.0
          %v7687 = vpack.c.bf16 %v7685, %v7685
          %v7688 = vpack.c.bf16 %v7686, %v7686
          %v7689 = vld [vmem:[#allocation17] sm:$0xff]
          %v7690 = vld [vmem:[#allocation17 + $0x8] sm:$0xff]
          %v7691 = vld [vmem:[#allocation17 + $0x10] sm:$0xff]
          %v7692 = vld [vmem:[#allocation17 + $0x18] sm:$0xff]
          %v7693 = vld [vmem:[#allocation17 + $0x20] sm:$0xff]
          %v7694 = vld [vmem:[#allocation17 + $0x28] sm:$0xff]
          %v7695 = vld [vmem:[#allocation17 + $0x30] sm:$0xff]
          %v7696 = vld [vmem:[#allocation17 + $0x38] sm:$0xff]
          %v7697 = vld [vmem:[#allocation17 + $0x40] sm:$0xff]
          %v7698 = vld [vmem:[#allocation17 + $0x48] sm:$0xff]
          %v7699 = vld [vmem:[#allocation17 + $0x50] sm:$0xff]
          %v7700 = vld [vmem:[#allocation17 + $0x58] sm:$0xff]
          %v7701 = vld [vmem:[#allocation17 + $0x60] sm:$0xff]
          %v7702 = vld [vmem:[#allocation17 + $0x68] sm:$0xff]
          %v7703 = vld [vmem:[#allocation17 + $0x70] sm:$0xff]
          %v7704 = vld [vmem:[#allocation17 + $0x78] sm:$0xff]
          %v7705 = vld [vmem:[#allocation17 + $0x80] sm:$0xff]
          %v7706 = vld [vmem:[#allocation17 + $0x88] sm:$0xff]
          %v7707 = vld [vmem:[#allocation17 + $0x90] sm:$0xff]
          %v7708 = vld [vmem:[#allocation17 + $0x98] sm:$0xff]
          %v7709 = vld [vmem:[#allocation17 + $0xa0] sm:$0xff]
          %v7710 = vld [vmem:[#allocation17 + $0xa8] sm:$0xff]
          %v7711 = vld [vmem:[#allocation17 + $0xb0] sm:$0xff]
          %v7712 = vld [vmem:[#allocation17 + $0xb8] sm:$0xff]
          %v7713 = vld [vmem:[#allocation17 + $0xc0] sm:$0xff]
          %v7714 = vld [vmem:[#allocation17 + $0xc8] sm:$0xff]
          %v7715 = vld [vmem:[#allocation17 + $0xd0] sm:$0xff]
          %v7716 = vld [vmem:[#allocation17 + $0xd8] sm:$0xff]
          %v7717 = vld [vmem:[#allocation17 + $0xe0] sm:$0xff]
          %v7718 = vld [vmem:[#allocation17 + $0xe8] sm:$0xff]
          %v7719 = vld [vmem:[#allocation17 + $0xf0] sm:$0xff]
          %v7720 = vld [vmem:[#allocation17 + $0xf8] sm:$0xff]
          %v7721 = vld [vmem:[#allocation19] sm:$0x3]
          %v7723 = vperm.slane %v7721, 0
          %v7724 = vperm.slane %v7721, 1
          %v7759 = vunpack.c.l.b16 %v7689
          %v7760 = vunpack.c.h.b16 %v7689
          %v7761 = vunpack.c.l.b16 %v7690
          %v7762 = vunpack.c.h.b16 %v7690
          %v7763 = vunpack.c.l.b16 %v7691
          %v7764 = vunpack.c.h.b16 %v7691
          %v7765 = vunpack.c.l.b16 %v7692
          %v7766 = vunpack.c.h.b16 %v7692
          %v7767 = vunpack.c.l.b16 %v7693
          %v7768 = vunpack.c.h.b16 %v7693
          %v7769 = vunpack.c.l.b16 %v7694
          %v7770 = vunpack.c.h.b16 %v7694
          %v7771 = vunpack.c.l.b16 %v7695
          %v7772 = vunpack.c.h.b16 %v7695
          %v7773 = vunpack.c.l.b16 %v7696
          %v7774 = vunpack.c.h.b16 %v7696
          %v7775 = vunpack.c.l.b16 %v7697
          %v7776 = vunpack.c.h.b16 %v7697
          %v7777 = vunpack.c.l.b16 %v7698
          %v7778 = vunpack.c.h.b16 %v7698
          %v7779 = vunpack.c.l.b16 %v7699
          %v7780 = vunpack.c.h.b16 %v7699
          %v7781 = vunpack.c.l.b16 %v7700
          %v7782 = vunpack.c.h.b16 %v7700
          %v7783 = vunpack.c.l.b16 %v7701
          %v7784 = vunpack.c.h.b16 %v7701
          %v7785 = vunpack.c.l.b16 %v7702
          %v7786 = vunpack.c.h.b16 %v7702
          %v7787 = vunpack.c.l.b16 %v7703
          %v7788 = vunpack.c.h.b16 %v7703
          %v7789 = vunpack.c.l.b16 %v7704
          %v7790 = vunpack.c.h.b16 %v7704
          %v7791 = vunpack.c.l.b16 %v7705
          %v7792 = vunpack.c.h.b16 %v7705
          %v7793 = vunpack.c.l.b16 %v7706
          %v7794 = vunpack.c.h.b16 %v7706
          %v7795 = vunpack.c.l.b16 %v7707
          %v7796 = vunpack.c.h.b16 %v7707
          %v7797 = vunpack.c.l.b16 %v7708
          %v7798 = vunpack.c.h.b16 %v7708
          %v7799 = vunpack.c.l.b16 %v7709
          %v7800 = vunpack.c.h.b16 %v7709
          %v7801 = vunpack.c.l.b16 %v7710
          %v7802 = vunpack.c.h.b16 %v7710
          %v7803 = vunpack.c.l.b16 %v7711
          %v7804 = vunpack.c.h.b16 %v7711
          %v7805 = vunpack.c.l.b16 %v7712
          %v7806 = vunpack.c.h.b16 %v7712
          %v7807 = vunpack.c.l.b16 %v7713
          %v7808 = vunpack.c.h.b16 %v7713
          %v7809 = vunpack.c.l.b16 %v7714
          %v7810 = vunpack.c.h.b16 %v7714
          %v7811 = vunpack.c.l.b16 %v7715
          %v7812 = vunpack.c.h.b16 %v7715
          %v7813 = vunpack.c.l.b16 %v7716
          %v7814 = vunpack.c.h.b16 %v7716
          %v7815 = vunpack.c.l.b16 %v7717
          %v7816 = vunpack.c.h.b16 %v7717
          %v7817 = vunpack.c.l.b16 %v7718
          %v7818 = vunpack.c.h.b16 %v7718
          %v7819 = vunpack.c.l.b16 %v7719
          %v7820 = vunpack.c.h.b16 %v7719
          %v7821 = vunpack.c.l.b16 %v7720
          %v7822 = vunpack.c.h.b16 %v7720
          %v7823 = vpack.c.b16 %v7761, %v7759
          %v7824 = vpack.c.b16 %v7762, %v7760
          %v7825 = vpack.c.b16 %v7765, %v7763
          %v7826 = vpack.c.b16 %v7766, %v7764
          %v7827 = vpack.c.b16 %v7769, %v7767
          %v7828 = vpack.c.b16 %v7770, %v7768
          %v7829 = vpack.c.b16 %v7773, %v7771
          %v7830 = vpack.c.b16 %v7774, %v7772
          %v7831 = vpack.c.b16 %v7777, %v7775
          %v7832 = vpack.c.b16 %v7778, %v7776
          %v7833 = vpack.c.b16 %v7781, %v7779
          %v7834 = vpack.c.b16 %v7782, %v7780
          %v7835 = vpack.c.b16 %v7785, %v7783
          %v7836 = vpack.c.b16 %v7786, %v7784
          %v7837 = vpack.c.b16 %v7789, %v7787
          %v7838 = vpack.c.b16 %v7790, %v7788
          %v7839 = vpack.c.b16 %v7793, %v7791
          %v7840 = vpack.c.b16 %v7794, %v7792
          %v7841 = vpack.c.b16 %v7797, %v7795
          %v7842 = vpack.c.b16 %v7798, %v7796
          %v7843 = vpack.c.b16 %v7801, %v7799
          %v7844 = vpack.c.b16 %v7802, %v7800
          %v7845 = vpack.c.b16 %v7805, %v7803
          %v7846 = vpack.c.b16 %v7806, %v7804
          %v7847 = vpack.c.b16 %v7809, %v7807
          %v7848 = vpack.c.b16 %v7810, %v7808
          %v7849 = vpack.c.b16 %v7813, %v7811
          %v7850 = vpack.c.b16 %v7814, %v7812
          %v7851 = vpack.c.b16 %v7817, %v7815
          %v7852 = vpack.c.b16 %v7818, %v7816
          %v7853 = vpack.c.b16 %v7821, %v7819
          %v7854 = vpack.c.b16 %v7822, %v7820
          %7887 = vmatpush.bf16.msra.mxu0 %v7837
          %7888 = vmatpush.bf16.msra.mxu0 %v7835
          %7889 = vmatpush.bf16.msra.mxu0 %v7833
          %7890 = vmatpush.bf16.msra.mxu0 %v7831
          %7891 = vmatpush.bf16.msra.mxu0 %v7829
          %7892 = vmatpush.bf16.msra.mxu0 %v7827
          %7893 = vmatpush.bf16.msra.mxu0 %v7825
          %7894 = vmatpush.bf16.msra.mxu0 %v7823
          %7895 = vmatmul.bf16.gmra.mxu0 %v7687
          %v7896 = vpop.f32.mrf.mxu0
          %v7897 = vadd.f32 %v7723, %v7896
          %v7898 = vpop.f32.mrf.mxu0
          %7899 = vdwg.mxu0
          %7900 = vmatpush.bf16.msra.mxu0 %v7853
          %7901 = vmatpush.bf16.msra.mxu0 %v7851
          %7902 = vmatpush.bf16.msra.mxu0 %v7849
          %7903 = vmatpush.bf16.msra.mxu0 %v7847
          %7904 = vmatpush.bf16.msra.mxu0 %v7845
          %7905 = vmatpush.bf16.msra.mxu0 %v7843
          %7906 = vmatpush.bf16.msra.mxu0 %v7841
          %7907 = vmatpush.bf16.msra.mxu0 %v7839
          %7908 = vmatmul.bf16.gmra.mxu0 %v7688
          %v7909 = vpop.f32.mrf.mxu0
          %v7910 = vadd.f32 %v7897, %v7909
          %v7911 = vpop.f32.mrf.mxu0
          %7912 = vdwg.mxu0
          %7913 = vmatpush.bf16.msra.mxu0 %v7838
          %7914 = vmatpush.bf16.msra.mxu0 %v7836
          %7915 = vmatpush.bf16.msra.mxu0 %v7834
          %7916 = vmatpush.bf16.msra.mxu0 %v7832
          %7917 = vmatpush.bf16.msra.mxu0 %v7830
          %7918 = vmatpush.bf16.msra.mxu0 %v7828
          %7919 = vmatpush.bf16.msra.mxu0 %v7826
          %7920 = vmatpush.bf16.msra.mxu0 %v7824
          %7921 = vmatmul.bf16.gmra.mxu0 %v7687
          %v7922 = vpop.f32.mrf.mxu0
          %v7923 = vadd.f32 %v7724, %v7922
          %v7924 = vpop.f32.mrf.mxu0
          %7925 = vdwg.mxu0
          %7926 = vmatpush.bf16.msra.mxu0 %v7854
          %7927 = vmatpush.bf16.msra.mxu0 %v7852
          %7928 = vmatpush.bf16.msra.mxu0 %v7850
          %7929 = vmatpush.bf16.msra.mxu0 %v7848
          %7930 = vmatpush.bf16.msra.mxu0 %v7846
          %7931 = vmatpush.bf16.msra.mxu0 %v7844
          %7932 = vmatpush.bf16.msra.mxu0 %v7842
          %7933 = vmatpush.bf16.msra.mxu0 %v7840
          %7934 = vmatmul.bf16.gmra.mxu0 %v7688
          %v7935 = vpop.f32.mrf.mxu0
          %v7936 = vadd.f32 %v7923, %v7935
          %v7937 = vpop.f32.mrf.mxu0
          %7938 = vdwg.mxu0
          %v7941 = vrot.slane %v7936, 6
          %vm7942 = vcmask 1041408
          %v7943 = vsel %vm7942, %v7910, %v7941
          %7945 = vst [vmem:[#allocation54] sm:$0xf] %v7943
          %v7946 = vld [vmem:[#allocation13] sm:$0x1]
          %v7947 = vperm.slane %v7946, 0
          %v7948 = vlaneseq
          %v7949 = vshrl.u32 %v7948, 7
          %7951 = vset.pattern.permute.xlu0 %v7949
          %7952 = vperm.xlu0 %7951, %v7947
          %v7953 = vpop.permute.xlu0 %7952
          %vm7954 = vcmp.gt.f32.partialorder %v7953, 0.0
          %v7955 = vsel %vm7954, 1, 0
          %vm7956 = vcmp.eq.s32.totalorder %v7955, 1
          %v7957 = vsel %vm7956, %v7910, -1e+30
          %v7958 = vsel %vm7956, %v7936, -1e+30
          %v7959 = vsel %vm7942, %v7957, -inf
          %v7960 = vrot.slane %v7959, 4
          %v7961 = vmax.f32 %v7959, %v7960
          %v7962 = vrot.slane %v7961, 2
          %v7963 = vmax.f32 %v7961, %v7962
          %v7964 = vrot.slane %v7963, 1
          %v7965 = vmax.f32 %v7963, %v7964
          %v7966 = vsel %vm7942, %v7958, -inf
          %v7967 = vrot.slane %v7966, 4
          %v7968 = vmax.f32 %v7966, %v7967
          %v7969 = vrot.slane %v7968, 2
          %v7970 = vmax.f32 %v7968, %v7969
          %v7971 = vrot.slane %v7970, 1
          %v7972 = vmax.f32 %v7970, %v7971
          %vm7973 = vcmask 8192
          %v7974 = vsel %vm7973, %v7946, 0.0
          %7975 = vadd.xlane.f32.xlu0 %v7974
          %v7976 = vpop.xlane.xlu0 %7975
          %vm7977 = vcmp.gt.f32.partialorder %v7976, 0.0
          %v7978 = vsel %vm7977, 1, 0
          %vm7979 = vcmp.eq.s32.totalorder %v7978, 1
          %v7980 = vsel %vm7979, %v7965, 0.0
          %v7981 = vsel %vm7979, %v7972, 0.0
          %v7982 = vpack.c.bf16 %v7980, %v7980
          %v7983 = vpack.c.bf16 %v7981, %v7981
          %v7984 = vld [vmem:[#allocation20] sm:$0xff]
          %v7985 = vld [vmem:[#allocation20 + $0x8] sm:$0xff]
          %v7986 = vld [vmem:[#allocation20 + $0x10] sm:$0xff]
          %v7987 = vld [vmem:[#allocation20 + $0x18] sm:$0xff]
          %v7988 = vld [vmem:[#allocation20 + $0x20] sm:$0xff]
          %v7989 = vld [vmem:[#allocation20 + $0x28] sm:$0xff]
          %v7990 = vld [vmem:[#allocation20 + $0x30] sm:$0xff]
          %v7991 = vld [vmem:[#allocation20 + $0x38] sm:$0xff]
          %v7992 = vld [vmem:[#allocation20 + $0x40] sm:$0xff]
          %v7993 = vld [vmem:[#allocation20 + $0x48] sm:$0xff]
          %v7994 = vld [vmem:[#allocation20 + $0x50] sm:$0xff]
          %v7995 = vld [vmem:[#allocation20 + $0x58] sm:$0xff]
          %v7996 = vld [vmem:[#allocation20 + $0x60] sm:$0xff]
          %v7997 = vld [vmem:[#allocation20 + $0x68] sm:$0xff]
          %v7998 = vld [vmem:[#allocation20 + $0x70] sm:$0xff]
          %v7999 = vld [vmem:[#allocation20 + $0x78] sm:$0xff]
          %v8000 = vld [vmem:[#allocation20 + $0x80] sm:$0xff]
          %v8001 = vld [vmem:[#allocation20 + $0x88] sm:$0xff]
          %v8002 = vld [vmem:[#allocation20 + $0x90] sm:$0xff]
          %v8003 = vld [vmem:[#allocation20 + $0x98] sm:$0xff]
          %v8004 = vld [vmem:[#allocation20 + $0xa0] sm:$0xff]
          %v8005 = vld [vmem:[#allocation20 + $0xa8] sm:$0xff]
          %v8006 = vld [vmem:[#allocation20 + $0xb0] sm:$0xff]
          %v8007 = vld [vmem:[#allocation20 + $0xb8] sm:$0xff]
          %v8008 = vld [vmem:[#allocation20 + $0xc0] sm:$0xff]
          %v8009 = vld [vmem:[#allocation20 + $0xc8] sm:$0xff]
          %v8010 = vld [vmem:[#allocation20 + $0xd0] sm:$0xff]
          %v8011 = vld [vmem:[#allocation20 + $0xd8] sm:$0xff]
          %v8012 = vld [vmem:[#allocation20 + $0xe0] sm:$0xff]
          %v8013 = vld [vmem:[#allocation20 + $0xe8] sm:$0xff]
          %v8014 = vld [vmem:[#allocation20 + $0xf0] sm:$0xff]
          %v8015 = vld [vmem:[#allocation20 + $0xf8] sm:$0xff]
          %v8016 = vld [vmem:[#allocation22] sm:$0x3]
          %v8049 = vunpack.c.l.b16 %v7984
          %v8050 = vunpack.c.h.b16 %v7984
          %v8051 = vunpack.c.l.b16 %v7985
          %v8052 = vunpack.c.h.b16 %v7985
          %v8053 = vunpack.c.l.b16 %v7986
          %v8054 = vunpack.c.h.b16 %v7986
          %v8055 = vunpack.c.l.b16 %v7987
          %v8056 = vunpack.c.h.b16 %v7987
          %v8057 = vunpack.c.l.b16 %v7988
          %v8058 = vunpack.c.h.b16 %v7988
          %v8059 = vunpack.c.l.b16 %v7989
          %v8060 = vunpack.c.h.b16 %v7989
          %v8061 = vunpack.c.l.b16 %v7990
          %v8062 = vunpack.c.h.b16 %v7990
          %v8063 = vunpack.c.l.b16 %v7991
          %v8064 = vunpack.c.h.b16 %v7991
          %v8065 = vunpack.c.l.b16 %v7992
          %v8066 = vunpack.c.h.b16 %v7992
          %v8067 = vunpack.c.l.b16 %v7993
          %v8068 = vunpack.c.h.b16 %v7993
          %v8069 = vunpack.c.l.b16 %v7994
          %v8070 = vunpack.c.h.b16 %v7994
          %v8071 = vunpack.c.l.b16 %v7995
          %v8072 = vunpack.c.h.b16 %v7995
          %v8073 = vunpack.c.l.b16 %v7996
          %v8074 = vunpack.c.h.b16 %v7996
          %v8075 = vunpack.c.l.b16 %v7997
          %v8076 = vunpack.c.h.b16 %v7997
          %v8077 = vunpack.c.l.b16 %v7998
          %v8078 = vunpack.c.h.b16 %v7998
          %v8079 = vunpack.c.l.b16 %v7999
          %v8080 = vunpack.c.h.b16 %v7999
          %v8081 = vunpack.c.l.b16 %v8000
          %v8082 = vunpack.c.h.b16 %v8000
          %v8083 = vunpack.c.l.b16 %v8001
          %v8084 = vunpack.c.h.b16 %v8001
          %v8085 = vunpack.c.l.b16 %v8002
          %v8086 = vunpack.c.h.b16 %v8002
          %v8087 = vunpack.c.l.b16 %v8003
          %v8088 = vunpack.c.h.b16 %v8003
          %v8089 = vunpack.c.l.b16 %v8004
          %v8090 = vunpack.c.h.b16 %v8004
          %v8091 = vunpack.c.l.b16 %v8005
          %v8092 = vunpack.c.h.b16 %v8005
          %v8093 = vunpack.c.l.b16 %v8006
          %v8094 = vunpack.c.h.b16 %v8006
          %v8095 = vunpack.c.l.b16 %v8007
          %v8096 = vunpack.c.h.b16 %v8007
          %v8097 = vunpack.c.l.b16 %v8008
          %v8098 = vunpack.c.h.b16 %v8008
          %v8099 = vunpack.c.l.b16 %v8009
          %v8100 = vunpack.c.h.b16 %v8009
          %v8101 = vunpack.c.l.b16 %v8010
          %v8102 = vunpack.c.h.b16 %v8010
          %v8103 = vunpack.c.l.b16 %v8011
          %v8104 = vunpack.c.h.b16 %v8011
          %v8105 = vunpack.c.l.b16 %v8012
          %v8106 = vunpack.c.h.b16 %v8012
          %v8107 = vunpack.c.l.b16 %v8013
          %v8108 = vunpack.c.h.b16 %v8013
          %v8109 = vunpack.c.l.b16 %v8014
          %v8110 = vunpack.c.h.b16 %v8014
          %v8111 = vunpack.c.l.b16 %v8015
          %v8112 = vunpack.c.h.b16 %v8015
          %v8113 = vpack.c.b16 %v8051, %v8049
          %v8114 = vpack.c.b16 %v8052, %v8050
          %v8115 = vpack.c.b16 %v8055, %v8053
          %v8116 = vpack.c.b16 %v8056, %v8054
          %v8117 = vpack.c.b16 %v8059, %v8057
          %v8118 = vpack.c.b16 %v8060, %v8058
          %v8119 = vpack.c.b16 %v8063, %v8061
          %v8120 = vpack.c.b16 %v8064, %v8062
          %v8121 = vpack.c.b16 %v8067, %v8065
          %v8122 = vpack.c.b16 %v8068, %v8066
          %v8123 = vpack.c.b16 %v8071, %v8069
          %v8124 = vpack.c.b16 %v8072, %v8070
          %v8125 = vpack.c.b16 %v8075, %v8073
          %v8126 = vpack.c.b16 %v8076, %v8074
          %v8127 = vpack.c.b16 %v8079, %v8077
          %v8128 = vpack.c.b16 %v8080, %v8078
          %v8129 = vpack.c.b16 %v8083, %v8081
          %v8130 = vpack.c.b16 %v8084, %v8082
          %v8131 = vpack.c.b16 %v8087, %v8085
          %v8132 = vpack.c.b16 %v8088, %v8086
          %v8133 = vpack.c.b16 %v8091, %v8089
          %v8134 = vpack.c.b16 %v8092, %v8090
          %v8135 = vpack.c.b16 %v8095, %v8093
          %v8136 = vpack.c.b16 %v8096, %v8094
          %v8137 = vpack.c.b16 %v8099, %v8097
          %v8138 = vpack.c.b16 %v8100, %v8098
          %v8139 = vpack.c.b16 %v8103, %v8101
          %v8140 = vpack.c.b16 %v8104, %v8102
          %v8141 = vpack.c.b16 %v8107, %v8105
          %v8142 = vpack.c.b16 %v8108, %v8106
          %v8143 = vpack.c.b16 %v8111, %v8109
          %v8144 = vpack.c.b16 %v8112, %v8110
          %v8178 = vperm.slane %v8016, 0
          %v8179 = vperm.slane %v8016, 1
          %8182 = vmatpush.bf16.msra.mxu0 %v8127
          %8183 = vmatpush.bf16.msra.mxu0 %v8125
          %8184 = vmatpush.bf16.msra.mxu0 %v8123
          %8185 = vmatpush.bf16.msra.mxu0 %v8121
          %8186 = vmatpush.bf16.msra.mxu0 %v8119
          %8187 = vmatpush.bf16.msra.mxu0 %v8117
          %8188 = vmatpush.bf16.msra.mxu0 %v8115
          %8189 = vmatpush.bf16.msra.mxu0 %v8113
          %8190 = vmatmul.bf16.gmra.mxu0 %v7982
          %v8191 = vpop.f32.mrf.mxu0
          %v8192 = vadd.f32 %v8178, %v8191
          %v8193 = vpop.f32.mrf.mxu0
          %8194 = vdwg.mxu0
          %8195 = vmatpush.bf16.msra.mxu0 %v8143
          %8196 = vmatpush.bf16.msra.mxu0 %v8141
          %8197 = vmatpush.bf16.msra.mxu0 %v8139
          %8198 = vmatpush.bf16.msra.mxu0 %v8137
          %8199 = vmatpush.bf16.msra.mxu0 %v8135
          %8200 = vmatpush.bf16.msra.mxu0 %v8133
          %8201 = vmatpush.bf16.msra.mxu0 %v8131
          %8202 = vmatpush.bf16.msra.mxu0 %v8129
          %8203 = vmatmul.bf16.gmra.mxu0 %v7983
          %v8204 = vpop.f32.mrf.mxu0
          %v8205 = vadd.f32 %v8192, %v8204
          %v8206 = vpop.f32.mrf.mxu0
          %8207 = vdwg.mxu0
          %8208 = vmatpush.bf16.msra.mxu0 %v8128
          %8209 = vmatpush.bf16.msra.mxu0 %v8126
          %8210 = vmatpush.bf16.msra.mxu0 %v8124
          %8211 = vmatpush.bf16.msra.mxu0 %v8122
          %8212 = vmatpush.bf16.msra.mxu0 %v8120
          %8213 = vmatpush.bf16.msra.mxu0 %v8118
          %8214 = vmatpush.bf16.msra.mxu0 %v8116
          %8215 = vmatpush.bf16.msra.mxu0 %v8114
          %8216 = vmatmul.bf16.gmra.mxu0 %v7982
          %v8217 = vpop.f32.mrf.mxu0
          %v8218 = vadd.f32 %v8179, %v8217
          %v8219 = vpop.f32.mrf.mxu0
          %8220 = vdwg.mxu0
          %8221 = vmatpush.bf16.msra.mxu0 %v8144
          %8222 = vmatpush.bf16.msra.mxu0 %v8142
          %8223 = vmatpush.bf16.msra.mxu0 %v8140
          %8224 = vmatpush.bf16.msra.mxu0 %v8138
          %8225 = vmatpush.bf16.msra.mxu0 %v8136
          %8226 = vmatpush.bf16.msra.mxu0 %v8134
          %8227 = vmatpush.bf16.msra.mxu0 %v8132
          %8228 = vmatpush.bf16.msra.mxu0 %v8130
          %8229 = vmatmul.bf16.gmra.mxu0 %v7983
          %v8230 = vpop.f32.mrf.mxu0
          %v8231 = vadd.f32 %v8218, %v8230
          %v8232 = vpop.f32.mrf.mxu0
          %8233 = vdwg.mxu0
          %v8236 = vrot.slane %v8231, 7
          %vm8237 = vcmask 1040384
          %v8238 = vsel %vm8237, %v8205, %v8236
          %v8240 = vlaneseq
          %vm8241 = vcmp.ge.s32.totalorder %v8240, 0
          %vm8242 = vcmp.lt.s32.totalorder %v8240, 256
          %vm8243 = vmand %vm8241, %vm8242
          %8244 = vst.msk [vmem:[#allocation56] sm:$0x3] %vm8243, %v8238
        $region292: #{tpu_custom_call.1} parent=159 // pred_fallthru
          _
        // Predicated region
        $region293: #{tpu_custom_call.1} parent=159 // pred_check
          %p8245 = pneg %p993
        $region294: #{tpu_custom_call.1} parent=159 // pred_check_branch
          %8247 = sbr.rel (%p8245) target = $region296
        $region295: #{tpu_custom_call.1} parent=159 // pred_region
          %8249 = vsyncadd [#allocation7], 0
          %s8251 = sshll.u32 [#allocation53], 4
          %s8252 = int_to_ptr.vmem [resolvable:$true] %s8251
          %s8253 = sshll.u32 %s71, 4
          %s8254 = int_to_ptr.hbm [resolvable:$true] %s8253
          %8256 = dma.vmem_to_hbm [thread:$0]  %s8252, 256, %s8254, [#allocation7]
        $region296: #{tpu_custom_call.1} parent=159 // pred_fallthru
          _
        // Predicated region
        $region297: #{tpu_custom_call.1} parent=159 // pred_check
          %p8257 = pneg %p1014
        $region298: #{tpu_custom_call.1} parent=159 // pred_check_branch
          %8259 = sbr.rel (%p8257) target = $region300
        $region299: #{tpu_custom_call.1} parent=159 // pred_region
          %8261 = vsyncadd [#allocation55], 0
          %s8263 = sshll.u32 [#allocation54], 4
          %s8264 = int_to_ptr.vmem [resolvable:$true] %s8263
          %s8265 = sshll.u32 %s73, 4
          %s8266 = int_to_ptr.hbm [resolvable:$true] %s8265
          %8268 = dma.vmem_to_hbm [thread:$0]  %s8264, 64, %s8266, [#allocation55]
        $region300: #{tpu_custom_call.1} parent=159 // pred_fallthru
          _
        // Predicated region
        $region301: #{tpu_custom_call.1} parent=159 // pred_check
          %p8269 = pneg %p1035
        $region302: #{tpu_custom_call.1} parent=159 // pred_check_branch
          %8271 = sbr.rel (%p8269) target = $region304
        $region303: #{tpu_custom_call.1} parent=159 // pred_region
          %8273 = vsyncadd [#allocation55], 0
          %s8275 = sshll.u32 [#allocation56], 4
          %s8276 = int_to_ptr.vmem [resolvable:$true] %s8275
          %s8277 = sshll.u32 %s75, 4
          %s8278 = int_to_ptr.hbm [resolvable:$true] %s8277
          %8280 = dma.vmem_to_hbm [thread:$0]  %s8276, 32, %s8278, [#allocation55]
        $region304: #{tpu_custom_call.1} parent=159 // pred_fallthru
          _
        // Predicated region
        $region305: #{tpu_custom_call.1} parent=159 // pred_check
          %p8281 = pneg %p993
        $region306: #{tpu_custom_call.1} parent=159 // pred_check_branch
          %8283 = sbr.rel (%p8281) target = $region308
        $region307: #{tpu_custom_call.1} parent=159 // pred_region
          %8285 = dma.done [#allocation7], 256
        $region308: #{tpu_custom_call.1} parent=159 // pred_fallthru
          _
        // Predicated region
        $region309: #{tpu_custom_call.1} parent=159 // pred_check
          %p8286 = pneg %p1014
        $region310: #{tpu_custom_call.1} parent=159 // pred_check_branch
          %8288 = sbr.rel (%p8286) target = $region312
        $region311: #{tpu_custom_call.1} parent=159 // pred_region
          %8290 = dma.done [#allocation55], 64
        $region312: #{tpu_custom_call.1} parent=159 // pred_fallthru
          _
        // Predicated region
        $region313: #{tpu_custom_call.1} parent=159 // pred_check
          %p8291 = pneg %p1035
        $region314: #{tpu_custom_call.1} parent=159 // pred_check_branch
          %8293 = sbr.rel (%p8291) target = $region316
        $region315: #{tpu_custom_call.1} parent=159 // pred_region
          %8295 = dma.done [#allocation55], 32
        $region316: #{tpu_custom_call.1} parent=159 // pred_fallthru
          _
      $region160: #{tpu_custom_call.1} parent=5 // pred_fallthru
        _
      %p8296 = scmp.le.s32.totalorder 2, %s120
      // Predicated region
      $region317: #{tpu_custom_call.1} parent=5 // pred_check
        %p8297 = pneg %p8296
      $region318: #{tpu_custom_call.1} parent=5 // pred_check_branch
        %8299 = sbr.rel (%p8297) target = $region320
      $region319: #{tpu_custom_call.1} parent=5 // pred_region
        %s8300 = ssub.s32 %s120, 2
      $region320: #{tpu_custom_call.1} parent=5 // pred_fallthru
        _
    $region6: #{tpu_custom_call.1} parent=1 // loop_footer
      %s124 = sadd.s32 1, %s120
    $region7: #{tpu_custom_call.1} parent=1 // loop_footer_branch
      %119 = sbr.rel target = $region3
    $region8: #{tpu_custom_call.1} parent=1 // loop_exit
      _
    %8301 = vsyncpa [#allocation6], 1
    %s8302 = scalar_lea.sflag [#allocation6], 1
    %8303 = vsyncpa %s8302, 1
    %8304 = vsyncpa [#allocation9], 1
    %8305 = vsyncpa [#allocation12], 1
    %8306 = vsyncpa [#allocation15], 1
    %8307 = vsyncpa [#allocation18], 1
    %8308 = vsyncpa [#allocation21], 1
    %8309 = vsyncpa [#allocation24], 1
    %s8310 = scalar_lea.sflag [#allocation24], 1
    %8311 = vsyncpa %s8310, 1
    %8312 = vsyncpa [#allocation27], 1
    %s8313 = scalar_lea.sflag [#allocation27], 1
    %8314 = vsyncpa %s8313, 1
    %8315 = vsyncpa [#allocation30], 1
    %s8316 = scalar_lea.sflag [#allocation30], 1
    %8317 = vsyncpa %s8316, 1
    %8318 = vsyncpa [#allocation33], 1
    %s8319 = scalar_lea.sflag [#allocation33], 1
    %8320 = vsyncpa %s8319, 1
    %8321 = vsyncpa [#allocation36], 1
    %s8322 = scalar_lea.sflag [#allocation36], 1
    %8323 = vsyncpa %s8322, 1
    %8324 = vsyncpa [#allocation39], 1
    %s8325 = scalar_lea.sflag [#allocation39], 1
    %8326 = vsyncpa %s8325, 1
    %8327 = vsyncpa [#allocation42], 1
    %s8328 = scalar_lea.sflag [#allocation42], 1
    %8329 = vsyncpa %s8328, 1
    %8330 = vsyncpa [#allocation45], 1
    %s8331 = scalar_lea.sflag [#allocation45], 1
    %8332 = vsyncpa %s8331, 1
    %8333 = vsyncpa [#allocation48], 1
    %s8334 = scalar_lea.sflag [#allocation48], 1
    %8335 = vsyncpa %s8334, 1
    %8336 = vsyncpa [#allocation51], 1
    %s8337 = scalar_lea.sflag [#allocation51], 1
    %8338 = vsyncpa %s8337, 1
    %8339 = vsyncpa [#allocation7], 1
    %s8340 = scalar_lea.sflag [#allocation7], 1
    %8341 = vsyncpa %s8340, 1
    %8342 = vsyncpa [#allocation55], 1

</llo_original>
